<compile_context>
chip_gen: v5e
topology: v5e:2x2
jax: 0.10.0
libtpu: 0.0.40
codegen_flags: <defaults>
</compile_context>

<pallas_src>
import jax
import jax.numpy as jnp
from jax import lax
from jax.experimental import pallas as pl
from jax.experimental.pallas import tpu as pltpu

D_EMBED = 64
N_HEADS = 8
D_MODEL = D_EMBED * N_HEADS  # 512
N_LAYER = 5
LN_EPS = 1e-5
NEG_INF = -1.0e9


def _layer_norm(x):
    # nn.LayerNorm(64) with default affine (weight=1, bias=0)
    mu = jnp.mean(x, axis=-1, keepdims=True)
    var = jnp.mean(jnp.square(x - mu), axis=-1, keepdims=True)
    return (x - mu) * lax.rsqrt(var + LN_EPS)


def _softmax(x):
    m = jnp.max(x, axis=-1, keepdims=True)
    e = jnp.exp(x - m)
    return e / jnp.sum(e, axis=-1, keepdims=True)


def transformer_kernel(trg_ref, src_ref, keep_ref,
                       qw_ref, qb_ref, kvw_ref, kvb_ref,
                       ow_ref, ob_ref,
                       f1w_ref, f1b_ref, f2w_ref, f2b_ref,
                       r0w_ref, r0b_ref, r1w_ref, r1b_ref,
                       out_ref):
    trg = trg_ref[0]          # (L, D)
    src = src_ref[0]          # (L, D)
    keep = keep_ref[0]        # (L, 1)  1.0 keep / 0.0 masked query row

    # ---- hoisted (identical for every layer): src LN + fused K/V projection
    s_ln = _layer_norm(src)
    kv = jnp.dot(s_ln, kvw_ref[...],
                 preferred_element_type=jnp.float32) + kvb_ref[...]   # (L, 2*D_MODEL)
    k_heads = jnp.stack(
        [kv[:, h * D_EMBED:(h + 1) * D_EMBED] for h in range(N_HEADS)],
        axis=0)                                                        # (H, L, d)
    v_heads = jnp.stack(
        [kv[:, D_MODEL + h * D_EMBED:D_MODEL + (h + 1) * D_EMBED]
         for h in range(N_HEADS)], axis=0)                             # (H, L, d)

    inv_sqrt_dk = 1.0 / (float(D_EMBED) ** 0.5)

    def layer(i, x):
        # ---------------- multi-head cross attention ----------------
        x_ln = _layer_norm(x)
        q = jnp.dot(x_ln, qw_ref[...],
                    preferred_element_type=jnp.float32) + qb_ref[...]  # (L, D_MODEL)
        q = q * inv_sqrt_dk            # fold 1/sqrt(d_k) into Q once
        q_heads = jnp.stack(
            [q[:, h * D_EMBED:(h + 1) * D_EMBED] for h in range(N_HEADS)],
            axis=0)                                                    # (H, L, d)

        s = jnp.einsum("hqd,hkd->hqk", q_heads, k_heads,
                       preferred_element_type=jnp.float32)             # (H, L, L)
        p = _softmax(s)
        o = jnp.einsum("hqk,hkd->hqd", p, v_heads,
                       preferred_element_type=jnp.float32)             # (H, L, d)

        o_cat = jnp.concatenate([o[h] for h in range(N_HEADS)], axis=-1)  # (L, D_MODEL)
        # Row-constant mask: masking scores to -1e9 then zeroing the probs is
        # exactly equivalent to zeroing the attention-output rows here.
        o_cat = o_cat * keep
        attn = jnp.dot(o_cat, ow_ref[...],
                       preferred_element_type=jnp.float32) + ob_ref[...]  # (L, D)

        # -------- residual 0: Linear(LN(attn)) + LN(attn) ------------
        a = _layer_norm(attn)
        a = jnp.dot(a, r0w_ref[i],
                    preferred_element_type=jnp.float32) + r0b_ref[i] + a

        # -------- position-wise FFN ----------------------------------
        t = _layer_norm(a)
        t = jnp.maximum(
            jnp.dot(t, f1w_ref[...],
                    preferred_element_type=jnp.float32) + f1b_ref[...], 0.0)
        a = jnp.dot(t, f2w_ref[...],
                    preferred_element_type=jnp.float32) + f2b_ref[...]

        # -------- residual 1 ------------------------------------------
        a2 = _layer_norm(a)
        a2 = jnp.dot(a2, r1w_ref[i],
                     preferred_element_type=jnp.float32) + r1b_ref[i] + a2
        return a2

    out = lax.fori_loop(0, N_LAYER, layer, trg, unroll=True)
    out_ref[0] = out


def encoder_stack(query, key_arr, keep, weights):
    B, L, D = query.shape

    seq_spec = pl.BlockSpec((1, L, D), lambda b: (b, 0, 0))
    keep_spec = pl.BlockSpec((1, L, 1), lambda b: (b, 0, 0))

    def full_spec(arr):
        nd = arr.ndim
        return pl.BlockSpec(arr.shape, lambda b, _nd=nd: (0,) * _nd)

    in_specs = [seq_spec, seq_spec, keep_spec] + [full_spec(w) for w in weights]

    return pl.pallas_call(
        transformer_kernel,
        out_shape=jax.ShapeDtypeStruct((B, L, D), jnp.float32),
        grid_spec=pltpu.PrefetchScalarGridSpec(
            num_scalar_prefetch=0,
            grid=(B,),
            in_specs=in_specs,
            out_specs=seq_spec,
        ),
        compiler_params=pltpu.CompilerParams(
            dimension_semantics=("parallel",)),
    )(query, key_arr, keep, *weights)


def cross_modal_transformer(query, key_arr, params, bMask=True):
    assert bMask, "bMask=False crashes in the reference PyTorch code (mask=None)"
    B, L, D = query.shape
    # make_src_mask / make_pad_mask semantics: after the transpose the mask
    # depends only on the query row index i:
    #   mask[b, i, j] = (query[b, i, 0] != 0) & (key[b, i, 0] != 0)
    row_keep = jnp.logical_and(query[:, :, 0] != 0.0, key_arr[:, :, 0] != 0.0)
    keep = row_keep.astype(jnp.float32)[:, :, None]            # (B, L, 1)

    # Fuse K and V projection weights -> one (64, 1024) matmul inside the kernel.
    kvw = jnp.concatenate([params["kw"], params["vw"]], axis=1)
    kvb = jnp.concatenate([params["kb"], params["vb"]], axis=1)

    weights = [params["qw"], params["qb"], kvw, kvb,
               params["ow"], params["ob"],
               params["f1w"], params["f1b"], params["f2w"], params["f2b"],
               params["r0w"], params["r0b"], params["r1w"], params["r1b"]]

    return encoder_stack(query, key_arr, keep, weights)


# ----------------------- deterministic parameter init -----------------------

def init_params(key):
    def linear(k, fan_in, fan_out):
        k1, k2 = jax.random.split(k)
        bound = 1.0 / (fan_in ** 0.5)
        w = jax.random.uniform(k1, (fan_in, fan_out), jnp.float32, -bound, bound)
        b = jax.random.uniform(k2, (1, fan_out), jnp.float32, -bound, bound)
        return w, b

    keys = jax.random.split(key, 6 + 2 * N_LAYER)
    p = {}
    p["qw"], p["qb"] = linear(keys[0], D_EMBED, D_MODEL)
    p["kw"], p["kb"] = linear(keys[1], D_EMBED, D_MODEL)
    p["vw"], p["vb"] = linear(keys[2], D_EMBED, D_MODEL)
    p["ow"], p["ob"] = linear(keys[3], D_MODEL, D_EMBED)
    p["f1w"], p["f1b"] = linear(keys[4], D_EMBED, D_EMBED)
    p["f2w"], p["f2b"] = linear(keys[5], D_EMBED, D_EMBED)
    # ResidualConnectionLayer builds a fresh nn.Linear on every forward call;
    # here: one deterministic Linear per (layer, residual-slot), stacked so the
    # whole set is passed to the fused kernel once.
    r0w, r0b, r1w, r1b = [], [], [], []
    for i in range(N_LAYER):
        w0, b0 = linear(keys[6 + 2 * i], D_EMBED, D_EMBED)
        w1, b1 = linear(keys[7 + 2 * i], D_EMBED, D_EMBED)
        r0w.append(w0); r0b.append(b0); r1w.append(w1); r1b.append(b1)
    p["r0w"] = jnp.stack(r0w)   # (N_LAYER, D, D)
    p["r0b"] = jnp.stack(r0b)   # (N_LAYER, 1, D)
    p["r1w"] = jnp.stack(r1w)
    p["r1b"] = jnp.stack(r1b)
    return p


# ----------------------------- pure-JAX reference ----------------------------

def reference_forward(query, key_arr, params):
    B, L, D = query.shape
    row_keep = jnp.logical_and(query[:, :, 0] != 0.0, key_arr[:, :, 0] != 0.0)
    mask = jnp.broadcast_to(row_keep[:, :, None], (B, L, L))

    def ln(x):
        mu = jnp.mean(x, -1, keepdims=True)
        var = jnp.mean((x - mu) ** 2, -1, keepdims=True)
        return (x - mu) / jnp.sqrt(var + LN_EPS)

    s_ln = ln(key_arr)
    out = query
    for i in range(N_LAYER):
        x_ln = ln(out)
        q = x_ln @ params["qw"] + params["qb"]
        k = s_ln @ params["kw"] + params["kb"]
        v = s_ln @ params["vw"] + params["vb"]
        q = q.reshape(B, L, N_HEADS, D_EMBED).transpose(0, 2, 1, 3)
        k = k.reshape(B, L, N_HEADS, D_EMBED).transpose(0, 2, 1, 3)
        v = v.reshape(B, L, N_HEADS, D_EMBED).transpose(0, 2, 1, 3)
        sc = jnp.einsum("bhqd,bhkd->bhqk", q, k) / (D_EMBED ** 0.5)
        m4 = mask[:, None, :, :]
        sc = jnp.where(m4, sc, NEG_INF)
        pr = jax.nn.softmax(sc, axis=-1)
        pr = jnp.where(m4, pr, 0.0)
        o = jnp.einsum("bhqk,bhkd->bhqd", pr, v)
        o = o.transpose(0, 2, 1, 3).reshape(B, L, D_MODEL)
        attn = o @ params["ow"] + params["ob"]

        r0w, r0b = params["r0w"][i], params["r0b"][i]
        r1w, r1b = params["r1w"][i], params["r1b"][i]
        a = ln(attn)
        a = a @ r0w + r0b + a
        t = ln(a)
        t = jnp.maximum(t @ params["f1w"] + params["f1b"], 0.0)
        a = t @ params["f2w"] + params["f2b"]
        a = ln(a)
        a = a @ r1w + r1b + a
        out = a
    return out


if __name__ == "__main__":
    B, L = 2, 8  # small seq; D is fixed to 64 by the module definition

    root = jax.random.PRNGKey(0)
    k_params, k_q, k_k = jax.random.split(root, 3)
    params = init_params(k_params)

    query = jax.random.normal(k_q, (B, L, D_EMBED), dtype=jnp.float32)
    key_arr = jax.random.normal(k_k, (B, L, D_EMBED), dtype=jnp.float32)
    # zero out one sequence position to exercise the pad mask
    query = query.at[1, L - 1, :].set(0.0)
    key_arr = key_arr.at[1, L - 1, :].set(0.0)

    fwd = jax.jit(lambda q, k: cross_modal_transformer(q, k, params, bMask=True))
    out = jax.block_until_ready(fwd(query, key_arr))

    ref = reference_forward(query, key_arr, params)
    assert out.shape == (B, L, D_EMBED)
    assert jnp.allclose(out, ref, atol=2e-3, rtol=2e-3), (
        float(jnp.max(jnp.abs(out - ref))))

    print("KERNEL_OK")
</pallas_src>

<mosaic_0001>
module attributes {stable_mosaic.version = 11 : i64} {
  func.func @transformer_kernel(%arg0: i32, %arg1: memref<1x8x64xf32, #tpu.memory_space<vmem>>, %arg2: memref<1x8x64xf32, #tpu.memory_space<vmem>>, %arg3: memref<1x8x1xf32, #tpu.memory_space<vmem>>, %arg4: memref<64x512xf32, #tpu.memory_space<vmem>>, %arg5: memref<1x512xf32, #tpu.memory_space<vmem>>, %arg6: memref<64x1024xf32, #tpu.memory_space<vmem>>, %arg7: memref<1x1024xf32, #tpu.memory_space<vmem>>, %arg8: memref<512x64xf32, #tpu.memory_space<vmem>>, %arg9: memref<1x64xf32, #tpu.memory_space<vmem>>, %arg10: memref<64x64xf32, #tpu.memory_space<vmem>>, %arg11: memref<1x64xf32, #tpu.memory_space<vmem>>, %arg12: memref<64x64xf32, #tpu.memory_space<vmem>>, %arg13: memref<1x64xf32, #tpu.memory_space<vmem>>, %arg14: memref<5x64x64xf32, #tpu.memory_space<vmem>>, %arg15: memref<5x1x64xf32, #tpu.memory_space<vmem>>, %arg16: memref<5x64x64xf32, #tpu.memory_space<vmem>>, %arg17: memref<5x1x64xf32, #tpu.memory_space<vmem>>, %arg18: memref<1x8x64xf32, #tpu.memory_space<vmem>>) attributes {dimension_semantics = [#tpu.dimension_semantics<parallel>], iteration_bounds = array<i64: 2>, scalar_prefetch = 0 : i64, scratch_operands = 0 : i64, tpu.core_type = #tpu.core_type<tc>, window_params = [{transform_indices = @transform_0, window_bounds = array<i64: 1, 8, 64>}, {transform_indices = @transform_1, window_bounds = array<i64: 1, 8, 64>}, {transform_indices = @transform_2, window_bounds = array<i64: 1, 8, 1>}, {pipeline_mode = #tpu.pipeline_mode<synchronous>, transform_indices = @transform_3, window_bounds = array<i64: 64, 512>}, {pipeline_mode = #tpu.pipeline_mode<synchronous>, transform_indices = @transform_4, window_bounds = array<i64: 1, 512>}, {pipeline_mode = #tpu.pipeline_mode<synchronous>, transform_indices = @transform_5, window_bounds = array<i64: 64, 1024>}, {pipeline_mode = #tpu.pipeline_mode<synchronous>, transform_indices = @transform_6, window_bounds = array<i64: 1, 1024>}, {pipeline_mode = #tpu.pipeline_mode<synchronous>, transform_indices = @transform_7, window_bounds = array<i64: 512, 64>}, {pipeline_mode = #tpu.pipeline_mode<synchronous>, transform_indices = @transform_8, window_bounds = array<i64: 1, 64>}, {pipeline_mode = #tpu.pipeline_mode<synchronous>, transform_indices = @transform_9, window_bounds = array<i64: 64, 64>}, {pipeline_mode = #tpu.pipeline_mode<synchronous>, transform_indices = @transform_10, window_bounds = array<i64: 1, 64>}, {pipeline_mode = #tpu.pipeline_mode<synchronous>, transform_indices = @transform_11, window_bounds = array<i64: 64, 64>}, {pipeline_mode = #tpu.pipeline_mode<synchronous>, transform_indices = @transform_12, window_bounds = array<i64: 1, 64>}, {pipeline_mode = #tpu.pipeline_mode<synchronous>, transform_indices = @transform_13, window_bounds = array<i64: 5, 64, 64>}, {pipeline_mode = #tpu.pipeline_mode<synchronous>, transform_indices = @transform_14, window_bounds = array<i64: 5, 1, 64>}, {pipeline_mode = #tpu.pipeline_mode<synchronous>, transform_indices = @transform_15, window_bounds = array<i64: 5, 64, 64>}, {pipeline_mode = #tpu.pipeline_mode<synchronous>, transform_indices = @transform_16, window_bounds = array<i64: 5, 1, 64>}, {transform_indices = @transform_17, window_bounds = array<i64: 1, 8, 64>}]} {
    %c0 = arith.constant 0 : index
    %c0_0 = arith.constant 0 : index
    %c0_1 = arith.constant 0 : index
    %0 = vector.load %arg1[%c0, %c0_0, %c0_1] : memref<1x8x64xf32, #tpu.memory_space<vmem>>, vector<1x8x64xf32>
    %1 = vector.shape_cast %0 : vector<1x8x64xf32> to vector<8x64xf32>
    %c0_2 = arith.constant 0 : index
    %c0_3 = arith.constant 0 : index
    %c0_4 = arith.constant 0 : index
    %2 = vector.load %arg2[%c0_2, %c0_3, %c0_4] : memref<1x8x64xf32, #tpu.memory_space<vmem>>, vector<1x8x64xf32>
    %3 = vector.shape_cast %2 : vector<1x8x64xf32> to vector<8x64xf32>
    %c0_5 = arith.constant 0 : index
    %c0_6 = arith.constant 0 : index
    %c0_7 = arith.constant 0 : index
    %4 = vector.load %arg3[%c0_5, %c0_6, %c0_7] : memref<1x8x1xf32, #tpu.memory_space<vmem>>, vector<1x8x1xf32>
    %5 = vector.shape_cast %4 : vector<1x8x1xf32> to vector<8x1xf32>
    %cst = arith.constant dense<0.000000e+00> : vector<8xf32>
    %6 = vector.multi_reduction <add>, %3, %cst [1] : vector<8x64xf32> to vector<8xf32>
    %7 = vector.shape_cast %6 : vector<8xf32> to vector<8x1xf32>
    %cst_8 = arith.constant 6.400000e+01 : f32
    %8 = vector.broadcast %cst_8 : f32 to vector<8x1xf32>
    %9 = arith.divf %7, %8 : vector<8x1xf32>
    %10 = vector.broadcast %9 : vector<8x1xf32> to vector<8x64xf32>
    %11 = arith.subf %3, %10 : vector<8x64xf32>
    %12 = arith.mulf %11, %11 : vector<8x64xf32>
    %cst_9 = arith.constant dense<0.000000e+00> : vector<8xf32>
    %13 = vector.multi_reduction <add>, %12, %cst_9 [1] : vector<8x64xf32> to vector<8xf32>
    %14 = vector.shape_cast %13 : vector<8xf32> to vector<8x1xf32>
    %cst_10 = arith.constant 6.400000e+01 : f32
    %15 = vector.broadcast %cst_10 : f32 to vector<8x1xf32>
    %16 = arith.divf %14, %15 : vector<8x1xf32>
    %17 = vector.broadcast %9 : vector<8x1xf32> to vector<8x64xf32>
    %18 = arith.subf %3, %17 : vector<8x64xf32>
    %cst_11 = arith.constant 9.99999974E-6 : f32
    %19 = vector.broadcast %cst_11 : f32 to vector<8x1xf32>
    %20 = arith.addf %16, %19 : vector<8x1xf32>
    %21 = math.rsqrt %20 : vector<8x1xf32>
    %22 = vector.broadcast %21 : vector<8x1xf32> to vector<8x64xf32>
    %23 = arith.mulf %18, %22 : vector<8x64xf32>
    %c0_12 = arith.constant 0 : index
    %c0_13 = arith.constant 0 : index
    %24 = vector.load %arg6[%c0_12, %c0_13] : memref<64x1024xf32, #tpu.memory_space<vmem>>, vector<64x1024xf32>
    %cst_14 = arith.constant dense<0.000000e+00> : vector<8x1024xf32>
    %25 = tpu.matmul %23, %24, %cst_14 {dimension_numbers = #tpu.dot_dimension_numbers<[1], [0], [0], [1], [0, 0, 1, 1], [], []>} : vector<8x64xf32>, vector<64x1024xf32>, vector<8x1024xf32> -> vector<8x1024xf32>
    %c0_15 = arith.constant 0 : index
    %c0_16 = arith.constant 0 : index
    %26 = vector.load %arg7[%c0_15, %c0_16] : memref<1x1024xf32, #tpu.memory_space<vmem>>, vector<1x1024xf32>
    %27 = vector.broadcast %26 : vector<1x1024xf32> to vector<8x1024xf32>
    %28 = arith.addf %25, %27 : vector<8x1024xf32>
    %29 = vector.extract_strided_slice %28 {offsets = [0, 0], sizes = [8, 64], strides = [1, 1]} : vector<8x1024xf32> to vector<8x64xf32>
    %30 = vector.extract_strided_slice %28 {offsets = [0, 64], sizes = [8, 64], strides = [1, 1]} : vector<8x1024xf32> to vector<8x64xf32>
    %31 = vector.extract_strided_slice %28 {offsets = [0, 128], sizes = [8, 64], strides = [1, 1]} : vector<8x1024xf32> to vector<8x64xf32>
    %32 = vector.extract_strided_slice %28 {offsets = [0, 192], sizes = [8, 64], strides = [1, 1]} : vector<8x1024xf32> to vector<8x64xf32>
    %33 = vector.extract_strided_slice %28 {offsets = [0, 256], sizes = [8, 64], strides = [1, 1]} : vector<8x1024xf32> to vector<8x64xf32>
    %34 = vector.extract_strided_slice %28 {offsets = [0, 320], sizes = [8, 64], strides = [1, 1]} : vector<8x1024xf32> to vector<8x64xf32>
    %35 = vector.extract_strided_slice %28 {offsets = [0, 384], sizes = [8, 64], strides = [1, 1]} : vector<8x1024xf32> to vector<8x64xf32>
    %36 = vector.extract_strided_slice %28 {offsets = [0, 448], sizes = [8, 64], strides = [1, 1]} : vector<8x1024xf32> to vector<8x64xf32>
    %37 = vector.shape_cast %29 : vector<8x64xf32> to vector<1x8x64xf32>
    %38 = vector.shape_cast %30 : vector<8x64xf32> to vector<1x8x64xf32>
    %39 = vector.shape_cast %31 : vector<8x64xf32> to vector<1x8x64xf32>
    %40 = vector.shape_cast %32 : vector<8x64xf32> to vector<1x8x64xf32>
    %41 = vector.shape_cast %33 : vector<8x64xf32> to vector<1x8x64xf32>
    %42 = vector.shape_cast %34 : vector<8x64xf32> to vector<1x8x64xf32>
    %43 = vector.shape_cast %35 : vector<8x64xf32> to vector<1x8x64xf32>
    %44 = vector.shape_cast %36 : vector<8x64xf32> to vector<1x8x64xf32>
    %45 = tpu.concatenate %37, %38, %39, %40, %41, %42, %43, %44 in 0 : vector<1x8x64xf32>, vector<1x8x64xf32>, vector<1x8x64xf32>, vector<1x8x64xf32>, vector<1x8x64xf32>, vector<1x8x64xf32>, vector<1x8x64xf32>, vector<1x8x64xf32> -> vector<8x8x64xf32>
    %46 = vector.extract_strided_slice %28 {offsets = [0, 512], sizes = [8, 64], strides = [1, 1]} : vector<8x1024xf32> to vector<8x64xf32>
    %47 = vector.extract_strided_slice %28 {offsets = [0, 576], sizes = [8, 64], strides = [1, 1]} : vector<8x1024xf32> to vector<8x64xf32>
    %48 = vector.extract_strided_slice %28 {offsets = [0, 640], sizes = [8, 64], strides = [1, 1]} : vector<8x1024xf32> to vector<8x64xf32>
    %49 = vector.extract_strided_slice %28 {offsets = [0, 704], sizes = [8, 64], strides = [1, 1]} : vector<8x1024xf32> to vector<8x64xf32>
    %50 = vector.extract_strided_slice %28 {offsets = [0, 768], sizes = [8, 64], strides = [1, 1]} : vector<8x1024xf32> to vector<8x64xf32>
    %51 = vector.extract_strided_slice %28 {offsets = [0, 832], sizes = [8, 64], strides = [1, 1]} : vector<8x1024xf32> to vector<8x64xf32>
    %52 = vector.extract_strided_slice %28 {offsets = [0, 896], sizes = [8, 64], strides = [1, 1]} : vector<8x1024xf32> to vector<8x64xf32>
    %53 = vector.extract_strided_slice %28 {offsets = [0, 960], sizes = [8, 64], strides = [1, 1]} : vector<8x1024xf32> to vector<8x64xf32>
    %54 = vector.shape_cast %46 : vector<8x64xf32> to vector<1x8x64xf32>
    %55 = vector.shape_cast %47 : vector<8x64xf32> to vector<1x8x64xf32>
    %56 = vector.shape_cast %48 : vector<8x64xf32> to vector<1x8x64xf32>
    %57 = vector.shape_cast %49 : vector<8x64xf32> to vector<1x8x64xf32>
    %58 = vector.shape_cast %50 : vector<8x64xf32> to vector<1x8x64xf32>
    %59 = vector.shape_cast %51 : vector<8x64xf32> to vector<1x8x64xf32>
    %60 = vector.shape_cast %52 : vector<8x64xf32> to vector<1x8x64xf32>
    %61 = vector.shape_cast %53 : vector<8x64xf32> to vector<1x8x64xf32>
    %62 = tpu.concatenate %54, %55, %56, %57, %58, %59, %60, %61 in 0 : vector<1x8x64xf32>, vector<1x8x64xf32>, vector<1x8x64xf32>, vector<1x8x64xf32>, vector<1x8x64xf32>, vector<1x8x64xf32>, vector<1x8x64xf32>, vector<1x8x64xf32> -> vector<8x8x64xf32>
    %c0_i32 = arith.constant 0 : i32
    %cst_17 = arith.constant dense<0.000000e+00> : vector<8xf32>
    %63 = vector.multi_reduction <add>, %1, %cst_17 [1] : vector<8x64xf32> to vector<8xf32>
    %64 = vector.shape_cast %63 : vector<8xf32> to vector<8x1xf32>
    %cst_18 = arith.constant 6.400000e+01 : f32
    %65 = vector.broadcast %cst_18 : f32 to vector<8x1xf32>
    %66 = arith.divf %64, %65 : vector<8x1xf32>
    %67 = vector.broadcast %66 : vector<8x1xf32> to vector<8x64xf32>
    %68 = arith.subf %1, %67 : vector<8x64xf32>
    %69 = arith.mulf %68, %68 : vector<8x64xf32>
    %cst_19 = arith.constant dense<0.000000e+00> : vector<8xf32>
    %70 = vector.multi_reduction <add>, %69, %cst_19 [1] : vector<8x64xf32> to vector<8xf32>
    %71 = vector.shape_cast %70 : vector<8xf32> to vector<8x1xf32>
    %cst_20 = arith.constant 6.400000e+01 : f32
    %72 = vector.broadcast %cst_20 : f32 to vector<8x1xf32>
    %73 = arith.divf %71, %72 : vector<8x1xf32>
    %74 = vector.broadcast %66 : vector<8x1xf32> to vector<8x64xf32>
    %75 = arith.subf %1, %74 : vector<8x64xf32>
    %cst_21 = arith.constant 9.99999974E-6 : f32
    %76 = vector.broadcast %cst_21 : f32 to vector<8x1xf32>
    %77 = arith.addf %73, %76 : vector<8x1xf32>
    %78 = math.rsqrt %77 : vector<8x1xf32>
    %79 = vector.broadcast %78 : vector<8x1xf32> to vector<8x64xf32>
    %80 = arith.mulf %75, %79 : vector<8x64xf32>
    %c0_22 = arith.constant 0 : index
    %c0_23 = arith.constant 0 : index
    %81 = vector.load %arg4[%c0_22, %c0_23] : memref<64x512xf32, #tpu.memory_space<vmem>>, vector<64x512xf32>
    %cst_24 = arith.constant dense<0.000000e+00> : vector<8x512xf32>
    %82 = tpu.matmul %80, %81, %cst_24 {dimension_numbers = #tpu.dot_dimension_numbers<[1], [0], [0], [1], [0, 0, 1, 1], [], []>} : vector<8x64xf32>, vector<64x512xf32>, vector<8x512xf32> -> vector<8x512xf32>
    %c0_25 = arith.constant 0 : index
    %c0_26 = arith.constant 0 : index
    %83 = vector.load %arg5[%c0_25, %c0_26] : memref<1x512xf32, #tpu.memory_space<vmem>>, vector<1x512xf32>
    %84 = vector.broadcast %83 : vector<1x512xf32> to vector<8x512xf32>
    %85 = arith.addf %82, %84 : vector<8x512xf32>
    %cst_27 = arith.constant 1.250000e-01 : f32
    %86 = vector.broadcast %cst_27 : f32 to vector<8x512xf32>
    %87 = arith.mulf %85, %86 : vector<8x512xf32>
    %88 = vector.extract_strided_slice %87 {offsets = [0, 0], sizes = [8, 64], strides = [1, 1]} : vector<8x512xf32> to vector<8x64xf32>
    %89 = vector.extract_strided_slice %87 {offsets = [0, 64], sizes = [8, 64], strides = [1, 1]} : vector<8x512xf32> to vector<8x64xf32>
    %90 = vector.extract_strided_slice %87 {offsets = [0, 128], sizes = [8, 64], strides = [1, 1]} : vector<8x512xf32> to vector<8x64xf32>
    %91 = vector.extract_strided_slice %87 {offsets = [0, 192], sizes = [8, 64], strides = [1, 1]} : vector<8x512xf32> to vector<8x64xf32>
    %92 = vector.extract_strided_slice %87 {offsets = [0, 256], sizes = [8, 64], strides = [1, 1]} : vector<8x512xf32> to vector<8x64xf32>
    %93 = vector.extract_strided_slice %87 {offsets = [0, 320], sizes = [8, 64], strides = [1, 1]} : vector<8x512xf32> to vector<8x64xf32>
    %94 = vector.extract_strided_slice %87 {offsets = [0, 384], sizes = [8, 64], strides = [1, 1]} : vector<8x512xf32> to vector<8x64xf32>
    %95 = vector.extract_strided_slice %87 {offsets = [0, 448], sizes = [8, 64], strides = [1, 1]} : vector<8x512xf32> to vector<8x64xf32>
    %96 = vector.shape_cast %88 : vector<8x64xf32> to vector<1x8x64xf32>
    %97 = vector.shape_cast %89 : vector<8x64xf32> to vector<1x8x64xf32>
    %98 = vector.shape_cast %90 : vector<8x64xf32> to vector<1x8x64xf32>
    %99 = vector.shape_cast %91 : vector<8x64xf32> to vector<1x8x64xf32>
    %100 = vector.shape_cast %92 : vector<8x64xf32> to vector<1x8x64xf32>
    %101 = vector.shape_cast %93 : vector<8x64xf32> to vector<1x8x64xf32>
    %102 = vector.shape_cast %94 : vector<8x64xf32> to vector<1x8x64xf32>
    %103 = vector.shape_cast %95 : vector<8x64xf32> to vector<1x8x64xf32>
    %104 = tpu.concatenate %96, %97, %98, %99, %100, %101, %102, %103 in 0 : vector<1x8x64xf32>, vector<1x8x64xf32>, vector<1x8x64xf32>, vector<1x8x64xf32>, vector<1x8x64xf32>, vector<1x8x64xf32>, vector<1x8x64xf32>, vector<1x8x64xf32> -> vector<8x8x64xf32>
    "tpu.trace_start"() <{level = 10 : i32, message = "hqd,hkd->hqk"}> : () -> ()
    %cst_28 = arith.constant dense<0.000000e+00> : vector<8x8x8xf32>
    %105 = tpu.matmul %104, %45, %cst_28 {dimension_numbers = #tpu.dot_dimension_numbers<[2], [2], [1], [1], [0, 0, 0, 1, 1, 1], [0], [0]>} : vector<8x8x64xf32>, vector<8x8x64xf32>, vector<8x8x8xf32> -> vector<8x8x8xf32>
    "tpu.trace_stop"() : () -> ()
    %cst_29 = arith.constant dense<0xFF800000> : vector<8x8xf32>
    %106 = vector.multi_reduction <maximumf>, %105, %cst_29 [2] : vector<8x8x8xf32> to vector<8x8xf32>
    %107 = vector.shape_cast %106 : vector<8x8xf32> to vector<8x8x1xf32>
    %108 = vector.broadcast %107 : vector<8x8x1xf32> to vector<8x8x8xf32>
    %109 = arith.subf %105, %108 : vector<8x8x8xf32>
    %110 = math.exp %109 : vector<8x8x8xf32>
    %cst_30 = arith.constant dense<0.000000e+00> : vector<8x8xf32>
    %111 = vector.multi_reduction <add>, %110, %cst_30 [2] : vector<8x8x8xf32> to vector<8x8xf32>
    %112 = vector.shape_cast %111 : vector<8x8xf32> to vector<8x8x1xf32>
    %113 = vector.broadcast %112 : vector<8x8x1xf32> to vector<8x8x8xf32>
    %114 = arith.divf %110, %113 : vector<8x8x8xf32>
    "tpu.trace_start"() <{level = 10 : i32, message = "hqk,hkd->hqd"}> : () -> ()
    %cst_31 = arith.constant dense<0.000000e+00> : vector<8x8x64xf32>
    %115 = tpu.matmul %114, %62, %cst_31 {dimension_numbers = #tpu.dot_dimension_numbers<[2], [1], [1], [2], [0, 0, 0, 1, 1, 2], [0], [0]>} : vector<8x8x8xf32>, vector<8x8x64xf32>, vector<8x8x64xf32> -> vector<8x8x64xf32>
    "tpu.trace_stop"() : () -> ()
    %116 = vector.extract_strided_slice %115 {offsets = [0, 0, 0], sizes = [1, 8, 64], strides = [1, 1, 1]} : vector<8x8x64xf32> to vector<1x8x64xf32>
    %117 = vector.shape_cast %116 : vector<1x8x64xf32> to vector<8x64xf32>
    %118 = vector.extract_strided_slice %115 {offsets = [1, 0, 0], sizes = [1, 8, 64], strides = [1, 1, 1]} : vector<8x8x64xf32> to vector<1x8x64xf32>
    %119 = vector.shape_cast %118 : vector<1x8x64xf32> to vector<8x64xf32>
    %120 = vector.extract_strided_slice %115 {offsets = [2, 0, 0], sizes = [1, 8, 64], strides = [1, 1, 1]} : vector<8x8x64xf32> to vector<1x8x64xf32>
    %121 = vector.shape_cast %120 : vector<1x8x64xf32> to vector<8x64xf32>
    %122 = vector.extract_strided_slice %115 {offsets = [3, 0, 0], sizes = [1, 8, 64], strides = [1, 1, 1]} : vector<8x8x64xf32> to vector<1x8x64xf32>
    %123 = vector.shape_cast %122 : vector<1x8x64xf32> to vector<8x64xf32>
    %124 = vector.extract_strided_slice %115 {offsets = [4, 0, 0], sizes = [1, 8, 64], strides = [1, 1, 1]} : vector<8x8x64xf32> to vector<1x8x64xf32>
    %125 = vector.shape_cast %124 : vector<1x8x64xf32> to vector<8x64xf32>
    %126 = vector.extract_strided_slice %115 {offsets = [5, 0, 0], sizes = [1, 8, 64], strides = [1, 1, 1]} : vector<8x8x64xf32> to vector<1x8x64xf32>
    %127 = vector.shape_cast %126 : vector<1x8x64xf32> to vector<8x64xf32>
    %128 = vector.extract_strided_slice %115 {offsets = [6, 0, 0], sizes = [1, 8, 64], strides = [1, 1, 1]} : vector<8x8x64xf32> to vector<1x8x64xf32>
    %129 = vector.shape_cast %128 : vector<1x8x64xf32> to vector<8x64xf32>
    %130 = vector.extract_strided_slice %115 {offsets = [7, 0, 0], sizes = [1, 8, 64], strides = [1, 1, 1]} : vector<8x8x64xf32> to vector<1x8x64xf32>
    %131 = vector.shape_cast %130 : vector<1x8x64xf32> to vector<8x64xf32>
    %132 = tpu.concatenate %117, %119, %121, %123, %125, %127, %129, %131 in 1 : vector<8x64xf32>, vector<8x64xf32>, vector<8x64xf32>, vector<8x64xf32>, vector<8x64xf32>, vector<8x64xf32>, vector<8x64xf32>, vector<8x64xf32> -> vector<8x512xf32>
    %133 = vector.broadcast %5 : vector<8x1xf32> to vector<8x512xf32>
    %134 = arith.mulf %132, %133 : vector<8x512xf32>
    %c0_32 = arith.constant 0 : index
    %c0_33 = arith.constant 0 : index
    %135 = vector.load %arg8[%c0_32, %c0_33] : memref<512x64xf32, #tpu.memory_space<vmem>>, vector<512x64xf32>
    %cst_34 = arith.constant dense<0.000000e+00> : vector<8x64xf32>
    %136 = tpu.matmul %134, %135, %cst_34 {dimension_numbers = #tpu.dot_dimension_numbers<[1], [0], [0], [1], [0, 0, 1, 1], [], []>} : vector<8x512xf32>, vector<512x64xf32>, vector<8x64xf32> -> vector<8x64xf32>
    %c0_35 = arith.constant 0 : index
    %c0_36 = arith.constant 0 : index
    %137 = vector.load %arg9[%c0_35, %c0_36] : memref<1x64xf32, #tpu.memory_space<vmem>>, vector<1x64xf32>
    %138 = vector.broadcast %137 : vector<1x64xf32> to vector<8x64xf32>
    %139 = arith.addf %136, %138 : vector<8x64xf32>
    %cst_37 = arith.constant dense<0.000000e+00> : vector<8xf32>
    %140 = vector.multi_reduction <add>, %139, %cst_37 [1] : vector<8x64xf32> to vector<8xf32>
    %141 = vector.shape_cast %140 : vector<8xf32> to vector<8x1xf32>
    %cst_38 = arith.constant 6.400000e+01 : f32
    %142 = vector.broadcast %cst_38 : f32 to vector<8x1xf32>
    %143 = arith.divf %141, %142 : vector<8x1xf32>
    %144 = vector.broadcast %143 : vector<8x1xf32> to vector<8x64xf32>
    %145 = arith.subf %139, %144 : vector<8x64xf32>
    %146 = arith.mulf %145, %145 : vector<8x64xf32>
    %cst_39 = arith.constant dense<0.000000e+00> : vector<8xf32>
    %147 = vector.multi_reduction <add>, %146, %cst_39 [1] : vector<8x64xf32> to vector<8xf32>
    %148 = vector.shape_cast %147 : vector<8xf32> to vector<8x1xf32>
    %cst_40 = arith.constant 6.400000e+01 : f32
    %149 = vector.broadcast %cst_40 : f32 to vector<8x1xf32>
    %150 = arith.divf %148, %149 : vector<8x1xf32>
    %151 = vector.broadcast %143 : vector<8x1xf32> to vector<8x64xf32>
    %152 = arith.subf %139, %151 : vector<8x64xf32>
    %cst_41 = arith.constant 9.99999974E-6 : f32
    %153 = vector.broadcast %cst_41 : f32 to vector<8x1xf32>
    %154 = arith.addf %150, %153 : vector<8x1xf32>
    %155 = math.rsqrt %154 : vector<8x1xf32>
    %156 = vector.broadcast %155 : vector<8x1xf32> to vector<8x64xf32>
    %157 = arith.mulf %152, %156 : vector<8x64xf32>
    %158 = arith.index_cast %c0_i32 : i32 to index
    %c0_42 = arith.constant 0 : index
    %c0_43 = arith.constant 0 : index
    %159 = vector.load %arg14[%158, %c0_42, %c0_43] : memref<5x64x64xf32, #tpu.memory_space<vmem>>, vector<1x64x64xf32>
    %160 = vector.shape_cast %159 : vector<1x64x64xf32> to vector<64x64xf32>
    %cst_44 = arith.constant dense<0.000000e+00> : vector<8x64xf32>
    %161 = tpu.matmul %157, %160, %cst_44 {dimension_numbers = #tpu.dot_dimension_numbers<[1], [0], [0], [1], [0, 0, 1, 1], [], []>} : vector<8x64xf32>, vector<64x64xf32>, vector<8x64xf32> -> vector<8x64xf32>
    %162 = arith.index_cast %c0_i32 : i32 to index
    %c0_45 = arith.constant 0 : index
    %c0_46 = arith.constant 0 : index
    %163 = vector.load %arg15[%162, %c0_45, %c0_46] : memref<5x1x64xf32, #tpu.memory_space<vmem>>, vector<1x1x64xf32>
    %164 = vector.shape_cast %163 : vector<1x1x64xf32> to vector<1x64xf32>
    %165 = vector.broadcast %164 : vector<1x64xf32> to vector<8x64xf32>
    %166 = arith.addf %161, %165 : vector<8x64xf32>
    %167 = arith.addf %166, %157 : vector<8x64xf32>
    %cst_47 = arith.constant dense<0.000000e+00> : vector<8xf32>
    %168 = vector.multi_reduction <add>, %167, %cst_47 [1] : vector<8x64xf32> to vector<8xf32>
    %169 = vector.shape_cast %168 : vector<8xf32> to vector<8x1xf32>
    %cst_48 = arith.constant 6.400000e+01 : f32
    %170 = vector.broadcast %cst_48 : f32 to vector<8x1xf32>
    %171 = arith.divf %169, %170 : vector<8x1xf32>
    %172 = vector.broadcast %171 : vector<8x1xf32> to vector<8x64xf32>
    %173 = arith.subf %167, %172 : vector<8x64xf32>
    %174 = arith.mulf %173, %173 : vector<8x64xf32>
    %cst_49 = arith.constant dense<0.000000e+00> : vector<8xf32>
    %175 = vector.multi_reduction <add>, %174, %cst_49 [1] : vector<8x64xf32> to vector<8xf32>
    %176 = vector.shape_cast %175 : vector<8xf32> to vector<8x1xf32>
    %cst_50 = arith.constant 6.400000e+01 : f32
    %177 = vector.broadcast %cst_50 : f32 to vector<8x1xf32>
    %178 = arith.divf %176, %177 : vector<8x1xf32>
    %179 = vector.broadcast %171 : vector<8x1xf32> to vector<8x64xf32>
    %180 = arith.subf %167, %179 : vector<8x64xf32>
    %cst_51 = arith.constant 9.99999974E-6 : f32
    %181 = vector.broadcast %cst_51 : f32 to vector<8x1xf32>
    %182 = arith.addf %178, %181 : vector<8x1xf32>
    %183 = math.rsqrt %182 : vector<8x1xf32>
    %184 = vector.broadcast %183 : vector<8x1xf32> to vector<8x64xf32>
    %185 = arith.mulf %180, %184 : vector<8x64xf32>
    %c0_52 = arith.constant 0 : index
    %c0_53 = arith.constant 0 : index
    %186 = vector.load %arg10[%c0_52, %c0_53] : memref<64x64xf32, #tpu.memory_space<vmem>>, vector<64x64xf32>
    %cst_54 = arith.constant dense<0.000000e+00> : vector<8x64xf32>
    %187 = tpu.matmul %185, %186, %cst_54 {dimension_numbers = #tpu.dot_dimension_numbers<[1], [0], [0], [1], [0, 0, 1, 1], [], []>} : vector<8x64xf32>, vector<64x64xf32>, vector<8x64xf32> -> vector<8x64xf32>
    %c0_55 = arith.constant 0 : index
    %c0_56 = arith.constant 0 : index
    %188 = vector.load %arg11[%c0_55, %c0_56] : memref<1x64xf32, #tpu.memory_space<vmem>>, vector<1x64xf32>
    %189 = vector.broadcast %188 : vector<1x64xf32> to vector<8x64xf32>
    %190 = arith.addf %187, %189 : vector<8x64xf32>
    %cst_57 = arith.constant 0.000000e+00 : f32
    %191 = vector.broadcast %cst_57 : f32 to vector<8x64xf32>
    %192 = arith.maximumf %190, %191 : vector<8x64xf32>
    %c0_58 = arith.constant 0 : index
    %c0_59 = arith.constant 0 : index
    %193 = vector.load %arg12[%c0_58, %c0_59] : memref<64x64xf32, #tpu.memory_space<vmem>>, vector<64x64xf32>
    %cst_60 = arith.constant dense<0.000000e+00> : vector<8x64xf32>
    %194 = tpu.matmul %192, %193, %cst_60 {dimension_numbers = #tpu.dot_dimension_numbers<[1], [0], [0], [1], [0, 0, 1, 1], [], []>} : vector<8x64xf32>, vector<64x64xf32>, vector<8x64xf32> -> vector<8x64xf32>
    %c0_61 = arith.constant 0 : index
    %c0_62 = arith.constant 0 : index
    %195 = vector.load %arg13[%c0_61, %c0_62] : memref<1x64xf32, #tpu.memory_space<vmem>>, vector<1x64xf32>
    %196 = vector.broadcast %195 : vector<1x64xf32> to vector<8x64xf32>
    %197 = arith.addf %194, %196 : vector<8x64xf32>
    %cst_63 = arith.constant dense<0.000000e+00> : vector<8xf32>
    %198 = vector.multi_reduction <add>, %197, %cst_63 [1] : vector<8x64xf32> to vector<8xf32>
    %199 = vector.shape_cast %198 : vector<8xf32> to vector<8x1xf32>
    %cst_64 = arith.constant 6.400000e+01 : f32
    %200 = vector.broadcast %cst_64 : f32 to vector<8x1xf32>
    %201 = arith.divf %199, %200 : vector<8x1xf32>
    %202 = vector.broadcast %201 : vector<8x1xf32> to vector<8x64xf32>
    %203 = arith.subf %197, %202 : vector<8x64xf32>
    %204 = arith.mulf %203, %203 : vector<8x64xf32>
    %cst_65 = arith.constant dense<0.000000e+00> : vector<8xf32>
    %205 = vector.multi_reduction <add>, %204, %cst_65 [1] : vector<8x64xf32> to vector<8xf32>
    %206 = vector.shape_cast %205 : vector<8xf32> to vector<8x1xf32>
    %cst_66 = arith.constant 6.400000e+01 : f32
    %207 = vector.broadcast %cst_66 : f32 to vector<8x1xf32>
    %208 = arith.divf %206, %207 : vector<8x1xf32>
    %209 = vector.broadcast %201 : vector<8x1xf32> to vector<8x64xf32>
    %210 = arith.subf %197, %209 : vector<8x64xf32>
    %cst_67 = arith.constant 9.99999974E-6 : f32
    %211 = vector.broadcast %cst_67 : f32 to vector<8x1xf32>
    %212 = arith.addf %208, %211 : vector<8x1xf32>
    %213 = math.rsqrt %212 : vector<8x1xf32>
    %214 = vector.broadcast %213 : vector<8x1xf32> to vector<8x64xf32>
    %215 = arith.mulf %210, %214 : vector<8x64xf32>
    %216 = arith.index_cast %c0_i32 : i32 to index
    %c0_68 = arith.constant 0 : index
    %c0_69 = arith.constant 0 : index
    %217 = vector.load %arg16[%216, %c0_68, %c0_69] : memref<5x64x64xf32, #tpu.memory_space<vmem>>, vector<1x64x64xf32>
    %218 = vector.shape_cast %217 : vector<1x64x64xf32> to vector<64x64xf32>
    %cst_70 = arith.constant dense<0.000000e+00> : vector<8x64xf32>
    %219 = tpu.matmul %215, %218, %cst_70 {dimension_numbers = #tpu.dot_dimension_numbers<[1], [0], [0], [1], [0, 0, 1, 1], [], []>} : vector<8x64xf32>, vector<64x64xf32>, vector<8x64xf32> -> vector<8x64xf32>
    %220 = arith.index_cast %c0_i32 : i32 to index
    %c0_71 = arith.constant 0 : index
    %c0_72 = arith.constant 0 : index
    %221 = vector.load %arg17[%220, %c0_71, %c0_72] : memref<5x1x64xf32, #tpu.memory_space<vmem>>, vector<1x1x64xf32>
    %222 = vector.shape_cast %221 : vector<1x1x64xf32> to vector<1x64xf32>
    %223 = vector.broadcast %222 : vector<1x64xf32> to vector<8x64xf32>
    %224 = arith.addf %219, %223 : vector<8x64xf32>
    %225 = arith.addf %224, %215 : vector<8x64xf32>
    %c1_i32 = arith.constant 1 : i32
    %cst_73 = arith.constant dense<0.000000e+00> : vector<8xf32>
    %226 = vector.multi_reduction <add>, %225, %cst_73 [1] : vector<8x64xf32> to vector<8xf32>
    %227 = vector.shape_cast %226 : vector<8xf32> to vector<8x1xf32>
    %cst_74 = arith.constant 6.400000e+01 : f32
    %228 = vector.broadcast %cst_74 : f32 to vector<8x1xf32>
    %229 = arith.divf %227, %228 : vector<8x1xf32>
    %230 = vector.broadcast %229 : vector<8x1xf32> to vector<8x64xf32>
    %231 = arith.subf %225, %230 : vector<8x64xf32>
    %232 = arith.mulf %231, %231 : vector<8x64xf32>
    %cst_75 = arith.constant dense<0.000000e+00> : vector<8xf32>
    %233 = vector.multi_reduction <add>, %232, %cst_75 [1] : vector<8x64xf32> to vector<8xf32>
    %234 = vector.shape_cast %233 : vector<8xf32> to vector<8x1xf32>
    %cst_76 = arith.constant 6.400000e+01 : f32
    %235 = vector.broadcast %cst_76 : f32 to vector<8x1xf32>
    %236 = arith.divf %234, %235 : vector<8x1xf32>
    %237 = vector.broadcast %229 : vector<8x1xf32> to vector<8x64xf32>
    %238 = arith.subf %225, %237 : vector<8x64xf32>
    %cst_77 = arith.constant 9.99999974E-6 : f32
    %239 = vector.broadcast %cst_77 : f32 to vector<8x1xf32>
    %240 = arith.addf %236, %239 : vector<8x1xf32>
    %241 = math.rsqrt %240 : vector<8x1xf32>
    %242 = vector.broadcast %241 : vector<8x1xf32> to vector<8x64xf32>
    %243 = arith.mulf %238, %242 : vector<8x64xf32>
    %c0_78 = arith.constant 0 : index
    %c0_79 = arith.constant 0 : index
    %244 = vector.load %arg4[%c0_78, %c0_79] : memref<64x512xf32, #tpu.memory_space<vmem>>, vector<64x512xf32>
    %cst_80 = arith.constant dense<0.000000e+00> : vector<8x512xf32>
    %245 = tpu.matmul %243, %244, %cst_80 {dimension_numbers = #tpu.dot_dimension_numbers<[1], [0], [0], [1], [0, 0, 1, 1], [], []>} : vector<8x64xf32>, vector<64x512xf32>, vector<8x512xf32> -> vector<8x512xf32>
    %c0_81 = arith.constant 0 : index
    %c0_82 = arith.constant 0 : index
    %246 = vector.load %arg5[%c0_81, %c0_82] : memref<1x512xf32, #tpu.memory_space<vmem>>, vector<1x512xf32>
    %247 = vector.broadcast %246 : vector<1x512xf32> to vector<8x512xf32>
    %248 = arith.addf %245, %247 : vector<8x512xf32>
    %cst_83 = arith.constant 1.250000e-01 : f32
    %249 = vector.broadcast %cst_83 : f32 to vector<8x512xf32>
    %250 = arith.mulf %248, %249 : vector<8x512xf32>
    %251 = vector.extract_strided_slice %250 {offsets = [0, 0], sizes = [8, 64], strides = [1, 1]} : vector<8x512xf32> to vector<8x64xf32>
    %252 = vector.extract_strided_slice %250 {offsets = [0, 64], sizes = [8, 64], strides = [1, 1]} : vector<8x512xf32> to vector<8x64xf32>
    %253 = vector.extract_strided_slice %250 {offsets = [0, 128], sizes = [8, 64], strides = [1, 1]} : vector<8x512xf32> to vector<8x64xf32>
    %254 = vector.extract_strided_slice %250 {offsets = [0, 192], sizes = [8, 64], strides = [1, 1]} : vector<8x512xf32> to vector<8x64xf32>
    %255 = vector.extract_strided_slice %250 {offsets = [0, 256], sizes = [8, 64], strides = [1, 1]} : vector<8x512xf32> to vector<8x64xf32>
    %256 = vector.extract_strided_slice %250 {offsets = [0, 320], sizes = [8, 64], strides = [1, 1]} : vector<8x512xf32> to vector<8x64xf32>
    %257 = vector.extract_strided_slice %250 {offsets = [0, 384], sizes = [8, 64], strides = [1, 1]} : vector<8x512xf32> to vector<8x64xf32>
    %258 = vector.extract_strided_slice %250 {offsets = [0, 448], sizes = [8, 64], strides = [1, 1]} : vector<8x512xf32> to vector<8x64xf32>
    %259 = vector.shape_cast %251 : vector<8x64xf32> to vector<1x8x64xf32>
    %260 = vector.shape_cast %252 : vector<8x64xf32> to vector<1x8x64xf32>
    %261 = vector.shape_cast %253 : vector<8x64xf32> to vector<1x8x64xf32>
    %262 = vector.shape_cast %254 : vector<8x64xf32> to vector<1x8x64xf32>
    %263 = vector.shape_cast %255 : vector<8x64xf32> to vector<1x8x64xf32>
    %264 = vector.shape_cast %256 : vector<8x64xf32> to vector<1x8x64xf32>
    %265 = vector.shape_cast %257 : vector<8x64xf32> to vector<1x8x64xf32>
    %266 = vector.shape_cast %258 : vector<8x64xf32> to vector<1x8x64xf32>
    %267 = tpu.concatenate %259, %260, %261, %262, %263, %264, %265, %266 in 0 : vector<1x8x64xf32>, vector<1x8x64xf32>, vector<1x8x64xf32>, vector<1x8x64xf32>, vector<1x8x64xf32>, vector<1x8x64xf32>, vector<1x8x64xf32>, vector<1x8x64xf32> -> vector<8x8x64xf32>
    "tpu.trace_start"() <{level = 10 : i32, message = "hqd,hkd->hqk"}> : () -> ()
    %cst_84 = arith.constant dense<0.000000e+00> : vector<8x8x8xf32>
    %268 = tpu.matmul %267, %45, %cst_84 {dimension_numbers = #tpu.dot_dimension_numbers<[2], [2], [1], [1], [0, 0, 0, 1, 1, 1], [0], [0]>} : vector<8x8x64xf32>, vector<8x8x64xf32>, vector<8x8x8xf32> -> vector<8x8x8xf32>
    "tpu.trace_stop"() : () -> ()
    %cst_85 = arith.constant dense<0xFF800000> : vector<8x8xf32>
    %269 = vector.multi_reduction <maximumf>, %268, %cst_85 [2] : vector<8x8x8xf32> to vector<8x8xf32>
    %270 = vector.shape_cast %269 : vector<8x8xf32> to vector<8x8x1xf32>
    %271 = vector.broadcast %270 : vector<8x8x1xf32> to vector<8x8x8xf32>
    %272 = arith.subf %268, %271 : vector<8x8x8xf32>
    %273 = math.exp %272 : vector<8x8x8xf32>
    %cst_86 = arith.constant dense<0.000000e+00> : vector<8x8xf32>
    %274 = vector.multi_reduction <add>, %273, %cst_86 [2] : vector<8x8x8xf32> to vector<8x8xf32>
    %275 = vector.shape_cast %274 : vector<8x8xf32> to vector<8x8x1xf32>
    %276 = vector.broadcast %275 : vector<8x8x1xf32> to vector<8x8x8xf32>
    %277 = arith.divf %273, %276 : vector<8x8x8xf32>
    "tpu.trace_start"() <{level = 10 : i32, message = "hqk,hkd->hqd"}> : () -> ()
    %cst_87 = arith.constant dense<0.000000e+00> : vector<8x8x64xf32>
    %278 = tpu.matmul %277, %62, %cst_87 {dimension_numbers = #tpu.dot_dimension_numbers<[2], [1], [1], [2], [0, 0, 0, 1, 1, 2], [0], [0]>} : vector<8x8x8xf32>, vector<8x8x64xf32>, vector<8x8x64xf32> -> vector<8x8x64xf32>
    "tpu.trace_stop"() : () -> ()
    %279 = vector.extract_strided_slice %278 {offsets = [0, 0, 0], sizes = [1, 8, 64], strides = [1, 1, 1]} : vector<8x8x64xf32> to vector<1x8x64xf32>
    %280 = vector.shape_cast %279 : vector<1x8x64xf32> to vector<8x64xf32>
    %281 = vector.extract_strided_slice %278 {offsets = [1, 0, 0], sizes = [1, 8, 64], strides = [1, 1, 1]} : vector<8x8x64xf32> to vector<1x8x64xf32>
    %282 = vector.shape_cast %281 : vector<1x8x64xf32> to vector<8x64xf32>
    %283 = vector.extract_strided_slice %278 {offsets = [2, 0, 0], sizes = [1, 8, 64], strides = [1, 1, 1]} : vector<8x8x64xf32> to vector<1x8x64xf32>
    %284 = vector.shape_cast %283 : vector<1x8x64xf32> to vector<8x64xf32>
    %285 = vector.extract_strided_slice %278 {offsets = [3, 0, 0], sizes = [1, 8, 64], strides = [1, 1, 1]} : vector<8x8x64xf32> to vector<1x8x64xf32>
    %286 = vector.shape_cast %285 : vector<1x8x64xf32> to vector<8x64xf32>
    %287 = vector.extract_strided_slice %278 {offsets = [4, 0, 0], sizes = [1, 8, 64], strides = [1, 1, 1]} : vector<8x8x64xf32> to vector<1x8x64xf32>
    %288 = vector.shape_cast %287 : vector<1x8x64xf32> to vector<8x64xf32>
    %289 = vector.extract_strided_slice %278 {offsets = [5, 0, 0], sizes = [1, 8, 64], strides = [1, 1, 1]} : vector<8x8x64xf32> to vector<1x8x64xf32>
    %290 = vector.shape_cast %289 : vector<1x8x64xf32> to vector<8x64xf32>
    %291 = vector.extract_strided_slice %278 {offsets = [6, 0, 0], sizes = [1, 8, 64], strides = [1, 1, 1]} : vector<8x8x64xf32> to vector<1x8x64xf32>
    %292 = vector.shape_cast %291 : vector<1x8x64xf32> to vector<8x64xf32>
    %293 = vector.extract_strided_slice %278 {offsets = [7, 0, 0], sizes = [1, 8, 64], strides = [1, 1, 1]} : vector<8x8x64xf32> to vector<1x8x64xf32>
    %294 = vector.shape_cast %293 : vector<1x8x64xf32> to vector<8x64xf32>
    %295 = tpu.concatenate %280, %282, %284, %286, %288, %290, %292, %294 in 1 : vector<8x64xf32>, vector<8x64xf32>, vector<8x64xf32>, vector<8x64xf32>, vector<8x64xf32>, vector<8x64xf32>, vector<8x64xf32>, vector<8x64xf32> -> vector<8x512xf32>
    %296 = vector.broadcast %5 : vector<8x1xf32> to vector<8x512xf32>
    %297 = arith.mulf %295, %296 : vector<8x512xf32>
    %c0_88 = arith.constant 0 : index
    %c0_89 = arith.constant 0 : index
    %298 = vector.load %arg8[%c0_88, %c0_89] : memref<512x64xf32, #tpu.memory_space<vmem>>, vector<512x64xf32>
    %cst_90 = arith.constant dense<0.000000e+00> : vector<8x64xf32>
    %299 = tpu.matmul %297, %298, %cst_90 {dimension_numbers = #tpu.dot_dimension_numbers<[1], [0], [0], [1], [0, 0, 1, 1], [], []>} : vector<8x512xf32>, vector<512x64xf32>, vector<8x64xf32> -> vector<8x64xf32>
    %c0_91 = arith.constant 0 : index
    %c0_92 = arith.constant 0 : index
    %300 = vector.load %arg9[%c0_91, %c0_92] : memref<1x64xf32, #tpu.memory_space<vmem>>, vector<1x64xf32>
    %301 = vector.broadcast %300 : vector<1x64xf32> to vector<8x64xf32>
    %302 = arith.addf %299, %301 : vector<8x64xf32>
    %cst_93 = arith.constant dense<0.000000e+00> : vector<8xf32>
    %303 = vector.multi_reduction <add>, %302, %cst_93 [1] : vector<8x64xf32> to vector<8xf32>
    %304 = vector.shape_cast %303 : vector<8xf32> to vector<8x1xf32>
    %cst_94 = arith.constant 6.400000e+01 : f32
    %305 = vector.broadcast %cst_94 : f32 to vector<8x1xf32>
    %306 = arith.divf %304, %305 : vector<8x1xf32>
    %307 = vector.broadcast %306 : vector<8x1xf32> to vector<8x64xf32>
    %308 = arith.subf %302, %307 : vector<8x64xf32>
    %309 = arith.mulf %308, %308 : vector<8x64xf32>
    %cst_95 = arith.constant dense<0.000000e+00> : vector<8xf32>
    %310 = vector.multi_reduction <add>, %309, %cst_95 [1] : vector<8x64xf32> to vector<8xf32>
    %311 = vector.shape_cast %310 : vector<8xf32> to vector<8x1xf32>
    %cst_96 = arith.constant 6.400000e+01 : f32
    %312 = vector.broadcast %cst_96 : f32 to vector<8x1xf32>
    %313 = arith.divf %311, %312 : vector<8x1xf32>
    %314 = vector.broadcast %306 : vector<8x1xf32> to vector<8x64xf32>
    %315 = arith.subf %302, %314 : vector<8x64xf32>
    %cst_97 = arith.constant 9.99999974E-6 : f32
    %316 = vector.broadcast %cst_97 : f32 to vector<8x1xf32>
    %317 = arith.addf %313, %316 : vector<8x1xf32>
    %318 = math.rsqrt %317 : vector<8x1xf32>
    %319 = vector.broadcast %318 : vector<8x1xf32> to vector<8x64xf32>
    %320 = arith.mulf %315, %319 : vector<8x64xf32>
    %321 = arith.index_cast %c1_i32 : i32 to index
    %c0_98 = arith.constant 0 : index
    %c0_99 = arith.constant 0 : index
    %322 = vector.load %arg14[%321, %c0_98, %c0_99] : memref<5x64x64xf32, #tpu.memory_space<vmem>>, vector<1x64x64xf32>
    %323 = vector.shape_cast %322 : vector<1x64x64xf32> to vector<64x64xf32>
    %cst_100 = arith.constant dense<0.000000e+00> : vector<8x64xf32>
    %324 = tpu.matmul %320, %323, %cst_100 {dimension_numbers = #tpu.dot_dimension_numbers<[1], [0], [0], [1], [0, 0, 1, 1], [], []>} : vector<8x64xf32>, vector<64x64xf32>, vector<8x64xf32> -> vector<8x64xf32>
    %325 = arith.index_cast %c1_i32 : i32 to index
    %c0_101 = arith.constant 0 : index
    %c0_102 = arith.constant 0 : index
    %326 = vector.load %arg15[%325, %c0_101, %c0_102] : memref<5x1x64xf32, #tpu.memory_space<vmem>>, vector<1x1x64xf32>
    %327 = vector.shape_cast %326 : vector<1x1x64xf32> to vector<1x64xf32>
    %328 = vector.broadcast %327 : vector<1x64xf32> to vector<8x64xf32>
    %329 = arith.addf %324, %328 : vector<8x64xf32>
    %330 = arith.addf %329, %320 : vector<8x64xf32>
    %cst_103 = arith.constant dense<0.000000e+00> : vector<8xf32>
    %331 = vector.multi_reduction <add>, %330, %cst_103 [1] : vector<8x64xf32> to vector<8xf32>
    %332 = vector.shape_cast %331 : vector<8xf32> to vector<8x1xf32>
    %cst_104 = arith.constant 6.400000e+01 : f32
    %333 = vector.broadcast %cst_104 : f32 to vector<8x1xf32>
    %334 = arith.divf %332, %333 : vector<8x1xf32>
    %335 = vector.broadcast %334 : vector<8x1xf32> to vector<8x64xf32>
    %336 = arith.subf %330, %335 : vector<8x64xf32>
    %337 = arith.mulf %336, %336 : vector<8x64xf32>
    %cst_105 = arith.constant dense<0.000000e+00> : vector<8xf32>
    %338 = vector.multi_reduction <add>, %337, %cst_105 [1] : vector<8x64xf32> to vector<8xf32>
    %339 = vector.shape_cast %338 : vector<8xf32> to vector<8x1xf32>
    %cst_106 = arith.constant 6.400000e+01 : f32
    %340 = vector.broadcast %cst_106 : f32 to vector<8x1xf32>
    %341 = arith.divf %339, %340 : vector<8x1xf32>
    %342 = vector.broadcast %334 : vector<8x1xf32> to vector<8x64xf32>
    %343 = arith.subf %330, %342 : vector<8x64xf32>
    %cst_107 = arith.constant 9.99999974E-6 : f32
    %344 = vector.broadcast %cst_107 : f32 to vector<8x1xf32>
    %345 = arith.addf %341, %344 : vector<8x1xf32>
    %346 = math.rsqrt %345 : vector<8x1xf32>
    %347 = vector.broadcast %346 : vector<8x1xf32> to vector<8x64xf32>
    %348 = arith.mulf %343, %347 : vector<8x64xf32>
    %c0_108 = arith.constant 0 : index
    %c0_109 = arith.constant 0 : index
    %349 = vector.load %arg10[%c0_108, %c0_109] : memref<64x64xf32, #tpu.memory_space<vmem>>, vector<64x64xf32>
    %cst_110 = arith.constant dense<0.000000e+00> : vector<8x64xf32>
    %350 = tpu.matmul %348, %349, %cst_110 {dimension_numbers = #tpu.dot_dimension_numbers<[1], [0], [0], [1], [0, 0, 1, 1], [], []>} : vector<8x64xf32>, vector<64x64xf32>, vector<8x64xf32> -> vector<8x64xf32>
    %c0_111 = arith.constant 0 : index
    %c0_112 = arith.constant 0 : index
    %351 = vector.load %arg11[%c0_111, %c0_112] : memref<1x64xf32, #tpu.memory_space<vmem>>, vector<1x64xf32>
    %352 = vector.broadcast %351 : vector<1x64xf32> to vector<8x64xf32>
    %353 = arith.addf %350, %352 : vector<8x64xf32>
    %cst_113 = arith.constant 0.000000e+00 : f32
    %354 = vector.broadcast %cst_113 : f32 to vector<8x64xf32>
    %355 = arith.maximumf %353, %354 : vector<8x64xf32>
    %c0_114 = arith.constant 0 : index
    %c0_115 = arith.constant 0 : index
    %356 = vector.load %arg12[%c0_114, %c0_115] : memref<64x64xf32, #tpu.memory_space<vmem>>, vector<64x64xf32>
    %cst_116 = arith.constant dense<0.000000e+00> : vector<8x64xf32>
    %357 = tpu.matmul %355, %356, %cst_116 {dimension_numbers = #tpu.dot_dimension_numbers<[1], [0], [0], [1], [0, 0, 1, 1], [], []>} : vector<8x64xf32>, vector<64x64xf32>, vector<8x64xf32> -> vector<8x64xf32>
    %c0_117 = arith.constant 0 : index
    %c0_118 = arith.constant 0 : index
    %358 = vector.load %arg13[%c0_117, %c0_118] : memref<1x64xf32, #tpu.memory_space<vmem>>, vector<1x64xf32>
    %359 = vector.broadcast %358 : vector<1x64xf32> to vector<8x64xf32>
    %360 = arith.addf %357, %359 : vector<8x64xf32>
    %cst_119 = arith.constant dense<0.000000e+00> : vector<8xf32>
    %361 = vector.multi_reduction <add>, %360, %cst_119 [1] : vector<8x64xf32> to vector<8xf32>
    %362 = vector.shape_cast %361 : vector<8xf32> to vector<8x1xf32>
    %cst_120 = arith.constant 6.400000e+01 : f32
    %363 = vector.broadcast %cst_120 : f32 to vector<8x1xf32>
    %364 = arith.divf %362, %363 : vector<8x1xf32>
    %365 = vector.broadcast %364 : vector<8x1xf32> to vector<8x64xf32>
    %366 = arith.subf %360, %365 : vector<8x64xf32>
    %367 = arith.mulf %366, %366 : vector<8x64xf32>
    %cst_121 = arith.constant dense<0.000000e+00> : vector<8xf32>
    %368 = vector.multi_reduction <add>, %367, %cst_121 [1] : vector<8x64xf32> to vector<8xf32>
    %369 = vector.shape_cast %368 : vector<8xf32> to vector<8x1xf32>
    %cst_122 = arith.constant 6.400000e+01 : f32
    %370 = vector.broadcast %cst_122 : f32 to vector<8x1xf32>
    %371 = arith.divf %369, %370 : vector<8x1xf32>
    %372 = vector.broadcast %364 : vector<8x1xf32> to vector<8x64xf32>
    %373 = arith.subf %360, %372 : vector<8x64xf32>
    %cst_123 = arith.constant 9.99999974E-6 : f32
    %374 = vector.broadcast %cst_123 : f32 to vector<8x1xf32>
    %375 = arith.addf %371, %374 : vector<8x1xf32>
    %376 = math.rsqrt %375 : vector<8x1xf32>
    %377 = vector.broadcast %376 : vector<8x1xf32> to vector<8x64xf32>
    %378 = arith.mulf %373, %377 : vector<8x64xf32>
    %379 = arith.index_cast %c1_i32 : i32 to index
    %c0_124 = arith.constant 0 : index
    %c0_125 = arith.constant 0 : index
    %380 = vector.load %arg16[%379, %c0_124, %c0_125] : memref<5x64x64xf32, #tpu.memory_space<vmem>>, vector<1x64x64xf32>
    %381 = vector.shape_cast %380 : vector<1x64x64xf32> to vector<64x64xf32>
    %cst_126 = arith.constant dense<0.000000e+00> : vector<8x64xf32>
    %382 = tpu.matmul %378, %381, %cst_126 {dimension_numbers = #tpu.dot_dimension_numbers<[1], [0], [0], [1], [0, 0, 1, 1], [], []>} : vector<8x64xf32>, vector<64x64xf32>, vector<8x64xf32> -> vector<8x64xf32>
    %383 = arith.index_cast %c1_i32 : i32 to index
    %c0_127 = arith.constant 0 : index
    %c0_128 = arith.constant 0 : index
    %384 = vector.load %arg17[%383, %c0_127, %c0_128] : memref<5x1x64xf32, #tpu.memory_space<vmem>>, vector<1x1x64xf32>
    %385 = vector.shape_cast %384 : vector<1x1x64xf32> to vector<1x64xf32>
    %386 = vector.broadcast %385 : vector<1x64xf32> to vector<8x64xf32>
    %387 = arith.addf %382, %386 : vector<8x64xf32>
    %388 = arith.addf %387, %378 : vector<8x64xf32>
    %c2_i32 = arith.constant 2 : i32
    %cst_129 = arith.constant dense<0.000000e+00> : vector<8xf32>
    %389 = vector.multi_reduction <add>, %388, %cst_129 [1] : vector<8x64xf32> to vector<8xf32>
    %390 = vector.shape_cast %389 : vector<8xf32> to vector<8x1xf32>
    %cst_130 = arith.constant 6.400000e+01 : f32
    %391 = vector.broadcast %cst_130 : f32 to vector<8x1xf32>
    %392 = arith.divf %390, %391 : vector<8x1xf32>
    %393 = vector.broadcast %392 : vector<8x1xf32> to vector<8x64xf32>
    %394 = arith.subf %388, %393 : vector<8x64xf32>
    %395 = arith.mulf %394, %394 : vector<8x64xf32>
    %cst_131 = arith.constant dense<0.000000e+00> : vector<8xf32>
    %396 = vector.multi_reduction <add>, %395, %cst_131 [1] : vector<8x64xf32> to vector<8xf32>
    %397 = vector.shape_cast %396 : vector<8xf32> to vector<8x1xf32>
    %cst_132 = arith.constant 6.400000e+01 : f32
    %398 = vector.broadcast %cst_132 : f32 to vector<8x1xf32>
    %399 = arith.divf %397, %398 : vector<8x1xf32>
    %400 = vector.broadcast %392 : vector<8x1xf32> to vector<8x64xf32>
    %401 = arith.subf %388, %400 : vector<8x64xf32>
    %cst_133 = arith.constant 9.99999974E-6 : f32
    %402 = vector.broadcast %cst_133 : f32 to vector<8x1xf32>
    %403 = arith.addf %399, %402 : vector<8x1xf32>
    %404 = math.rsqrt %403 : vector<8x1xf32>
    %405 = vector.broadcast %404 : vector<8x1xf32> to vector<8x64xf32>
    %406 = arith.mulf %401, %405 : vector<8x64xf32>
    %c0_134 = arith.constant 0 : index
    %c0_135 = arith.constant 0 : index
    %407 = vector.load %arg4[%c0_134, %c0_135] : memref<64x512xf32, #tpu.memory_space<vmem>>, vector<64x512xf32>
    %cst_136 = arith.constant dense<0.000000e+00> : vector<8x512xf32>
    %408 = tpu.matmul %406, %407, %cst_136 {dimension_numbers = #tpu.dot_dimension_numbers<[1], [0], [0], [1], [0, 0, 1, 1], [], []>} : vector<8x64xf32>, vector<64x512xf32>, vector<8x512xf32> -> vector<8x512xf32>
    %c0_137 = arith.constant 0 : index
    %c0_138 = arith.constant 0 : index
    %409 = vector.load %arg5[%c0_137, %c0_138] : memref<1x512xf32, #tpu.memory_space<vmem>>, vector<1x512xf32>
    %410 = vector.broadcast %409 : vector<1x512xf32> to vector<8x512xf32>
    %411 = arith.addf %408, %410 : vector<8x512xf32>
    %cst_139 = arith.constant 1.250000e-01 : f32
    %412 = vector.broadcast %cst_139 : f32 to vector<8x512xf32>
    %413 = arith.mulf %411, %412 : vector<8x512xf32>
    %414 = vector.extract_strided_slice %413 {offsets = [0, 0], sizes = [8, 64], strides = [1, 1]} : vector<8x512xf32> to vector<8x64xf32>
    %415 = vector.extract_strided_slice %413 {offsets = [0, 64], sizes = [8, 64], strides = [1, 1]} : vector<8x512xf32> to vector<8x64xf32>
    %416 = vector.extract_strided_slice %413 {offsets = [0, 128], sizes = [8, 64], strides = [1, 1]} : vector<8x512xf32> to vector<8x64xf32>
    %417 = vector.extract_strided_slice %413 {offsets = [0, 192], sizes = [8, 64], strides = [1, 1]} : vector<8x512xf32> to vector<8x64xf32>
    %418 = vector.extract_strided_slice %413 {offsets = [0, 256], sizes = [8, 64], strides = [1, 1]} : vector<8x512xf32> to vector<8x64xf32>
    %419 = vector.extract_strided_slice %413 {offsets = [0, 320], sizes = [8, 64], strides = [1, 1]} : vector<8x512xf32> to vector<8x64xf32>
    %420 = vector.extract_strided_slice %413 {offsets = [0, 384], sizes = [8, 64], strides = [1, 1]} : vector<8x512xf32> to vector<8x64xf32>
    %421 = vector.extract_strided_slice %413 {offsets = [0, 448], sizes = [8, 64], strides = [1, 1]} : vector<8x512xf32> to vector<8x64xf32>
    %422 = vector.shape_cast %414 : vector<8x64xf32> to vector<1x8x64xf32>
    %423 = vector.shape_cast %415 : vector<8x64xf32> to vector<1x8x64xf32>
    %424 = vector.shape_cast %416 : vector<8x64xf32> to vector<1x8x64xf32>
    %425 = vector.shape_cast %417 : vector<8x64xf32> to vector<1x8x64xf32>
    %426 = vector.shape_cast %418 : vector<8x64xf32> to vector<1x8x64xf32>
    %427 = vector.shape_cast %419 : vector<8x64xf32> to vector<1x8x64xf32>
    %428 = vector.shape_cast %420 : vector<8x64xf32> to vector<1x8x64xf32>
    %429 = vector.shape_cast %421 : vector<8x64xf32> to vector<1x8x64xf32>
    %430 = tpu.concatenate %422, %423, %424, %425, %426, %427, %428, %429 in 0 : vector<1x8x64xf32>, vector<1x8x64xf32>, vector<1x8x64xf32>, vector<1x8x64xf32>, vector<1x8x64xf32>, vector<1x8x64xf32>, vector<1x8x64xf32>, vector<1x8x64xf32> -> vector<8x8x64xf32>
    "tpu.trace_start"() <{level = 10 : i32, message = "hqd,hkd->hqk"}> : () -> ()
    %cst_140 = arith.constant dense<0.000000e+00> : vector<8x8x8xf32>
    %431 = tpu.matmul %430, %45, %cst_140 {dimension_numbers = #tpu.dot_dimension_numbers<[2], [2], [1], [1], [0, 0, 0, 1, 1, 1], [0], [0]>} : vector<8x8x64xf32>, vector<8x8x64xf32>, vector<8x8x8xf32> -> vector<8x8x8xf32>
    "tpu.trace_stop"() : () -> ()
    %cst_141 = arith.constant dense<0xFF800000> : vector<8x8xf32>
    %432 = vector.multi_reduction <maximumf>, %431, %cst_141 [2] : vector<8x8x8xf32> to vector<8x8xf32>
    %433 = vector.shape_cast %432 : vector<8x8xf32> to vector<8x8x1xf32>
    %434 = vector.broadcast %433 : vector<8x8x1xf32> to vector<8x8x8xf32>
    %435 = arith.subf %431, %434 : vector<8x8x8xf32>
    %436 = math.exp %435 : vector<8x8x8xf32>
    %cst_142 = arith.constant dense<0.000000e+00> : vector<8x8xf32>
    %437 = vector.multi_reduction <add>, %436, %cst_142 [2] : vector<8x8x8xf32> to vector<8x8xf32>
    %438 = vector.shape_cast %437 : vector<8x8xf32> to vector<8x8x1xf32>
    %439 = vector.broadcast %438 : vector<8x8x1xf32> to vector<8x8x8xf32>
    %440 = arith.divf %436, %439 : vector<8x8x8xf32>
    "tpu.trace_start"() <{level = 10 : i32, message = "hqk,hkd->hqd"}> : () -> ()
    %cst_143 = arith.constant dense<0.000000e+00> : vector<8x8x64xf32>
    %441 = tpu.matmul %440, %62, %cst_143 {dimension_numbers = #tpu.dot_dimension_numbers<[2], [1], [1], [2], [0, 0, 0, 1, 1, 2], [0], [0]>} : vector<8x8x8xf32>, vector<8x8x64xf32>, vector<8x8x64xf32> -> vector<8x8x64xf32>
    "tpu.trace_stop"() : () -> ()
    %442 = vector.extract_strided_slice %441 {offsets = [0, 0, 0], sizes = [1, 8, 64], strides = [1, 1, 1]} : vector<8x8x64xf32> to vector<1x8x64xf32>
    %443 = vector.shape_cast %442 : vector<1x8x64xf32> to vector<8x64xf32>
    %444 = vector.extract_strided_slice %441 {offsets = [1, 0, 0], sizes = [1, 8, 64], strides = [1, 1, 1]} : vector<8x8x64xf32> to vector<1x8x64xf32>
    %445 = vector.shape_cast %444 : vector<1x8x64xf32> to vector<8x64xf32>
    %446 = vector.extract_strided_slice %441 {offsets = [2, 0, 0], sizes = [1, 8, 64], strides = [1, 1, 1]} : vector<8x8x64xf32> to vector<1x8x64xf32>
    %447 = vector.shape_cast %446 : vector<1x8x64xf32> to vector<8x64xf32>
    %448 = vector.extract_strided_slice %441 {offsets = [3, 0, 0], sizes = [1, 8, 64], strides = [1, 1, 1]} : vector<8x8x64xf32> to vector<1x8x64xf32>
    %449 = vector.shape_cast %448 : vector<1x8x64xf32> to vector<8x64xf32>
    %450 = vector.extract_strided_slice %441 {offsets = [4, 0, 0], sizes = [1, 8, 64], strides = [1, 1, 1]} : vector<8x8x64xf32> to vector<1x8x64xf32>
    %451 = vector.shape_cast %450 : vector<1x8x64xf32> to vector<8x64xf32>
    %452 = vector.extract_strided_slice %441 {offsets = [5, 0, 0], sizes = [1, 8, 64], strides = [1, 1, 1]} : vector<8x8x64xf32> to vector<1x8x64xf32>
    %453 = vector.shape_cast %452 : vector<1x8x64xf32> to vector<8x64xf32>
    %454 = vector.extract_strided_slice %441 {offsets = [6, 0, 0], sizes = [1, 8, 64], strides = [1, 1, 1]} : vector<8x8x64xf32> to vector<1x8x64xf32>
    %455 = vector.shape_cast %454 : vector<1x8x64xf32> to vector<8x64xf32>
    %456 = vector.extract_strided_slice %441 {offsets = [7, 0, 0], sizes = [1, 8, 64], strides = [1, 1, 1]} : vector<8x8x64xf32> to vector<1x8x64xf32>
    %457 = vector.shape_cast %456 : vector<1x8x64xf32> to vector<8x64xf32>
    %458 = tpu.concatenate %443, %445, %447, %449, %451, %453, %455, %457 in 1 : vector<8x64xf32>, vector<8x64xf32>, vector<8x64xf32>, vector<8x64xf32>, vector<8x64xf32>, vector<8x64xf32>, vector<8x64xf32>, vector<8x64xf32> -> vector<8x512xf32>
    %459 = vector.broadcast %5 : vector<8x1xf32> to vector<8x512xf32>
    %460 = arith.mulf %458, %459 : vector<8x512xf32>
    %c0_144 = arith.constant 0 : index
    %c0_145 = arith.constant 0 : index
    %461 = vector.load %arg8[%c0_144, %c0_145] : memref<512x64xf32, #tpu.memory_space<vmem>>, vector<512x64xf32>
    %cst_146 = arith.constant dense<0.000000e+00> : vector<8x64xf32>
    %462 = tpu.matmul %460, %461, %cst_146 {dimension_numbers = #tpu.dot_dimension_numbers<[1], [0], [0], [1], [0, 0, 1, 1], [], []>} : vector<8x512xf32>, vector<512x64xf32>, vector<8x64xf32> -> vector<8x64xf32>
    %c0_147 = arith.constant 0 : index
    %c0_148 = arith.constant 0 : index
    %463 = vector.load %arg9[%c0_147, %c0_148] : memref<1x64xf32, #tpu.memory_space<vmem>>, vector<1x64xf32>
    %464 = vector.broadcast %463 : vector<1x64xf32> to vector<8x64xf32>
    %465 = arith.addf %462, %464 : vector<8x64xf32>
    %cst_149 = arith.constant dense<0.000000e+00> : vector<8xf32>
    %466 = vector.multi_reduction <add>, %465, %cst_149 [1] : vector<8x64xf32> to vector<8xf32>
    %467 = vector.shape_cast %466 : vector<8xf32> to vector<8x1xf32>
    %cst_150 = arith.constant 6.400000e+01 : f32
    %468 = vector.broadcast %cst_150 : f32 to vector<8x1xf32>
    %469 = arith.divf %467, %468 : vector<8x1xf32>
    %470 = vector.broadcast %469 : vector<8x1xf32> to vector<8x64xf32>
    %471 = arith.subf %465, %470 : vector<8x64xf32>
    %472 = arith.mulf %471, %471 : vector<8x64xf32>
    %cst_151 = arith.constant dense<0.000000e+00> : vector<8xf32>
    %473 = vector.multi_reduction <add>, %472, %cst_151 [1] : vector<8x64xf32> to vector<8xf32>
    %474 = vector.shape_cast %473 : vector<8xf32> to vector<8x1xf32>
    %cst_152 = arith.constant 6.400000e+01 : f32
    %475 = vector.broadcast %cst_152 : f32 to vector<8x1xf32>
    %476 = arith.divf %474, %475 : vector<8x1xf32>
    %477 = vector.broadcast %469 : vector<8x1xf32> to vector<8x64xf32>
    %478 = arith.subf %465, %477 : vector<8x64xf32>
    %cst_153 = arith.constant 9.99999974E-6 : f32
    %479 = vector.broadcast %cst_153 : f32 to vector<8x1xf32>
    %480 = arith.addf %476, %479 : vector<8x1xf32>
    %481 = math.rsqrt %480 : vector<8x1xf32>
    %482 = vector.broadcast %481 : vector<8x1xf32> to vector<8x64xf32>
    %483 = arith.mulf %478, %482 : vector<8x64xf32>
    %484 = arith.index_cast %c2_i32 : i32 to index
    %c0_154 = arith.constant 0 : index
    %c0_155 = arith.constant 0 : index
    %485 = vector.load %arg14[%484, %c0_154, %c0_155] : memref<5x64x64xf32, #tpu.memory_space<vmem>>, vector<1x64x64xf32>
    %486 = vector.shape_cast %485 : vector<1x64x64xf32> to vector<64x64xf32>
    %cst_156 = arith.constant dense<0.000000e+00> : vector<8x64xf32>
    %487 = tpu.matmul %483, %486, %cst_156 {dimension_numbers = #tpu.dot_dimension_numbers<[1], [0], [0], [1], [0, 0, 1, 1], [], []>} : vector<8x64xf32>, vector<64x64xf32>, vector<8x64xf32> -> vector<8x64xf32>
    %488 = arith.index_cast %c2_i32 : i32 to index
    %c0_157 = arith.constant 0 : index
    %c0_158 = arith.constant 0 : index
    %489 = vector.load %arg15[%488, %c0_157, %c0_158] : memref<5x1x64xf32, #tpu.memory_space<vmem>>, vector<1x1x64xf32>
    %490 = vector.shape_cast %489 : vector<1x1x64xf32> to vector<1x64xf32>
    %491 = vector.broadcast %490 : vector<1x64xf32> to vector<8x64xf32>
    %492 = arith.addf %487, %491 : vector<8x64xf32>
    %493 = arith.addf %492, %483 : vector<8x64xf32>
    %cst_159 = arith.constant dense<0.000000e+00> : vector<8xf32>
    %494 = vector.multi_reduction <add>, %493, %cst_159 [1] : vector<8x64xf32> to vector<8xf32>
    %495 = vector.shape_cast %494 : vector<8xf32> to vector<8x1xf32>
    %cst_160 = arith.constant 6.400000e+01 : f32
    %496 = vector.broadcast %cst_160 : f32 to vector<8x1xf32>
    %497 = arith.divf %495, %496 : vector<8x1xf32>
    %498 = vector.broadcast %497 : vector<8x1xf32> to vector<8x64xf32>
    %499 = arith.subf %493, %498 : vector<8x64xf32>
    %500 = arith.mulf %499, %499 : vector<8x64xf32>
    %cst_161 = arith.constant dense<0.000000e+00> : vector<8xf32>
    %501 = vector.multi_reduction <add>, %500, %cst_161 [1] : vector<8x64xf32> to vector<8xf32>
    %502 = vector.shape_cast %501 : vector<8xf32> to vector<8x1xf32>
    %cst_162 = arith.constant 6.400000e+01 : f32
    %503 = vector.broadcast %cst_162 : f32 to vector<8x1xf32>
    %504 = arith.divf %502, %503 : vector<8x1xf32>
    %505 = vector.broadcast %497 : vector<8x1xf32> to vector<8x64xf32>
    %506 = arith.subf %493, %505 : vector<8x64xf32>
    %cst_163 = arith.constant 9.99999974E-6 : f32
    %507 = vector.broadcast %cst_163 : f32 to vector<8x1xf32>
    %508 = arith.addf %504, %507 : vector<8x1xf32>
    %509 = math.rsqrt %508 : vector<8x1xf32>
    %510 = vector.broadcast %509 : vector<8x1xf32> to vector<8x64xf32>
    %511 = arith.mulf %506, %510 : vector<8x64xf32>
    %c0_164 = arith.constant 0 : index
    %c0_165 = arith.constant 0 : index
    %512 = vector.load %arg10[%c0_164, %c0_165] : memref<64x64xf32, #tpu.memory_space<vmem>>, vector<64x64xf32>
    %cst_166 = arith.constant dense<0.000000e+00> : vector<8x64xf32>
    %513 = tpu.matmul %511, %512, %cst_166 {dimension_numbers = #tpu.dot_dimension_numbers<[1], [0], [0], [1], [0, 0, 1, 1], [], []>} : vector<8x64xf32>, vector<64x64xf32>, vector<8x64xf32> -> vector<8x64xf32>
    %c0_167 = arith.constant 0 : index
    %c0_168 = arith.constant 0 : index
    %514 = vector.load %arg11[%c0_167, %c0_168] : memref<1x64xf32, #tpu.memory_space<vmem>>, vector<1x64xf32>
    %515 = vector.broadcast %514 : vector<1x64xf32> to vector<8x64xf32>
    %516 = arith.addf %513, %515 : vector<8x64xf32>
    %cst_169 = arith.constant 0.000000e+00 : f32
    %517 = vector.broadcast %cst_169 : f32 to vector<8x64xf32>
    %518 = arith.maximumf %516, %517 : vector<8x64xf32>
    %c0_170 = arith.constant 0 : index
    %c0_171 = arith.constant 0 : index
    %519 = vector.load %arg12[%c0_170, %c0_171] : memref<64x64xf32, #tpu.memory_space<vmem>>, vector<64x64xf32>
    %cst_172 = arith.constant dense<0.000000e+00> : vector<8x64xf32>
    %520 = tpu.matmul %518, %519, %cst_172 {dimension_numbers = #tpu.dot_dimension_numbers<[1], [0], [0], [1], [0, 0, 1, 1], [], []>} : vector<8x64xf32>, vector<64x64xf32>, vector<8x64xf32> -> vector<8x64xf32>
    %c0_173 = arith.constant 0 : index
    %c0_174 = arith.constant 0 : index
    %521 = vector.load %arg13[%c0_173, %c0_174] : memref<1x64xf32, #tpu.memory_space<vmem>>, vector<1x64xf32>
    %522 = vector.broadcast %521 : vector<1x64xf32> to vector<8x64xf32>
    %523 = arith.addf %520, %522 : vector<8x64xf32>
    %cst_175 = arith.constant dense<0.000000e+00> : vector<8xf32>
    %524 = vector.multi_reduction <add>, %523, %cst_175 [1] : vector<8x64xf32> to vector<8xf32>
    %525 = vector.shape_cast %524 : vector<8xf32> to vector<8x1xf32>
    %cst_176 = arith.constant 6.400000e+01 : f32
    %526 = vector.broadcast %cst_176 : f32 to vector<8x1xf32>
    %527 = arith.divf %525, %526 : vector<8x1xf32>
    %528 = vector.broadcast %527 : vector<8x1xf32> to vector<8x64xf32>
    %529 = arith.subf %523, %528 : vector<8x64xf32>
    %530 = arith.mulf %529, %529 : vector<8x64xf32>
    %cst_177 = arith.constant dense<0.000000e+00> : vector<8xf32>
    %531 = vector.multi_reduction <add>, %530, %cst_177 [1] : vector<8x64xf32> to vector<8xf32>
    %532 = vector.shape_cast %531 : vector<8xf32> to vector<8x1xf32>
    %cst_178 = arith.constant 6.400000e+01 : f32
    %533 = vector.broadcast %cst_178 : f32 to vector<8x1xf32>
    %534 = arith.divf %532, %533 : vector<8x1xf32>
    %535 = vector.broadcast %527 : vector<8x1xf32> to vector<8x64xf32>
    %536 = arith.subf %523, %535 : vector<8x64xf32>
    %cst_179 = arith.constant 9.99999974E-6 : f32
    %537 = vector.broadcast %cst_179 : f32 to vector<8x1xf32>
    %538 = arith.addf %534, %537 : vector<8x1xf32>
    %539 = math.rsqrt %538 : vector<8x1xf32>
    %540 = vector.broadcast %539 : vector<8x1xf32> to vector<8x64xf32>
    %541 = arith.mulf %536, %540 : vector<8x64xf32>
    %542 = arith.index_cast %c2_i32 : i32 to index
    %c0_180 = arith.constant 0 : index
    %c0_181 = arith.constant 0 : index
    %543 = vector.load %arg16[%542, %c0_180, %c0_181] : memref<5x64x64xf32, #tpu.memory_space<vmem>>, vector<1x64x64xf32>
    %544 = vector.shape_cast %543 : vector<1x64x64xf32> to vector<64x64xf32>
    %cst_182 = arith.constant dense<0.000000e+00> : vector<8x64xf32>
    %545 = tpu.matmul %541, %544, %cst_182 {dimension_numbers = #tpu.dot_dimension_numbers<[1], [0], [0], [1], [0, 0, 1, 1], [], []>} : vector<8x64xf32>, vector<64x64xf32>, vector<8x64xf32> -> vector<8x64xf32>
    %546 = arith.index_cast %c2_i32 : i32 to index
    %c0_183 = arith.constant 0 : index
    %c0_184 = arith.constant 0 : index
    %547 = vector.load %arg17[%546, %c0_183, %c0_184] : memref<5x1x64xf32, #tpu.memory_space<vmem>>, vector<1x1x64xf32>
    %548 = vector.shape_cast %547 : vector<1x1x64xf32> to vector<1x64xf32>
    %549 = vector.broadcast %548 : vector<1x64xf32> to vector<8x64xf32>
    %550 = arith.addf %545, %549 : vector<8x64xf32>
    %551 = arith.addf %550, %541 : vector<8x64xf32>
    %c3_i32 = arith.constant 3 : i32
    %cst_185 = arith.constant dense<0.000000e+00> : vector<8xf32>
    %552 = vector.multi_reduction <add>, %551, %cst_185 [1] : vector<8x64xf32> to vector<8xf32>
    %553 = vector.shape_cast %552 : vector<8xf32> to vector<8x1xf32>
    %cst_186 = arith.constant 6.400000e+01 : f32
    %554 = vector.broadcast %cst_186 : f32 to vector<8x1xf32>
    %555 = arith.divf %553, %554 : vector<8x1xf32>
    %556 = vector.broadcast %555 : vector<8x1xf32> to vector<8x64xf32>
    %557 = arith.subf %551, %556 : vector<8x64xf32>
    %558 = arith.mulf %557, %557 : vector<8x64xf32>
    %cst_187 = arith.constant dense<0.000000e+00> : vector<8xf32>
    %559 = vector.multi_reduction <add>, %558, %cst_187 [1] : vector<8x64xf32> to vector<8xf32>
    %560 = vector.shape_cast %559 : vector<8xf32> to vector<8x1xf32>
    %cst_188 = arith.constant 6.400000e+01 : f32
    %561 = vector.broadcast %cst_188 : f32 to vector<8x1xf32>
    %562 = arith.divf %560, %561 : vector<8x1xf32>
    %563 = vector.broadcast %555 : vector<8x1xf32> to vector<8x64xf32>
    %564 = arith.subf %551, %563 : vector<8x64xf32>
    %cst_189 = arith.constant 9.99999974E-6 : f32
    %565 = vector.broadcast %cst_189 : f32 to vector<8x1xf32>
    %566 = arith.addf %562, %565 : vector<8x1xf32>
    %567 = math.rsqrt %566 : vector<8x1xf32>
    %568 = vector.broadcast %567 : vector<8x1xf32> to vector<8x64xf32>
    %569 = arith.mulf %564, %568 : vector<8x64xf32>
    %c0_190 = arith.constant 0 : index
    %c0_191 = arith.constant 0 : index
    %570 = vector.load %arg4[%c0_190, %c0_191] : memref<64x512xf32, #tpu.memory_space<vmem>>, vector<64x512xf32>
    %cst_192 = arith.constant dense<0.000000e+00> : vector<8x512xf32>
    %571 = tpu.matmul %569, %570, %cst_192 {dimension_numbers = #tpu.dot_dimension_numbers<[1], [0], [0], [1], [0, 0, 1, 1], [], []>} : vector<8x64xf32>, vector<64x512xf32>, vector<8x512xf32> -> vector<8x512xf32>
    %c0_193 = arith.constant 0 : index
    %c0_194 = arith.constant 0 : index
    %572 = vector.load %arg5[%c0_193, %c0_194] : memref<1x512xf32, #tpu.memory_space<vmem>>, vector<1x512xf32>
    %573 = vector.broadcast %572 : vector<1x512xf32> to vector<8x512xf32>
    %574 = arith.addf %571, %573 : vector<8x512xf32>
    %cst_195 = arith.constant 1.250000e-01 : f32
    %575 = vector.broadcast %cst_195 : f32 to vector<8x512xf32>
    %576 = arith.mulf %574, %575 : vector<8x512xf32>
    %577 = vector.extract_strided_slice %576 {offsets = [0, 0], sizes = [8, 64], strides = [1, 1]} : vector<8x512xf32> to vector<8x64xf32>
    %578 = vector.extract_strided_slice %576 {offsets = [0, 64], sizes = [8, 64], strides = [1, 1]} : vector<8x512xf32> to vector<8x64xf32>
    %579 = vector.extract_strided_slice %576 {offsets = [0, 128], sizes = [8, 64], strides = [1, 1]} : vector<8x512xf32> to vector<8x64xf32>
    %580 = vector.extract_strided_slice %576 {offsets = [0, 192], sizes = [8, 64], strides = [1, 1]} : vector<8x512xf32> to vector<8x64xf32>
    %581 = vector.extract_strided_slice %576 {offsets = [0, 256], sizes = [8, 64], strides = [1, 1]} : vector<8x512xf32> to vector<8x64xf32>
    %582 = vector.extract_strided_slice %576 {offsets = [0, 320], sizes = [8, 64], strides = [1, 1]} : vector<8x512xf32> to vector<8x64xf32>
    %583 = vector.extract_strided_slice %576 {offsets = [0, 384], sizes = [8, 64], strides = [1, 1]} : vector<8x512xf32> to vector<8x64xf32>
    %584 = vector.extract_strided_slice %576 {offsets = [0, 448], sizes = [8, 64], strides = [1, 1]} : vector<8x512xf32> to vector<8x64xf32>
    %585 = vector.shape_cast %577 : vector<8x64xf32> to vector<1x8x64xf32>
    %586 = vector.shape_cast %578 : vector<8x64xf32> to vector<1x8x64xf32>
    %587 = vector.shape_cast %579 : vector<8x64xf32> to vector<1x8x64xf32>
    %588 = vector.shape_cast %580 : vector<8x64xf32> to vector<1x8x64xf32>
    %589 = vector.shape_cast %581 : vector<8x64xf32> to vector<1x8x64xf32>
    %590 = vector.shape_cast %582 : vector<8x64xf32> to vector<1x8x64xf32>
    %591 = vector.shape_cast %583 : vector<8x64xf32> to vector<1x8x64xf32>
    %592 = vector.shape_cast %584 : vector<8x64xf32> to vector<1x8x64xf32>
    %593 = tpu.concatenate %585, %586, %587, %588, %589, %590, %591, %592 in 0 : vector<1x8x64xf32>, vector<1x8x64xf32>, vector<1x8x64xf32>, vector<1x8x64xf32>, vector<1x8x64xf32>, vector<1x8x64xf32>, vector<1x8x64xf32>, vector<1x8x64xf32> -> vector<8x8x64xf32>
    "tpu.trace_start"() <{level = 10 : i32, message = "hqd,hkd->hqk"}> : () -> ()
    %cst_196 = arith.constant dense<0.000000e+00> : vector<8x8x8xf32>
    %594 = tpu.matmul %593, %45, %cst_196 {dimension_numbers = #tpu.dot_dimension_numbers<[2], [2], [1], [1], [0, 0, 0, 1, 1, 1], [0], [0]>} : vector<8x8x64xf32>, vector<8x8x64xf32>, vector<8x8x8xf32> -> vector<8x8x8xf32>
    "tpu.trace_stop"() : () -> ()
    %cst_197 = arith.constant dense<0xFF800000> : vector<8x8xf32>
    %595 = vector.multi_reduction <maximumf>, %594, %cst_197 [2] : vector<8x8x8xf32> to vector<8x8xf32>
    %596 = vector.shape_cast %595 : vector<8x8xf32> to vector<8x8x1xf32>
    %597 = vector.broadcast %596 : vector<8x8x1xf32> to vector<8x8x8xf32>
    %598 = arith.subf %594, %597 : vector<8x8x8xf32>
    %599 = math.exp %598 : vector<8x8x8xf32>
    %cst_198 = arith.constant dense<0.000000e+00> : vector<8x8xf32>
    %600 = vector.multi_reduction <add>, %599, %cst_198 [2] : vector<8x8x8xf32> to vector<8x8xf32>
    %601 = vector.shape_cast %600 : vector<8x8xf32> to vector<8x8x1xf32>
    %602 = vector.broadcast %601 : vector<8x8x1xf32> to vector<8x8x8xf32>
    %603 = arith.divf %599, %602 : vector<8x8x8xf32>
    "tpu.trace_start"() <{level = 10 : i32, message = "hqk,hkd->hqd"}> : () -> ()
    %cst_199 = arith.constant dense<0.000000e+00> : vector<8x8x64xf32>
    %604 = tpu.matmul %603, %62, %cst_199 {dimension_numbers = #tpu.dot_dimension_numbers<[2], [1], [1], [2], [0, 0, 0, 1, 1, 2], [0], [0]>} : vector<8x8x8xf32>, vector<8x8x64xf32>, vector<8x8x64xf32> -> vector<8x8x64xf32>
    "tpu.trace_stop"() : () -> ()
    %605 = vector.extract_strided_slice %604 {offsets = [0, 0, 0], sizes = [1, 8, 64], strides = [1, 1, 1]} : vector<8x8x64xf32> to vector<1x8x64xf32>
    %606 = vector.shape_cast %605 : vector<1x8x64xf32> to vector<8x64xf32>
    %607 = vector.extract_strided_slice %604 {offsets = [1, 0, 0], sizes = [1, 8, 64], strides = [1, 1, 1]} : vector<8x8x64xf32> to vector<1x8x64xf32>
    %608 = vector.shape_cast %607 : vector<1x8x64xf32> to vector<8x64xf32>
    %609 = vector.extract_strided_slice %604 {offsets = [2, 0, 0], sizes = [1, 8, 64], strides = [1, 1, 1]} : vector<8x8x64xf32> to vector<1x8x64xf32>
    %610 = vector.shape_cast %609 : vector<1x8x64xf32> to vector<8x64xf32>
    %611 = vector.extract_strided_slice %604 {offsets = [3, 0, 0], sizes = [1, 8, 64], strides = [1, 1, 1]} : vector<8x8x64xf32> to vector<1x8x64xf32>
    %612 = vector.shape_cast %611 : vector<1x8x64xf32> to vector<8x64xf32>
    %613 = vector.extract_strided_slice %604 {offsets = [4, 0, 0], sizes = [1, 8, 64], strides = [1, 1, 1]} : vector<8x8x64xf32> to vector<1x8x64xf32>
    %614 = vector.shape_cast %613 : vector<1x8x64xf32> to vector<8x64xf32>
    %615 = vector.extract_strided_slice %604 {offsets = [5, 0, 0], sizes = [1, 8, 64], strides = [1, 1, 1]} : vector<8x8x64xf32> to vector<1x8x64xf32>
    %616 = vector.shape_cast %615 : vector<1x8x64xf32> to vector<8x64xf32>
    %617 = vector.extract_strided_slice %604 {offsets = [6, 0, 0], sizes = [1, 8, 64], strides = [1, 1, 1]} : vector<8x8x64xf32> to vector<1x8x64xf32>
    %618 = vector.shape_cast %617 : vector<1x8x64xf32> to vector<8x64xf32>
    %619 = vector.extract_strided_slice %604 {offsets = [7, 0, 0], sizes = [1, 8, 64], strides = [1, 1, 1]} : vector<8x8x64xf32> to vector<1x8x64xf32>
    %620 = vector.shape_cast %619 : vector<1x8x64xf32> to vector<8x64xf32>
    %621 = tpu.concatenate %606, %608, %610, %612, %614, %616, %618, %620 in 1 : vector<8x64xf32>, vector<8x64xf32>, vector<8x64xf32>, vector<8x64xf32>, vector<8x64xf32>, vector<8x64xf32>, vector<8x64xf32>, vector<8x64xf32> -> vector<8x512xf32>
    %622 = vector.broadcast %5 : vector<8x1xf32> to vector<8x512xf32>
    %623 = arith.mulf %621, %622 : vector<8x512xf32>
    %c0_200 = arith.constant 0 : index
    %c0_201 = arith.constant 0 : index
    %624 = vector.load %arg8[%c0_200, %c0_201] : memref<512x64xf32, #tpu.memory_space<vmem>>, vector<512x64xf32>
    %cst_202 = arith.constant dense<0.000000e+00> : vector<8x64xf32>
    %625 = tpu.matmul %623, %624, %cst_202 {dimension_numbers = #tpu.dot_dimension_numbers<[1], [0], [0], [1], [0, 0, 1, 1], [], []>} : vector<8x512xf32>, vector<512x64xf32>, vector<8x64xf32> -> vector<8x64xf32>
    %c0_203 = arith.constant 0 : index
    %c0_204 = arith.constant 0 : index
    %626 = vector.load %arg9[%c0_203, %c0_204] : memref<1x64xf32, #tpu.memory_space<vmem>>, vector<1x64xf32>
    %627 = vector.broadcast %626 : vector<1x64xf32> to vector<8x64xf32>
    %628 = arith.addf %625, %627 : vector<8x64xf32>
    %cst_205 = arith.constant dense<0.000000e+00> : vector<8xf32>
    %629 = vector.multi_reduction <add>, %628, %cst_205 [1] : vector<8x64xf32> to vector<8xf32>
    %630 = vector.shape_cast %629 : vector<8xf32> to vector<8x1xf32>
    %cst_206 = arith.constant 6.400000e+01 : f32
    %631 = vector.broadcast %cst_206 : f32 to vector<8x1xf32>
    %632 = arith.divf %630, %631 : vector<8x1xf32>
    %633 = vector.broadcast %632 : vector<8x1xf32> to vector<8x64xf32>
    %634 = arith.subf %628, %633 : vector<8x64xf32>
    %635 = arith.mulf %634, %634 : vector<8x64xf32>
    %cst_207 = arith.constant dense<0.000000e+00> : vector<8xf32>
    %636 = vector.multi_reduction <add>, %635, %cst_207 [1] : vector<8x64xf32> to vector<8xf32>
    %637 = vector.shape_cast %636 : vector<8xf32> to vector<8x1xf32>
    %cst_208 = arith.constant 6.400000e+01 : f32
    %638 = vector.broadcast %cst_208 : f32 to vector<8x1xf32>
    %639 = arith.divf %637, %638 : vector<8x1xf32>
    %640 = vector.broadcast %632 : vector<8x1xf32> to vector<8x64xf32>
    %641 = arith.subf %628, %640 : vector<8x64xf32>
    %cst_209 = arith.constant 9.99999974E-6 : f32
    %642 = vector.broadcast %cst_209 : f32 to vector<8x1xf32>
    %643 = arith.addf %639, %642 : vector<8x1xf32>
    %644 = math.rsqrt %643 : vector<8x1xf32>
    %645 = vector.broadcast %644 : vector<8x1xf32> to vector<8x64xf32>
    %646 = arith.mulf %641, %645 : vector<8x64xf32>
    %647 = arith.index_cast %c3_i32 : i32 to index
    %c0_210 = arith.constant 0 : index
    %c0_211 = arith.constant 0 : index
    %648 = vector.load %arg14[%647, %c0_210, %c0_211] : memref<5x64x64xf32, #tpu.memory_space<vmem>>, vector<1x64x64xf32>
    %649 = vector.shape_cast %648 : vector<1x64x64xf32> to vector<64x64xf32>
    %cst_212 = arith.constant dense<0.000000e+00> : vector<8x64xf32>
    %650 = tpu.matmul %646, %649, %cst_212 {dimension_numbers = #tpu.dot_dimension_numbers<[1], [0], [0], [1], [0, 0, 1, 1], [], []>} : vector<8x64xf32>, vector<64x64xf32>, vector<8x64xf32> -> vector<8x64xf32>
    %651 = arith.index_cast %c3_i32 : i32 to index
    %c0_213 = arith.constant 0 : index
    %c0_214 = arith.constant 0 : index
    %652 = vector.load %arg15[%651, %c0_213, %c0_214] : memref<5x1x64xf32, #tpu.memory_space<vmem>>, vector<1x1x64xf32>
    %653 = vector.shape_cast %652 : vector<1x1x64xf32> to vector<1x64xf32>
    %654 = vector.broadcast %653 : vector<1x64xf32> to vector<8x64xf32>
    %655 = arith.addf %650, %654 : vector<8x64xf32>
    %656 = arith.addf %655, %646 : vector<8x64xf32>
    %cst_215 = arith.constant dense<0.000000e+00> : vector<8xf32>
    %657 = vector.multi_reduction <add>, %656, %cst_215 [1] : vector<8x64xf32> to vector<8xf32>
    %658 = vector.shape_cast %657 : vector<8xf32> to vector<8x1xf32>
    %cst_216 = arith.constant 6.400000e+01 : f32
    %659 = vector.broadcast %cst_216 : f32 to vector<8x1xf32>
    %660 = arith.divf %658, %659 : vector<8x1xf32>
    %661 = vector.broadcast %660 : vector<8x1xf32> to vector<8x64xf32>
    %662 = arith.subf %656, %661 : vector<8x64xf32>
    %663 = arith.mulf %662, %662 : vector<8x64xf32>
    %cst_217 = arith.constant dense<0.000000e+00> : vector<8xf32>
    %664 = vector.multi_reduction <add>, %663, %cst_217 [1] : vector<8x64xf32> to vector<8xf32>
    %665 = vector.shape_cast %664 : vector<8xf32> to vector<8x1xf32>
    %cst_218 = arith.constant 6.400000e+01 : f32
    %666 = vector.broadcast %cst_218 : f32 to vector<8x1xf32>
    %667 = arith.divf %665, %666 : vector<8x1xf32>
    %668 = vector.broadcast %660 : vector<8x1xf32> to vector<8x64xf32>
    %669 = arith.subf %656, %668 : vector<8x64xf32>
    %cst_219 = arith.constant 9.99999974E-6 : f32
    %670 = vector.broadcast %cst_219 : f32 to vector<8x1xf32>
    %671 = arith.addf %667, %670 : vector<8x1xf32>
    %672 = math.rsqrt %671 : vector<8x1xf32>
    %673 = vector.broadcast %672 : vector<8x1xf32> to vector<8x64xf32>
    %674 = arith.mulf %669, %673 : vector<8x64xf32>
    %c0_220 = arith.constant 0 : index
    %c0_221 = arith.constant 0 : index
    %675 = vector.load %arg10[%c0_220, %c0_221] : memref<64x64xf32, #tpu.memory_space<vmem>>, vector<64x64xf32>
    %cst_222 = arith.constant dense<0.000000e+00> : vector<8x64xf32>
    %676 = tpu.matmul %674, %675, %cst_222 {dimension_numbers = #tpu.dot_dimension_numbers<[1], [0], [0], [1], [0, 0, 1, 1], [], []>} : vector<8x64xf32>, vector<64x64xf32>, vector<8x64xf32> -> vector<8x64xf32>
    %c0_223 = arith.constant 0 : index
    %c0_224 = arith.constant 0 : index
    %677 = vector.load %arg11[%c0_223, %c0_224] : memref<1x64xf32, #tpu.memory_space<vmem>>, vector<1x64xf32>
    %678 = vector.broadcast %677 : vector<1x64xf32> to vector<8x64xf32>
    %679 = arith.addf %676, %678 : vector<8x64xf32>
    %cst_225 = arith.constant 0.000000e+00 : f32
    %680 = vector.broadcast %cst_225 : f32 to vector<8x64xf32>
    %681 = arith.maximumf %679, %680 : vector<8x64xf32>
    %c0_226 = arith.constant 0 : index
    %c0_227 = arith.constant 0 : index
    %682 = vector.load %arg12[%c0_226, %c0_227] : memref<64x64xf32, #tpu.memory_space<vmem>>, vector<64x64xf32>
    %cst_228 = arith.constant dense<0.000000e+00> : vector<8x64xf32>
    %683 = tpu.matmul %681, %682, %cst_228 {dimension_numbers = #tpu.dot_dimension_numbers<[1], [0], [0], [1], [0, 0, 1, 1], [], []>} : vector<8x64xf32>, vector<64x64xf32>, vector<8x64xf32> -> vector<8x64xf32>
    %c0_229 = arith.constant 0 : index
    %c0_230 = arith.constant 0 : index
    %684 = vector.load %arg13[%c0_229, %c0_230] : memref<1x64xf32, #tpu.memory_space<vmem>>, vector<1x64xf32>
    %685 = vector.broadcast %684 : vector<1x64xf32> to vector<8x64xf32>
    %686 = arith.addf %683, %685 : vector<8x64xf32>
    %cst_231 = arith.constant dense<0.000000e+00> : vector<8xf32>
    %687 = vector.multi_reduction <add>, %686, %cst_231 [1] : vector<8x64xf32> to vector<8xf32>
    %688 = vector.shape_cast %687 : vector<8xf32> to vector<8x1xf32>
    %cst_232 = arith.constant 6.400000e+01 : f32
    %689 = vector.broadcast %cst_232 : f32 to vector<8x1xf32>
    %690 = arith.divf %688, %689 : vector<8x1xf32>
    %691 = vector.broadcast %690 : vector<8x1xf32> to vector<8x64xf32>
    %692 = arith.subf %686, %691 : vector<8x64xf32>
    %693 = arith.mulf %692, %692 : vector<8x64xf32>
    %cst_233 = arith.constant dense<0.000000e+00> : vector<8xf32>
    %694 = vector.multi_reduction <add>, %693, %cst_233 [1] : vector<8x64xf32> to vector<8xf32>
    %695 = vector.shape_cast %694 : vector<8xf32> to vector<8x1xf32>
    %cst_234 = arith.constant 6.400000e+01 : f32
    %696 = vector.broadcast %cst_234 : f32 to vector<8x1xf32>
    %697 = arith.divf %695, %696 : vector<8x1xf32>
    %698 = vector.broadcast %690 : vector<8x1xf32> to vector<8x64xf32>
    %699 = arith.subf %686, %698 : vector<8x64xf32>
    %cst_235 = arith.constant 9.99999974E-6 : f32
    %700 = vector.broadcast %cst_235 : f32 to vector<8x1xf32>
    %701 = arith.addf %697, %700 : vector<8x1xf32>
    %702 = math.rsqrt %701 : vector<8x1xf32>
    %703 = vector.broadcast %702 : vector<8x1xf32> to vector<8x64xf32>
    %704 = arith.mulf %699, %703 : vector<8x64xf32>
    %705 = arith.index_cast %c3_i32 : i32 to index
    %c0_236 = arith.constant 0 : index
    %c0_237 = arith.constant 0 : index
    %706 = vector.load %arg16[%705, %c0_236, %c0_237] : memref<5x64x64xf32, #tpu.memory_space<vmem>>, vector<1x64x64xf32>
    %707 = vector.shape_cast %706 : vector<1x64x64xf32> to vector<64x64xf32>
    %cst_238 = arith.constant dense<0.000000e+00> : vector<8x64xf32>
    %708 = tpu.matmul %704, %707, %cst_238 {dimension_numbers = #tpu.dot_dimension_numbers<[1], [0], [0], [1], [0, 0, 1, 1], [], []>} : vector<8x64xf32>, vector<64x64xf32>, vector<8x64xf32> -> vector<8x64xf32>
    %709 = arith.index_cast %c3_i32 : i32 to index
    %c0_239 = arith.constant 0 : index
    %c0_240 = arith.constant 0 : index
    %710 = vector.load %arg17[%709, %c0_239, %c0_240] : memref<5x1x64xf32, #tpu.memory_space<vmem>>, vector<1x1x64xf32>
    %711 = vector.shape_cast %710 : vector<1x1x64xf32> to vector<1x64xf32>
    %712 = vector.broadcast %711 : vector<1x64xf32> to vector<8x64xf32>
    %713 = arith.addf %708, %712 : vector<8x64xf32>
    %714 = arith.addf %713, %704 : vector<8x64xf32>
    %c4_i32 = arith.constant 4 : i32
    %cst_241 = arith.constant dense<0.000000e+00> : vector<8xf32>
    %715 = vector.multi_reduction <add>, %714, %cst_241 [1] : vector<8x64xf32> to vector<8xf32>
    %716 = vector.shape_cast %715 : vector<8xf32> to vector<8x1xf32>
    %cst_242 = arith.constant 6.400000e+01 : f32
    %717 = vector.broadcast %cst_242 : f32 to vector<8x1xf32>
    %718 = arith.divf %716, %717 : vector<8x1xf32>
    %719 = vector.broadcast %718 : vector<8x1xf32> to vector<8x64xf32>
    %720 = arith.subf %714, %719 : vector<8x64xf32>
    %721 = arith.mulf %720, %720 : vector<8x64xf32>
    %cst_243 = arith.constant dense<0.000000e+00> : vector<8xf32>
    %722 = vector.multi_reduction <add>, %721, %cst_243 [1] : vector<8x64xf32> to vector<8xf32>
    %723 = vector.shape_cast %722 : vector<8xf32> to vector<8x1xf32>
    %cst_244 = arith.constant 6.400000e+01 : f32
    %724 = vector.broadcast %cst_244 : f32 to vector<8x1xf32>
    %725 = arith.divf %723, %724 : vector<8x1xf32>
    %726 = vector.broadcast %718 : vector<8x1xf32> to vector<8x64xf32>
    %727 = arith.subf %714, %726 : vector<8x64xf32>
    %cst_245 = arith.constant 9.99999974E-6 : f32
    %728 = vector.broadcast %cst_245 : f32 to vector<8x1xf32>
    %729 = arith.addf %725, %728 : vector<8x1xf32>
    %730 = math.rsqrt %729 : vector<8x1xf32>
    %731 = vector.broadcast %730 : vector<8x1xf32> to vector<8x64xf32>
    %732 = arith.mulf %727, %731 : vector<8x64xf32>
    %c0_246 = arith.constant 0 : index
    %c0_247 = arith.constant 0 : index
    %733 = vector.load %arg4[%c0_246, %c0_247] : memref<64x512xf32, #tpu.memory_space<vmem>>, vector<64x512xf32>
    %cst_248 = arith.constant dense<0.000000e+00> : vector<8x512xf32>
    %734 = tpu.matmul %732, %733, %cst_248 {dimension_numbers = #tpu.dot_dimension_numbers<[1], [0], [0], [1], [0, 0, 1, 1], [], []>} : vector<8x64xf32>, vector<64x512xf32>, vector<8x512xf32> -> vector<8x512xf32>
    %c0_249 = arith.constant 0 : index
    %c0_250 = arith.constant 0 : index
    %735 = vector.load %arg5[%c0_249, %c0_250] : memref<1x512xf32, #tpu.memory_space<vmem>>, vector<1x512xf32>
    %736 = vector.broadcast %735 : vector<1x512xf32> to vector<8x512xf32>
    %737 = arith.addf %734, %736 : vector<8x512xf32>
    %cst_251 = arith.constant 1.250000e-01 : f32
    %738 = vector.broadcast %cst_251 : f32 to vector<8x512xf32>
    %739 = arith.mulf %737, %738 : vector<8x512xf32>
    %740 = vector.extract_strided_slice %739 {offsets = [0, 0], sizes = [8, 64], strides = [1, 1]} : vector<8x512xf32> to vector<8x64xf32>
    %741 = vector.extract_strided_slice %739 {offsets = [0, 64], sizes = [8, 64], strides = [1, 1]} : vector<8x512xf32> to vector<8x64xf32>
    %742 = vector.extract_strided_slice %739 {offsets = [0, 128], sizes = [8, 64], strides = [1, 1]} : vector<8x512xf32> to vector<8x64xf32>
    %743 = vector.extract_strided_slice %739 {offsets = [0, 192], sizes = [8, 64], strides = [1, 1]} : vector<8x512xf32> to vector<8x64xf32>
    %744 = vector.extract_strided_slice %739 {offsets = [0, 256], sizes = [8, 64], strides = [1, 1]} : vector<8x512xf32> to vector<8x64xf32>
    %745 = vector.extract_strided_slice %739 {offsets = [0, 320], sizes = [8, 64], strides = [1, 1]} : vector<8x512xf32> to vector<8x64xf32>
    %746 = vector.extract_strided_slice %739 {offsets = [0, 384], sizes = [8, 64], strides = [1, 1]} : vector<8x512xf32> to vector<8x64xf32>
    %747 = vector.extract_strided_slice %739 {offsets = [0, 448], sizes = [8, 64], strides = [1, 1]} : vector<8x512xf32> to vector<8x64xf32>
    %748 = vector.shape_cast %740 : vector<8x64xf32> to vector<1x8x64xf32>
    %749 = vector.shape_cast %741 : vector<8x64xf32> to vector<1x8x64xf32>
    %750 = vector.shape_cast %742 : vector<8x64xf32> to vector<1x8x64xf32>
    %751 = vector.shape_cast %743 : vector<8x64xf32> to vector<1x8x64xf32>
    %752 = vector.shape_cast %744 : vector<8x64xf32> to vector<1x8x64xf32>
    %753 = vector.shape_cast %745 : vector<8x64xf32> to vector<1x8x64xf32>
    %754 = vector.shape_cast %746 : vector<8x64xf32> to vector<1x8x64xf32>
    %755 = vector.shape_cast %747 : vector<8x64xf32> to vector<1x8x64xf32>
    %756 = tpu.concatenate %748, %749, %750, %751, %752, %753, %754, %755 in 0 : vector<1x8x64xf32>, vector<1x8x64xf32>, vector<1x8x64xf32>, vector<1x8x64xf32>, vector<1x8x64xf32>, vector<1x8x64xf32>, vector<1x8x64xf32>, vector<1x8x64xf32> -> vector<8x8x64xf32>
    "tpu.trace_start"() <{level = 10 : i32, message = "hqd,hkd->hqk"}> : () -> ()
    %cst_252 = arith.constant dense<0.000000e+00> : vector<8x8x8xf32>
    %757 = tpu.matmul %756, %45, %cst_252 {dimension_numbers = #tpu.dot_dimension_numbers<[2], [2], [1], [1], [0, 0, 0, 1, 1, 1], [0], [0]>} : vector<8x8x64xf32>, vector<8x8x64xf32>, vector<8x8x8xf32> -> vector<8x8x8xf32>
    "tpu.trace_stop"() : () -> ()
    %cst_253 = arith.constant dense<0xFF800000> : vector<8x8xf32>
    %758 = vector.multi_reduction <maximumf>, %757, %cst_253 [2] : vector<8x8x8xf32> to vector<8x8xf32>
    %759 = vector.shape_cast %758 : vector<8x8xf32> to vector<8x8x1xf32>
    %760 = vector.broadcast %759 : vector<8x8x1xf32> to vector<8x8x8xf32>
    %761 = arith.subf %757, %760 : vector<8x8x8xf32>
    %762 = math.exp %761 : vector<8x8x8xf32>
    %cst_254 = arith.constant dense<0.000000e+00> : vector<8x8xf32>
    %763 = vector.multi_reduction <add>, %762, %cst_254 [2] : vector<8x8x8xf32> to vector<8x8xf32>
    %764 = vector.shape_cast %763 : vector<8x8xf32> to vector<8x8x1xf32>
    %765 = vector.broadcast %764 : vector<8x8x1xf32> to vector<8x8x8xf32>
    %766 = arith.divf %762, %765 : vector<8x8x8xf32>
    "tpu.trace_start"() <{level = 10 : i32, message = "hqk,hkd->hqd"}> : () -> ()
    %cst_255 = arith.constant dense<0.000000e+00> : vector<8x8x64xf32>
    %767 = tpu.matmul %766, %62, %cst_255 {dimension_numbers = #tpu.dot_dimension_numbers<[2], [1], [1], [2], [0, 0, 0, 1, 1, 2], [0], [0]>} : vector<8x8x8xf32>, vector<8x8x64xf32>, vector<8x8x64xf32> -> vector<8x8x64xf32>
    "tpu.trace_stop"() : () -> ()
    %768 = vector.extract_strided_slice %767 {offsets = [0, 0, 0], sizes = [1, 8, 64], strides = [1, 1, 1]} : vector<8x8x64xf32> to vector<1x8x64xf32>
    %769 = vector.shape_cast %768 : vector<1x8x64xf32> to vector<8x64xf32>
    %770 = vector.extract_strided_slice %767 {offsets = [1, 0, 0], sizes = [1, 8, 64], strides = [1, 1, 1]} : vector<8x8x64xf32> to vector<1x8x64xf32>
    %771 = vector.shape_cast %770 : vector<1x8x64xf32> to vector<8x64xf32>
    %772 = vector.extract_strided_slice %767 {offsets = [2, 0, 0], sizes = [1, 8, 64], strides = [1, 1, 1]} : vector<8x8x64xf32> to vector<1x8x64xf32>
    %773 = vector.shape_cast %772 : vector<1x8x64xf32> to vector<8x64xf32>
    %774 = vector.extract_strided_slice %767 {offsets = [3, 0, 0], sizes = [1, 8, 64], strides = [1, 1, 1]} : vector<8x8x64xf32> to vector<1x8x64xf32>
    %775 = vector.shape_cast %774 : vector<1x8x64xf32> to vector<8x64xf32>
    %776 = vector.extract_strided_slice %767 {offsets = [4, 0, 0], sizes = [1, 8, 64], strides = [1, 1, 1]} : vector<8x8x64xf32> to vector<1x8x64xf32>
    %777 = vector.shape_cast %776 : vector<1x8x64xf32> to vector<8x64xf32>
    %778 = vector.extract_strided_slice %767 {offsets = [5, 0, 0], sizes = [1, 8, 64], strides = [1, 1, 1]} : vector<8x8x64xf32> to vector<1x8x64xf32>
    %779 = vector.shape_cast %778 : vector<1x8x64xf32> to vector<8x64xf32>
    %780 = vector.extract_strided_slice %767 {offsets = [6, 0, 0], sizes = [1, 8, 64], strides = [1, 1, 1]} : vector<8x8x64xf32> to vector<1x8x64xf32>
    %781 = vector.shape_cast %780 : vector<1x8x64xf32> to vector<8x64xf32>
    %782 = vector.extract_strided_slice %767 {offsets = [7, 0, 0], sizes = [1, 8, 64], strides = [1, 1, 1]} : vector<8x8x64xf32> to vector<1x8x64xf32>
    %783 = vector.shape_cast %782 : vector<1x8x64xf32> to vector<8x64xf32>
    %784 = tpu.concatenate %769, %771, %773, %775, %777, %779, %781, %783 in 1 : vector<8x64xf32>, vector<8x64xf32>, vector<8x64xf32>, vector<8x64xf32>, vector<8x64xf32>, vector<8x64xf32>, vector<8x64xf32>, vector<8x64xf32> -> vector<8x512xf32>
    %785 = vector.broadcast %5 : vector<8x1xf32> to vector<8x512xf32>
    %786 = arith.mulf %784, %785 : vector<8x512xf32>
    %c0_256 = arith.constant 0 : index
    %c0_257 = arith.constant 0 : index
    %787 = vector.load %arg8[%c0_256, %c0_257] : memref<512x64xf32, #tpu.memory_space<vmem>>, vector<512x64xf32>
    %cst_258 = arith.constant dense<0.000000e+00> : vector<8x64xf32>
    %788 = tpu.matmul %786, %787, %cst_258 {dimension_numbers = #tpu.dot_dimension_numbers<[1], [0], [0], [1], [0, 0, 1, 1], [], []>} : vector<8x512xf32>, vector<512x64xf32>, vector<8x64xf32> -> vector<8x64xf32>
    %c0_259 = arith.constant 0 : index
    %c0_260 = arith.constant 0 : index
    %789 = vector.load %arg9[%c0_259, %c0_260] : memref<1x64xf32, #tpu.memory_space<vmem>>, vector<1x64xf32>
    %790 = vector.broadcast %789 : vector<1x64xf32> to vector<8x64xf32>
    %791 = arith.addf %788, %790 : vector<8x64xf32>
    %cst_261 = arith.constant dense<0.000000e+00> : vector<8xf32>
    %792 = vector.multi_reduction <add>, %791, %cst_261 [1] : vector<8x64xf32> to vector<8xf32>
    %793 = vector.shape_cast %792 : vector<8xf32> to vector<8x1xf32>
    %cst_262 = arith.constant 6.400000e+01 : f32
    %794 = vector.broadcast %cst_262 : f32 to vector<8x1xf32>
    %795 = arith.divf %793, %794 : vector<8x1xf32>
    %796 = vector.broadcast %795 : vector<8x1xf32> to vector<8x64xf32>
    %797 = arith.subf %791, %796 : vector<8x64xf32>
    %798 = arith.mulf %797, %797 : vector<8x64xf32>
    %cst_263 = arith.constant dense<0.000000e+00> : vector<8xf32>
    %799 = vector.multi_reduction <add>, %798, %cst_263 [1] : vector<8x64xf32> to vector<8xf32>
    %800 = vector.shape_cast %799 : vector<8xf32> to vector<8x1xf32>
    %cst_264 = arith.constant 6.400000e+01 : f32
    %801 = vector.broadcast %cst_264 : f32 to vector<8x1xf32>
    %802 = arith.divf %800, %801 : vector<8x1xf32>
    %803 = vector.broadcast %795 : vector<8x1xf32> to vector<8x64xf32>
    %804 = arith.subf %791, %803 : vector<8x64xf32>
    %cst_265 = arith.constant 9.99999974E-6 : f32
    %805 = vector.broadcast %cst_265 : f32 to vector<8x1xf32>
    %806 = arith.addf %802, %805 : vector<8x1xf32>
    %807 = math.rsqrt %806 : vector<8x1xf32>
    %808 = vector.broadcast %807 : vector<8x1xf32> to vector<8x64xf32>
    %809 = arith.mulf %804, %808 : vector<8x64xf32>
    %810 = arith.index_cast %c4_i32 : i32 to index
    %c0_266 = arith.constant 0 : index
    %c0_267 = arith.constant 0 : index
    %811 = vector.load %arg14[%810, %c0_266, %c0_267] : memref<5x64x64xf32, #tpu.memory_space<vmem>>, vector<1x64x64xf32>
    %812 = vector.shape_cast %811 : vector<1x64x64xf32> to vector<64x64xf32>
    %cst_268 = arith.constant dense<0.000000e+00> : vector<8x64xf32>
    %813 = tpu.matmul %809, %812, %cst_268 {dimension_numbers = #tpu.dot_dimension_numbers<[1], [0], [0], [1], [0, 0, 1, 1], [], []>} : vector<8x64xf32>, vector<64x64xf32>, vector<8x64xf32> -> vector<8x64xf32>
    %814 = arith.index_cast %c4_i32 : i32 to index
    %c0_269 = arith.constant 0 : index
    %c0_270 = arith.constant 0 : index
    %815 = vector.load %arg15[%814, %c0_269, %c0_270] : memref<5x1x64xf32, #tpu.memory_space<vmem>>, vector<1x1x64xf32>
    %816 = vector.shape_cast %815 : vector<1x1x64xf32> to vector<1x64xf32>
    %817 = vector.broadcast %816 : vector<1x64xf32> to vector<8x64xf32>
    %818 = arith.addf %813, %817 : vector<8x64xf32>
    %819 = arith.addf %818, %809 : vector<8x64xf32>
    %cst_271 = arith.constant dense<0.000000e+00> : vector<8xf32>
    %820 = vector.multi_reduction <add>, %819, %cst_271 [1] : vector<8x64xf32> to vector<8xf32>
    %821 = vector.shape_cast %820 : vector<8xf32> to vector<8x1xf32>
    %cst_272 = arith.constant 6.400000e+01 : f32
    %822 = vector.broadcast %cst_272 : f32 to vector<8x1xf32>
    %823 = arith.divf %821, %822 : vector<8x1xf32>
    %824 = vector.broadcast %823 : vector<8x1xf32> to vector<8x64xf32>
    %825 = arith.subf %819, %824 : vector<8x64xf32>
    %826 = arith.mulf %825, %825 : vector<8x64xf32>
    %cst_273 = arith.constant dense<0.000000e+00> : vector<8xf32>
    %827 = vector.multi_reduction <add>, %826, %cst_273 [1] : vector<8x64xf32> to vector<8xf32>
    %828 = vector.shape_cast %827 : vector<8xf32> to vector<8x1xf32>
    %cst_274 = arith.constant 6.400000e+01 : f32
    %829 = vector.broadcast %cst_274 : f32 to vector<8x1xf32>
    %830 = arith.divf %828, %829 : vector<8x1xf32>
    %831 = vector.broadcast %823 : vector<8x1xf32> to vector<8x64xf32>
    %832 = arith.subf %819, %831 : vector<8x64xf32>
    %cst_275 = arith.constant 9.99999974E-6 : f32
    %833 = vector.broadcast %cst_275 : f32 to vector<8x1xf32>
    %834 = arith.addf %830, %833 : vector<8x1xf32>
    %835 = math.rsqrt %834 : vector<8x1xf32>
    %836 = vector.broadcast %835 : vector<8x1xf32> to vector<8x64xf32>
    %837 = arith.mulf %832, %836 : vector<8x64xf32>
    %c0_276 = arith.constant 0 : index
    %c0_277 = arith.constant 0 : index
    %838 = vector.load %arg10[%c0_276, %c0_277] : memref<64x64xf32, #tpu.memory_space<vmem>>, vector<64x64xf32>
    %cst_278 = arith.constant dense<0.000000e+00> : vector<8x64xf32>
    %839 = tpu.matmul %837, %838, %cst_278 {dimension_numbers = #tpu.dot_dimension_numbers<[1], [0], [0], [1], [0, 0, 1, 1], [], []>} : vector<8x64xf32>, vector<64x64xf32>, vector<8x64xf32> -> vector<8x64xf32>
    %c0_279 = arith.constant 0 : index
    %c0_280 = arith.constant 0 : index
    %840 = vector.load %arg11[%c0_279, %c0_280] : memref<1x64xf32, #tpu.memory_space<vmem>>, vector<1x64xf32>
    %841 = vector.broadcast %840 : vector<1x64xf32> to vector<8x64xf32>
    %842 = arith.addf %839, %841 : vector<8x64xf32>
    %cst_281 = arith.constant 0.000000e+00 : f32
    %843 = vector.broadcast %cst_281 : f32 to vector<8x64xf32>
    %844 = arith.maximumf %842, %843 : vector<8x64xf32>
    %c0_282 = arith.constant 0 : index
    %c0_283 = arith.constant 0 : index
    %845 = vector.load %arg12[%c0_282, %c0_283] : memref<64x64xf32, #tpu.memory_space<vmem>>, vector<64x64xf32>
    %cst_284 = arith.constant dense<0.000000e+00> : vector<8x64xf32>
    %846 = tpu.matmul %844, %845, %cst_284 {dimension_numbers = #tpu.dot_dimension_numbers<[1], [0], [0], [1], [0, 0, 1, 1], [], []>} : vector<8x64xf32>, vector<64x64xf32>, vector<8x64xf32> -> vector<8x64xf32>
    %c0_285 = arith.constant 0 : index
    %c0_286 = arith.constant 0 : index
    %847 = vector.load %arg13[%c0_285, %c0_286] : memref<1x64xf32, #tpu.memory_space<vmem>>, vector<1x64xf32>
    %848 = vector.broadcast %847 : vector<1x64xf32> to vector<8x64xf32>
    %849 = arith.addf %846, %848 : vector<8x64xf32>
    %cst_287 = arith.constant dense<0.000000e+00> : vector<8xf32>
    %850 = vector.multi_reduction <add>, %849, %cst_287 [1] : vector<8x64xf32> to vector<8xf32>
    %851 = vector.shape_cast %850 : vector<8xf32> to vector<8x1xf32>
    %cst_288 = arith.constant 6.400000e+01 : f32
    %852 = vector.broadcast %cst_288 : f32 to vector<8x1xf32>
    %853 = arith.divf %851, %852 : vector<8x1xf32>
    %854 = vector.broadcast %853 : vector<8x1xf32> to vector<8x64xf32>
    %855 = arith.subf %849, %854 : vector<8x64xf32>
    %856 = arith.mulf %855, %855 : vector<8x64xf32>
    %cst_289 = arith.constant dense<0.000000e+00> : vector<8xf32>
    %857 = vector.multi_reduction <add>, %856, %cst_289 [1] : vector<8x64xf32> to vector<8xf32>
    %858 = vector.shape_cast %857 : vector<8xf32> to vector<8x1xf32>
    %cst_290 = arith.constant 6.400000e+01 : f32
    %859 = vector.broadcast %cst_290 : f32 to vector<8x1xf32>
    %860 = arith.divf %858, %859 : vector<8x1xf32>
    %861 = vector.broadcast %853 : vector<8x1xf32> to vector<8x64xf32>
    %862 = arith.subf %849, %861 : vector<8x64xf32>
    %cst_291 = arith.constant 9.99999974E-6 : f32
    %863 = vector.broadcast %cst_291 : f32 to vector<8x1xf32>
    %864 = arith.addf %860, %863 : vector<8x1xf32>
    %865 = math.rsqrt %864 : vector<8x1xf32>
    %866 = vector.broadcast %865 : vector<8x1xf32> to vector<8x64xf32>
    %867 = arith.mulf %862, %866 : vector<8x64xf32>
    %868 = arith.index_cast %c4_i32 : i32 to index
    %c0_292 = arith.constant 0 : index
    %c0_293 = arith.constant 0 : index
    %869 = vector.load %arg16[%868, %c0_292, %c0_293] : memref<5x64x64xf32, #tpu.memory_space<vmem>>, vector<1x64x64xf32>
    %870 = vector.shape_cast %869 : vector<1x64x64xf32> to vector<64x64xf32>
    %cst_294 = arith.constant dense<0.000000e+00> : vector<8x64xf32>
    %871 = tpu.matmul %867, %870, %cst_294 {dimension_numbers = #tpu.dot_dimension_numbers<[1], [0], [0], [1], [0, 0, 1, 1], [], []>} : vector<8x64xf32>, vector<64x64xf32>, vector<8x64xf32> -> vector<8x64xf32>
    %872 = arith.index_cast %c4_i32 : i32 to index
    %c0_295 = arith.constant 0 : index
    %c0_296 = arith.constant 0 : index
    %873 = vector.load %arg17[%872, %c0_295, %c0_296] : memref<5x1x64xf32, #tpu.memory_space<vmem>>, vector<1x1x64xf32>
    %874 = vector.shape_cast %873 : vector<1x1x64xf32> to vector<1x64xf32>
    %875 = vector.broadcast %874 : vector<1x64xf32> to vector<8x64xf32>
    %876 = arith.addf %871, %875 : vector<8x64xf32>
    %877 = arith.addf %876, %867 : vector<8x64xf32>
    %c5_i32 = arith.constant 5 : i32
    %c0_297 = arith.constant 0 : index
    %c0_298 = arith.constant 0 : index
    %c0_299 = arith.constant 0 : index
    %878 = vector.load %arg18[%c0_297, %c0_298, %c0_299] : memref<1x8x64xf32, #tpu.memory_space<vmem>>, vector<1x8x64xf32>
    %879 = vector.shape_cast %878 : vector<1x8x64xf32> to vector<8x64xf32>
    %880 = vector.shape_cast %877 : vector<8x64xf32> to vector<1x8x64xf32>
    tpu.vector_store %arg18[%c0_297, %c0_298, %c0_299], %880 {strides = array<i32>} : memref<1x8x64xf32, #tpu.memory_space<vmem>>, vector<1x8x64xf32>,
    return
  }
  func.func @transform_0(%arg0: i32) -> (i32, i32, i32) {
    %c0_i32 = arith.constant 0 : i32
    %c0_i32_0 = arith.constant 0 : i32
    %c0_i32_1 = arith.constant 0 : i32
    return %arg0, %c0_i32, %c0_i32_0 : i32, i32, i32
  }
  func.func @transform_1(%arg0: i32) -> (i32, i32, i32) {
    %c0_i32 = arith.constant 0 : i32
    %c0_i32_0 = arith.constant 0 : i32
    %c0_i32_1 = arith.constant 0 : i32
    return %arg0, %c0_i32, %c0_i32_0 : i32, i32, i32
  }
  func.func @transform_2(%arg0: i32) -> (i32, i32, i32) {
    %c0_i32 = arith.constant 0 : i32
    %c0_i32_0 = arith.constant 0 : i32
    %c0_i32_1 = arith.constant 0 : i32
    return %arg0, %c0_i32, %c0_i32_0 : i32, i32, i32
  }
  func.func @transform_3(%arg0: i32) -> (i32, i32) {
    %c0_i32 = arith.constant 0 : i32
    %c0_i32_0 = arith.constant 0 : i32
    %c0_i32_1 = arith.constant 0 : i32
    return %c0_i32, %c0_i32_0 : i32, i32
  }
  func.func @transform_4(%arg0: i32) -> (i32, i32) {
    %c0_i32 = arith.constant 0 : i32
    %c0_i32_0 = arith.constant 0 : i32
    %c0_i32_1 = arith.constant 0 : i32
    return %c0_i32, %c0_i32_0 : i32, i32
  }
  func.func @transform_5(%arg0: i32) -> (i32, i32) {
    %c0_i32 = arith.constant 0 : i32
    %c0_i32_0 = arith.constant 0 : i32
    %c0_i32_1 = arith.constant 0 : i32
    return %c0_i32, %c0_i32_0 : i32, i32
  }
  func.func @transform_6(%arg0: i32) -> (i32, i32) {
    %c0_i32 = arith.constant 0 : i32
    %c0_i32_0 = arith.constant 0 : i32
    %c0_i32_1 = arith.constant 0 : i32
    return %c0_i32, %c0_i32_0 : i32, i32
  }
  func.func @transform_7(%arg0: i32) -> (i32, i32) {
    %c0_i32 = arith.constant 0 : i32
    %c0_i32_0 = arith.constant 0 : i32
    %c0_i32_1 = arith.constant 0 : i32
    return %c0_i32, %c0_i32_0 : i32, i32
  }
  func.func @transform_8(%arg0: i32) -> (i32, i32) {
    %c0_i32 = arith.constant 0 : i32
    %c0_i32_0 = arith.constant 0 : i32
    %c0_i32_1 = arith.constant 0 : i32
    return %c0_i32, %c0_i32_0 : i32, i32
  }
  func.func @transform_9(%arg0: i32) -> (i32, i32) {
    %c0_i32 = arith.constant 0 : i32
    %c0_i32_0 = arith.constant 0 : i32
    %c0_i32_1 = arith.constant 0 : i32
    return %c0_i32, %c0_i32_0 : i32, i32
  }
  func.func @transform_10(%arg0: i32) -> (i32, i32) {
    %c0_i32 = arith.constant 0 : i32
    %c0_i32_0 = arith.constant 0 : i32
    %c0_i32_1 = arith.constant 0 : i32
    return %c0_i32, %c0_i32_0 : i32, i32
  }
  func.func @transform_11(%arg0: i32) -> (i32, i32) {
    %c0_i32 = arith.constant 0 : i32
    %c0_i32_0 = arith.constant 0 : i32
    %c0_i32_1 = arith.constant 0 : i32
    return %c0_i32, %c0_i32_0 : i32, i32
  }
  func.func @transform_12(%arg0: i32) -> (i32, i32) {
    %c0_i32 = arith.constant 0 : i32
    %c0_i32_0 = arith.constant 0 : i32
    %c0_i32_1 = arith.constant 0 : i32
    return %c0_i32, %c0_i32_0 : i32, i32
  }
  func.func @transform_13(%arg0: i32) -> (i32, i32, i32) {
    %c0_i32 = arith.constant 0 : i32
    %c0_i32_0 = arith.constant 0 : i32
    %c0_i32_1 = arith.constant 0 : i32
    %c0_i32_2 = arith.constant 0 : i32
    return %c0_i32, %c0_i32_0, %c0_i32_1 : i32, i32, i32
  }
  func.func @transform_14(%arg0: i32) -> (i32, i32, i32) {
    %c0_i32 = arith.constant 0 : i32
    %c0_i32_0 = arith.constant 0 : i32
    %c0_i32_1 = arith.constant 0 : i32
    %c0_i32_2 = arith.constant 0 : i32
    return %c0_i32, %c0_i32_0, %c0_i32_1 : i32, i32, i32
  }
  func.func @transform_15(%arg0: i32) -> (i32, i32, i32) {
    %c0_i32 = arith.constant 0 : i32
    %c0_i32_0 = arith.constant 0 : i32
    %c0_i32_1 = arith.constant 0 : i32
    %c0_i32_2 = arith.constant 0 : i32
    return %c0_i32, %c0_i32_0, %c0_i32_1 : i32, i32, i32
  }
  func.func @transform_16(%arg0: i32) -> (i32, i32, i32) {
    %c0_i32 = arith.constant 0 : i32
    %c0_i32_0 = arith.constant 0 : i32
    %c0_i32_1 = arith.constant 0 : i32
    %c0_i32_2 = arith.constant 0 : i32
    return %c0_i32, %c0_i32_0, %c0_i32_1 : i32, i32, i32
  }
  func.func @transform_17(%arg0: i32) -> (i32, i32, i32) {
    %c0_i32 = arith.constant 0 : i32
    %c0_i32_0 = arith.constant 0 : i32
    %c0_i32_1 = arith.constant 0 : i32
    return %arg0, %c0_i32, %c0_i32_0 : i32, i32, i32
  }
}

</mosaic_0001>

<llo_original>
// kernel: _lambda_.1
$region0: #{_lambda_.1}
  #allocation0 [shape = 'u32[]', space=smem, size = 0x4, offset = 0x4, fixed_abs, tag = 'smem constant byte address 0x4 - core index']
  #allocation1 [shape = 'u32[72,128]{1,0:T(1,128)}', space=vmem, size = 0x9000, scoped, tag = 'internal scratch']
  %s0 = inlined_call_operand.vmem [shape: f32[2,8,64], index: 0, kind: input, shape index: {}]
  %s1 = inlined_call_operand.vmem [shape: f32[2,8,64], index: 1, kind: input, shape index: {}]
  %s2 = inlined_call_operand.vmem [shape: f32[2,8,1], index: 2, kind: input, shape index: {}]
  %s3 = inlined_call_operand.hbm [shape: f32[64,512], index: 3, kind: input, shape index: {}]
  %s4 = inlined_call_operand.hbm [shape: f32[1,512], index: 4, kind: input, shape index: {}]
  %s5 = inlined_call_operand.hbm [shape: f32[64,1024], index: 5, kind: input, shape index: {}]
  %s6 = inlined_call_operand.vmem [shape: f32[1,1024], index: 6, kind: input, shape index: {}]
  %s7 = inlined_call_operand.hbm [shape: f32[512,64], index: 7, kind: input, shape index: {}]
  %s8 = inlined_call_operand.vmem [shape: f32[1,64], index: 8, kind: input, shape index: {}]
  %s9 = inlined_call_operand.hbm [shape: f32[64,64], index: 9, kind: input, shape index: {}]
  %s10 = inlined_call_operand.vmem [shape: f32[1,64], index: 10, kind: input, shape index: {}]
  %s11 = inlined_call_operand.hbm [shape: f32[64,64], index: 11, kind: input, shape index: {}]
  %s12 = inlined_call_operand.vmem [shape: f32[1,64], index: 12, kind: input, shape index: {}]
  %s13 = inlined_call_operand.hbm [shape: f32[5,64,64], index: 13, kind: input, shape index: {}]
  %s14 = inlined_call_operand.vmem [shape: f32[5,1,64], index: 14, kind: input, shape index: {}]
  %s15 = inlined_call_operand.hbm [shape: f32[5,64,64], index: 15, kind: input, shape index: {}]
  %s16 = inlined_call_operand.vmem [shape: f32[5,1,64], index: 16, kind: input, shape index: {}]
  %s17 = inlined_call_operand.hbm [shape: f32[2,8,64], index: 17, kind: output, shape index: {}]
  %s18 = sld [smem:[#allocation0]]
  $region133: #{_lambda_.1} parent=0
    _
  %s20 = ssub.s32 1, %s18
  %s21 = scalar_select 0, %s20, %s18
  $region1: #{_lambda_.1} parent=0
    #allocation2 [shape = 'u8[131072]{0}', space=vmem, size = 0x20000, scoped, tag = 'input window, operand 3, single buffered']
    #allocation3 [shape = 's32[2]{0}', space=sflag, size = 0x8, scoped, tag = 'scoped memory for _lambda_.1']
    #allocation4 [shape = 's32[2]{0}', space=sflag, size = 0x8, scoped, tag = 'scoped memory for _lambda_.1']
    #allocation5 [shape = 'u8[2048]{0}', space=vmem, size = 0x800, scoped, tag = 'input window, operand 4, single buffered']
    #allocation6 [shape = 's32[1]{0}', space=sflag, size = 0x4, scoped, tag = 'scoped memory for _lambda_.1']
    #allocation7 [shape = 'u8[262144]{0}', space=vmem, size = 0x40000, scoped, tag = 'input window, operand 5, single buffered']
    #allocation8 [shape = 'u8[262144]{0}', space=vmem, size = 0x40000, scoped, tag = 'input window, operand 7, single buffered']
    #allocation9 [shape = 's32[1]{0}', space=sflag, size = 0x4, scoped, tag = 'scoped memory for _lambda_.1']
    #allocation10 [shape = 'u8[32768]{0}', space=vmem, size = 0x8000, scoped, tag = 'input window, operand 9, single buffered']
    #allocation11 [shape = 'u8[32768]{0}', space=vmem, size = 0x8000, scoped, tag = 'input window, operand 11, single buffered']
    #allocation12 [shape = 's32[1]{0}', space=sflag, size = 0x4, scoped, tag = 'scoped memory for _lambda_.1']
    #allocation13 [shape = 'u8[163840]{0}', space=vmem, size = 0x28000, scoped, tag = 'input window, operand 13, single buffered']
    #allocation14 [shape = 'u8[163840]{0}', space=vmem, size = 0x28000, scoped, tag = 'input window, operand 15, single buffered']
    #allocation15 [shape = 's32[1]{0}', space=sflag, size = 0x4, scoped, tag = 'scoped memory for _lambda_.1']
    #allocation16 [shape = 'u8[8192]{0}', space=vmem, size = 0x2000, scoped, tag = 'output window, operand 0']
    %22 = vsyncpa [#allocation3], 0
    %23 = vsyncpa [#allocation6], 0
    %24 = vsyncpa [#allocation9], 0
    %25 = vsyncpa [#allocation12], 0
    %26 = vsyncpa [#allocation15], 0
    %27 = vsyncpa [#allocation4], 0
    %s28 = scalar_lea.sflag [#allocation4], 1
    %29 = vsyncpa %s28, 0
    loop: start=0, step=1, limit=4
    $region2: #{_lambda_.1} parent=1 // loop_pre_header
      _
    $region3: #{_lambda_.1} parent=1 // loop_header
      %s31 = sphi 0, %s35
      %p32 = scmp.ge.s32.totalorder %s31, 4
      %s41 = sphi 0, %s43
      %s44 = sphi 0, %s41
      %s45 = sphi 0, %s44
      %s61 = sphi 0, %s45
      %s67 = sphi 0, %s69
      %s70 = sphi 0, %s67
      %s71 = sphi 0, %s70
      %s87 = sphi 0, %s71
      %s93 = sphi 0, %s95
      %s96 = sphi 0, %s93
      %s97 = sphi 0, %s96
      %s113 = sphi 0, %s97
      %s117 = sphi 0, %s117
      %s119 = sphi 0, %s117
      %s120 = sphi 0, %s119
      %s134 = sphi 0, %s120
      %s138 = sphi 0, %s138
      %s140 = sphi 0, %s138
      %s141 = sphi 0, %s140
      %s155 = sphi 0, %s141
      %s159 = sphi 0, %s159
      %s161 = sphi 0, %s159
      %s162 = sphi 0, %s161
      %s176 = sphi 0, %s162
      %s180 = sphi 0, %s180
      %s182 = sphi 0, %s180
      %s183 = sphi 0, %s182
      %s197 = sphi 0, %s183
      %s201 = sphi 0, %s201
      %s203 = sphi 0, %s201
      %s204 = sphi 0, %s203
      %s218 = sphi 0, %s204
      %s222 = sphi 0, %s222
      %s224 = sphi 0, %s222
      %s225 = sphi 0, %s224
      %s239 = sphi 0, %s225
      %s243 = sphi 0, %s243
      %s245 = sphi 0, %s243
      %s246 = sphi 0, %s245
      %s260 = sphi 0, %s246
      %s264 = sphi 0, %s264
      %s266 = sphi 0, %s264
      %s267 = sphi 0, %s266
      %s281 = sphi 0, %s267
      %s285 = sphi 0, %s285
      %s287 = sphi 0, %s285
      %s288 = sphi 0, %s287
      %s302 = sphi 0, %s288
      %s306 = sphi 0, %s306
      %s308 = sphi 0, %s306
      %s309 = sphi 0, %s308
      %s323 = sphi 0, %s309
      %s327 = sphi 0, %s327
      %s329 = sphi 0, %s327
      %s330 = sphi 0, %s329
      %s344 = sphi 0, %s330
      %s348 = sphi 0, %s348
      %s350 = sphi 0, %s348
      %s351 = sphi 0, %s350
      %s365 = sphi 0, %s351
      %s369 = sphi 0, %s369
      %s371 = sphi 0, %s369
      %s372 = sphi 0, %s371
      %s386 = sphi 0, %s372
      %s390 = sphi 0, %s390
      %s392 = sphi 0, %s390
      %s393 = sphi 0, %s392
      %s407 = sphi 0, %s393
      %s413 = sphi 0, %s415
      %s416 = sphi 0, %s413
      %s417 = sphi 0, %s416
      %s433 = sphi 0, %s417
    $region4: #{_lambda_.1} parent=1 // loop_header_branch
      %34 = sbr.rel (%p32) target = $region8
    $region5: #{_lambda_.1} parent=1 // loop_body
      %s36 = ssub.s32 %s31, 1
      %s37 = ssub.s32 %s31, 2
      %s38 = sadd.s32 %s31, 1
      %s39 = ssub.s32 %s31, %s38
      %p40 = scmp.eq.s32.totalorder %s39, 0
      %s42 = sadd.s32 %s41, 1
      %s43 = scalar_select %p40, %s41, %s42
      %p46 = pneg %p40
      %p47 = scmp.eq.s32.totalorder %s31, 1
      %p48 = por %p46, %p47
      %p49 = scmp.ne.s32.totalorder %s41, %s44
      %p50 = scmp.eq.s32.totalorder %s31, 0
      %p51 = por %p49, %p50
      %p52 = scmp.ne.s32.totalorder %s41, %s44
      %p53 = scmp.eq.s32.totalorder %s36, 1
      %p54 = por %p52, %p53
      %p55 = scmp.ne.s32.totalorder %s44, %s45
      %p56 = scmp.eq.s32.totalorder %s36, 0
      %p57 = por %p55, %p56
      %p58 = scmp.ne.s32.totalorder %s44, %s45
      %p59 = scmp.eq.s32.totalorder %s37, 1
      %p60 = por %p58, %p59
      %p62 = scmp.ne.s32.totalorder %s45, %s61
      %p63 = scmp.eq.s32.totalorder %s37, 0
      %p64 = por %p62, %p63
      %s65 = ssub.s32 %s31, %s38
      %p66 = scmp.eq.s32.totalorder %s65, 0
      %s68 = sadd.s32 %s67, 1
      %s69 = scalar_select %p66, %s67, %s68
      %p72 = pneg %p66
      %p73 = scmp.eq.s32.totalorder %s31, 1
      %p74 = por %p72, %p73
      %p75 = scmp.ne.s32.totalorder %s67, %s70
      %p76 = scmp.eq.s32.totalorder %s31, 0
      %p77 = por %p75, %p76
      %p78 = scmp.ne.s32.totalorder %s67, %s70
      %p79 = scmp.eq.s32.totalorder %s36, 1
      %p80 = por %p78, %p79
      %p81 = scmp.ne.s32.totalorder %s70, %s71
      %p82 = scmp.eq.s32.totalorder %s36, 0
      %p83 = por %p81, %p82
      %p84 = scmp.ne.s32.totalorder %s70, %s71
      %p85 = scmp.eq.s32.totalorder %s37, 1
      %p86 = por %p84, %p85
      %p88 = scmp.ne.s32.totalorder %s71, %s87
      %p89 = scmp.eq.s32.totalorder %s37, 0
      %p90 = por %p88, %p89
      %s91 = ssub.s32 %s31, %s38
      %p92 = scmp.eq.s32.totalorder %s91, 0
      %s94 = sadd.s32 %s93, 1
      %s95 = scalar_select %p92, %s93, %s94
      %p98 = pneg %p92
      %p99 = scmp.eq.s32.totalorder %s31, 1
      %p100 = por %p98, %p99
      %p101 = scmp.ne.s32.totalorder %s93, %s96
      %p102 = scmp.eq.s32.totalorder %s31, 0
      %p103 = por %p101, %p102
      %p104 = scmp.ne.s32.totalorder %s93, %s96
      %p105 = scmp.eq.s32.totalorder %s36, 1
      %p106 = por %p104, %p105
      %p107 = scmp.ne.s32.totalorder %s96, %s97
      %p108 = scmp.eq.s32.totalorder %s36, 0
      %p109 = por %p107, %p108
      %p110 = scmp.ne.s32.totalorder %s96, %s97
      %p111 = scmp.eq.s32.totalorder %s37, 1
      %p112 = por %p110, %p111
      %p114 = scmp.ne.s32.totalorder %s97, %s113
      %p115 = scmp.eq.s32.totalorder %s37, 0
      %p116 = por %p114, %p115
      %s118 = sadd.s32 %s117, 1
      %p121 = scmp.eq.s32.totalorder %s31, 1
      %p122 = scmp.ne.s32.totalorder %s117, %s119
      %p123 = scmp.eq.s32.totalorder %s31, 0
      %p124 = por %p122, %p123
      %p125 = scmp.ne.s32.totalorder %s117, %s119
      %p126 = scmp.eq.s32.totalorder %s36, 1
      %p127 = por %p125, %p126
      %p128 = scmp.ne.s32.totalorder %s119, %s120
      %p129 = scmp.eq.s32.totalorder %s36, 0
      %p130 = por %p128, %p129
      %p131 = scmp.ne.s32.totalorder %s119, %s120
      %p132 = scmp.eq.s32.totalorder %s37, 1
      %p133 = por %p131, %p132
      %p135 = scmp.ne.s32.totalorder %s120, %s134
      %p136 = scmp.eq.s32.totalorder %s37, 0
      %p137 = por %p135, %p136
      %s139 = sadd.s32 %s138, 1
      %p142 = scmp.eq.s32.totalorder %s31, 1
      %p143 = scmp.ne.s32.totalorder %s138, %s140
      %p144 = scmp.eq.s32.totalorder %s31, 0
      %p145 = por %p143, %p144
      %p146 = scmp.ne.s32.totalorder %s138, %s140
      %p147 = scmp.eq.s32.totalorder %s36, 1
      %p148 = por %p146, %p147
      %p149 = scmp.ne.s32.totalorder %s140, %s141
      %p150 = scmp.eq.s32.totalorder %s36, 0
      %p151 = por %p149, %p150
      %p152 = scmp.ne.s32.totalorder %s140, %s141
      %p153 = scmp.eq.s32.totalorder %s37, 1
      %p154 = por %p152, %p153
      %p156 = scmp.ne.s32.totalorder %s141, %s155
      %p157 = scmp.eq.s32.totalorder %s37, 0
      %p158 = por %p156, %p157
      %s160 = sadd.s32 %s159, 1
      %p163 = scmp.eq.s32.totalorder %s31, 1
      %p164 = scmp.ne.s32.totalorder %s159, %s161
      %p165 = scmp.eq.s32.totalorder %s31, 0
      %p166 = por %p164, %p165
      %p167 = scmp.ne.s32.totalorder %s159, %s161
      %p168 = scmp.eq.s32.totalorder %s36, 1
      %p169 = por %p167, %p168
      %p170 = scmp.ne.s32.totalorder %s161, %s162
      %p171 = scmp.eq.s32.totalorder %s36, 0
      %p172 = por %p170, %p171
      %p173 = scmp.ne.s32.totalorder %s161, %s162
      %p174 = scmp.eq.s32.totalorder %s37, 1
      %p175 = por %p173, %p174
      %p177 = scmp.ne.s32.totalorder %s162, %s176
      %p178 = scmp.eq.s32.totalorder %s37, 0
      %p179 = por %p177, %p178
      %s181 = sadd.s32 %s180, 1
      %p184 = scmp.eq.s32.totalorder %s31, 1
      %p185 = scmp.ne.s32.totalorder %s180, %s182
      %p186 = scmp.eq.s32.totalorder %s31, 0
      %p187 = por %p185, %p186
      %p188 = scmp.ne.s32.totalorder %s180, %s182
      %p189 = scmp.eq.s32.totalorder %s36, 1
      %p190 = por %p188, %p189
      %p191 = scmp.ne.s32.totalorder %s182, %s183
      %p192 = scmp.eq.s32.totalorder %s36, 0
      %p193 = por %p191, %p192
      %p194 = scmp.ne.s32.totalorder %s182, %s183
      %p195 = scmp.eq.s32.totalorder %s37, 1
      %p196 = por %p194, %p195
      %p198 = scmp.ne.s32.totalorder %s183, %s197
      %p199 = scmp.eq.s32.totalorder %s37, 0
      %p200 = por %p198, %p199
      %s202 = sadd.s32 %s201, 1
      %p205 = scmp.eq.s32.totalorder %s31, 1
      %p206 = scmp.ne.s32.totalorder %s201, %s203
      %p207 = scmp.eq.s32.totalorder %s31, 0
      %p208 = por %p206, %p207
      %p209 = scmp.ne.s32.totalorder %s201, %s203
      %p210 = scmp.eq.s32.totalorder %s36, 1
      %p211 = por %p209, %p210
      %p212 = scmp.ne.s32.totalorder %s203, %s204
      %p213 = scmp.eq.s32.totalorder %s36, 0
      %p214 = por %p212, %p213
      %p215 = scmp.ne.s32.totalorder %s203, %s204
      %p216 = scmp.eq.s32.totalorder %s37, 1
      %p217 = por %p215, %p216
      %p219 = scmp.ne.s32.totalorder %s204, %s218
      %p220 = scmp.eq.s32.totalorder %s37, 0
      %p221 = por %p219, %p220
      %s223 = sadd.s32 %s222, 1
      %p226 = scmp.eq.s32.totalorder %s31, 1
      %p227 = scmp.ne.s32.totalorder %s222, %s224
      %p228 = scmp.eq.s32.totalorder %s31, 0
      %p229 = por %p227, %p228
      %p230 = scmp.ne.s32.totalorder %s222, %s224
      %p231 = scmp.eq.s32.totalorder %s36, 1
      %p232 = por %p230, %p231
      %p233 = scmp.ne.s32.totalorder %s224, %s225
      %p234 = scmp.eq.s32.totalorder %s36, 0
      %p235 = por %p233, %p234
      %p236 = scmp.ne.s32.totalorder %s224, %s225
      %p237 = scmp.eq.s32.totalorder %s37, 1
      %p238 = por %p236, %p237
      %p240 = scmp.ne.s32.totalorder %s225, %s239
      %p241 = scmp.eq.s32.totalorder %s37, 0
      %p242 = por %p240, %p241
      %s244 = sadd.s32 %s243, 1
      %p247 = scmp.eq.s32.totalorder %s31, 1
      %p248 = scmp.ne.s32.totalorder %s243, %s245
      %p249 = scmp.eq.s32.totalorder %s31, 0
      %p250 = por %p248, %p249
      %p251 = scmp.ne.s32.totalorder %s243, %s245
      %p252 = scmp.eq.s32.totalorder %s36, 1
      %p253 = por %p251, %p252
      %p254 = scmp.ne.s32.totalorder %s245, %s246
      %p255 = scmp.eq.s32.totalorder %s36, 0
      %p256 = por %p254, %p255
      %p257 = scmp.ne.s32.totalorder %s245, %s246
      %p258 = scmp.eq.s32.totalorder %s37, 1
      %p259 = por %p257, %p258
      %p261 = scmp.ne.s32.totalorder %s246, %s260
      %p262 = scmp.eq.s32.totalorder %s37, 0
      %p263 = por %p261, %p262
      %s265 = sadd.s32 %s264, 1
      %p268 = scmp.eq.s32.totalorder %s31, 1
      %p269 = scmp.ne.s32.totalorder %s264, %s266
      %p270 = scmp.eq.s32.totalorder %s31, 0
      %p271 = por %p269, %p270
      %p272 = scmp.ne.s32.totalorder %s264, %s266
      %p273 = scmp.eq.s32.totalorder %s36, 1
      %p274 = por %p272, %p273
      %p275 = scmp.ne.s32.totalorder %s266, %s267
      %p276 = scmp.eq.s32.totalorder %s36, 0
      %p277 = por %p275, %p276
      %p278 = scmp.ne.s32.totalorder %s266, %s267
      %p279 = scmp.eq.s32.totalorder %s37, 1
      %p280 = por %p278, %p279
      %p282 = scmp.ne.s32.totalorder %s267, %s281
      %p283 = scmp.eq.s32.totalorder %s37, 0
      %p284 = por %p282, %p283
      %s286 = sadd.s32 %s285, 1
      %p289 = scmp.eq.s32.totalorder %s31, 1
      %p290 = scmp.ne.s32.totalorder %s285, %s287
      %p291 = scmp.eq.s32.totalorder %s31, 0
      %p292 = por %p290, %p291
      %p293 = scmp.ne.s32.totalorder %s285, %s287
      %p294 = scmp.eq.s32.totalorder %s36, 1
      %p295 = por %p293, %p294
      %p296 = scmp.ne.s32.totalorder %s287, %s288
      %p297 = scmp.eq.s32.totalorder %s36, 0
      %p298 = por %p296, %p297
      %p299 = scmp.ne.s32.totalorder %s287, %s288
      %p300 = scmp.eq.s32.totalorder %s37, 1
      %p301 = por %p299, %p300
      %p303 = scmp.ne.s32.totalorder %s288, %s302
      %p304 = scmp.eq.s32.totalorder %s37, 0
      %p305 = por %p303, %p304
      %s307 = sadd.s32 %s306, 1
      %p310 = scmp.eq.s32.totalorder %s31, 1
      %p311 = scmp.ne.s32.totalorder %s306, %s308
      %p312 = scmp.eq.s32.totalorder %s31, 0
      %p313 = por %p311, %p312
      %p314 = scmp.ne.s32.totalorder %s306, %s308
      %p315 = scmp.eq.s32.totalorder %s36, 1
      %p316 = por %p314, %p315
      %p317 = scmp.ne.s32.totalorder %s308, %s309
      %p318 = scmp.eq.s32.totalorder %s36, 0
      %p319 = por %p317, %p318
      %p320 = scmp.ne.s32.totalorder %s308, %s309
      %p321 = scmp.eq.s32.totalorder %s37, 1
      %p322 = por %p320, %p321
      %p324 = scmp.ne.s32.totalorder %s309, %s323
      %p325 = scmp.eq.s32.totalorder %s37, 0
      %p326 = por %p324, %p325
      %s328 = sadd.s32 %s327, 1
      %p331 = scmp.eq.s32.totalorder %s31, 1
      %p332 = scmp.ne.s32.totalorder %s327, %s329
      %p333 = scmp.eq.s32.totalorder %s31, 0
      %p334 = por %p332, %p333
      %p335 = scmp.ne.s32.totalorder %s327, %s329
      %p336 = scmp.eq.s32.totalorder %s36, 1
      %p337 = por %p335, %p336
      %p338 = scmp.ne.s32.totalorder %s329, %s330
      %p339 = scmp.eq.s32.totalorder %s36, 0
      %p340 = por %p338, %p339
      %p341 = scmp.ne.s32.totalorder %s329, %s330
      %p342 = scmp.eq.s32.totalorder %s37, 1
      %p343 = por %p341, %p342
      %p345 = scmp.ne.s32.totalorder %s330, %s344
      %p346 = scmp.eq.s32.totalorder %s37, 0
      %p347 = por %p345, %p346
      %s349 = sadd.s32 %s348, 1
      %p352 = scmp.eq.s32.totalorder %s31, 1
      %p353 = scmp.ne.s32.totalorder %s348, %s350
      %p354 = scmp.eq.s32.totalorder %s31, 0
      %p355 = por %p353, %p354
      %p356 = scmp.ne.s32.totalorder %s348, %s350
      %p357 = scmp.eq.s32.totalorder %s36, 1
      %p358 = por %p356, %p357
      %p359 = scmp.ne.s32.totalorder %s350, %s351
      %p360 = scmp.eq.s32.totalorder %s36, 0
      %p361 = por %p359, %p360
      %p362 = scmp.ne.s32.totalorder %s350, %s351
      %p363 = scmp.eq.s32.totalorder %s37, 1
      %p364 = por %p362, %p363
      %p366 = scmp.ne.s32.totalorder %s351, %s365
      %p367 = scmp.eq.s32.totalorder %s37, 0
      %p368 = por %p366, %p367
      %s370 = sadd.s32 %s369, 1
      %p373 = scmp.eq.s32.totalorder %s31, 1
      %p374 = scmp.ne.s32.totalorder %s369, %s371
      %p375 = scmp.eq.s32.totalorder %s31, 0
      %p376 = por %p374, %p375
      %p377 = scmp.ne.s32.totalorder %s369, %s371
      %p378 = scmp.eq.s32.totalorder %s36, 1
      %p379 = por %p377, %p378
      %p380 = scmp.ne.s32.totalorder %s371, %s372
      %p381 = scmp.eq.s32.totalorder %s36, 0
      %p382 = por %p380, %p381
      %p383 = scmp.ne.s32.totalorder %s371, %s372
      %p384 = scmp.eq.s32.totalorder %s37, 1
      %p385 = por %p383, %p384
      %p387 = scmp.ne.s32.totalorder %s372, %s386
      %p388 = scmp.eq.s32.totalorder %s37, 0
      %p389 = por %p387, %p388
      %s391 = sadd.s32 %s390, 1
      %p394 = scmp.eq.s32.totalorder %s31, 1
      %p395 = scmp.ne.s32.totalorder %s390, %s392
      %p396 = scmp.eq.s32.totalorder %s31, 0
      %p397 = por %p395, %p396
      %p398 = scmp.ne.s32.totalorder %s390, %s392
      %p399 = scmp.eq.s32.totalorder %s36, 1
      %p400 = por %p398, %p399
      %p401 = scmp.ne.s32.totalorder %s392, %s393
      %p402 = scmp.eq.s32.totalorder %s36, 0
      %p403 = por %p401, %p402
      %p404 = scmp.ne.s32.totalorder %s392, %s393
      %p405 = scmp.eq.s32.totalorder %s37, 1
      %p406 = por %p404, %p405
      %p408 = scmp.ne.s32.totalorder %s393, %s407
      %p409 = scmp.eq.s32.totalorder %s37, 0
      %p410 = por %p408, %p409
      %s411 = ssub.s32 %s31, %s38
      %p412 = scmp.eq.s32.totalorder %s411, 0
      %s414 = sadd.s32 %s413, 1
      %s415 = scalar_select %p412, %s413, %s414
      %p418 = pneg %p412
      %p419 = scmp.eq.s32.totalorder %s31, 1
      %p420 = por %p418, %p419
      %p421 = scmp.ne.s32.totalorder %s413, %s416
      %p422 = scmp.eq.s32.totalorder %s31, 0
      %p423 = por %p421, %p422
      %p424 = scmp.ne.s32.totalorder %s413, %s416
      %p425 = scmp.eq.s32.totalorder %s36, 1
      %p426 = por %p424, %p425
      %p427 = scmp.ne.s32.totalorder %s416, %s417
      %p428 = scmp.eq.s32.totalorder %s36, 0
      %p429 = por %p427, %p428
      %p430 = scmp.ne.s32.totalorder %s416, %s417
      %p431 = scmp.eq.s32.totalorder %s37, 1
      %p432 = por %p430, %p431
      %p434 = scmp.ne.s32.totalorder %s417, %s433
      %p435 = scmp.eq.s32.totalorder %s37, 0
      %p436 = por %p434, %p435
      %p437 = scmp.le.s32.totalorder 1, %s31
      %p438 = scmp.lt.s32.totalorder %s31, 3
      %p439 = pnand %p437, %p438
      %p440 = pneg %p439
      // Predicated region
      $region9: #{_lambda_.1} parent=5 // pred_check
        _
      $region10: #{_lambda_.1} parent=5 // pred_check_branch
        %442 = sbr.rel (%p439) target = $region12
      $region11: #{_lambda_.1} parent=5 // pred_region
        %s443 = ssub.s32 %s31, 1
        // Predicated region
        $region13: #{_lambda_.1} parent=11 // pred_check
          %p444 = pneg %p130
        $region14: #{_lambda_.1} parent=11 // pred_check_branch
          %446 = sbr.rel (%p444) target = $region16
        $region15: #{_lambda_.1} parent=11 // pred_region
          %448 = vsyncadd [#allocation3], 0
          %s449 = sshll.u32 %s3, 4
          %s450 = int_to_ptr.hbm [resolvable:$true] %s449
          %s451 = sshll.u32 [#allocation2], 4
          %s452 = int_to_ptr.vmem [resolvable:$true] %s451
          %457 = dma.hbm_to_vmem [thread:$0]  %s450, 4096, %s452, [#allocation3], 512, 512, 32
        $region16: #{_lambda_.1} parent=11 // pred_fallthru
          _
        // Predicated region
        $region17: #{_lambda_.1} parent=11 // pred_check
          %p458 = pneg %p151
        $region18: #{_lambda_.1} parent=11 // pred_check_branch
          %460 = sbr.rel (%p458) target = $region20
        $region19: #{_lambda_.1} parent=11 // pred_region
          %462 = vsyncadd [#allocation6], 0
          %s464 = sshll.u32 %s4, 4
          %s465 = int_to_ptr.hbm [resolvable:$true] %s464
          %s466 = sshll.u32 [#allocation5], 4
          %s467 = int_to_ptr.vmem [resolvable:$true] %s466
          %469 = dma.hbm_to_vmem [thread:$0]  %s465, 64, %s467, [#allocation6]
        $region20: #{_lambda_.1} parent=11 // pred_fallthru
          _
        // Predicated region
        $region21: #{_lambda_.1} parent=11 // pred_check
          %p470 = pneg %p172
        $region22: #{_lambda_.1} parent=11 // pred_check_branch
          %472 = sbr.rel (%p470) target = $region24
        $region23: #{_lambda_.1} parent=11 // pred_region
          %474 = vsyncadd [#allocation6], 0
          %s475 = sshll.u32 %s5, 4
          %s476 = int_to_ptr.hbm [resolvable:$true] %s475
          %s477 = sshll.u32 [#allocation7], 4
          %s478 = int_to_ptr.vmem [resolvable:$true] %s477
          %483 = dma.hbm_to_vmem [thread:$0]  %s476, 8192, %s478, [#allocation6], 1024, 1024, 64
        $region24: #{_lambda_.1} parent=11 // pred_fallthru
          _
        // Predicated region
        $region25: #{_lambda_.1} parent=11 // pred_check
          %p484 = pneg %p193
        $region26: #{_lambda_.1} parent=11 // pred_check_branch
          %486 = sbr.rel (%p484) target = $region28
        $region27: #{_lambda_.1} parent=11 // pred_region
          _
        $region28: #{_lambda_.1} parent=11 // pred_fallthru
          _
        // Predicated region
        $region29: #{_lambda_.1} parent=11 // pred_check
          %p487 = pneg %p214
        $region30: #{_lambda_.1} parent=11 // pred_check_branch
          %489 = sbr.rel (%p487) target = $region32
        $region31: #{_lambda_.1} parent=11 // pred_region
          %491 = vsyncadd [#allocation9], 0
          %s492 = sshll.u32 %s7, 4
          %s493 = int_to_ptr.hbm [resolvable:$true] %s492
          %s494 = sshll.u32 [#allocation8], 4
          %s495 = int_to_ptr.vmem [resolvable:$true] %s494
          %500 = dma.hbm_to_vmem [thread:$0]  %s493, 8192, %s495, [#allocation9], 128, 128, 8
        $region32: #{_lambda_.1} parent=11 // pred_fallthru
          _
        // Predicated region
        $region33: #{_lambda_.1} parent=11 // pred_check
          %p501 = pneg %p235
        $region34: #{_lambda_.1} parent=11 // pred_check_branch
          %503 = sbr.rel (%p501) target = $region36
        $region35: #{_lambda_.1} parent=11 // pred_region
          _
        $region36: #{_lambda_.1} parent=11 // pred_fallthru
          _
        // Predicated region
        $region37: #{_lambda_.1} parent=11 // pred_check
          %p504 = pneg %p256
        $region38: #{_lambda_.1} parent=11 // pred_check_branch
          %506 = sbr.rel (%p504) target = $region40
        $region39: #{_lambda_.1} parent=11 // pred_region
          %508 = vsyncadd [#allocation9], 0
          %s509 = sshll.u32 %s9, 4
          %s510 = int_to_ptr.hbm [resolvable:$true] %s509
          %s511 = sshll.u32 [#allocation10], 4
          %s512 = int_to_ptr.vmem [resolvable:$true] %s511
          %517 = dma.hbm_to_vmem [thread:$0]  %s510, 1024, %s512, [#allocation9], 128, 128, 8
        $region40: #{_lambda_.1} parent=11 // pred_fallthru
          _
        // Predicated region
        $region41: #{_lambda_.1} parent=11 // pred_check
          %p518 = pneg %p277
        $region42: #{_lambda_.1} parent=11 // pred_check_branch
          %520 = sbr.rel (%p518) target = $region44
        $region43: #{_lambda_.1} parent=11 // pred_region
          _
        $region44: #{_lambda_.1} parent=11 // pred_fallthru
          _
        // Predicated region
        $region45: #{_lambda_.1} parent=11 // pred_check
          %p521 = pneg %p298
        $region46: #{_lambda_.1} parent=11 // pred_check_branch
          %523 = sbr.rel (%p521) target = $region48
        $region47: #{_lambda_.1} parent=11 // pred_region
          %525 = vsyncadd [#allocation12], 0
          %s526 = sshll.u32 %s11, 4
          %s527 = int_to_ptr.hbm [resolvable:$true] %s526
          %s528 = sshll.u32 [#allocation11], 4
          %s529 = int_to_ptr.vmem [resolvable:$true] %s528
          %534 = dma.hbm_to_vmem [thread:$0]  %s527, 1024, %s529, [#allocation12], 128, 128, 8
        $region48: #{_lambda_.1} parent=11 // pred_fallthru
          _
        // Predicated region
        $region49: #{_lambda_.1} parent=11 // pred_check
          %p535 = pneg %p319
        $region50: #{_lambda_.1} parent=11 // pred_check_branch
          %537 = sbr.rel (%p535) target = $region52
        $region51: #{_lambda_.1} parent=11 // pred_region
          _
        $region52: #{_lambda_.1} parent=11 // pred_fallthru
          _
        // Predicated region
        $region53: #{_lambda_.1} parent=11 // pred_check
          %p538 = pneg %p340
        $region54: #{_lambda_.1} parent=11 // pred_check_branch
          %540 = sbr.rel (%p538) target = $region56
        $region55: #{_lambda_.1} parent=11 // pred_region
          %542 = vsyncadd [#allocation12], 0
          %s543 = sshll.u32 %s13, 4
          %s544 = int_to_ptr.hbm [resolvable:$true] %s543
          %s545 = sshll.u32 [#allocation13], 4
          %s546 = int_to_ptr.vmem [resolvable:$true] %s545
          %551 = dma.hbm_to_vmem [thread:$0]  %s544, 5120, %s546, [#allocation12], 128, 128, 8
        $region56: #{_lambda_.1} parent=11 // pred_fallthru
          _
        // Predicated region
        $region57: #{_lambda_.1} parent=11 // pred_check
          %p552 = pneg %p361
        $region58: #{_lambda_.1} parent=11 // pred_check_branch
          %554 = sbr.rel (%p552) target = $region60
        $region59: #{_lambda_.1} parent=11 // pred_region
          _
        $region60: #{_lambda_.1} parent=11 // pred_fallthru
          _
        // Predicated region
        $region61: #{_lambda_.1} parent=11 // pred_check
          %p555 = pneg %p382
        $region62: #{_lambda_.1} parent=11 // pred_check_branch
          %557 = sbr.rel (%p555) target = $region64
        $region63: #{_lambda_.1} parent=11 // pred_region
          %559 = vsyncadd [#allocation15], 0
          %s560 = sshll.u32 %s15, 4
          %s561 = int_to_ptr.hbm [resolvable:$true] %s560
          %s562 = sshll.u32 [#allocation14], 4
          %s563 = int_to_ptr.vmem [resolvable:$true] %s562
          %568 = dma.hbm_to_vmem [thread:$0]  %s561, 5120, %s563, [#allocation15], 128, 128, 8
        $region64: #{_lambda_.1} parent=11 // pred_fallthru
          _
        // Predicated region
        $region65: #{_lambda_.1} parent=11 // pred_check
          %p569 = pneg %p403
        $region66: #{_lambda_.1} parent=11 // pred_check_branch
          %571 = sbr.rel (%p569) target = $region68
        $region67: #{_lambda_.1} parent=11 // pred_region
          _
        $region68: #{_lambda_.1} parent=11 // pred_fallthru
          _
      $region12: #{_lambda_.1} parent=5 // pred_fallthru
        _
      %p572 = scmp.lt.s32.totalorder %s31, 2
      // Predicated region
      $region69: #{_lambda_.1} parent=5 // pred_check
        %p573 = pneg %p572
      $region70: #{_lambda_.1} parent=5 // pred_check_branch
        %575 = sbr.rel (%p573) target = $region72
      $region71: #{_lambda_.1} parent=5 // pred_region
        // Predicated region
        $region73: #{_lambda_.1} parent=71 // pred_check
          %p576 = pneg %p51
        $region74: #{_lambda_.1} parent=71 // pred_check_branch
          %578 = sbr.rel (%p576) target = $region76
        $region75: #{_lambda_.1} parent=71 // pred_region
          %p579 = scmp.lt.s32.totalorder %s31, 1
          %s580 = scalar_select %p579, %s31, 1
          %s581 = smul.addr %s580, 8
          %s582 = scalar_lea.vmem %s0, %s581
        $region76: #{_lambda_.1} parent=71 // pred_fallthru
          _
        // Predicated region
        $region77: #{_lambda_.1} parent=71 // pred_check
          %p583 = pneg %p77
        $region78: #{_lambda_.1} parent=71 // pred_check_branch
          %585 = sbr.rel (%p583) target = $region80
        $region79: #{_lambda_.1} parent=71 // pred_region
          %p586 = scmp.lt.s32.totalorder %s31, 1
          %s587 = scalar_select %p586, %s31, 1
          %s588 = smul.addr %s587, 8
          %s589 = scalar_lea.vmem %s1, %s588
        $region80: #{_lambda_.1} parent=71 // pred_fallthru
          _
        // Predicated region
        $region81: #{_lambda_.1} parent=71 // pred_check
          %p590 = pneg %p103
        $region82: #{_lambda_.1} parent=71 // pred_check_branch
          %592 = sbr.rel (%p590) target = $region84
        $region83: #{_lambda_.1} parent=71 // pred_region
          %p593 = scmp.lt.s32.totalorder %s31, 1
          %s594 = scalar_select %p593, %s31, 1
          %s595 = smul.addr %s594, 8
          %s596 = scalar_lea.vmem %s2, %s595
        $region84: #{_lambda_.1} parent=71 // pred_fallthru
          _
      $region72: #{_lambda_.1} parent=5 // pred_fallthru
        _
      %p597 = scmp.le.s32.totalorder 1, %s31
      %p598 = scmp.lt.s32.totalorder %s31, 3
      %p599 = pnand %p597, %p598
      %p600 = pneg %p599
      // Predicated region
      $region85: #{_lambda_.1} parent=5 // pred_check
        _
      $region86: #{_lambda_.1} parent=5 // pred_check_branch
        %602 = sbr.rel (%p599) target = $region88
      $region87: #{_lambda_.1} parent=5 // pred_region
        %s603 = ssub.s32 %s31, 1
        // Predicated region
        $region89: #{_lambda_.1} parent=87 // pred_check
          %p604 = pneg %p130
        $region90: #{_lambda_.1} parent=87 // pred_check_branch
          %606 = sbr.rel (%p604) target = $region92
        $region91: #{_lambda_.1} parent=87 // pred_region
          %608 = dma.done [#allocation3], 4096
        $region92: #{_lambda_.1} parent=87 // pred_fallthru
          _
        // Predicated region
        $region93: #{_lambda_.1} parent=87 // pred_check
          %p609 = pneg %p151
        $region94: #{_lambda_.1} parent=87 // pred_check_branch
          %611 = sbr.rel (%p609) target = $region96
        $region95: #{_lambda_.1} parent=87 // pred_region
          %613 = dma.done [#allocation6], 64
        $region96: #{_lambda_.1} parent=87 // pred_fallthru
          _
        // Predicated region
        $region97: #{_lambda_.1} parent=87 // pred_check
          %p614 = pneg %p172
        $region98: #{_lambda_.1} parent=87 // pred_check_branch
          %616 = sbr.rel (%p614) target = $region100
        $region99: #{_lambda_.1} parent=87 // pred_region
          %618 = dma.done [#allocation6], 8192
        $region100: #{_lambda_.1} parent=87 // pred_fallthru
          _
        // Predicated region
        $region101: #{_lambda_.1} parent=87 // pred_check
          %p619 = pneg %p214
        $region102: #{_lambda_.1} parent=87 // pred_check_branch
          %621 = sbr.rel (%p619) target = $region104
        $region103: #{_lambda_.1} parent=87 // pred_region
          %623 = dma.done [#allocation9], 8192
        $region104: #{_lambda_.1} parent=87 // pred_fallthru
          _
        // Predicated region
        $region105: #{_lambda_.1} parent=87 // pred_check
          %p624 = pneg %p256
        $region106: #{_lambda_.1} parent=87 // pred_check_branch
          %626 = sbr.rel (%p624) target = $region108
        $region107: #{_lambda_.1} parent=87 // pred_region
          %628 = dma.done [#allocation9], 1024
        $region108: #{_lambda_.1} parent=87 // pred_fallthru
          _
        // Predicated region
        $region109: #{_lambda_.1} parent=87 // pred_check
          %p629 = pneg %p298
        $region110: #{_lambda_.1} parent=87 // pred_check_branch
          %631 = sbr.rel (%p629) target = $region112
        $region111: #{_lambda_.1} parent=87 // pred_region
          %633 = dma.done [#allocation12], 1024
        $region112: #{_lambda_.1} parent=87 // pred_fallthru
          _
        // Predicated region
        $region113: #{_lambda_.1} parent=87 // pred_check
          %p634 = pneg %p340
        $region114: #{_lambda_.1} parent=87 // pred_check_branch
          %636 = sbr.rel (%p634) target = $region116
        $region115: #{_lambda_.1} parent=87 // pred_region
          %638 = dma.done [#allocation12], 5120
        $region116: #{_lambda_.1} parent=87 // pred_fallthru
          _
        // Predicated region
        $region117: #{_lambda_.1} parent=87 // pred_check
          %p639 = pneg %p382
        $region118: #{_lambda_.1} parent=87 // pred_check_branch
          %641 = sbr.rel (%p639) target = $region120
        $region119: #{_lambda_.1} parent=87 // pred_region
          %643 = dma.done [#allocation15], 5120
        $region120: #{_lambda_.1} parent=87 // pred_fallthru
          _
        %p644 = scmp.lt.s32.totalorder %s36, 1
        %s645 = scalar_select %p644, %s36, 1
        %s646 = smul.addr %s645, 8
        %s647 = scalar_lea.vmem %s0, %s646
        %p648 = pneg %p57
        %p649 = pneg %p54
        %p650 = scmp.lt.s32.totalorder %s36, 1
        %s651 = scalar_select %p650, %s36, 1
        %s652 = smul.addr %s651, 8
        %s653 = scalar_lea.vmem %s1, %s652
        %p654 = pneg %p83
        %p655 = pneg %p80
        %p656 = scmp.lt.s32.totalorder %s36, 1
        %s657 = scalar_select %p656, %s36, 1
        %s658 = smul.addr %s657, 8
        %s659 = scalar_lea.vmem %s2, %s658
        %p660 = pneg %p109
        %p661 = pneg %p106
        %p662 = pneg %p130
        %p663 = pneg %p127
        %p664 = pneg %p151
        %p665 = pneg %p148
        %p666 = pneg %p172
        %p667 = pneg %p169
        %p668 = pneg %p193
        %p669 = pneg %p190
        %p670 = pneg %p214
        %p671 = pneg %p211
        %p672 = pneg %p235
        %p673 = pneg %p232
        %p674 = pneg %p256
        %p675 = pneg %p253
        %p676 = pneg %p277
        %p677 = pneg %p274
        %p678 = pneg %p298
        %p679 = pneg %p295
        %p680 = pneg %p319
        %p681 = pneg %p316
        %p682 = pneg %p340
        %p683 = pneg %p337
        %p684 = pneg %p361
        %p685 = pneg %p358
        %p686 = pneg %p382
        %p687 = pneg %p379
        %p688 = pneg %p403
        %p689 = pneg %p400
        %p690 = pneg %p429
        %p691 = pneg %p426
        %s692 = sand.u32 %s416, 1
        %s693 = scalar_lea.sflag [#allocation4], %s692
        %s694 = sand.u32 %s416, 1
        %s695 = smul.addr %s694, 8
        %s696 = scalar_lea.vmem [#allocation16], %s695
        %p697 = scmp.lt.s32.totalorder %s36, 1
        %s698 = scalar_select %p697, %s36, 1
        %s699 = smul.addr %s698, 8
        %s700 = scalar_lea.vmem %s0, %s699
        %p701 = scmp.lt.s32.totalorder %s36, 1
        %s702 = scalar_select %p701, %s36, 1
        %s703 = smul.addr %s702, 8
        %s704 = scalar_lea.vmem %s1, %s703
        %p705 = scmp.lt.s32.totalorder %s36, 1
        %s706 = scalar_select %p705, %s36, 1
        %s707 = smul.addr %s706, 8
        %s708 = scalar_lea.vmem %s2, %s707
        %v709 = vld [vmem:[%s700] sm:$0xff]
        %v710 = vld [vmem:[%s704] sm:$0xff]
        %v711 = vld [vmem:[%s708] sm:$0xff]
        %vm712 = vcmask 523264
        %v713 = vsel %vm712, %v710, 0.0
        %714 = vadd.xlane.f32.xlu0 %v713
        %v715 = vpop.xlane.xlu0 %714
        %v716 = vrcp.pop 64.0
        %v717 = vmul.f32 64.0, %v716
        %v718 = vsub.f32 1.0, %v717
        %v719 = vmul.f32 %v716, %v718
        %v720 = vadd.f32 %v716, %v719
        %vm721 = vweird.f32 %v716
        %v722 = vsel %vm721, %v716, %v720
        %v723 = vmul.f32 %v715, %v722
        %v724 = vsub.f32 %v710, %v723
        %v725 = vmul.f32 %v724, %v724
        %v726 = vsel %vm712, %v725, 0.0
        %727 = vadd.xlane.f32.xlu0 %v726
        %v728 = vpop.xlane.xlu0 %727
        %v729 = vmul.f32 %v728, %v722
        %v730 = vadd.f32 %v729, 1e-05
        %v731 = vrsqrt.pop %v730
        %v732 = vmul.f32 %v731, %v730
        %v733 = vmul.f32 %v732, %v731
        %v734 = vmul.f32 0.5, %v733
        %v735 = vsub.f32 1.5, %v734
        %v736 = vmul.f32 %v731, %v735
        %vm737 = vweird.f32 %v730
        %vm738 = vweird.f32 %v731
        %vm739 = vmor %vm737, %vm738
        %v740 = vsel %vm739, %v731, %v736
        %v741 = vmul.f32 %v724, %v740
        %v742 = vld [vmem:[#allocation7] sm:$0xff]
        %v743 = vld [vmem:[#allocation7 + $0x8] sm:$0xff]
        %v744 = vld [vmem:[#allocation7 + $0x10] sm:$0xff]
        %v745 = vld [vmem:[#allocation7 + $0x18] sm:$0xff]
        %v746 = vld [vmem:[#allocation7 + $0x20] sm:$0xff]
        %v747 = vld [vmem:[#allocation7 + $0x28] sm:$0xff]
        %v748 = vld [vmem:[#allocation7 + $0x30] sm:$0xff]
        %v749 = vld [vmem:[#allocation7 + $0x38] sm:$0xff]
        %v750 = vld [vmem:[#allocation7 + $0x40] sm:$0xff]
        %v751 = vld [vmem:[#allocation7 + $0x48] sm:$0xff]
        %v752 = vld [vmem:[#allocation7 + $0x50] sm:$0xff]
        %v753 = vld [vmem:[#allocation7 + $0x58] sm:$0xff]
        %v754 = vld [vmem:[#allocation7 + $0x60] sm:$0xff]
        %v755 = vld [vmem:[#allocation7 + $0x68] sm:$0xff]
        %v756 = vld [vmem:[#allocation7 + $0x70] sm:$0xff]
        %v757 = vld [vmem:[#allocation7 + $0x78] sm:$0xff]
        %v758 = vld [vmem:[#allocation7 + $0x80] sm:$0xff]
        %v759 = vld [vmem:[#allocation7 + $0x88] sm:$0xff]
        %v760 = vld [vmem:[#allocation7 + $0x90] sm:$0xff]
        %v761 = vld [vmem:[#allocation7 + $0x98] sm:$0xff]
        %v762 = vld [vmem:[#allocation7 + $0xa0] sm:$0xff]
        %v763 = vld [vmem:[#allocation7 + $0xa8] sm:$0xff]
        %v764 = vld [vmem:[#allocation7 + $0xb0] sm:$0xff]
        %v765 = vld [vmem:[#allocation7 + $0xb8] sm:$0xff]
        %v766 = vld [vmem:[#allocation7 + $0xc0] sm:$0xff]
        %v767 = vld [vmem:[#allocation7 + $0xc8] sm:$0xff]
        %v768 = vld [vmem:[#allocation7 + $0xd0] sm:$0xff]
        %v769 = vld [vmem:[#allocation7 + $0xd8] sm:$0xff]
        %v770 = vld [vmem:[#allocation7 + $0xe0] sm:$0xff]
        %v771 = vld [vmem:[#allocation7 + $0xe8] sm:$0xff]
        %v772 = vld [vmem:[#allocation7 + $0xf0] sm:$0xff]
        %v773 = vld [vmem:[#allocation7 + $0xf8] sm:$0xff]
        %v774 = vld [vmem:[#allocation7 + $0x100] sm:$0xff]
        %v775 = vld [vmem:[#allocation7 + $0x108] sm:$0xff]
        %v776 = vld [vmem:[#allocation7 + $0x110] sm:$0xff]
        %v777 = vld [vmem:[#allocation7 + $0x118] sm:$0xff]
        %v778 = vld [vmem:[#allocation7 + $0x120] sm:$0xff]
        %v779 = vld [vmem:[#allocation7 + $0x128] sm:$0xff]
        %v780 = vld [vmem:[#allocation7 + $0x130] sm:$0xff]
        %v781 = vld [vmem:[#allocation7 + $0x138] sm:$0xff]
        %v782 = vld [vmem:[#allocation7 + $0x140] sm:$0xff]
        %v783 = vld [vmem:[#allocation7 + $0x148] sm:$0xff]
        %v784 = vld [vmem:[#allocation7 + $0x150] sm:$0xff]
        %v785 = vld [vmem:[#allocation7 + $0x158] sm:$0xff]
        %v786 = vld [vmem:[#allocation7 + $0x160] sm:$0xff]
        %v787 = vld [vmem:[#allocation7 + $0x168] sm:$0xff]
        %v788 = vld [vmem:[#allocation7 + $0x170] sm:$0xff]
        %v789 = vld [vmem:[#allocation7 + $0x178] sm:$0xff]
        %v790 = vld [vmem:[#allocation7 + $0x180] sm:$0xff]
        %v791 = vld [vmem:[#allocation7 + $0x188] sm:$0xff]
        %v792 = vld [vmem:[#allocation7 + $0x190] sm:$0xff]
        %v793 = vld [vmem:[#allocation7 + $0x198] sm:$0xff]
        %v794 = vld [vmem:[#allocation7 + $0x1a0] sm:$0xff]
        %v795 = vld [vmem:[#allocation7 + $0x1a8] sm:$0xff]
        %v796 = vld [vmem:[#allocation7 + $0x1b0] sm:$0xff]
        %v797 = vld [vmem:[#allocation7 + $0x1b8] sm:$0xff]
        %v798 = vld [vmem:[#allocation7 + $0x1c0] sm:$0xff]
        %v799 = vld [vmem:[#allocation7 + $0x1c8] sm:$0xff]
        %v800 = vld [vmem:[#allocation7 + $0x1d0] sm:$0xff]
        %v801 = vld [vmem:[#allocation7 + $0x1d8] sm:$0xff]
        %v802 = vld [vmem:[#allocation7 + $0x1e0] sm:$0xff]
        %v803 = vld [vmem:[#allocation7 + $0x1e8] sm:$0xff]
        %v804 = vld [vmem:[#allocation7 + $0x1f0] sm:$0xff]
        %v805 = vld [vmem:[#allocation7 + $0x1f8] sm:$0xff]
        %v806 = vld [vmem:[%s6] sm:$0xff]
        %v808 = vperm.slane %v806, 0
        %v809 = vperm.slane %v806, 1
        %v810 = vperm.slane %v806, 2
        %v811 = vperm.slane %v806, 3
        %v812 = vperm.slane %v806, 4
        %v813 = vperm.slane %v806, 5
        %v814 = vperm.slane %v806, 6
        %v815 = vperm.slane %v806, 7
        %v825 = vsel %vm712, %v741, 0
        %827 = vmatpush.msra.mxu0 0.0
        %828 = vmatpush.msra.mxu0 0.0
        %829 = vmatpush.msra.mxu0 0.0
        %830 = vmatpush.msra.mxu0 0.0
        %831 = vmatpush.msra.mxu0 0.0
        %832 = vmatpush.msra.mxu0 0.0
        %833 = vmatpush.msra.mxu0 0.0
        %834 = vmatpush.msra.mxu0 0.0
        %835 = vmatpush.msra.mxu0 %v798
        %836 = vmatpush.msra.mxu0 %v790
        %837 = vmatpush.msra.mxu0 %v782
        %838 = vmatpush.msra.mxu0 %v774
        %839 = vmatpush.msra.mxu0 %v766
        %840 = vmatpush.msra.mxu0 %v758
        %841 = vmatpush.msra.mxu0 %v750
        %842 = vmatpush.msra.mxu0 %v742
        %843 = vmatmul.f32.gmra.mxu0 %v825
        %v844 = vpop.f32.mrf.mxu0
        %v845 = vadd.f32 %v808, %v844
        %846 = vdwg.mxu0
        %847 = vmatpush.msra.mxu0 0.0
        %848 = vmatpush.msra.mxu0 0.0
        %849 = vmatpush.msra.mxu0 0.0
        %850 = vmatpush.msra.mxu0 0.0
        %851 = vmatpush.msra.mxu0 0.0
        %852 = vmatpush.msra.mxu0 0.0
        %853 = vmatpush.msra.mxu0 0.0
        %854 = vmatpush.msra.mxu0 0.0
        %855 = vmatpush.msra.mxu0 %v799
        %856 = vmatpush.msra.mxu0 %v791
        %857 = vmatpush.msra.mxu0 %v783
        %858 = vmatpush.msra.mxu0 %v775
        %859 = vmatpush.msra.mxu0 %v767
        %860 = vmatpush.msra.mxu0 %v759
        %861 = vmatpush.msra.mxu0 %v751
        %862 = vmatpush.msra.mxu0 %v743
        %863 = vmatmul.f32.gmra.mxu0 %v825
        %v864 = vpop.f32.mrf.mxu0
        %v865 = vadd.f32 %v809, %v864
        %866 = vdwg.mxu0
        %867 = vmatpush.msra.mxu0 0.0
        %868 = vmatpush.msra.mxu0 0.0
        %869 = vmatpush.msra.mxu0 0.0
        %870 = vmatpush.msra.mxu0 0.0
        %871 = vmatpush.msra.mxu0 0.0
        %872 = vmatpush.msra.mxu0 0.0
        %873 = vmatpush.msra.mxu0 0.0
        %874 = vmatpush.msra.mxu0 0.0
        %875 = vmatpush.msra.mxu0 %v800
        %876 = vmatpush.msra.mxu0 %v792
        %877 = vmatpush.msra.mxu0 %v784
        %878 = vmatpush.msra.mxu0 %v776
        %879 = vmatpush.msra.mxu0 %v768
        %880 = vmatpush.msra.mxu0 %v760
        %881 = vmatpush.msra.mxu0 %v752
        %882 = vmatpush.msra.mxu0 %v744
        %883 = vmatmul.f32.gmra.mxu0 %v825
        %v884 = vpop.f32.mrf.mxu0
        %v885 = vadd.f32 %v810, %v884
        %886 = vdwg.mxu0
        %887 = vmatpush.msra.mxu0 0.0
        %888 = vmatpush.msra.mxu0 0.0
        %889 = vmatpush.msra.mxu0 0.0
        %890 = vmatpush.msra.mxu0 0.0
        %891 = vmatpush.msra.mxu0 0.0
        %892 = vmatpush.msra.mxu0 0.0
        %893 = vmatpush.msra.mxu0 0.0
        %894 = vmatpush.msra.mxu0 0.0
        %895 = vmatpush.msra.mxu0 %v801
        %896 = vmatpush.msra.mxu0 %v793
        %897 = vmatpush.msra.mxu0 %v785
        %898 = vmatpush.msra.mxu0 %v777
        %899 = vmatpush.msra.mxu0 %v769
        %900 = vmatpush.msra.mxu0 %v761
        %901 = vmatpush.msra.mxu0 %v753
        %902 = vmatpush.msra.mxu0 %v745
        %903 = vmatmul.f32.gmra.mxu0 %v825
        %v904 = vpop.f32.mrf.mxu0
        %v905 = vadd.f32 %v811, %v904
        %906 = vdwg.mxu0
        %907 = vmatpush.msra.mxu0 0.0
        %908 = vmatpush.msra.mxu0 0.0
        %909 = vmatpush.msra.mxu0 0.0
        %910 = vmatpush.msra.mxu0 0.0
        %911 = vmatpush.msra.mxu0 0.0
        %912 = vmatpush.msra.mxu0 0.0
        %913 = vmatpush.msra.mxu0 0.0
        %914 = vmatpush.msra.mxu0 0.0
        %915 = vmatpush.msra.mxu0 %v802
        %916 = vmatpush.msra.mxu0 %v794
        %917 = vmatpush.msra.mxu0 %v786
        %918 = vmatpush.msra.mxu0 %v778
        %919 = vmatpush.msra.mxu0 %v770
        %920 = vmatpush.msra.mxu0 %v762
        %921 = vmatpush.msra.mxu0 %v754
        %922 = vmatpush.msra.mxu0 %v746
        %923 = vmatmul.f32.gmra.mxu0 %v825
        %v924 = vpop.f32.mrf.mxu0
        %v925 = vadd.f32 %v812, %v924
        %926 = vdwg.mxu0
        %927 = vmatpush.msra.mxu0 0.0
        %928 = vmatpush.msra.mxu0 0.0
        %929 = vmatpush.msra.mxu0 0.0
        %930 = vmatpush.msra.mxu0 0.0
        %931 = vmatpush.msra.mxu0 0.0
        %932 = vmatpush.msra.mxu0 0.0
        %933 = vmatpush.msra.mxu0 0.0
        %934 = vmatpush.msra.mxu0 0.0
        %935 = vmatpush.msra.mxu0 %v803
        %936 = vmatpush.msra.mxu0 %v795
        %937 = vmatpush.msra.mxu0 %v787
        %938 = vmatpush.msra.mxu0 %v779
        %939 = vmatpush.msra.mxu0 %v771
        %940 = vmatpush.msra.mxu0 %v763
        %941 = vmatpush.msra.mxu0 %v755
        %942 = vmatpush.msra.mxu0 %v747
        %943 = vmatmul.f32.gmra.mxu0 %v825
        %v944 = vpop.f32.mrf.mxu0
        %v945 = vadd.f32 %v813, %v944
        %946 = vdwg.mxu0
        %947 = vmatpush.msra.mxu0 0.0
        %948 = vmatpush.msra.mxu0 0.0
        %949 = vmatpush.msra.mxu0 0.0
        %950 = vmatpush.msra.mxu0 0.0
        %951 = vmatpush.msra.mxu0 0.0
        %952 = vmatpush.msra.mxu0 0.0
        %953 = vmatpush.msra.mxu0 0.0
        %954 = vmatpush.msra.mxu0 0.0
        %955 = vmatpush.msra.mxu0 %v804
        %956 = vmatpush.msra.mxu0 %v796
        %957 = vmatpush.msra.mxu0 %v788
        %958 = vmatpush.msra.mxu0 %v780
        %959 = vmatpush.msra.mxu0 %v772
        %960 = vmatpush.msra.mxu0 %v764
        %961 = vmatpush.msra.mxu0 %v756
        %962 = vmatpush.msra.mxu0 %v748
        %963 = vmatmul.f32.gmra.mxu0 %v825
        %v964 = vpop.f32.mrf.mxu0
        %v965 = vadd.f32 %v814, %v964
        %966 = vdwg.mxu0
        %967 = vmatpush.msra.mxu0 0.0
        %968 = vmatpush.msra.mxu0 0.0
        %969 = vmatpush.msra.mxu0 0.0
        %970 = vmatpush.msra.mxu0 0.0
        %971 = vmatpush.msra.mxu0 0.0
        %972 = vmatpush.msra.mxu0 0.0
        %973 = vmatpush.msra.mxu0 0.0
        %974 = vmatpush.msra.mxu0 0.0
        %975 = vmatpush.msra.mxu0 %v805
        %976 = vmatpush.msra.mxu0 %v797
        %977 = vmatpush.msra.mxu0 %v789
        %978 = vmatpush.msra.mxu0 %v781
        %979 = vmatpush.msra.mxu0 %v773
        %980 = vmatpush.msra.mxu0 %v765
        %981 = vmatpush.msra.mxu0 %v757
        %982 = vmatpush.msra.mxu0 %v749
        %983 = vmatmul.f32.gmra.mxu0 %v825
        %v984 = vpop.f32.mrf.mxu0
        %v985 = vadd.f32 %v815, %v984
        %986 = vdwg.mxu0
        %988 = vrot.lane.b32.xlu0 %v845, 64
        %v989 = vpop.permute.xlu0 %988
        %991 = vrot.lane.b32.xlu0 %v865, 64
        %v992 = vpop.permute.xlu0 %991
        %994 = vrot.lane.b32.xlu0 %v885, 64
        %v995 = vpop.permute.xlu0 %994
        %997 = vrot.lane.b32.xlu0 %v905, 64
        %v998 = vpop.permute.xlu0 %997
        %1000 = vrot.lane.b32.xlu0 %v925, 64
        %v1001 = vpop.permute.xlu0 %1000
        %1004 = vrot.lane.b32.xlu0 %v945, 64
        %v1005 = vpop.permute.xlu0 %1004
        %1008 = vrot.lane.b32.xlu0 %v965, 64
        %v1009 = vpop.permute.xlu0 %1008
        %1012 = vrot.lane.b32.xlu0 %v985, 64
        %v1013 = vpop.permute.xlu0 %1012
        %v1015 = vsel %vm712, %v709, 0.0
        %1016 = vadd.xlane.f32.xlu0 %v1015
        %v1017 = vpop.xlane.xlu0 %1016
        %v1018 = vmul.f32 %v1017, %v722
        %v1019 = vsub.f32 %v709, %v1018
        %v1020 = vmul.f32 %v1019, %v1019
        %v1021 = vsel %vm712, %v1020, 0.0
        %1022 = vadd.xlane.f32.xlu0 %v1021
        %v1023 = vpop.xlane.xlu0 %1022
        %v1024 = vmul.f32 %v1023, %v722
        %v1025 = vadd.f32 %v1024, 1e-05
        %v1026 = vrsqrt.pop %v1025
        %v1027 = vmul.f32 %v1026, %v1025
        %v1028 = vmul.f32 %v1027, %v1026
        %v1029 = vmul.f32 0.5, %v1028
        %v1030 = vsub.f32 1.5, %v1029
        %v1031 = vmul.f32 %v1026, %v1030
        %vm1032 = vweird.f32 %v1025
        %vm1033 = vweird.f32 %v1026
        %vm1034 = vmor %vm1032, %vm1033
        %v1035 = vsel %vm1034, %v1026, %v1031
        %v1036 = vmul.f32 %v1019, %v1035
        %v1037 = vld [vmem:[#allocation2] sm:$0xff]
        %v1038 = vld [vmem:[#allocation2 + $0x8] sm:$0xff]
        %v1039 = vld [vmem:[#allocation2 + $0x10] sm:$0xff]
        %v1040 = vld [vmem:[#allocation2 + $0x18] sm:$0xff]
        %v1041 = vld [vmem:[#allocation2 + $0x20] sm:$0xff]
        %v1042 = vld [vmem:[#allocation2 + $0x28] sm:$0xff]
        %v1043 = vld [vmem:[#allocation2 + $0x30] sm:$0xff]
        %v1044 = vld [vmem:[#allocation2 + $0x38] sm:$0xff]
        %v1045 = vld [vmem:[#allocation2 + $0x40] sm:$0xff]
        %v1046 = vld [vmem:[#allocation2 + $0x48] sm:$0xff]
        %v1047 = vld [vmem:[#allocation2 + $0x50] sm:$0xff]
        %v1048 = vld [vmem:[#allocation2 + $0x58] sm:$0xff]
        %v1049 = vld [vmem:[#allocation2 + $0x60] sm:$0xff]
        %v1050 = vld [vmem:[#allocation2 + $0x68] sm:$0xff]
        %v1051 = vld [vmem:[#allocation2 + $0x70] sm:$0xff]
        %v1052 = vld [vmem:[#allocation2 + $0x78] sm:$0xff]
        %v1053 = vld [vmem:[#allocation2 + $0x80] sm:$0xff]
        %v1054 = vld [vmem:[#allocation2 + $0x88] sm:$0xff]
        %v1055 = vld [vmem:[#allocation2 + $0x90] sm:$0xff]
        %v1056 = vld [vmem:[#allocation2 + $0x98] sm:$0xff]
        %v1057 = vld [vmem:[#allocation2 + $0xa0] sm:$0xff]
        %v1058 = vld [vmem:[#allocation2 + $0xa8] sm:$0xff]
        %v1059 = vld [vmem:[#allocation2 + $0xb0] sm:$0xff]
        %v1060 = vld [vmem:[#allocation2 + $0xb8] sm:$0xff]
        %v1061 = vld [vmem:[#allocation2 + $0xc0] sm:$0xff]
        %v1062 = vld [vmem:[#allocation2 + $0xc8] sm:$0xff]
        %v1063 = vld [vmem:[#allocation2 + $0xd0] sm:$0xff]
        %v1064 = vld [vmem:[#allocation2 + $0xd8] sm:$0xff]
        %v1065 = vld [vmem:[#allocation2 + $0xe0] sm:$0xff]
        %v1066 = vld [vmem:[#allocation2 + $0xe8] sm:$0xff]
        %v1067 = vld [vmem:[#allocation2 + $0xf0] sm:$0xff]
        %v1068 = vld [vmem:[#allocation2 + $0xf8] sm:$0xff]
        %v1069 = vld [vmem:[#allocation5] sm:$0xf]
        %v1071 = vperm.slane %v1069, 0
        %v1072 = vperm.slane %v1069, 1
        %v1073 = vperm.slane %v1069, 2
        %v1074 = vperm.slane %v1069, 3
        %v1080 = vsel %vm712, %v1036, 0
        %1082 = vmatpush.msra.mxu0 0.0
        %1083 = vmatpush.msra.mxu0 0.0
        %1084 = vmatpush.msra.mxu0 0.0
        %1085 = vmatpush.msra.mxu0 0.0
        %1086 = vmatpush.msra.mxu0 0.0
        %1087 = vmatpush.msra.mxu0 0.0
        %1088 = vmatpush.msra.mxu0 0.0
        %1089 = vmatpush.msra.mxu0 0.0
        %1090 = vmatpush.msra.mxu0 %v1065
        %1091 = vmatpush.msra.mxu0 %v1061
        %1092 = vmatpush.msra.mxu0 %v1057
        %1093 = vmatpush.msra.mxu0 %v1053
        %1094 = vmatpush.msra.mxu0 %v1049
        %1095 = vmatpush.msra.mxu0 %v1045
        %1096 = vmatpush.msra.mxu0 %v1041
        %1097 = vmatpush.msra.mxu0 %v1037
        %1098 = vmatmul.f32.gmra.mxu0 %v1080
        %v1099 = vpop.f32.mrf.mxu0
        %v1100 = vadd.f32 %v1071, %v1099
        %1101 = vdwg.mxu0
        %1102 = vmatpush.msra.mxu0 0.0
        %1103 = vmatpush.msra.mxu0 0.0
        %1104 = vmatpush.msra.mxu0 0.0
        %1105 = vmatpush.msra.mxu0 0.0
        %1106 = vmatpush.msra.mxu0 0.0
        %1107 = vmatpush.msra.mxu0 0.0
        %1108 = vmatpush.msra.mxu0 0.0
        %1109 = vmatpush.msra.mxu0 0.0
        %1110 = vmatpush.msra.mxu0 %v1066
        %1111 = vmatpush.msra.mxu0 %v1062
        %1112 = vmatpush.msra.mxu0 %v1058
        %1113 = vmatpush.msra.mxu0 %v1054
        %1114 = vmatpush.msra.mxu0 %v1050
        %1115 = vmatpush.msra.mxu0 %v1046
        %1116 = vmatpush.msra.mxu0 %v1042
        %1117 = vmatpush.msra.mxu0 %v1038
        %1118 = vmatmul.f32.gmra.mxu0 %v1080
        %v1119 = vpop.f32.mrf.mxu0
        %v1120 = vadd.f32 %v1072, %v1119
        %1121 = vdwg.mxu0
        %1122 = vmatpush.msra.mxu0 0.0
        %1123 = vmatpush.msra.mxu0 0.0
        %1124 = vmatpush.msra.mxu0 0.0
        %1125 = vmatpush.msra.mxu0 0.0
        %1126 = vmatpush.msra.mxu0 0.0
        %1127 = vmatpush.msra.mxu0 0.0
        %1128 = vmatpush.msra.mxu0 0.0
        %1129 = vmatpush.msra.mxu0 0.0
        %1130 = vmatpush.msra.mxu0 %v1067
        %1131 = vmatpush.msra.mxu0 %v1063
        %1132 = vmatpush.msra.mxu0 %v1059
        %1133 = vmatpush.msra.mxu0 %v1055
        %1134 = vmatpush.msra.mxu0 %v1051
        %1135 = vmatpush.msra.mxu0 %v1047
        %1136 = vmatpush.msra.mxu0 %v1043
        %1137 = vmatpush.msra.mxu0 %v1039
        %1138 = vmatmul.f32.gmra.mxu0 %v1080
        %v1139 = vpop.f32.mrf.mxu0
        %v1140 = vadd.f32 %v1073, %v1139
        %1141 = vdwg.mxu0
        %1142 = vmatpush.msra.mxu0 0.0
        %1143 = vmatpush.msra.mxu0 0.0
        %1144 = vmatpush.msra.mxu0 0.0
        %1145 = vmatpush.msra.mxu0 0.0
        %1146 = vmatpush.msra.mxu0 0.0
        %1147 = vmatpush.msra.mxu0 0.0
        %1148 = vmatpush.msra.mxu0 0.0
        %1149 = vmatpush.msra.mxu0 0.0
        %1150 = vmatpush.msra.mxu0 %v1068
        %1151 = vmatpush.msra.mxu0 %v1064
        %1152 = vmatpush.msra.mxu0 %v1060
        %1153 = vmatpush.msra.mxu0 %v1056
        %1154 = vmatpush.msra.mxu0 %v1052
        %1155 = vmatpush.msra.mxu0 %v1048
        %1156 = vmatpush.msra.mxu0 %v1044
        %1157 = vmatpush.msra.mxu0 %v1040
        %1158 = vmatmul.f32.gmra.mxu0 %v1080
        %v1159 = vpop.f32.mrf.mxu0
        %v1160 = vadd.f32 %v1074, %v1159
        %1161 = vdwg.mxu0
        %v1162 = vmul.f32 %v1100, 0.125
        %v1163 = vmul.f32 %v1120, 0.125
        %v1164 = vmul.f32 %v1140, 0.125
        %v1165 = vmul.f32 %v1160, 0.125
        %1167 = vrot.lane.b32.xlu0 %v1162, 64
        %v1168 = vpop.permute.xlu0 %1167
        %1170 = vrot.lane.b32.xlu0 %v1163, 64
        %v1171 = vpop.permute.xlu0 %1170
        %1173 = vrot.lane.b32.xlu0 %v1164, 64
        %v1174 = vpop.permute.xlu0 %1173
        %1176 = vrot.lane.b32.xlu0 %v1165, 64
        %v1177 = vpop.permute.xlu0 %1176
        %v1178 = vsel %vm712, %v1162, 0
        %v1180 = vsel %vm712, %v845, 0
        %1182 = vmatpush.xpose.msra.mxu0 0.0
        %1183 = vmatpush.xpose.msra.mxu0 0.0
        %1184 = vmatpush.xpose.msra.mxu0 0.0
        %1185 = vmatpush.xpose.msra.mxu0 0.0
        %1186 = vmatpush.xpose.msra.mxu0 0.0
        %1187 = vmatpush.xpose.msra.mxu0 0.0
        %1188 = vmatpush.xpose.msra.mxu0 0.0
        %1189 = vmatpush.xpose.msra.mxu0 0.0
        %1190 = vmatpush.xpose.msra.mxu0 0.0
        %1191 = vmatpush.xpose.msra.mxu0 0.0
        %1192 = vmatpush.xpose.msra.mxu0 0.0
        %1193 = vmatpush.xpose.msra.mxu0 0.0
        %1194 = vmatpush.xpose.msra.mxu0 0.0
        %1195 = vmatpush.xpose.msra.mxu0 0.0
        %1196 = vmatpush.xpose.msra.mxu0 0.0
        %1197 = vmatpush.xpose.msra.mxu0 %v1180
        %1198 = vmatmul.f32.gmra.mxu0 %v1178
        %v1199 = vpop.f32.mrf.mxu0
        %v1200 = vadd.f32 0.0, %v1199
        %1201 = vdwg.mxu0
        %v1202 = vsel %vm712, %v1168, 0
        %v1204 = vsel %vm712, %v989, 0
        %1206 = vmatpush.xpose.msra.mxu0 0.0
        %1207 = vmatpush.xpose.msra.mxu0 0.0
        %1208 = vmatpush.xpose.msra.mxu0 0.0
        %1209 = vmatpush.xpose.msra.mxu0 0.0
        %1210 = vmatpush.xpose.msra.mxu0 0.0
        %1211 = vmatpush.xpose.msra.mxu0 0.0
        %1212 = vmatpush.xpose.msra.mxu0 0.0
        %1213 = vmatpush.xpose.msra.mxu0 0.0
        %1214 = vmatpush.xpose.msra.mxu0 0.0
        %1215 = vmatpush.xpose.msra.mxu0 0.0
        %1216 = vmatpush.xpose.msra.mxu0 0.0
        %1217 = vmatpush.xpose.msra.mxu0 0.0
        %1218 = vmatpush.xpose.msra.mxu0 0.0
        %1219 = vmatpush.xpose.msra.mxu0 0.0
        %1220 = vmatpush.xpose.msra.mxu0 0.0
        %1221 = vmatpush.xpose.msra.mxu0 %v1204
        %1222 = vmatmul.f32.gmra.mxu0 %v1202
        %v1223 = vpop.f32.mrf.mxu0
        %v1224 = vadd.f32 0.0, %v1223
        %1225 = vdwg.mxu0
        %v1226 = vsel %vm712, %v1163, 0
        %v1228 = vsel %vm712, %v865, 0
        %1230 = vmatpush.xpose.msra.mxu0 0.0
        %1231 = vmatpush.xpose.msra.mxu0 0.0
        %1232 = vmatpush.xpose.msra.mxu0 0.0
        %1233 = vmatpush.xpose.msra.mxu0 0.0
        %1234 = vmatpush.xpose.msra.mxu0 0.0
        %1235 = vmatpush.xpose.msra.mxu0 0.0
        %1236 = vmatpush.xpose.msra.mxu0 0.0
        %1237 = vmatpush.xpose.msra.mxu0 0.0
        %1238 = vmatpush.xpose.msra.mxu0 0.0
        %1239 = vmatpush.xpose.msra.mxu0 0.0
        %1240 = vmatpush.xpose.msra.mxu0 0.0
        %1241 = vmatpush.xpose.msra.mxu0 0.0
        %1242 = vmatpush.xpose.msra.mxu0 0.0
        %1243 = vmatpush.xpose.msra.mxu0 0.0
        %1244 = vmatpush.xpose.msra.mxu0 0.0
        %1245 = vmatpush.xpose.msra.mxu0 %v1228
        %1246 = vmatmul.f32.gmra.mxu0 %v1226
        %v1247 = vpop.f32.mrf.mxu0
        %v1248 = vadd.f32 0.0, %v1247
        %1249 = vdwg.mxu0
        %v1250 = vsel %vm712, %v1171, 0
        %v1252 = vsel %vm712, %v992, 0
        %1254 = vmatpush.xpose.msra.mxu0 0.0
        %1255 = vmatpush.xpose.msra.mxu0 0.0
        %1256 = vmatpush.xpose.msra.mxu0 0.0
        %1257 = vmatpush.xpose.msra.mxu0 0.0
        %1258 = vmatpush.xpose.msra.mxu0 0.0
        %1259 = vmatpush.xpose.msra.mxu0 0.0
        %1260 = vmatpush.xpose.msra.mxu0 0.0
        %1261 = vmatpush.xpose.msra.mxu0 0.0
        %1262 = vmatpush.xpose.msra.mxu0 0.0
        %1263 = vmatpush.xpose.msra.mxu0 0.0
        %1264 = vmatpush.xpose.msra.mxu0 0.0
        %1265 = vmatpush.xpose.msra.mxu0 0.0
        %1266 = vmatpush.xpose.msra.mxu0 0.0
        %1267 = vmatpush.xpose.msra.mxu0 0.0
        %1268 = vmatpush.xpose.msra.mxu0 0.0
        %1269 = vmatpush.xpose.msra.mxu0 %v1252
        %1270 = vmatmul.f32.gmra.mxu0 %v1250
        %v1271 = vpop.f32.mrf.mxu0
        %v1272 = vadd.f32 0.0, %v1271
        %1273 = vdwg.mxu0
        %v1274 = vsel %vm712, %v1164, 0
        %v1276 = vsel %vm712, %v885, 0
        %1278 = vmatpush.xpose.msra.mxu0 0.0
        %1279 = vmatpush.xpose.msra.mxu0 0.0
        %1280 = vmatpush.xpose.msra.mxu0 0.0
        %1281 = vmatpush.xpose.msra.mxu0 0.0
        %1282 = vmatpush.xpose.msra.mxu0 0.0
        %1283 = vmatpush.xpose.msra.mxu0 0.0
        %1284 = vmatpush.xpose.msra.mxu0 0.0
        %1285 = vmatpush.xpose.msra.mxu0 0.0
        %1286 = vmatpush.xpose.msra.mxu0 0.0
        %1287 = vmatpush.xpose.msra.mxu0 0.0
        %1288 = vmatpush.xpose.msra.mxu0 0.0
        %1289 = vmatpush.xpose.msra.mxu0 0.0
        %1290 = vmatpush.xpose.msra.mxu0 0.0
        %1291 = vmatpush.xpose.msra.mxu0 0.0
        %1292 = vmatpush.xpose.msra.mxu0 0.0
        %1293 = vmatpush.xpose.msra.mxu0 %v1276
        %1294 = vmatmul.f32.gmra.mxu0 %v1274
        %v1295 = vpop.f32.mrf.mxu0
        %v1296 = vadd.f32 0.0, %v1295
        %1297 = vdwg.mxu0
        %v1298 = vsel %vm712, %v1174, 0
        %v1300 = vsel %vm712, %v995, 0
        %1302 = vmatpush.xpose.msra.mxu0 0.0
        %1303 = vmatpush.xpose.msra.mxu0 0.0
        %1304 = vmatpush.xpose.msra.mxu0 0.0
        %1305 = vmatpush.xpose.msra.mxu0 0.0
        %1306 = vmatpush.xpose.msra.mxu0 0.0
        %1307 = vmatpush.xpose.msra.mxu0 0.0
        %1308 = vmatpush.xpose.msra.mxu0 0.0
        %1309 = vmatpush.xpose.msra.mxu0 0.0
        %1310 = vmatpush.xpose.msra.mxu0 0.0
        %1311 = vmatpush.xpose.msra.mxu0 0.0
        %1312 = vmatpush.xpose.msra.mxu0 0.0
        %1313 = vmatpush.xpose.msra.mxu0 0.0
        %1314 = vmatpush.xpose.msra.mxu0 0.0
        %1315 = vmatpush.xpose.msra.mxu0 0.0
        %1316 = vmatpush.xpose.msra.mxu0 0.0
        %1317 = vmatpush.xpose.msra.mxu0 %v1300
        %1318 = vmatmul.f32.gmra.mxu0 %v1298
        %v1319 = vpop.f32.mrf.mxu0
        %v1320 = vadd.f32 0.0, %v1319
        %1321 = vdwg.mxu0
        %v1322 = vsel %vm712, %v1165, 0
        %v1324 = vsel %vm712, %v905, 0
        %1326 = vmatpush.xpose.msra.mxu0 0.0
        %1327 = vmatpush.xpose.msra.mxu0 0.0
        %1328 = vmatpush.xpose.msra.mxu0 0.0
        %1329 = vmatpush.xpose.msra.mxu0 0.0
        %1330 = vmatpush.xpose.msra.mxu0 0.0
        %1331 = vmatpush.xpose.msra.mxu0 0.0
        %1332 = vmatpush.xpose.msra.mxu0 0.0
        %1333 = vmatpush.xpose.msra.mxu0 0.0
        %1334 = vmatpush.xpose.msra.mxu0 0.0
        %1335 = vmatpush.xpose.msra.mxu0 0.0
        %1336 = vmatpush.xpose.msra.mxu0 0.0
        %1337 = vmatpush.xpose.msra.mxu0 0.0
        %1338 = vmatpush.xpose.msra.mxu0 0.0
        %1339 = vmatpush.xpose.msra.mxu0 0.0
        %1340 = vmatpush.xpose.msra.mxu0 0.0
        %1341 = vmatpush.xpose.msra.mxu0 %v1324
        %1342 = vmatmul.f32.gmra.mxu0 %v1322
        %v1343 = vpop.f32.mrf.mxu0
        %v1344 = vadd.f32 0.0, %v1343
        %1345 = vdwg.mxu0
        %v1346 = vsel %vm712, %v1177, 0
        %v1348 = vsel %vm712, %v998, 0
        %1350 = vmatpush.xpose.msra.mxu0 0.0
        %1351 = vmatpush.xpose.msra.mxu0 0.0
        %1352 = vmatpush.xpose.msra.mxu0 0.0
        %1353 = vmatpush.xpose.msra.mxu0 0.0
        %1354 = vmatpush.xpose.msra.mxu0 0.0
        %1355 = vmatpush.xpose.msra.mxu0 0.0
        %1356 = vmatpush.xpose.msra.mxu0 0.0
        %1357 = vmatpush.xpose.msra.mxu0 0.0
        %1358 = vmatpush.xpose.msra.mxu0 0.0
        %1359 = vmatpush.xpose.msra.mxu0 0.0
        %1360 = vmatpush.xpose.msra.mxu0 0.0
        %1361 = vmatpush.xpose.msra.mxu0 0.0
        %1362 = vmatpush.xpose.msra.mxu0 0.0
        %1363 = vmatpush.xpose.msra.mxu0 0.0
        %1364 = vmatpush.xpose.msra.mxu0 0.0
        %1365 = vmatpush.xpose.msra.mxu0 %v1348
        %1366 = vmatmul.f32.gmra.mxu0 %v1346
        %v1367 = vpop.f32.mrf.mxu0
        %v1368 = vadd.f32 0.0, %v1367
        %1369 = vdwg.mxu0
        %vm1370 = vcmask 64512
        %v1371 = vsel %vm1370, %v1200, -inf
        %1372 = vmax.xlane.f32.xlu0 %v1371
        %v1373 = vpop.xlane.xlu0 %1372
        %v1374 = vsel %vm1370, %v1224, -inf
        %1375 = vmax.xlane.f32.xlu0 %v1374
        %v1376 = vpop.xlane.xlu0 %1375
        %v1377 = vsel %vm1370, %v1248, -inf
        %1378 = vmax.xlane.f32.xlu0 %v1377
        %v1379 = vpop.xlane.xlu0 %1378
        %v1380 = vsel %vm1370, %v1272, -inf
        %1381 = vmax.xlane.f32.xlu0 %v1380
        %v1382 = vpop.xlane.xlu0 %1381
        %v1383 = vsel %vm1370, %v1296, -inf
        %1384 = vmax.xlane.f32.xlu0 %v1383
        %v1385 = vpop.xlane.xlu0 %1384
        %v1386 = vsel %vm1370, %v1320, -inf
        %1387 = vmax.xlane.f32.xlu0 %v1386
        %v1388 = vpop.xlane.xlu0 %1387
        %v1389 = vsel %vm1370, %v1344, -inf
        %1390 = vmax.xlane.f32.xlu0 %v1389
        %v1391 = vpop.xlane.xlu0 %1390
        %v1392 = vsel %vm1370, %v1368, -inf
        %1393 = vmax.xlane.f32.xlu0 %v1392
        %v1394 = vpop.xlane.xlu0 %1393
        %v1395 = vsub.f32 %v1200, %v1373
        %v1396 = vsub.f32 %v1224, %v1376
        %v1397 = vsub.f32 %v1248, %v1379
        %v1398 = vsub.f32 %v1272, %v1382
        %v1399 = vsub.f32 %v1296, %v1385
        %v1400 = vsub.f32 %v1320, %v1388
        %v1401 = vsub.f32 %v1344, %v1391
        %v1402 = vsub.f32 %v1368, %v1394
        %v1403 = vmul.f32 %v1395, 1.442695
        %v1404 = vpow.pop %v1403
        %v1405 = vmul.f32 %v1396, 1.442695
        %v1406 = vpow.pop %v1405
        %v1407 = vmul.f32 %v1397, 1.442695
        %v1408 = vpow.pop %v1407
        %v1409 = vmul.f32 %v1398, 1.442695
        %v1410 = vpow.pop %v1409
        %v1411 = vmul.f32 %v1399, 1.442695
        %v1412 = vpow.pop %v1411
        %v1413 = vmul.f32 %v1400, 1.442695
        %v1414 = vpow.pop %v1413
        %v1415 = vmul.f32 %v1401, 1.442695
        %v1416 = vpow.pop %v1415
        %v1417 = vmul.f32 %v1402, 1.442695
        %v1418 = vpow.pop %v1417
        %v1419 = vsel %vm1370, %v1404, 0.0
        %1420 = vadd.xlane.f32.xlu0 %v1419
        %v1421 = vpop.xlane.xlu0 %1420
        %v1422 = vsel %vm1370, %v1406, 0.0
        %1423 = vadd.xlane.f32.xlu0 %v1422
        %v1424 = vpop.xlane.xlu0 %1423
        %v1425 = vsel %vm1370, %v1408, 0.0
        %1426 = vadd.xlane.f32.xlu0 %v1425
        %v1427 = vpop.xlane.xlu0 %1426
        %v1428 = vsel %vm1370, %v1410, 0.0
        %1429 = vadd.xlane.f32.xlu0 %v1428
        %v1430 = vpop.xlane.xlu0 %1429
        %v1431 = vsel %vm1370, %v1412, 0.0
        %1432 = vadd.xlane.f32.xlu0 %v1431
        %v1433 = vpop.xlane.xlu0 %1432
        %v1434 = vsel %vm1370, %v1414, 0.0
        %1435 = vadd.xlane.f32.xlu0 %v1434
        %v1436 = vpop.xlane.xlu0 %1435
        %v1437 = vsel %vm1370, %v1416, 0.0
        %1438 = vadd.xlane.f32.xlu0 %v1437
        %v1439 = vpop.xlane.xlu0 %1438
        %v1440 = vsel %vm1370, %v1418, 0.0
        %1441 = vadd.xlane.f32.xlu0 %v1440
        %v1442 = vpop.xlane.xlu0 %1441
        %v1443 = vrcp.pop %v1421
        %v1444 = vmul.f32 %v1421, %v1443
        %v1445 = vsub.f32 1.0, %v1444
        %v1446 = vmul.f32 %v1443, %v1445
        %v1447 = vadd.f32 %v1443, %v1446
        %vm1448 = vweird.f32 %v1421
        %vm1449 = vweird.f32 %v1443
        %vm1450 = vmor %vm1448, %vm1449
        %v1451 = vsel %vm1450, %v1443, %v1447
        %v1452 = vand.u32 2147483647, %v1421
        %vm1453 = vcmp.eq.f32.partialorder %v1452, 8.507059e+37
        %v1454 = vand.u32 %v1421, 2147483648
        %v1455 = vor.u32 1.1754944e-38, %v1454
        %v1456 = vsel %vm1453, %v1455, %v1451
        %v1457 = vmul.f32 %v1404, %v1456
        %v1458 = vrcp.pop %v1424
        %v1459 = vmul.f32 %v1424, %v1458
        %v1460 = vsub.f32 1.0, %v1459
        %v1461 = vmul.f32 %v1458, %v1460
        %v1462 = vadd.f32 %v1458, %v1461
        %vm1463 = vweird.f32 %v1424
        %vm1464 = vweird.f32 %v1458
        %vm1465 = vmor %vm1463, %vm1464
        %v1466 = vsel %vm1465, %v1458, %v1462
        %v1467 = vand.u32 2147483647, %v1424
        %vm1468 = vcmp.eq.f32.partialorder %v1467, 8.507059e+37
        %v1469 = vand.u32 %v1424, 2147483648
        %v1470 = vor.u32 1.1754944e-38, %v1469
        %v1471 = vsel %vm1468, %v1470, %v1466
        %v1472 = vmul.f32 %v1406, %v1471
        %v1473 = vrcp.pop %v1427
        %v1474 = vmul.f32 %v1427, %v1473
        %v1475 = vsub.f32 1.0, %v1474
        %v1476 = vmul.f32 %v1473, %v1475
        %v1477 = vadd.f32 %v1473, %v1476
        %vm1478 = vweird.f32 %v1427
        %vm1479 = vweird.f32 %v1473
        %vm1480 = vmor %vm1478, %vm1479
        %v1481 = vsel %vm1480, %v1473, %v1477
        %v1482 = vand.u32 2147483647, %v1427
        %vm1483 = vcmp.eq.f32.partialorder %v1482, 8.507059e+37
        %v1484 = vand.u32 %v1427, 2147483648
        %v1485 = vor.u32 1.1754944e-38, %v1484
        %v1486 = vsel %vm1483, %v1485, %v1481
        %v1487 = vmul.f32 %v1408, %v1486
        %v1488 = vrcp.pop %v1430
        %v1489 = vmul.f32 %v1430, %v1488
        %v1490 = vsub.f32 1.0, %v1489
        %v1491 = vmul.f32 %v1488, %v1490
        %v1492 = vadd.f32 %v1488, %v1491
        %vm1493 = vweird.f32 %v1430
        %vm1494 = vweird.f32 %v1488
        %vm1495 = vmor %vm1493, %vm1494
        %v1496 = vsel %vm1495, %v1488, %v1492
        %v1497 = vand.u32 2147483647, %v1430
        %vm1498 = vcmp.eq.f32.partialorder %v1497, 8.507059e+37
        %v1499 = vand.u32 %v1430, 2147483648
        %v1500 = vor.u32 1.1754944e-38, %v1499
        %v1501 = vsel %vm1498, %v1500, %v1496
        %v1502 = vmul.f32 %v1410, %v1501
        %v1503 = vrcp.pop %v1433
        %v1504 = vmul.f32 %v1433, %v1503
        %v1505 = vsub.f32 1.0, %v1504
        %v1506 = vmul.f32 %v1503, %v1505
        %v1507 = vadd.f32 %v1503, %v1506
        %vm1508 = vweird.f32 %v1433
        %vm1509 = vweird.f32 %v1503
        %vm1510 = vmor %vm1508, %vm1509
        %v1511 = vsel %vm1510, %v1503, %v1507
        %v1512 = vand.u32 2147483647, %v1433
        %vm1513 = vcmp.eq.f32.partialorder %v1512, 8.507059e+37
        %v1514 = vand.u32 %v1433, 2147483648
        %v1515 = vor.u32 1.1754944e-38, %v1514
        %v1516 = vsel %vm1513, %v1515, %v1511
        %v1517 = vmul.f32 %v1412, %v1516
        %v1518 = vrcp.pop %v1436
        %v1519 = vmul.f32 %v1436, %v1518
        %v1520 = vsub.f32 1.0, %v1519
        %v1521 = vmul.f32 %v1518, %v1520
        %v1522 = vadd.f32 %v1518, %v1521
        %vm1523 = vweird.f32 %v1436
        %vm1524 = vweird.f32 %v1518
        %vm1525 = vmor %vm1523, %vm1524
        %v1526 = vsel %vm1525, %v1518, %v1522
        %v1527 = vand.u32 2147483647, %v1436
        %vm1528 = vcmp.eq.f32.partialorder %v1527, 8.507059e+37
        %v1529 = vand.u32 %v1436, 2147483648
        %v1530 = vor.u32 1.1754944e-38, %v1529
        %v1531 = vsel %vm1528, %v1530, %v1526
        %v1532 = vmul.f32 %v1414, %v1531
        %v1533 = vrcp.pop %v1439
        %v1534 = vmul.f32 %v1439, %v1533
        %v1535 = vsub.f32 1.0, %v1534
        %v1536 = vmul.f32 %v1533, %v1535
        %v1537 = vadd.f32 %v1533, %v1536
        %vm1538 = vweird.f32 %v1439
        %vm1539 = vweird.f32 %v1533
        %vm1540 = vmor %vm1538, %vm1539
        %v1541 = vsel %vm1540, %v1533, %v1537
        %v1542 = vand.u32 2147483647, %v1439
        %vm1543 = vcmp.eq.f32.partialorder %v1542, 8.507059e+37
        %v1544 = vand.u32 %v1439, 2147483648
        %v1545 = vor.u32 1.1754944e-38, %v1544
        %v1546 = vsel %vm1543, %v1545, %v1541
        %v1547 = vmul.f32 %v1416, %v1546
        %v1548 = vrcp.pop %v1442
        %v1549 = vmul.f32 %v1442, %v1548
        %v1550 = vsub.f32 1.0, %v1549
        %v1551 = vmul.f32 %v1548, %v1550
        %v1552 = vadd.f32 %v1548, %v1551
        %vm1553 = vweird.f32 %v1442
        %vm1554 = vweird.f32 %v1548
        %vm1555 = vmor %vm1553, %vm1554
        %v1556 = vsel %vm1555, %v1548, %v1552
        %v1557 = vand.u32 2147483647, %v1442
        %vm1558 = vcmp.eq.f32.partialorder %v1557, 8.507059e+37
        %v1559 = vand.u32 %v1442, 2147483648
        %v1560 = vor.u32 1.1754944e-38, %v1559
        %v1561 = vsel %vm1558, %v1560, %v1556
        %v1562 = vmul.f32 %v1418, %v1561
        %v1564 = vsel %vm1370, %v1457, 0
        %1566 = vmatpush.msra.mxu0 0.0
        %1567 = vmatpush.msra.mxu0 0.0
        %1568 = vmatpush.msra.mxu0 0.0
        %1569 = vmatpush.msra.mxu0 0.0
        %1570 = vmatpush.msra.mxu0 0.0
        %1571 = vmatpush.msra.mxu0 0.0
        %1572 = vmatpush.msra.mxu0 0.0
        %1573 = vmatpush.msra.mxu0 0.0
        %1574 = vmatpush.msra.mxu0 0.0
        %1575 = vmatpush.msra.mxu0 0.0
        %1576 = vmatpush.msra.mxu0 0.0
        %1577 = vmatpush.msra.mxu0 0.0
        %1578 = vmatpush.msra.mxu0 0.0
        %1579 = vmatpush.msra.mxu0 0.0
        %1580 = vmatpush.msra.mxu0 0.0
        %1581 = vmatpush.msra.mxu0 %v925
        %1582 = vmatmul.f32.gmra.mxu0 %v1564
        %v1583 = vpop.f32.mrf.mxu0
        %v1584 = vadd.f32 0.0, %v1583
        %1585 = vdwg.mxu0
        %v1587 = vsel %vm1370, %v1472, 0
        %1589 = vmatpush.msra.mxu0 0.0
        %1590 = vmatpush.msra.mxu0 0.0
        %1591 = vmatpush.msra.mxu0 0.0
        %1592 = vmatpush.msra.mxu0 0.0
        %1593 = vmatpush.msra.mxu0 0.0
        %1594 = vmatpush.msra.mxu0 0.0
        %1595 = vmatpush.msra.mxu0 0.0
        %1596 = vmatpush.msra.mxu0 0.0
        %1597 = vmatpush.msra.mxu0 0.0
        %1598 = vmatpush.msra.mxu0 0.0
        %1599 = vmatpush.msra.mxu0 0.0
        %1600 = vmatpush.msra.mxu0 0.0
        %1601 = vmatpush.msra.mxu0 0.0
        %1602 = vmatpush.msra.mxu0 0.0
        %1603 = vmatpush.msra.mxu0 0.0
        %1604 = vmatpush.msra.mxu0 %v1001
        %1605 = vmatmul.f32.gmra.mxu0 %v1587
        %v1606 = vpop.f32.mrf.mxu0
        %v1607 = vadd.f32 0.0, %v1606
        %1608 = vdwg.mxu0
        %v1610 = vsel %vm1370, %v1487, 0
        %1612 = vmatpush.msra.mxu0 0.0
        %1613 = vmatpush.msra.mxu0 0.0
        %1614 = vmatpush.msra.mxu0 0.0
        %1615 = vmatpush.msra.mxu0 0.0
        %1616 = vmatpush.msra.mxu0 0.0
        %1617 = vmatpush.msra.mxu0 0.0
        %1618 = vmatpush.msra.mxu0 0.0
        %1619 = vmatpush.msra.mxu0 0.0
        %1620 = vmatpush.msra.mxu0 0.0
        %1621 = vmatpush.msra.mxu0 0.0
        %1622 = vmatpush.msra.mxu0 0.0
        %1623 = vmatpush.msra.mxu0 0.0
        %1624 = vmatpush.msra.mxu0 0.0
        %1625 = vmatpush.msra.mxu0 0.0
        %1626 = vmatpush.msra.mxu0 0.0
        %1627 = vmatpush.msra.mxu0 %v945
        %1628 = vmatmul.f32.gmra.mxu0 %v1610
        %v1629 = vpop.f32.mrf.mxu0
        %v1630 = vadd.f32 0.0, %v1629
        %1631 = vdwg.mxu0
        %v1633 = vsel %vm1370, %v1502, 0
        %1635 = vmatpush.msra.mxu0 0.0
        %1636 = vmatpush.msra.mxu0 0.0
        %1637 = vmatpush.msra.mxu0 0.0
        %1638 = vmatpush.msra.mxu0 0.0
        %1639 = vmatpush.msra.mxu0 0.0
        %1640 = vmatpush.msra.mxu0 0.0
        %1641 = vmatpush.msra.mxu0 0.0
        %1642 = vmatpush.msra.mxu0 0.0
        %1643 = vmatpush.msra.mxu0 0.0
        %1644 = vmatpush.msra.mxu0 0.0
        %1645 = vmatpush.msra.mxu0 0.0
        %1646 = vmatpush.msra.mxu0 0.0
        %1647 = vmatpush.msra.mxu0 0.0
        %1648 = vmatpush.msra.mxu0 0.0
        %1649 = vmatpush.msra.mxu0 0.0
        %1650 = vmatpush.msra.mxu0 %v1005
        %1651 = vmatmul.f32.gmra.mxu0 %v1633
        %v1652 = vpop.f32.mrf.mxu0
        %v1653 = vadd.f32 0.0, %v1652
        %1654 = vdwg.mxu0
        %v1656 = vsel %vm1370, %v1517, 0
        %1658 = vmatpush.msra.mxu0 0.0
        %1659 = vmatpush.msra.mxu0 0.0
        %1660 = vmatpush.msra.mxu0 0.0
        %1661 = vmatpush.msra.mxu0 0.0
        %1662 = vmatpush.msra.mxu0 0.0
        %1663 = vmatpush.msra.mxu0 0.0
        %1664 = vmatpush.msra.mxu0 0.0
        %1665 = vmatpush.msra.mxu0 0.0
        %1666 = vmatpush.msra.mxu0 0.0
        %1667 = vmatpush.msra.mxu0 0.0
        %1668 = vmatpush.msra.mxu0 0.0
        %1669 = vmatpush.msra.mxu0 0.0
        %1670 = vmatpush.msra.mxu0 0.0
        %1671 = vmatpush.msra.mxu0 0.0
        %1672 = vmatpush.msra.mxu0 0.0
        %1673 = vmatpush.msra.mxu0 %v965
        %1674 = vmatmul.f32.gmra.mxu0 %v1656
        %v1675 = vpop.f32.mrf.mxu0
        %v1676 = vadd.f32 0.0, %v1675
        %1677 = vdwg.mxu0
        %v1679 = vsel %vm1370, %v1532, 0
        %1681 = vmatpush.msra.mxu0 0.0
        %1682 = vmatpush.msra.mxu0 0.0
        %1683 = vmatpush.msra.mxu0 0.0
        %1684 = vmatpush.msra.mxu0 0.0
        %1685 = vmatpush.msra.mxu0 0.0
        %1686 = vmatpush.msra.mxu0 0.0
        %1687 = vmatpush.msra.mxu0 0.0
        %1688 = vmatpush.msra.mxu0 0.0
        %1689 = vmatpush.msra.mxu0 0.0
        %1690 = vmatpush.msra.mxu0 0.0
        %1691 = vmatpush.msra.mxu0 0.0
        %1692 = vmatpush.msra.mxu0 0.0
        %1693 = vmatpush.msra.mxu0 0.0
        %1694 = vmatpush.msra.mxu0 0.0
        %1695 = vmatpush.msra.mxu0 0.0
        %1696 = vmatpush.msra.mxu0 %v1009
        %1697 = vmatmul.f32.gmra.mxu0 %v1679
        %v1698 = vpop.f32.mrf.mxu0
        %v1699 = vadd.f32 0.0, %v1698
        %1700 = vdwg.mxu0
        %v1702 = vsel %vm1370, %v1547, 0
        %1704 = vmatpush.msra.mxu0 0.0
        %1705 = vmatpush.msra.mxu0 0.0
        %1706 = vmatpush.msra.mxu0 0.0
        %1707 = vmatpush.msra.mxu0 0.0
        %1708 = vmatpush.msra.mxu0 0.0
        %1709 = vmatpush.msra.mxu0 0.0
        %1710 = vmatpush.msra.mxu0 0.0
        %1711 = vmatpush.msra.mxu0 0.0
        %1712 = vmatpush.msra.mxu0 0.0
        %1713 = vmatpush.msra.mxu0 0.0
        %1714 = vmatpush.msra.mxu0 0.0
        %1715 = vmatpush.msra.mxu0 0.0
        %1716 = vmatpush.msra.mxu0 0.0
        %1717 = vmatpush.msra.mxu0 0.0
        %1718 = vmatpush.msra.mxu0 0.0
        %1719 = vmatpush.msra.mxu0 %v985
        %1720 = vmatmul.f32.gmra.mxu0 %v1702
        %v1721 = vpop.f32.mrf.mxu0
        %v1722 = vadd.f32 0.0, %v1721
        %1723 = vdwg.mxu0
        %v1725 = vsel %vm1370, %v1562, 0
        %1727 = vmatpush.msra.mxu0 0.0
        %1728 = vmatpush.msra.mxu0 0.0
        %1729 = vmatpush.msra.mxu0 0.0
        %1730 = vmatpush.msra.mxu0 0.0
        %1731 = vmatpush.msra.mxu0 0.0
        %1732 = vmatpush.msra.mxu0 0.0
        %1733 = vmatpush.msra.mxu0 0.0
        %1734 = vmatpush.msra.mxu0 0.0
        %1735 = vmatpush.msra.mxu0 0.0
        %1736 = vmatpush.msra.mxu0 0.0
        %1737 = vmatpush.msra.mxu0 0.0
        %1738 = vmatpush.msra.mxu0 0.0
        %1739 = vmatpush.msra.mxu0 0.0
        %1740 = vmatpush.msra.mxu0 0.0
        %1741 = vmatpush.msra.mxu0 0.0
        %1742 = vmatpush.msra.mxu0 %v1013
        %1743 = vmatmul.f32.gmra.mxu0 %v1725
        %v1744 = vpop.f32.mrf.mxu0
        %v1745 = vadd.f32 0.0, %v1744
        %1746 = vdwg.mxu0
        %1748 = vrot.lane.b32.xlu0 %v1607, 64
        %v1749 = vpop.permute.xlu0 %1748
        %1752 = vrot.lane.b32.xlu0 %v1653, 64
        %v1753 = vpop.permute.xlu0 %1752
        %1756 = vrot.lane.b32.xlu0 %v1699, 64
        %v1757 = vpop.permute.xlu0 %1756
        %1760 = vrot.lane.b32.xlu0 %v1745, 64
        %v1761 = vpop.permute.xlu0 %1760
        %v1763 = vsel %vm712, %v1584, %v1749
        %v1764 = vsel %vm712, %v1630, %v1753
        %v1765 = vsel %vm712, %v1676, %v1757
        %v1766 = vsel %vm712, %v1722, %v1761
        %1768 = vset.pattern.permute.xlu0 0
        %1769 = vperm.xlu0 %1768, %v711
        %v1770 = vpop.permute.xlu0 %1769
        %v1772 = vmul.f32 %v1763, %v1770
        %v1773 = vmul.f32 %v1764, %v1770
        %v1774 = vmul.f32 %v1765, %v1770
        %v1775 = vmul.f32 %v1766, %v1770
        %v1776 = vld [vmem:[#allocation8] sm:$0xff]
        %v1777 = vld [vmem:[#allocation8 + $0x8] sm:$0xff]
        %v1778 = vld [vmem:[#allocation8 + $0x10] sm:$0xff]
        %v1779 = vld [vmem:[#allocation8 + $0x18] sm:$0xff]
        %v1780 = vld [vmem:[#allocation8 + $0x20] sm:$0xff]
        %v1781 = vld [vmem:[#allocation8 + $0x28] sm:$0xff]
        %v1782 = vld [vmem:[#allocation8 + $0x30] sm:$0xff]
        %v1783 = vld [vmem:[#allocation8 + $0x38] sm:$0xff]
        %v1784 = vld [vmem:[#allocation8 + $0x40] sm:$0xff]
        %v1785 = vld [vmem:[#allocation8 + $0x48] sm:$0xff]
        %v1786 = vld [vmem:[#allocation8 + $0x50] sm:$0xff]
        %v1787 = vld [vmem:[#allocation8 + $0x58] sm:$0xff]
        %v1788 = vld [vmem:[#allocation8 + $0x60] sm:$0xff]
        %v1789 = vld [vmem:[#allocation8 + $0x68] sm:$0xff]
        %v1790 = vld [vmem:[#allocation8 + $0x70] sm:$0xff]
        %v1791 = vld [vmem:[#allocation8 + $0x78] sm:$0xff]
        %v1792 = vld [vmem:[#allocation8 + $0x80] sm:$0xff]
        %v1793 = vld [vmem:[#allocation8 + $0x88] sm:$0xff]
        %v1794 = vld [vmem:[#allocation8 + $0x90] sm:$0xff]
        %v1795 = vld [vmem:[#allocation8 + $0x98] sm:$0xff]
        %v1796 = vld [vmem:[#allocation8 + $0xa0] sm:$0xff]
        %v1797 = vld [vmem:[#allocation8 + $0xa8] sm:$0xff]
        %v1798 = vld [vmem:[#allocation8 + $0xb0] sm:$0xff]
        %v1799 = vld [vmem:[#allocation8 + $0xb8] sm:$0xff]
        %v1800 = vld [vmem:[#allocation8 + $0xc0] sm:$0xff]
        %v1801 = vld [vmem:[#allocation8 + $0xc8] sm:$0xff]
        %v1802 = vld [vmem:[#allocation8 + $0xd0] sm:$0xff]
        %v1803 = vld [vmem:[#allocation8 + $0xd8] sm:$0xff]
        %v1804 = vld [vmem:[#allocation8 + $0xe0] sm:$0xff]
        %v1805 = vld [vmem:[#allocation8 + $0xe8] sm:$0xff]
        %v1806 = vld [vmem:[#allocation8 + $0xf0] sm:$0xff]
        %v1807 = vld [vmem:[#allocation8 + $0xf8] sm:$0xff]
        %v1808 = vld [vmem:[#allocation8 + $0x100] sm:$0xff]
        %v1809 = vld [vmem:[#allocation8 + $0x108] sm:$0xff]
        %v1810 = vld [vmem:[#allocation8 + $0x110] sm:$0xff]
        %v1811 = vld [vmem:[#allocation8 + $0x118] sm:$0xff]
        %v1812 = vld [vmem:[#allocation8 + $0x120] sm:$0xff]
        %v1813 = vld [vmem:[#allocation8 + $0x128] sm:$0xff]
        %v1814 = vld [vmem:[#allocation8 + $0x130] sm:$0xff]
        %v1815 = vld [vmem:[#allocation8 + $0x138] sm:$0xff]
        %v1816 = vld [vmem:[#allocation8 + $0x140] sm:$0xff]
        %v1817 = vld [vmem:[#allocation8 + $0x148] sm:$0xff]
        %v1818 = vld [vmem:[#allocation8 + $0x150] sm:$0xff]
        %v1819 = vld [vmem:[#allocation8 + $0x158] sm:$0xff]
        %v1820 = vld [vmem:[#allocation8 + $0x160] sm:$0xff]
        %v1821 = vld [vmem:[#allocation8 + $0x168] sm:$0xff]
        %v1822 = vld [vmem:[#allocation8 + $0x170] sm:$0xff]
        %v1823 = vld [vmem:[#allocation8 + $0x178] sm:$0xff]
        %v1824 = vld [vmem:[#allocation8 + $0x180] sm:$0xff]
        %v1825 = vld [vmem:[#allocation8 + $0x188] sm:$0xff]
        %v1826 = vld [vmem:[#allocation8 + $0x190] sm:$0xff]
        %v1827 = vld [vmem:[#allocation8 + $0x198] sm:$0xff]
        %v1828 = vld [vmem:[#allocation8 + $0x1a0] sm:$0xff]
        %v1829 = vld [vmem:[#allocation8 + $0x1a8] sm:$0xff]
        %v1830 = vld [vmem:[#allocation8 + $0x1b0] sm:$0xff]
        %v1831 = vld [vmem:[#allocation8 + $0x1b8] sm:$0xff]
        %v1832 = vld [vmem:[#allocation8 + $0x1c0] sm:$0xff]
        %v1833 = vld [vmem:[#allocation8 + $0x1c8] sm:$0xff]
        %v1834 = vld [vmem:[#allocation8 + $0x1d0] sm:$0xff]
        %v1835 = vld [vmem:[#allocation8 + $0x1d8] sm:$0xff]
        %v1836 = vld [vmem:[#allocation8 + $0x1e0] sm:$0xff]
        %v1837 = vld [vmem:[#allocation8 + $0x1e8] sm:$0xff]
        %v1838 = vld [vmem:[#allocation8 + $0x1f0] sm:$0xff]
        %v1839 = vld [vmem:[#allocation8 + $0x1f8] sm:$0xff]
        %v1840 = vld [vmem:[%s8] sm:$0x1]
        %v1842 = vperm.slane %v1840, 0
        %1844 = vmatpush.msra.mxu0 %v1791
        %1845 = vmatpush.msra.mxu0 %v1790
        %1846 = vmatpush.msra.mxu0 %v1789
        %1847 = vmatpush.msra.mxu0 %v1788
        %1848 = vmatpush.msra.mxu0 %v1787
        %1849 = vmatpush.msra.mxu0 %v1786
        %1850 = vmatpush.msra.mxu0 %v1785
        %1851 = vmatpush.msra.mxu0 %v1784
        %1852 = vmatpush.msra.mxu0 %v1783
        %1853 = vmatpush.msra.mxu0 %v1782
        %1854 = vmatpush.msra.mxu0 %v1781
        %1855 = vmatpush.msra.mxu0 %v1780
        %1856 = vmatpush.msra.mxu0 %v1779
        %1857 = vmatpush.msra.mxu0 %v1778
        %1858 = vmatpush.msra.mxu0 %v1777
        %1859 = vmatpush.msra.mxu0 %v1776
        %1860 = vmatmul.f32.gmra.mxu0 %v1772
        %v1861 = vpop.f32.mrf.mxu0
        %v1862 = vadd.f32 %v1842, %v1861
        %1863 = vdwg.mxu0
        %1864 = vmatpush.msra.mxu0 %v1807
        %1865 = vmatpush.msra.mxu0 %v1806
        %1866 = vmatpush.msra.mxu0 %v1805
        %1867 = vmatpush.msra.mxu0 %v1804
        %1868 = vmatpush.msra.mxu0 %v1803
        %1869 = vmatpush.msra.mxu0 %v1802
        %1870 = vmatpush.msra.mxu0 %v1801
        %1871 = vmatpush.msra.mxu0 %v1800
        %1872 = vmatpush.msra.mxu0 %v1799
        %1873 = vmatpush.msra.mxu0 %v1798
        %1874 = vmatpush.msra.mxu0 %v1797
        %1875 = vmatpush.msra.mxu0 %v1796
        %1876 = vmatpush.msra.mxu0 %v1795
        %1877 = vmatpush.msra.mxu0 %v1794
        %1878 = vmatpush.msra.mxu0 %v1793
        %1879 = vmatpush.msra.mxu0 %v1792
        %1880 = vmatmul.f32.gmra.mxu0 %v1773
        %v1881 = vpop.f32.mrf.mxu0
        %v1882 = vadd.f32 %v1862, %v1881
        %1883 = vdwg.mxu0
        %1884 = vmatpush.msra.mxu0 %v1823
        %1885 = vmatpush.msra.mxu0 %v1822
        %1886 = vmatpush.msra.mxu0 %v1821
        %1887 = vmatpush.msra.mxu0 %v1820
        %1888 = vmatpush.msra.mxu0 %v1819
        %1889 = vmatpush.msra.mxu0 %v1818
        %1890 = vmatpush.msra.mxu0 %v1817
        %1891 = vmatpush.msra.mxu0 %v1816
        %1892 = vmatpush.msra.mxu0 %v1815
        %1893 = vmatpush.msra.mxu0 %v1814
        %1894 = vmatpush.msra.mxu0 %v1813
        %1895 = vmatpush.msra.mxu0 %v1812
        %1896 = vmatpush.msra.mxu0 %v1811
        %1897 = vmatpush.msra.mxu0 %v1810
        %1898 = vmatpush.msra.mxu0 %v1809
        %1899 = vmatpush.msra.mxu0 %v1808
        %1900 = vmatmul.f32.gmra.mxu0 %v1774
        %v1901 = vpop.f32.mrf.mxu0
        %v1902 = vadd.f32 %v1882, %v1901
        %1903 = vdwg.mxu0
        %1904 = vmatpush.msra.mxu0 %v1839
        %1905 = vmatpush.msra.mxu0 %v1838
        %1906 = vmatpush.msra.mxu0 %v1837
        %1907 = vmatpush.msra.mxu0 %v1836
        %1908 = vmatpush.msra.mxu0 %v1835
        %1909 = vmatpush.msra.mxu0 %v1834
        %1910 = vmatpush.msra.mxu0 %v1833
        %1911 = vmatpush.msra.mxu0 %v1832
        %1912 = vmatpush.msra.mxu0 %v1831
        %1913 = vmatpush.msra.mxu0 %v1830
        %1914 = vmatpush.msra.mxu0 %v1829
        %1915 = vmatpush.msra.mxu0 %v1828
        %1916 = vmatpush.msra.mxu0 %v1827
        %1917 = vmatpush.msra.mxu0 %v1826
        %1918 = vmatpush.msra.mxu0 %v1825
        %1919 = vmatpush.msra.mxu0 %v1824
        %1920 = vmatmul.f32.gmra.mxu0 %v1775
        %v1921 = vpop.f32.mrf.mxu0
        %v1922 = vadd.f32 %v1902, %v1921
        %1923 = vdwg.mxu0
        %v1924 = vsel %vm712, %v1922, 0.0
        %1925 = vadd.xlane.f32.xlu0 %v1924
        %v1926 = vpop.xlane.xlu0 %1925
        %v1927 = vmul.f32 %v1926, %v722
        %v1928 = vsub.f32 %v1922, %v1927
        %v1929 = vmul.f32 %v1928, %v1928
        %v1930 = vsel %vm712, %v1929, 0.0
        %1931 = vadd.xlane.f32.xlu0 %v1930
        %v1932 = vpop.xlane.xlu0 %1931
        %v1933 = vmul.f32 %v1932, %v722
        %v1934 = vadd.f32 %v1933, 1e-05
        %v1935 = vrsqrt.pop %v1934
        %v1936 = vmul.f32 %v1935, %v1934
        %v1937 = vmul.f32 %v1936, %v1935
        %v1938 = vmul.f32 0.5, %v1937
        %v1939 = vsub.f32 1.5, %v1938
        %v1940 = vmul.f32 %v1935, %v1939
        %vm1941 = vweird.f32 %v1934
        %vm1942 = vweird.f32 %v1935
        %vm1943 = vmor %vm1941, %vm1942
        %v1944 = vsel %vm1943, %v1935, %v1940
        %v1945 = vmul.f32 %v1928, %v1944
        %v1946 = vld [vmem:[#allocation13] sm:$0xff]
        %v1947 = vld [vmem:[#allocation13 + $0x8] sm:$0xff]
        %v1948 = vld [vmem:[#allocation13 + $0x10] sm:$0xff]
        %v1949 = vld [vmem:[#allocation13 + $0x18] sm:$0xff]
        %v1950 = vld [vmem:[#allocation13 + $0x20] sm:$0xff]
        %v1951 = vld [vmem:[#allocation13 + $0x28] sm:$0xff]
        %v1952 = vld [vmem:[#allocation13 + $0x30] sm:$0xff]
        %v1953 = vld [vmem:[#allocation13 + $0x38] sm:$0xff]
        %v1954 = vld [vmem:[%s14] sm:$0x1]
        %v1956 = vperm.slane %v1954, 0
        %v1959 = vsel %vm712, %v1945, 0
        %1961 = vmatpush.msra.mxu0 0.0
        %1962 = vmatpush.msra.mxu0 0.0
        %1963 = vmatpush.msra.mxu0 0.0
        %1964 = vmatpush.msra.mxu0 0.0
        %1965 = vmatpush.msra.mxu0 0.0
        %1966 = vmatpush.msra.mxu0 0.0
        %1967 = vmatpush.msra.mxu0 0.0
        %1968 = vmatpush.msra.mxu0 0.0
        %1969 = vmatpush.msra.mxu0 %v1953
        %1970 = vmatpush.msra.mxu0 %v1952
        %1971 = vmatpush.msra.mxu0 %v1951
        %1972 = vmatpush.msra.mxu0 %v1950
        %1973 = vmatpush.msra.mxu0 %v1949
        %1974 = vmatpush.msra.mxu0 %v1948
        %1975 = vmatpush.msra.mxu0 %v1947
        %1976 = vmatpush.msra.mxu0 %v1946
        %1977 = vmatmul.f32.gmra.mxu0 %v1959
        %v1978 = vpop.f32.mrf.mxu0
        %v1979 = vadd.f32 %v1956, %v1978
        %1980 = vdwg.mxu0
        %v1981 = vadd.f32 %v1979, %v1945
        %v1982 = vsel %vm712, %v1981, 0.0
        %1983 = vadd.xlane.f32.xlu0 %v1982
        %v1984 = vpop.xlane.xlu0 %1983
        %v1985 = vmul.f32 %v1984, %v722
        %v1986 = vsub.f32 %v1981, %v1985
        %v1987 = vmul.f32 %v1986, %v1986
        %v1988 = vsel %vm712, %v1987, 0.0
        %1989 = vadd.xlane.f32.xlu0 %v1988
        %v1990 = vpop.xlane.xlu0 %1989
        %v1991 = vmul.f32 %v1990, %v722
        %v1992 = vadd.f32 %v1991, 1e-05
        %v1993 = vrsqrt.pop %v1992
        %v1994 = vmul.f32 %v1993, %v1992
        %v1995 = vmul.f32 %v1994, %v1993
        %v1996 = vmul.f32 0.5, %v1995
        %v1997 = vsub.f32 1.5, %v1996
        %v1998 = vmul.f32 %v1993, %v1997
        %vm1999 = vweird.f32 %v1992
        %vm2000 = vweird.f32 %v1993
        %vm2001 = vmor %vm1999, %vm2000
        %v2002 = vsel %vm2001, %v1993, %v1998
        %v2003 = vmul.f32 %v1986, %v2002
        %v2004 = vld [vmem:[#allocation10] sm:$0xff]
        %v2005 = vld [vmem:[#allocation10 + $0x8] sm:$0xff]
        %v2006 = vld [vmem:[#allocation10 + $0x10] sm:$0xff]
        %v2007 = vld [vmem:[#allocation10 + $0x18] sm:$0xff]
        %v2008 = vld [vmem:[#allocation10 + $0x20] sm:$0xff]
        %v2009 = vld [vmem:[#allocation10 + $0x28] sm:$0xff]
        %v2010 = vld [vmem:[#allocation10 + $0x30] sm:$0xff]
        %v2011 = vld [vmem:[#allocation10 + $0x38] sm:$0xff]
        %v2012 = vld [vmem:[%s10] sm:$0x1]
        %v2014 = vperm.slane %v2012, 0
        %v2017 = vsel %vm712, %v2003, 0
        %2019 = vmatpush.msra.mxu0 0.0
        %2020 = vmatpush.msra.mxu0 0.0
        %2021 = vmatpush.msra.mxu0 0.0
        %2022 = vmatpush.msra.mxu0 0.0
        %2023 = vmatpush.msra.mxu0 0.0
        %2024 = vmatpush.msra.mxu0 0.0
        %2025 = vmatpush.msra.mxu0 0.0
        %2026 = vmatpush.msra.mxu0 0.0
        %2027 = vmatpush.msra.mxu0 %v2011
        %2028 = vmatpush.msra.mxu0 %v2010
        %2029 = vmatpush.msra.mxu0 %v2009
        %2030 = vmatpush.msra.mxu0 %v2008
        %2031 = vmatpush.msra.mxu0 %v2007
        %2032 = vmatpush.msra.mxu0 %v2006
        %2033 = vmatpush.msra.mxu0 %v2005
        %2034 = vmatpush.msra.mxu0 %v2004
        %2035 = vmatmul.f32.gmra.mxu0 %v2017
        %v2036 = vpop.f32.mrf.mxu0
        %v2037 = vadd.f32 %v2014, %v2036
        %2038 = vdwg.mxu0
        %v2039 = vmax.f32 %v2037, 0.0
        %v2040 = vld [vmem:[#allocation11] sm:$0xff]
        %v2041 = vld [vmem:[#allocation11 + $0x8] sm:$0xff]
        %v2042 = vld [vmem:[#allocation11 + $0x10] sm:$0xff]
        %v2043 = vld [vmem:[#allocation11 + $0x18] sm:$0xff]
        %v2044 = vld [vmem:[#allocation11 + $0x20] sm:$0xff]
        %v2045 = vld [vmem:[#allocation11 + $0x28] sm:$0xff]
        %v2046 = vld [vmem:[#allocation11 + $0x30] sm:$0xff]
        %v2047 = vld [vmem:[#allocation11 + $0x38] sm:$0xff]
        %v2048 = vld [vmem:[%s12] sm:$0x1]
        %v2050 = vperm.slane %v2048, 0
        %v2053 = vsel %vm712, %v2039, 0
        %2055 = vmatpush.msra.mxu0 0.0
        %2056 = vmatpush.msra.mxu0 0.0
        %2057 = vmatpush.msra.mxu0 0.0
        %2058 = vmatpush.msra.mxu0 0.0
        %2059 = vmatpush.msra.mxu0 0.0
        %2060 = vmatpush.msra.mxu0 0.0
        %2061 = vmatpush.msra.mxu0 0.0
        %2062 = vmatpush.msra.mxu0 0.0
        %2063 = vmatpush.msra.mxu0 %v2047
        %2064 = vmatpush.msra.mxu0 %v2046
        %2065 = vmatpush.msra.mxu0 %v2045
        %2066 = vmatpush.msra.mxu0 %v2044
        %2067 = vmatpush.msra.mxu0 %v2043
        %2068 = vmatpush.msra.mxu0 %v2042
        %2069 = vmatpush.msra.mxu0 %v2041
        %2070 = vmatpush.msra.mxu0 %v2040
        %2071 = vmatmul.f32.gmra.mxu0 %v2053
        %v2072 = vpop.f32.mrf.mxu0
        %v2073 = vadd.f32 %v2050, %v2072
        %2074 = vdwg.mxu0
        %v2075 = vsel %vm712, %v2073, 0.0
        %2076 = vadd.xlane.f32.xlu0 %v2075
        %v2077 = vpop.xlane.xlu0 %2076
        %v2078 = vmul.f32 %v2077, %v722
        %v2079 = vsub.f32 %v2073, %v2078
        %v2080 = vmul.f32 %v2079, %v2079
        %v2081 = vsel %vm712, %v2080, 0.0
        %2082 = vadd.xlane.f32.xlu0 %v2081
        %v2083 = vpop.xlane.xlu0 %2082
        %v2084 = vmul.f32 %v2083, %v722
        %v2085 = vadd.f32 %v2084, 1e-05
        %v2086 = vrsqrt.pop %v2085
        %v2087 = vmul.f32 %v2086, %v2085
        %v2088 = vmul.f32 %v2087, %v2086
        %v2089 = vmul.f32 0.5, %v2088
        %v2090 = vsub.f32 1.5, %v2089
        %v2091 = vmul.f32 %v2086, %v2090
        %vm2092 = vweird.f32 %v2085
        %vm2093 = vweird.f32 %v2086
        %vm2094 = vmor %vm2092, %vm2093
        %v2095 = vsel %vm2094, %v2086, %v2091
        %v2096 = vmul.f32 %v2079, %v2095
        %v2097 = vld [vmem:[#allocation14] sm:$0xff]
        %v2098 = vld [vmem:[#allocation14 + $0x8] sm:$0xff]
        %v2099 = vld [vmem:[#allocation14 + $0x10] sm:$0xff]
        %v2100 = vld [vmem:[#allocation14 + $0x18] sm:$0xff]
        %v2101 = vld [vmem:[#allocation14 + $0x20] sm:$0xff]
        %v2102 = vld [vmem:[#allocation14 + $0x28] sm:$0xff]
        %v2103 = vld [vmem:[#allocation14 + $0x30] sm:$0xff]
        %v2104 = vld [vmem:[#allocation14 + $0x38] sm:$0xff]
        %v2105 = vld [vmem:[%s16] sm:$0x1]
        %v2107 = vperm.slane %v2105, 0
        %v2110 = vsel %vm712, %v2096, 0
        %2112 = vmatpush.msra.mxu0 0.0
        %2113 = vmatpush.msra.mxu0 0.0
        %2114 = vmatpush.msra.mxu0 0.0
        %2115 = vmatpush.msra.mxu0 0.0
        %2116 = vmatpush.msra.mxu0 0.0
        %2117 = vmatpush.msra.mxu0 0.0
        %2118 = vmatpush.msra.mxu0 0.0
        %2119 = vmatpush.msra.mxu0 0.0
        %2120 = vmatpush.msra.mxu0 %v2104
        %2121 = vmatpush.msra.mxu0 %v2103
        %2122 = vmatpush.msra.mxu0 %v2102
        %2123 = vmatpush.msra.mxu0 %v2101
        %2124 = vmatpush.msra.mxu0 %v2100
        %2125 = vmatpush.msra.mxu0 %v2099
        %2126 = vmatpush.msra.mxu0 %v2098
        %2127 = vmatpush.msra.mxu0 %v2097
        %2128 = vmatmul.f32.gmra.mxu0 %v2110
        %v2129 = vpop.f32.mrf.mxu0
        %v2130 = vadd.f32 %v2107, %v2129
        %2131 = vdwg.mxu0
        %v2132 = vadd.f32 %v2130, %v2096
        %v2133 = vsel %vm712, %v2132, 0.0
        %2134 = vadd.xlane.f32.xlu0 %v2133
        %v2135 = vpop.xlane.xlu0 %2134
        %v2136 = vmul.f32 %v2135, %v722
        %v2137 = vsub.f32 %v2132, %v2136
        %v2138 = vmul.f32 %v2137, %v2137
        %v2139 = vsel %vm712, %v2138, 0.0
        %2140 = vadd.xlane.f32.xlu0 %v2139
        %v2141 = vpop.xlane.xlu0 %2140
        %v2142 = vmul.f32 %v2141, %v722
        %v2143 = vadd.f32 %v2142, 1e-05
        %v2144 = vrsqrt.pop %v2143
        %v2145 = vmul.f32 %v2144, %v2143
        %v2146 = vmul.f32 %v2145, %v2144
        %v2147 = vmul.f32 0.5, %v2146
        %v2148 = vsub.f32 1.5, %v2147
        %v2149 = vmul.f32 %v2144, %v2148
        %vm2150 = vweird.f32 %v2143
        %vm2151 = vweird.f32 %v2144
        %vm2152 = vmor %vm2150, %vm2151
        %v2153 = vsel %vm2152, %v2144, %v2149
        %v2154 = vmul.f32 %v2137, %v2153
        %v2155 = vld [vmem:[#allocation2] sm:$0xff]
        %v2156 = vld [vmem:[#allocation2 + $0x8] sm:$0xff]
        %v2157 = vld [vmem:[#allocation2 + $0x10] sm:$0xff]
        %v2158 = vld [vmem:[#allocation2 + $0x18] sm:$0xff]
        %v2159 = vld [vmem:[#allocation2 + $0x20] sm:$0xff]
        %v2160 = vld [vmem:[#allocation2 + $0x28] sm:$0xff]
        %v2161 = vld [vmem:[#allocation2 + $0x30] sm:$0xff]
        %v2162 = vld [vmem:[#allocation2 + $0x38] sm:$0xff]
        %v2163 = vld [vmem:[#allocation2 + $0x40] sm:$0xff]
        %v2164 = vld [vmem:[#allocation2 + $0x48] sm:$0xff]
        %v2165 = vld [vmem:[#allocation2 + $0x50] sm:$0xff]
        %v2166 = vld [vmem:[#allocation2 + $0x58] sm:$0xff]
        %v2167 = vld [vmem:[#allocation2 + $0x60] sm:$0xff]
        %v2168 = vld [vmem:[#allocation2 + $0x68] sm:$0xff]
        %v2169 = vld [vmem:[#allocation2 + $0x70] sm:$0xff]
        %v2170 = vld [vmem:[#allocation2 + $0x78] sm:$0xff]
        %v2171 = vld [vmem:[#allocation2 + $0x80] sm:$0xff]
        %v2172 = vld [vmem:[#allocation2 + $0x88] sm:$0xff]
        %v2173 = vld [vmem:[#allocation2 + $0x90] sm:$0xff]
        %v2174 = vld [vmem:[#allocation2 + $0x98] sm:$0xff]
        %v2175 = vld [vmem:[#allocation2 + $0xa0] sm:$0xff]
        %v2176 = vld [vmem:[#allocation2 + $0xa8] sm:$0xff]
        %v2177 = vld [vmem:[#allocation2 + $0xb0] sm:$0xff]
        %v2178 = vld [vmem:[#allocation2 + $0xb8] sm:$0xff]
        %v2179 = vld [vmem:[#allocation2 + $0xc0] sm:$0xff]
        %v2180 = vld [vmem:[#allocation2 + $0xc8] sm:$0xff]
        %v2181 = vld [vmem:[#allocation2 + $0xd0] sm:$0xff]
        %v2182 = vld [vmem:[#allocation2 + $0xd8] sm:$0xff]
        %v2183 = vld [vmem:[#allocation2 + $0xe0] sm:$0xff]
        %v2184 = vld [vmem:[#allocation2 + $0xe8] sm:$0xff]
        %v2185 = vld [vmem:[#allocation2 + $0xf0] sm:$0xff]
        %v2186 = vld [vmem:[#allocation2 + $0xf8] sm:$0xff]
        %v2187 = vld [vmem:[#allocation5] sm:$0xf]
        %v2189 = vperm.slane %v2187, 0
        %v2190 = vperm.slane %v2187, 1
        %v2191 = vperm.slane %v2187, 2
        %v2192 = vperm.slane %v2187, 3
        %v2198 = vsel %vm712, %v2154, 0
        %2200 = vmatpush.msra.mxu0 0.0
        %2201 = vmatpush.msra.mxu0 0.0
        %2202 = vmatpush.msra.mxu0 0.0
        %2203 = vmatpush.msra.mxu0 0.0
        %2204 = vmatpush.msra.mxu0 0.0
        %2205 = vmatpush.msra.mxu0 0.0
        %2206 = vmatpush.msra.mxu0 0.0
        %2207 = vmatpush.msra.mxu0 0.0
        %2208 = vmatpush.msra.mxu0 %v2183
        %2209 = vmatpush.msra.mxu0 %v2179
        %2210 = vmatpush.msra.mxu0 %v2175
        %2211 = vmatpush.msra.mxu0 %v2171
        %2212 = vmatpush.msra.mxu0 %v2167
        %2213 = vmatpush.msra.mxu0 %v2163
        %2214 = vmatpush.msra.mxu0 %v2159
        %2215 = vmatpush.msra.mxu0 %v2155
        %2216 = vmatmul.f32.gmra.mxu0 %v2198
        %v2217 = vpop.f32.mrf.mxu0
        %v2218 = vadd.f32 %v2189, %v2217
        %2219 = vdwg.mxu0
        %2220 = vmatpush.msra.mxu0 0.0
        %2221 = vmatpush.msra.mxu0 0.0
        %2222 = vmatpush.msra.mxu0 0.0
        %2223 = vmatpush.msra.mxu0 0.0
        %2224 = vmatpush.msra.mxu0 0.0
        %2225 = vmatpush.msra.mxu0 0.0
        %2226 = vmatpush.msra.mxu0 0.0
        %2227 = vmatpush.msra.mxu0 0.0
        %2228 = vmatpush.msra.mxu0 %v2184
        %2229 = vmatpush.msra.mxu0 %v2180
        %2230 = vmatpush.msra.mxu0 %v2176
        %2231 = vmatpush.msra.mxu0 %v2172
        %2232 = vmatpush.msra.mxu0 %v2168
        %2233 = vmatpush.msra.mxu0 %v2164
        %2234 = vmatpush.msra.mxu0 %v2160
        %2235 = vmatpush.msra.mxu0 %v2156
        %2236 = vmatmul.f32.gmra.mxu0 %v2198
        %v2237 = vpop.f32.mrf.mxu0
        %v2238 = vadd.f32 %v2190, %v2237
        %2239 = vdwg.mxu0
        %2240 = vmatpush.msra.mxu0 0.0
        %2241 = vmatpush.msra.mxu0 0.0
        %2242 = vmatpush.msra.mxu0 0.0
        %2243 = vmatpush.msra.mxu0 0.0
        %2244 = vmatpush.msra.mxu0 0.0
        %2245 = vmatpush.msra.mxu0 0.0
        %2246 = vmatpush.msra.mxu0 0.0
        %2247 = vmatpush.msra.mxu0 0.0
        %2248 = vmatpush.msra.mxu0 %v2185
        %2249 = vmatpush.msra.mxu0 %v2181
        %2250 = vmatpush.msra.mxu0 %v2177
        %2251 = vmatpush.msra.mxu0 %v2173
        %2252 = vmatpush.msra.mxu0 %v2169
        %2253 = vmatpush.msra.mxu0 %v2165
        %2254 = vmatpush.msra.mxu0 %v2161
        %2255 = vmatpush.msra.mxu0 %v2157
        %2256 = vmatmul.f32.gmra.mxu0 %v2198
        %v2257 = vpop.f32.mrf.mxu0
        %v2258 = vadd.f32 %v2191, %v2257
        %2259 = vdwg.mxu0
        %2260 = vmatpush.msra.mxu0 0.0
        %2261 = vmatpush.msra.mxu0 0.0
        %2262 = vmatpush.msra.mxu0 0.0
        %2263 = vmatpush.msra.mxu0 0.0
        %2264 = vmatpush.msra.mxu0 0.0
        %2265 = vmatpush.msra.mxu0 0.0
        %2266 = vmatpush.msra.mxu0 0.0
        %2267 = vmatpush.msra.mxu0 0.0
        %2268 = vmatpush.msra.mxu0 %v2186
        %2269 = vmatpush.msra.mxu0 %v2182
        %2270 = vmatpush.msra.mxu0 %v2178
        %2271 = vmatpush.msra.mxu0 %v2174
        %2272 = vmatpush.msra.mxu0 %v2170
        %2273 = vmatpush.msra.mxu0 %v2166
        %2274 = vmatpush.msra.mxu0 %v2162
        %2275 = vmatpush.msra.mxu0 %v2158
        %2276 = vmatmul.f32.gmra.mxu0 %v2198
        %v2277 = vpop.f32.mrf.mxu0
        %v2278 = vadd.f32 %v2192, %v2277
        %2279 = vdwg.mxu0
        %v2280 = vmul.f32 %v2218, 0.125
        %v2281 = vmul.f32 %v2238, 0.125
        %v2282 = vmul.f32 %v2258, 0.125
        %v2283 = vmul.f32 %v2278, 0.125
        %2285 = vrot.lane.b32.xlu0 %v2280, 64
        %v2286 = vpop.permute.xlu0 %2285
        %2288 = vrot.lane.b32.xlu0 %v2281, 64
        %v2289 = vpop.permute.xlu0 %2288
        %2291 = vrot.lane.b32.xlu0 %v2282, 64
        %v2292 = vpop.permute.xlu0 %2291
        %2294 = vrot.lane.b32.xlu0 %v2283, 64
        %v2295 = vpop.permute.xlu0 %2294
        %v2296 = vsel %vm712, %v2280, 0
        %2298 = vmatpush.xpose.msra.mxu0 0.0
        %2299 = vmatpush.xpose.msra.mxu0 0.0
        %2300 = vmatpush.xpose.msra.mxu0 0.0
        %2301 = vmatpush.xpose.msra.mxu0 0.0
        %2302 = vmatpush.xpose.msra.mxu0 0.0
        %2303 = vmatpush.xpose.msra.mxu0 0.0
        %2304 = vmatpush.xpose.msra.mxu0 0.0
        %2305 = vmatpush.xpose.msra.mxu0 0.0
        %2306 = vmatpush.xpose.msra.mxu0 0.0
        %2307 = vmatpush.xpose.msra.mxu0 0.0
        %2308 = vmatpush.xpose.msra.mxu0 0.0
        %2309 = vmatpush.xpose.msra.mxu0 0.0
        %2310 = vmatpush.xpose.msra.mxu0 0.0
        %2311 = vmatpush.xpose.msra.mxu0 0.0
        %2312 = vmatpush.xpose.msra.mxu0 0.0
        %2313 = vmatpush.xpose.msra.mxu0 %v1180
        %2314 = vmatmul.f32.gmra.mxu0 %v2296
        %v2315 = vpop.f32.mrf.mxu0
        %v2316 = vadd.f32 0.0, %v2315
        %2317 = vdwg.mxu0
        %v2318 = vsel %vm712, %v2286, 0
        %2320 = vmatpush.xpose.msra.mxu0 0.0
        %2321 = vmatpush.xpose.msra.mxu0 0.0
        %2322 = vmatpush.xpose.msra.mxu0 0.0
        %2323 = vmatpush.xpose.msra.mxu0 0.0
        %2324 = vmatpush.xpose.msra.mxu0 0.0
        %2325 = vmatpush.xpose.msra.mxu0 0.0
        %2326 = vmatpush.xpose.msra.mxu0 0.0
        %2327 = vmatpush.xpose.msra.mxu0 0.0
        %2328 = vmatpush.xpose.msra.mxu0 0.0
        %2329 = vmatpush.xpose.msra.mxu0 0.0
        %2330 = vmatpush.xpose.msra.mxu0 0.0
        %2331 = vmatpush.xpose.msra.mxu0 0.0
        %2332 = vmatpush.xpose.msra.mxu0 0.0
        %2333 = vmatpush.xpose.msra.mxu0 0.0
        %2334 = vmatpush.xpose.msra.mxu0 0.0
        %2335 = vmatpush.xpose.msra.mxu0 %v1204
        %2336 = vmatmul.f32.gmra.mxu0 %v2318
        %v2337 = vpop.f32.mrf.mxu0
        %v2338 = vadd.f32 0.0, %v2337
        %2339 = vdwg.mxu0
        %v2340 = vsel %vm712, %v2281, 0
        %2342 = vmatpush.xpose.msra.mxu0 0.0
        %2343 = vmatpush.xpose.msra.mxu0 0.0
        %2344 = vmatpush.xpose.msra.mxu0 0.0
        %2345 = vmatpush.xpose.msra.mxu0 0.0
        %2346 = vmatpush.xpose.msra.mxu0 0.0
        %2347 = vmatpush.xpose.msra.mxu0 0.0
        %2348 = vmatpush.xpose.msra.mxu0 0.0
        %2349 = vmatpush.xpose.msra.mxu0 0.0
        %2350 = vmatpush.xpose.msra.mxu0 0.0
        %2351 = vmatpush.xpose.msra.mxu0 0.0
        %2352 = vmatpush.xpose.msra.mxu0 0.0
        %2353 = vmatpush.xpose.msra.mxu0 0.0
        %2354 = vmatpush.xpose.msra.mxu0 0.0
        %2355 = vmatpush.xpose.msra.mxu0 0.0
        %2356 = vmatpush.xpose.msra.mxu0 0.0
        %2357 = vmatpush.xpose.msra.mxu0 %v1228
        %2358 = vmatmul.f32.gmra.mxu0 %v2340
        %v2359 = vpop.f32.mrf.mxu0
        %v2360 = vadd.f32 0.0, %v2359
        %2361 = vdwg.mxu0
        %v2362 = vsel %vm712, %v2289, 0
        %2364 = vmatpush.xpose.msra.mxu0 0.0
        %2365 = vmatpush.xpose.msra.mxu0 0.0
        %2366 = vmatpush.xpose.msra.mxu0 0.0
        %2367 = vmatpush.xpose.msra.mxu0 0.0
        %2368 = vmatpush.xpose.msra.mxu0 0.0
        %2369 = vmatpush.xpose.msra.mxu0 0.0
        %2370 = vmatpush.xpose.msra.mxu0 0.0
        %2371 = vmatpush.xpose.msra.mxu0 0.0
        %2372 = vmatpush.xpose.msra.mxu0 0.0
        %2373 = vmatpush.xpose.msra.mxu0 0.0
        %2374 = vmatpush.xpose.msra.mxu0 0.0
        %2375 = vmatpush.xpose.msra.mxu0 0.0
        %2376 = vmatpush.xpose.msra.mxu0 0.0
        %2377 = vmatpush.xpose.msra.mxu0 0.0
        %2378 = vmatpush.xpose.msra.mxu0 0.0
        %2379 = vmatpush.xpose.msra.mxu0 %v1252
        %2380 = vmatmul.f32.gmra.mxu0 %v2362
        %v2381 = vpop.f32.mrf.mxu0
        %v2382 = vadd.f32 0.0, %v2381
        %2383 = vdwg.mxu0
        %v2384 = vsel %vm712, %v2282, 0
        %2386 = vmatpush.xpose.msra.mxu0 0.0
        %2387 = vmatpush.xpose.msra.mxu0 0.0
        %2388 = vmatpush.xpose.msra.mxu0 0.0
        %2389 = vmatpush.xpose.msra.mxu0 0.0
        %2390 = vmatpush.xpose.msra.mxu0 0.0
        %2391 = vmatpush.xpose.msra.mxu0 0.0
        %2392 = vmatpush.xpose.msra.mxu0 0.0
        %2393 = vmatpush.xpose.msra.mxu0 0.0
        %2394 = vmatpush.xpose.msra.mxu0 0.0
        %2395 = vmatpush.xpose.msra.mxu0 0.0
        %2396 = vmatpush.xpose.msra.mxu0 0.0
        %2397 = vmatpush.xpose.msra.mxu0 0.0
        %2398 = vmatpush.xpose.msra.mxu0 0.0
        %2399 = vmatpush.xpose.msra.mxu0 0.0
        %2400 = vmatpush.xpose.msra.mxu0 0.0
        %2401 = vmatpush.xpose.msra.mxu0 %v1276
        %2402 = vmatmul.f32.gmra.mxu0 %v2384
        %v2403 = vpop.f32.mrf.mxu0
        %v2404 = vadd.f32 0.0, %v2403
        %2405 = vdwg.mxu0
        %v2406 = vsel %vm712, %v2292, 0
        %2408 = vmatpush.xpose.msra.mxu0 0.0
        %2409 = vmatpush.xpose.msra.mxu0 0.0
        %2410 = vmatpush.xpose.msra.mxu0 0.0
        %2411 = vmatpush.xpose.msra.mxu0 0.0
        %2412 = vmatpush.xpose.msra.mxu0 0.0
        %2413 = vmatpush.xpose.msra.mxu0 0.0
        %2414 = vmatpush.xpose.msra.mxu0 0.0
        %2415 = vmatpush.xpose.msra.mxu0 0.0
        %2416 = vmatpush.xpose.msra.mxu0 0.0
        %2417 = vmatpush.xpose.msra.mxu0 0.0
        %2418 = vmatpush.xpose.msra.mxu0 0.0
        %2419 = vmatpush.xpose.msra.mxu0 0.0
        %2420 = vmatpush.xpose.msra.mxu0 0.0
        %2421 = vmatpush.xpose.msra.mxu0 0.0
        %2422 = vmatpush.xpose.msra.mxu0 0.0
        %2423 = vmatpush.xpose.msra.mxu0 %v1300
        %2424 = vmatmul.f32.gmra.mxu0 %v2406
        %v2425 = vpop.f32.mrf.mxu0
        %v2426 = vadd.f32 0.0, %v2425
        %2427 = vdwg.mxu0
        %v2428 = vsel %vm712, %v2283, 0
        %2430 = vmatpush.xpose.msra.mxu0 0.0
        %2431 = vmatpush.xpose.msra.mxu0 0.0
        %2432 = vmatpush.xpose.msra.mxu0 0.0
        %2433 = vmatpush.xpose.msra.mxu0 0.0
        %2434 = vmatpush.xpose.msra.mxu0 0.0
        %2435 = vmatpush.xpose.msra.mxu0 0.0
        %2436 = vmatpush.xpose.msra.mxu0 0.0
        %2437 = vmatpush.xpose.msra.mxu0 0.0
        %2438 = vmatpush.xpose.msra.mxu0 0.0
        %2439 = vmatpush.xpose.msra.mxu0 0.0
        %2440 = vmatpush.xpose.msra.mxu0 0.0
        %2441 = vmatpush.xpose.msra.mxu0 0.0
        %2442 = vmatpush.xpose.msra.mxu0 0.0
        %2443 = vmatpush.xpose.msra.mxu0 0.0
        %2444 = vmatpush.xpose.msra.mxu0 0.0
        %2445 = vmatpush.xpose.msra.mxu0 %v1324
        %2446 = vmatmul.f32.gmra.mxu0 %v2428
        %v2447 = vpop.f32.mrf.mxu0
        %v2448 = vadd.f32 0.0, %v2447
        %2449 = vdwg.mxu0
        %v2450 = vsel %vm712, %v2295, 0
        %2452 = vmatpush.xpose.msra.mxu0 0.0
        %2453 = vmatpush.xpose.msra.mxu0 0.0
        %2454 = vmatpush.xpose.msra.mxu0 0.0
        %2455 = vmatpush.xpose.msra.mxu0 0.0
        %2456 = vmatpush.xpose.msra.mxu0 0.0
        %2457 = vmatpush.xpose.msra.mxu0 0.0
        %2458 = vmatpush.xpose.msra.mxu0 0.0
        %2459 = vmatpush.xpose.msra.mxu0 0.0
        %2460 = vmatpush.xpose.msra.mxu0 0.0
        %2461 = vmatpush.xpose.msra.mxu0 0.0
        %2462 = vmatpush.xpose.msra.mxu0 0.0
        %2463 = vmatpush.xpose.msra.mxu0 0.0
        %2464 = vmatpush.xpose.msra.mxu0 0.0
        %2465 = vmatpush.xpose.msra.mxu0 0.0
        %2466 = vmatpush.xpose.msra.mxu0 0.0
        %2467 = vmatpush.xpose.msra.mxu0 %v1348
        %2468 = vmatmul.f32.gmra.mxu0 %v2450
        %v2469 = vpop.f32.mrf.mxu0
        %v2470 = vadd.f32 0.0, %v2469
        %2471 = vdwg.mxu0
        %v2472 = vsel %vm1370, %v2316, -inf
        %2473 = vmax.xlane.f32.xlu0 %v2472
        %v2474 = vpop.xlane.xlu0 %2473
        %v2475 = vsel %vm1370, %v2338, -inf
        %2476 = vmax.xlane.f32.xlu0 %v2475
        %v2477 = vpop.xlane.xlu0 %2476
        %v2478 = vsel %vm1370, %v2360, -inf
        %2479 = vmax.xlane.f32.xlu0 %v2478
        %v2480 = vpop.xlane.xlu0 %2479
        %v2481 = vsel %vm1370, %v2382, -inf
        %2482 = vmax.xlane.f32.xlu0 %v2481
        %v2483 = vpop.xlane.xlu0 %2482
        %v2484 = vsel %vm1370, %v2404, -inf
        %2485 = vmax.xlane.f32.xlu0 %v2484
        %v2486 = vpop.xlane.xlu0 %2485
        %v2487 = vsel %vm1370, %v2426, -inf
        %2488 = vmax.xlane.f32.xlu0 %v2487
        %v2489 = vpop.xlane.xlu0 %2488
        %v2490 = vsel %vm1370, %v2448, -inf
        %2491 = vmax.xlane.f32.xlu0 %v2490
        %v2492 = vpop.xlane.xlu0 %2491
        %v2493 = vsel %vm1370, %v2470, -inf
        %2494 = vmax.xlane.f32.xlu0 %v2493
        %v2495 = vpop.xlane.xlu0 %2494
        %v2496 = vsub.f32 %v2316, %v2474
        %v2497 = vsub.f32 %v2338, %v2477
        %v2498 = vsub.f32 %v2360, %v2480
        %v2499 = vsub.f32 %v2382, %v2483
        %v2500 = vsub.f32 %v2404, %v2486
        %v2501 = vsub.f32 %v2426, %v2489
        %v2502 = vsub.f32 %v2448, %v2492
        %v2503 = vsub.f32 %v2470, %v2495
        %v2504 = vmul.f32 %v2496, 1.442695
        %v2505 = vpow.pop %v2504
        %v2506 = vmul.f32 %v2497, 1.442695
        %v2507 = vpow.pop %v2506
        %v2508 = vmul.f32 %v2498, 1.442695
        %v2509 = vpow.pop %v2508
        %v2510 = vmul.f32 %v2499, 1.442695
        %v2511 = vpow.pop %v2510
        %v2512 = vmul.f32 %v2500, 1.442695
        %v2513 = vpow.pop %v2512
        %v2514 = vmul.f32 %v2501, 1.442695
        %v2515 = vpow.pop %v2514
        %v2516 = vmul.f32 %v2502, 1.442695
        %v2517 = vpow.pop %v2516
        %v2518 = vmul.f32 %v2503, 1.442695
        %v2519 = vpow.pop %v2518
        %v2520 = vsel %vm1370, %v2505, 0.0
        %2521 = vadd.xlane.f32.xlu0 %v2520
        %v2522 = vpop.xlane.xlu0 %2521
        %v2523 = vsel %vm1370, %v2507, 0.0
        %2524 = vadd.xlane.f32.xlu0 %v2523
        %v2525 = vpop.xlane.xlu0 %2524
        %v2526 = vsel %vm1370, %v2509, 0.0
        %2527 = vadd.xlane.f32.xlu0 %v2526
        %v2528 = vpop.xlane.xlu0 %2527
        %v2529 = vsel %vm1370, %v2511, 0.0
        %2530 = vadd.xlane.f32.xlu0 %v2529
        %v2531 = vpop.xlane.xlu0 %2530
        %v2532 = vsel %vm1370, %v2513, 0.0
        %2533 = vadd.xlane.f32.xlu0 %v2532
        %v2534 = vpop.xlane.xlu0 %2533
        %v2535 = vsel %vm1370, %v2515, 0.0
        %2536 = vadd.xlane.f32.xlu0 %v2535
        %v2537 = vpop.xlane.xlu0 %2536
        %v2538 = vsel %vm1370, %v2517, 0.0
        %2539 = vadd.xlane.f32.xlu0 %v2538
        %v2540 = vpop.xlane.xlu0 %2539
        %v2541 = vsel %vm1370, %v2519, 0.0
        %2542 = vadd.xlane.f32.xlu0 %v2541
        %v2543 = vpop.xlane.xlu0 %2542
        %v2544 = vrcp.pop %v2522
        %v2545 = vmul.f32 %v2522, %v2544
        %v2546 = vsub.f32 1.0, %v2545
        %v2547 = vmul.f32 %v2544, %v2546
        %v2548 = vadd.f32 %v2544, %v2547
        %vm2549 = vweird.f32 %v2522
        %vm2550 = vweird.f32 %v2544
        %vm2551 = vmor %vm2549, %vm2550
        %v2552 = vsel %vm2551, %v2544, %v2548
        %v2553 = vand.u32 2147483647, %v2522
        %vm2554 = vcmp.eq.f32.partialorder %v2553, 8.507059e+37
        %v2555 = vand.u32 %v2522, 2147483648
        %v2556 = vor.u32 1.1754944e-38, %v2555
        %v2557 = vsel %vm2554, %v2556, %v2552
        %v2558 = vmul.f32 %v2505, %v2557
        %v2559 = vrcp.pop %v2525
        %v2560 = vmul.f32 %v2525, %v2559
        %v2561 = vsub.f32 1.0, %v2560
        %v2562 = vmul.f32 %v2559, %v2561
        %v2563 = vadd.f32 %v2559, %v2562
        %vm2564 = vweird.f32 %v2525
        %vm2565 = vweird.f32 %v2559
        %vm2566 = vmor %vm2564, %vm2565
        %v2567 = vsel %vm2566, %v2559, %v2563
        %v2568 = vand.u32 2147483647, %v2525
        %vm2569 = vcmp.eq.f32.partialorder %v2568, 8.507059e+37
        %v2570 = vand.u32 %v2525, 2147483648
        %v2571 = vor.u32 1.1754944e-38, %v2570
        %v2572 = vsel %vm2569, %v2571, %v2567
        %v2573 = vmul.f32 %v2507, %v2572
        %v2574 = vrcp.pop %v2528
        %v2575 = vmul.f32 %v2528, %v2574
        %v2576 = vsub.f32 1.0, %v2575
        %v2577 = vmul.f32 %v2574, %v2576
        %v2578 = vadd.f32 %v2574, %v2577
        %vm2579 = vweird.f32 %v2528
        %vm2580 = vweird.f32 %v2574
        %vm2581 = vmor %vm2579, %vm2580
        %v2582 = vsel %vm2581, %v2574, %v2578
        %v2583 = vand.u32 2147483647, %v2528
        %vm2584 = vcmp.eq.f32.partialorder %v2583, 8.507059e+37
        %v2585 = vand.u32 %v2528, 2147483648
        %v2586 = vor.u32 1.1754944e-38, %v2585
        %v2587 = vsel %vm2584, %v2586, %v2582
        %v2588 = vmul.f32 %v2509, %v2587
        %v2589 = vrcp.pop %v2531
        %v2590 = vmul.f32 %v2531, %v2589
        %v2591 = vsub.f32 1.0, %v2590
        %v2592 = vmul.f32 %v2589, %v2591
        %v2593 = vadd.f32 %v2589, %v2592
        %vm2594 = vweird.f32 %v2531
        %vm2595 = vweird.f32 %v2589
        %vm2596 = vmor %vm2594, %vm2595
        %v2597 = vsel %vm2596, %v2589, %v2593
        %v2598 = vand.u32 2147483647, %v2531
        %vm2599 = vcmp.eq.f32.partialorder %v2598, 8.507059e+37
        %v2600 = vand.u32 %v2531, 2147483648
        %v2601 = vor.u32 1.1754944e-38, %v2600
        %v2602 = vsel %vm2599, %v2601, %v2597
        %v2603 = vmul.f32 %v2511, %v2602
        %v2604 = vrcp.pop %v2534
        %v2605 = vmul.f32 %v2534, %v2604
        %v2606 = vsub.f32 1.0, %v2605
        %v2607 = vmul.f32 %v2604, %v2606
        %v2608 = vadd.f32 %v2604, %v2607
        %vm2609 = vweird.f32 %v2534
        %vm2610 = vweird.f32 %v2604
        %vm2611 = vmor %vm2609, %vm2610
        %v2612 = vsel %vm2611, %v2604, %v2608
        %v2613 = vand.u32 2147483647, %v2534
        %vm2614 = vcmp.eq.f32.partialorder %v2613, 8.507059e+37
        %v2615 = vand.u32 %v2534, 2147483648
        %v2616 = vor.u32 1.1754944e-38, %v2615
        %v2617 = vsel %vm2614, %v2616, %v2612
        %v2618 = vmul.f32 %v2513, %v2617
        %v2619 = vrcp.pop %v2537
        %v2620 = vmul.f32 %v2537, %v2619
        %v2621 = vsub.f32 1.0, %v2620
        %v2622 = vmul.f32 %v2619, %v2621
        %v2623 = vadd.f32 %v2619, %v2622
        %vm2624 = vweird.f32 %v2537
        %vm2625 = vweird.f32 %v2619
        %vm2626 = vmor %vm2624, %vm2625
        %v2627 = vsel %vm2626, %v2619, %v2623
        %v2628 = vand.u32 2147483647, %v2537
        %vm2629 = vcmp.eq.f32.partialorder %v2628, 8.507059e+37
        %v2630 = vand.u32 %v2537, 2147483648
        %v2631 = vor.u32 1.1754944e-38, %v2630
        %v2632 = vsel %vm2629, %v2631, %v2627
        %v2633 = vmul.f32 %v2515, %v2632
        %v2634 = vrcp.pop %v2540
        %v2635 = vmul.f32 %v2540, %v2634
        %v2636 = vsub.f32 1.0, %v2635
        %v2637 = vmul.f32 %v2634, %v2636
        %v2638 = vadd.f32 %v2634, %v2637
        %vm2639 = vweird.f32 %v2540
        %vm2640 = vweird.f32 %v2634
        %vm2641 = vmor %vm2639, %vm2640
        %v2642 = vsel %vm2641, %v2634, %v2638
        %v2643 = vand.u32 2147483647, %v2540
        %vm2644 = vcmp.eq.f32.partialorder %v2643, 8.507059e+37
        %v2645 = vand.u32 %v2540, 2147483648
        %v2646 = vor.u32 1.1754944e-38, %v2645
        %v2647 = vsel %vm2644, %v2646, %v2642
        %v2648 = vmul.f32 %v2517, %v2647
        %v2649 = vrcp.pop %v2543
        %v2650 = vmul.f32 %v2543, %v2649
        %v2651 = vsub.f32 1.0, %v2650
        %v2652 = vmul.f32 %v2649, %v2651
        %v2653 = vadd.f32 %v2649, %v2652
        %vm2654 = vweird.f32 %v2543
        %vm2655 = vweird.f32 %v2649
        %vm2656 = vmor %vm2654, %vm2655
        %v2657 = vsel %vm2656, %v2649, %v2653
        %v2658 = vand.u32 2147483647, %v2543
        %vm2659 = vcmp.eq.f32.partialorder %v2658, 8.507059e+37
        %v2660 = vand.u32 %v2543, 2147483648
        %v2661 = vor.u32 1.1754944e-38, %v2660
        %v2662 = vsel %vm2659, %v2661, %v2657
        %v2663 = vmul.f32 %v2519, %v2662
        %v2665 = vsel %vm1370, %v2558, 0
        %2667 = vmatpush.msra.mxu0 0.0
        %2668 = vmatpush.msra.mxu0 0.0
        %2669 = vmatpush.msra.mxu0 0.0
        %2670 = vmatpush.msra.mxu0 0.0
        %2671 = vmatpush.msra.mxu0 0.0
        %2672 = vmatpush.msra.mxu0 0.0
        %2673 = vmatpush.msra.mxu0 0.0
        %2674 = vmatpush.msra.mxu0 0.0
        %2675 = vmatpush.msra.mxu0 0.0
        %2676 = vmatpush.msra.mxu0 0.0
        %2677 = vmatpush.msra.mxu0 0.0
        %2678 = vmatpush.msra.mxu0 0.0
        %2679 = vmatpush.msra.mxu0 0.0
        %2680 = vmatpush.msra.mxu0 0.0
        %2681 = vmatpush.msra.mxu0 0.0
        %2682 = vmatpush.msra.mxu0 %v925
        %2683 = vmatmul.f32.gmra.mxu0 %v2665
        %v2684 = vpop.f32.mrf.mxu0
        %v2685 = vadd.f32 0.0, %v2684
        %2686 = vdwg.mxu0
        %v2688 = vsel %vm1370, %v2573, 0
        %2690 = vmatpush.msra.mxu0 0.0
        %2691 = vmatpush.msra.mxu0 0.0
        %2692 = vmatpush.msra.mxu0 0.0
        %2693 = vmatpush.msra.mxu0 0.0
        %2694 = vmatpush.msra.mxu0 0.0
        %2695 = vmatpush.msra.mxu0 0.0
        %2696 = vmatpush.msra.mxu0 0.0
        %2697 = vmatpush.msra.mxu0 0.0
        %2698 = vmatpush.msra.mxu0 0.0
        %2699 = vmatpush.msra.mxu0 0.0
        %2700 = vmatpush.msra.mxu0 0.0
        %2701 = vmatpush.msra.mxu0 0.0
        %2702 = vmatpush.msra.mxu0 0.0
        %2703 = vmatpush.msra.mxu0 0.0
        %2704 = vmatpush.msra.mxu0 0.0
        %2705 = vmatpush.msra.mxu0 %v1001
        %2706 = vmatmul.f32.gmra.mxu0 %v2688
        %v2707 = vpop.f32.mrf.mxu0
        %v2708 = vadd.f32 0.0, %v2707
        %2709 = vdwg.mxu0
        %v2711 = vsel %vm1370, %v2588, 0
        %2713 = vmatpush.msra.mxu0 0.0
        %2714 = vmatpush.msra.mxu0 0.0
        %2715 = vmatpush.msra.mxu0 0.0
        %2716 = vmatpush.msra.mxu0 0.0
        %2717 = vmatpush.msra.mxu0 0.0
        %2718 = vmatpush.msra.mxu0 0.0
        %2719 = vmatpush.msra.mxu0 0.0
        %2720 = vmatpush.msra.mxu0 0.0
        %2721 = vmatpush.msra.mxu0 0.0
        %2722 = vmatpush.msra.mxu0 0.0
        %2723 = vmatpush.msra.mxu0 0.0
        %2724 = vmatpush.msra.mxu0 0.0
        %2725 = vmatpush.msra.mxu0 0.0
        %2726 = vmatpush.msra.mxu0 0.0
        %2727 = vmatpush.msra.mxu0 0.0
        %2728 = vmatpush.msra.mxu0 %v945
        %2729 = vmatmul.f32.gmra.mxu0 %v2711
        %v2730 = vpop.f32.mrf.mxu0
        %v2731 = vadd.f32 0.0, %v2730
        %2732 = vdwg.mxu0
        %v2734 = vsel %vm1370, %v2603, 0
        %2736 = vmatpush.msra.mxu0 0.0
        %2737 = vmatpush.msra.mxu0 0.0
        %2738 = vmatpush.msra.mxu0 0.0
        %2739 = vmatpush.msra.mxu0 0.0
        %2740 = vmatpush.msra.mxu0 0.0
        %2741 = vmatpush.msra.mxu0 0.0
        %2742 = vmatpush.msra.mxu0 0.0
        %2743 = vmatpush.msra.mxu0 0.0
        %2744 = vmatpush.msra.mxu0 0.0
        %2745 = vmatpush.msra.mxu0 0.0
        %2746 = vmatpush.msra.mxu0 0.0
        %2747 = vmatpush.msra.mxu0 0.0
        %2748 = vmatpush.msra.mxu0 0.0
        %2749 = vmatpush.msra.mxu0 0.0
        %2750 = vmatpush.msra.mxu0 0.0
        %2751 = vmatpush.msra.mxu0 %v1005
        %2752 = vmatmul.f32.gmra.mxu0 %v2734
        %v2753 = vpop.f32.mrf.mxu0
        %v2754 = vadd.f32 0.0, %v2753
        %2755 = vdwg.mxu0
        %v2757 = vsel %vm1370, %v2618, 0
        %2759 = vmatpush.msra.mxu0 0.0
        %2760 = vmatpush.msra.mxu0 0.0
        %2761 = vmatpush.msra.mxu0 0.0
        %2762 = vmatpush.msra.mxu0 0.0
        %2763 = vmatpush.msra.mxu0 0.0
        %2764 = vmatpush.msra.mxu0 0.0
        %2765 = vmatpush.msra.mxu0 0.0
        %2766 = vmatpush.msra.mxu0 0.0
        %2767 = vmatpush.msra.mxu0 0.0
        %2768 = vmatpush.msra.mxu0 0.0
        %2769 = vmatpush.msra.mxu0 0.0
        %2770 = vmatpush.msra.mxu0 0.0
        %2771 = vmatpush.msra.mxu0 0.0
        %2772 = vmatpush.msra.mxu0 0.0
        %2773 = vmatpush.msra.mxu0 0.0
        %2774 = vmatpush.msra.mxu0 %v965
        %2775 = vmatmul.f32.gmra.mxu0 %v2757
        %v2776 = vpop.f32.mrf.mxu0
        %v2777 = vadd.f32 0.0, %v2776
        %2778 = vdwg.mxu0
        %v2780 = vsel %vm1370, %v2633, 0
        %2782 = vmatpush.msra.mxu0 0.0
        %2783 = vmatpush.msra.mxu0 0.0
        %2784 = vmatpush.msra.mxu0 0.0
        %2785 = vmatpush.msra.mxu0 0.0
        %2786 = vmatpush.msra.mxu0 0.0
        %2787 = vmatpush.msra.mxu0 0.0
        %2788 = vmatpush.msra.mxu0 0.0
        %2789 = vmatpush.msra.mxu0 0.0
        %2790 = vmatpush.msra.mxu0 0.0
        %2791 = vmatpush.msra.mxu0 0.0
        %2792 = vmatpush.msra.mxu0 0.0
        %2793 = vmatpush.msra.mxu0 0.0
        %2794 = vmatpush.msra.mxu0 0.0
        %2795 = vmatpush.msra.mxu0 0.0
        %2796 = vmatpush.msra.mxu0 0.0
        %2797 = vmatpush.msra.mxu0 %v1009
        %2798 = vmatmul.f32.gmra.mxu0 %v2780
        %v2799 = vpop.f32.mrf.mxu0
        %v2800 = vadd.f32 0.0, %v2799
        %2801 = vdwg.mxu0
        %v2803 = vsel %vm1370, %v2648, 0
        %2805 = vmatpush.msra.mxu0 0.0
        %2806 = vmatpush.msra.mxu0 0.0
        %2807 = vmatpush.msra.mxu0 0.0
        %2808 = vmatpush.msra.mxu0 0.0
        %2809 = vmatpush.msra.mxu0 0.0
        %2810 = vmatpush.msra.mxu0 0.0
        %2811 = vmatpush.msra.mxu0 0.0
        %2812 = vmatpush.msra.mxu0 0.0
        %2813 = vmatpush.msra.mxu0 0.0
        %2814 = vmatpush.msra.mxu0 0.0
        %2815 = vmatpush.msra.mxu0 0.0
        %2816 = vmatpush.msra.mxu0 0.0
        %2817 = vmatpush.msra.mxu0 0.0
        %2818 = vmatpush.msra.mxu0 0.0
        %2819 = vmatpush.msra.mxu0 0.0
        %2820 = vmatpush.msra.mxu0 %v985
        %2821 = vmatmul.f32.gmra.mxu0 %v2803
        %v2822 = vpop.f32.mrf.mxu0
        %v2823 = vadd.f32 0.0, %v2822
        %2824 = vdwg.mxu0
        %v2826 = vsel %vm1370, %v2663, 0
        %2828 = vmatpush.msra.mxu0 0.0
        %2829 = vmatpush.msra.mxu0 0.0
        %2830 = vmatpush.msra.mxu0 0.0
        %2831 = vmatpush.msra.mxu0 0.0
        %2832 = vmatpush.msra.mxu0 0.0
        %2833 = vmatpush.msra.mxu0 0.0
        %2834 = vmatpush.msra.mxu0 0.0
        %2835 = vmatpush.msra.mxu0 0.0
        %2836 = vmatpush.msra.mxu0 0.0
        %2837 = vmatpush.msra.mxu0 0.0
        %2838 = vmatpush.msra.mxu0 0.0
        %2839 = vmatpush.msra.mxu0 0.0
        %2840 = vmatpush.msra.mxu0 0.0
        %2841 = vmatpush.msra.mxu0 0.0
        %2842 = vmatpush.msra.mxu0 0.0
        %2843 = vmatpush.msra.mxu0 %v1013
        %2844 = vmatmul.f32.gmra.mxu0 %v2826
        %v2845 = vpop.f32.mrf.mxu0
        %v2846 = vadd.f32 0.0, %v2845
        %2847 = vdwg.mxu0
        %2849 = vrot.lane.b32.xlu0 %v2708, 64
        %v2850 = vpop.permute.xlu0 %2849
        %2853 = vrot.lane.b32.xlu0 %v2754, 64
        %v2854 = vpop.permute.xlu0 %2853
        %2857 = vrot.lane.b32.xlu0 %v2800, 64
        %v2858 = vpop.permute.xlu0 %2857
        %2861 = vrot.lane.b32.xlu0 %v2846, 64
        %v2862 = vpop.permute.xlu0 %2861
        %v2864 = vsel %vm712, %v2685, %v2850
        %v2865 = vsel %vm712, %v2731, %v2854
        %v2866 = vsel %vm712, %v2777, %v2858
        %v2867 = vsel %vm712, %v2823, %v2862
        %v2868 = vmul.f32 %v2864, %v1770
        %v2869 = vmul.f32 %v2865, %v1770
        %v2870 = vmul.f32 %v2866, %v1770
        %v2871 = vmul.f32 %v2867, %v1770
        %v2872 = vld [vmem:[#allocation8] sm:$0xff]
        %v2873 = vld [vmem:[#allocation8 + $0x8] sm:$0xff]
        %v2874 = vld [vmem:[#allocation8 + $0x10] sm:$0xff]
        %v2875 = vld [vmem:[#allocation8 + $0x18] sm:$0xff]
        %v2876 = vld [vmem:[#allocation8 + $0x20] sm:$0xff]
        %v2877 = vld [vmem:[#allocation8 + $0x28] sm:$0xff]
        %v2878 = vld [vmem:[#allocation8 + $0x30] sm:$0xff]
        %v2879 = vld [vmem:[#allocation8 + $0x38] sm:$0xff]
        %v2880 = vld [vmem:[#allocation8 + $0x40] sm:$0xff]
        %v2881 = vld [vmem:[#allocation8 + $0x48] sm:$0xff]
        %v2882 = vld [vmem:[#allocation8 + $0x50] sm:$0xff]
        %v2883 = vld [vmem:[#allocation8 + $0x58] sm:$0xff]
        %v2884 = vld [vmem:[#allocation8 + $0x60] sm:$0xff]
        %v2885 = vld [vmem:[#allocation8 + $0x68] sm:$0xff]
        %v2886 = vld [vmem:[#allocation8 + $0x70] sm:$0xff]
        %v2887 = vld [vmem:[#allocation8 + $0x78] sm:$0xff]
        %v2888 = vld [vmem:[#allocation8 + $0x80] sm:$0xff]
        %v2889 = vld [vmem:[#allocation8 + $0x88] sm:$0xff]
        %v2890 = vld [vmem:[#allocation8 + $0x90] sm:$0xff]
        %v2891 = vld [vmem:[#allocation8 + $0x98] sm:$0xff]
        %v2892 = vld [vmem:[#allocation8 + $0xa0] sm:$0xff]
        %v2893 = vld [vmem:[#allocation8 + $0xa8] sm:$0xff]
        %v2894 = vld [vmem:[#allocation8 + $0xb0] sm:$0xff]
        %v2895 = vld [vmem:[#allocation8 + $0xb8] sm:$0xff]
        %v2896 = vld [vmem:[#allocation8 + $0xc0] sm:$0xff]
        %v2897 = vld [vmem:[#allocation8 + $0xc8] sm:$0xff]
        %v2898 = vld [vmem:[#allocation8 + $0xd0] sm:$0xff]
        %v2899 = vld [vmem:[#allocation8 + $0xd8] sm:$0xff]
        %v2900 = vld [vmem:[#allocation8 + $0xe0] sm:$0xff]
        %v2901 = vld [vmem:[#allocation8 + $0xe8] sm:$0xff]
        %v2902 = vld [vmem:[#allocation8 + $0xf0] sm:$0xff]
        %v2903 = vld [vmem:[#allocation8 + $0xf8] sm:$0xff]
        %v2904 = vld [vmem:[#allocation8 + $0x100] sm:$0xff]
        %v2905 = vld [vmem:[#allocation8 + $0x108] sm:$0xff]
        %v2906 = vld [vmem:[#allocation8 + $0x110] sm:$0xff]
        %v2907 = vld [vmem:[#allocation8 + $0x118] sm:$0xff]
        %v2908 = vld [vmem:[#allocation8 + $0x120] sm:$0xff]
        %v2909 = vld [vmem:[#allocation8 + $0x128] sm:$0xff]
        %v2910 = vld [vmem:[#allocation8 + $0x130] sm:$0xff]
        %v2911 = vld [vmem:[#allocation8 + $0x138] sm:$0xff]
        %v2912 = vld [vmem:[#allocation8 + $0x140] sm:$0xff]
        %v2913 = vld [vmem:[#allocation8 + $0x148] sm:$0xff]
        %v2914 = vld [vmem:[#allocation8 + $0x150] sm:$0xff]
        %v2915 = vld [vmem:[#allocation8 + $0x158] sm:$0xff]
        %v2916 = vld [vmem:[#allocation8 + $0x160] sm:$0xff]
        %v2917 = vld [vmem:[#allocation8 + $0x168] sm:$0xff]
        %v2918 = vld [vmem:[#allocation8 + $0x170] sm:$0xff]
        %v2919 = vld [vmem:[#allocation8 + $0x178] sm:$0xff]
        %v2920 = vld [vmem:[#allocation8 + $0x180] sm:$0xff]
        %v2921 = vld [vmem:[#allocation8 + $0x188] sm:$0xff]
        %v2922 = vld [vmem:[#allocation8 + $0x190] sm:$0xff]
        %v2923 = vld [vmem:[#allocation8 + $0x198] sm:$0xff]
        %v2924 = vld [vmem:[#allocation8 + $0x1a0] sm:$0xff]
        %v2925 = vld [vmem:[#allocation8 + $0x1a8] sm:$0xff]
        %v2926 = vld [vmem:[#allocation8 + $0x1b0] sm:$0xff]
        %v2927 = vld [vmem:[#allocation8 + $0x1b8] sm:$0xff]
        %v2928 = vld [vmem:[#allocation8 + $0x1c0] sm:$0xff]
        %v2929 = vld [vmem:[#allocation8 + $0x1c8] sm:$0xff]
        %v2930 = vld [vmem:[#allocation8 + $0x1d0] sm:$0xff]
        %v2931 = vld [vmem:[#allocation8 + $0x1d8] sm:$0xff]
        %v2932 = vld [vmem:[#allocation8 + $0x1e0] sm:$0xff]
        %v2933 = vld [vmem:[#allocation8 + $0x1e8] sm:$0xff]
        %v2934 = vld [vmem:[#allocation8 + $0x1f0] sm:$0xff]
        %v2935 = vld [vmem:[#allocation8 + $0x1f8] sm:$0xff]
        %v2936 = vld [vmem:[%s8] sm:$0x1]
        %v2938 = vperm.slane %v2936, 0
        %2940 = vmatpush.msra.mxu0 %v2887
        %2941 = vmatpush.msra.mxu0 %v2886
        %2942 = vmatpush.msra.mxu0 %v2885
        %2943 = vmatpush.msra.mxu0 %v2884
        %2944 = vmatpush.msra.mxu0 %v2883
        %2945 = vmatpush.msra.mxu0 %v2882
        %2946 = vmatpush.msra.mxu0 %v2881
        %2947 = vmatpush.msra.mxu0 %v2880
        %2948 = vmatpush.msra.mxu0 %v2879
        %2949 = vmatpush.msra.mxu0 %v2878
        %2950 = vmatpush.msra.mxu0 %v2877
        %2951 = vmatpush.msra.mxu0 %v2876
        %2952 = vmatpush.msra.mxu0 %v2875
        %2953 = vmatpush.msra.mxu0 %v2874
        %2954 = vmatpush.msra.mxu0 %v2873
        %2955 = vmatpush.msra.mxu0 %v2872
        %2956 = vmatmul.f32.gmra.mxu0 %v2868
        %v2957 = vpop.f32.mrf.mxu0
        %v2958 = vadd.f32 %v2938, %v2957
        %2959 = vdwg.mxu0
        %2960 = vmatpush.msra.mxu0 %v2903
        %2961 = vmatpush.msra.mxu0 %v2902
        %2962 = vmatpush.msra.mxu0 %v2901
        %2963 = vmatpush.msra.mxu0 %v2900
        %2964 = vmatpush.msra.mxu0 %v2899
        %2965 = vmatpush.msra.mxu0 %v2898
        %2966 = vmatpush.msra.mxu0 %v2897
        %2967 = vmatpush.msra.mxu0 %v2896
        %2968 = vmatpush.msra.mxu0 %v2895
        %2969 = vmatpush.msra.mxu0 %v2894
        %2970 = vmatpush.msra.mxu0 %v2893
        %2971 = vmatpush.msra.mxu0 %v2892
        %2972 = vmatpush.msra.mxu0 %v2891
        %2973 = vmatpush.msra.mxu0 %v2890
        %2974 = vmatpush.msra.mxu0 %v2889
        %2975 = vmatpush.msra.mxu0 %v2888
        %2976 = vmatmul.f32.gmra.mxu0 %v2869
        %v2977 = vpop.f32.mrf.mxu0
        %v2978 = vadd.f32 %v2958, %v2977
        %2979 = vdwg.mxu0
        %2980 = vmatpush.msra.mxu0 %v2919
        %2981 = vmatpush.msra.mxu0 %v2918
        %2982 = vmatpush.msra.mxu0 %v2917
        %2983 = vmatpush.msra.mxu0 %v2916
        %2984 = vmatpush.msra.mxu0 %v2915
        %2985 = vmatpush.msra.mxu0 %v2914
        %2986 = vmatpush.msra.mxu0 %v2913
        %2987 = vmatpush.msra.mxu0 %v2912
        %2988 = vmatpush.msra.mxu0 %v2911
        %2989 = vmatpush.msra.mxu0 %v2910
        %2990 = vmatpush.msra.mxu0 %v2909
        %2991 = vmatpush.msra.mxu0 %v2908
        %2992 = vmatpush.msra.mxu0 %v2907
        %2993 = vmatpush.msra.mxu0 %v2906
        %2994 = vmatpush.msra.mxu0 %v2905
        %2995 = vmatpush.msra.mxu0 %v2904
        %2996 = vmatmul.f32.gmra.mxu0 %v2870
        %v2997 = vpop.f32.mrf.mxu0
        %v2998 = vadd.f32 %v2978, %v2997
        %2999 = vdwg.mxu0
        %3000 = vmatpush.msra.mxu0 %v2935
        %3001 = vmatpush.msra.mxu0 %v2934
        %3002 = vmatpush.msra.mxu0 %v2933
        %3003 = vmatpush.msra.mxu0 %v2932
        %3004 = vmatpush.msra.mxu0 %v2931
        %3005 = vmatpush.msra.mxu0 %v2930
        %3006 = vmatpush.msra.mxu0 %v2929
        %3007 = vmatpush.msra.mxu0 %v2928
        %3008 = vmatpush.msra.mxu0 %v2927
        %3009 = vmatpush.msra.mxu0 %v2926
        %3010 = vmatpush.msra.mxu0 %v2925
        %3011 = vmatpush.msra.mxu0 %v2924
        %3012 = vmatpush.msra.mxu0 %v2923
        %3013 = vmatpush.msra.mxu0 %v2922
        %3014 = vmatpush.msra.mxu0 %v2921
        %3015 = vmatpush.msra.mxu0 %v2920
        %3016 = vmatmul.f32.gmra.mxu0 %v2871
        %v3017 = vpop.f32.mrf.mxu0
        %v3018 = vadd.f32 %v2998, %v3017
        %3019 = vdwg.mxu0
        %v3020 = vsel %vm712, %v3018, 0.0
        %3021 = vadd.xlane.f32.xlu0 %v3020
        %v3022 = vpop.xlane.xlu0 %3021
        %v3023 = vmul.f32 %v3022, %v722
        %v3024 = vsub.f32 %v3018, %v3023
        %v3025 = vmul.f32 %v3024, %v3024
        %v3026 = vsel %vm712, %v3025, 0.0
        %3027 = vadd.xlane.f32.xlu0 %v3026
        %v3028 = vpop.xlane.xlu0 %3027
        %v3029 = vmul.f32 %v3028, %v722
        %v3030 = vadd.f32 %v3029, 1e-05
        %v3031 = vrsqrt.pop %v3030
        %v3032 = vmul.f32 %v3031, %v3030
        %v3033 = vmul.f32 %v3032, %v3031
        %v3034 = vmul.f32 0.5, %v3033
        %v3035 = vsub.f32 1.5, %v3034
        %v3036 = vmul.f32 %v3031, %v3035
        %vm3037 = vweird.f32 %v3030
        %vm3038 = vweird.f32 %v3031
        %vm3039 = vmor %vm3037, %vm3038
        %v3040 = vsel %vm3039, %v3031, %v3036
        %v3041 = vmul.f32 %v3024, %v3040
        %s3042 = scalar_lea.vmem [#allocation13], 64
        %v3043 = vld [vmem:[%s3042] sm:$0xff]
        %v3044 = vld [vmem:[%s3042 + $0x8] sm:$0xff]
        %v3045 = vld [vmem:[%s3042 + $0x10] sm:$0xff]
        %v3046 = vld [vmem:[%s3042 + $0x18] sm:$0xff]
        %v3047 = vld [vmem:[%s3042 + $0x20] sm:$0xff]
        %v3048 = vld [vmem:[%s3042 + $0x28] sm:$0xff]
        %v3049 = vld [vmem:[%s3042 + $0x30] sm:$0xff]
        %v3050 = vld [vmem:[%s3042 + $0x38] sm:$0xff]
        %s3051 = scalar_lea.vmem %s14, 1
        %v3052 = vld [vmem:[%s3051] sm:$0x1]
        %v3054 = vperm.slane %v3052, 0
        %v3057 = vsel %vm712, %v3041, 0
        %3059 = vmatpush.msra.mxu0 0.0
        %3060 = vmatpush.msra.mxu0 0.0
        %3061 = vmatpush.msra.mxu0 0.0
        %3062 = vmatpush.msra.mxu0 0.0
        %3063 = vmatpush.msra.mxu0 0.0
        %3064 = vmatpush.msra.mxu0 0.0
        %3065 = vmatpush.msra.mxu0 0.0
        %3066 = vmatpush.msra.mxu0 0.0
        %3067 = vmatpush.msra.mxu0 %v3050
        %3068 = vmatpush.msra.mxu0 %v3049
        %3069 = vmatpush.msra.mxu0 %v3048
        %3070 = vmatpush.msra.mxu0 %v3047
        %3071 = vmatpush.msra.mxu0 %v3046
        %3072 = vmatpush.msra.mxu0 %v3045
        %3073 = vmatpush.msra.mxu0 %v3044
        %3074 = vmatpush.msra.mxu0 %v3043
        %3075 = vmatmul.f32.gmra.mxu0 %v3057
        %v3076 = vpop.f32.mrf.mxu0
        %v3077 = vadd.f32 %v3054, %v3076
        %3078 = vdwg.mxu0
        %v3079 = vadd.f32 %v3077, %v3041
        %v3080 = vsel %vm712, %v3079, 0.0
        %3081 = vadd.xlane.f32.xlu0 %v3080
        %v3082 = vpop.xlane.xlu0 %3081
        %v3083 = vmul.f32 %v3082, %v722
        %v3084 = vsub.f32 %v3079, %v3083
        %v3085 = vmul.f32 %v3084, %v3084
        %v3086 = vsel %vm712, %v3085, 0.0
        %3087 = vadd.xlane.f32.xlu0 %v3086
        %v3088 = vpop.xlane.xlu0 %3087
        %v3089 = vmul.f32 %v3088, %v722
        %v3090 = vadd.f32 %v3089, 1e-05
        %v3091 = vrsqrt.pop %v3090
        %v3092 = vmul.f32 %v3091, %v3090
        %v3093 = vmul.f32 %v3092, %v3091
        %v3094 = vmul.f32 0.5, %v3093
        %v3095 = vsub.f32 1.5, %v3094
        %v3096 = vmul.f32 %v3091, %v3095
        %vm3097 = vweird.f32 %v3090
        %vm3098 = vweird.f32 %v3091
        %vm3099 = vmor %vm3097, %vm3098
        %v3100 = vsel %vm3099, %v3091, %v3096
        %v3101 = vmul.f32 %v3084, %v3100
        %v3102 = vld [vmem:[#allocation10] sm:$0xff]
        %v3103 = vld [vmem:[#allocation10 + $0x8] sm:$0xff]
        %v3104 = vld [vmem:[#allocation10 + $0x10] sm:$0xff]
        %v3105 = vld [vmem:[#allocation10 + $0x18] sm:$0xff]
        %v3106 = vld [vmem:[#allocation10 + $0x20] sm:$0xff]
        %v3107 = vld [vmem:[#allocation10 + $0x28] sm:$0xff]
        %v3108 = vld [vmem:[#allocation10 + $0x30] sm:$0xff]
        %v3109 = vld [vmem:[#allocation10 + $0x38] sm:$0xff]
        %v3110 = vld [vmem:[%s10] sm:$0x1]
        %v3112 = vperm.slane %v3110, 0
        %v3115 = vsel %vm712, %v3101, 0
        %3117 = vmatpush.msra.mxu0 0.0
        %3118 = vmatpush.msra.mxu0 0.0
        %3119 = vmatpush.msra.mxu0 0.0
        %3120 = vmatpush.msra.mxu0 0.0
        %3121 = vmatpush.msra.mxu0 0.0
        %3122 = vmatpush.msra.mxu0 0.0
        %3123 = vmatpush.msra.mxu0 0.0
        %3124 = vmatpush.msra.mxu0 0.0
        %3125 = vmatpush.msra.mxu0 %v3109
        %3126 = vmatpush.msra.mxu0 %v3108
        %3127 = vmatpush.msra.mxu0 %v3107
        %3128 = vmatpush.msra.mxu0 %v3106
        %3129 = vmatpush.msra.mxu0 %v3105
        %3130 = vmatpush.msra.mxu0 %v3104
        %3131 = vmatpush.msra.mxu0 %v3103
        %3132 = vmatpush.msra.mxu0 %v3102
        %3133 = vmatmul.f32.gmra.mxu0 %v3115
        %v3134 = vpop.f32.mrf.mxu0
        %v3135 = vadd.f32 %v3112, %v3134
        %3136 = vdwg.mxu0
        %v3137 = vmax.f32 %v3135, 0.0
        %v3138 = vld [vmem:[#allocation11] sm:$0xff]
        %v3139 = vld [vmem:[#allocation11 + $0x8] sm:$0xff]
        %v3140 = vld [vmem:[#allocation11 + $0x10] sm:$0xff]
        %v3141 = vld [vmem:[#allocation11 + $0x18] sm:$0xff]
        %v3142 = vld [vmem:[#allocation11 + $0x20] sm:$0xff]
        %v3143 = vld [vmem:[#allocation11 + $0x28] sm:$0xff]
        %v3144 = vld [vmem:[#allocation11 + $0x30] sm:$0xff]
        %v3145 = vld [vmem:[#allocation11 + $0x38] sm:$0xff]
        %v3146 = vld [vmem:[%s12] sm:$0x1]
        %v3148 = vperm.slane %v3146, 0
        %v3151 = vsel %vm712, %v3137, 0
        %3153 = vmatpush.msra.mxu0 0.0
        %3154 = vmatpush.msra.mxu0 0.0
        %3155 = vmatpush.msra.mxu0 0.0
        %3156 = vmatpush.msra.mxu0 0.0
        %3157 = vmatpush.msra.mxu0 0.0
        %3158 = vmatpush.msra.mxu0 0.0
        %3159 = vmatpush.msra.mxu0 0.0
        %3160 = vmatpush.msra.mxu0 0.0
        %3161 = vmatpush.msra.mxu0 %v3145
        %3162 = vmatpush.msra.mxu0 %v3144
        %3163 = vmatpush.msra.mxu0 %v3143
        %3164 = vmatpush.msra.mxu0 %v3142
        %3165 = vmatpush.msra.mxu0 %v3141
        %3166 = vmatpush.msra.mxu0 %v3140
        %3167 = vmatpush.msra.mxu0 %v3139
        %3168 = vmatpush.msra.mxu0 %v3138
        %3169 = vmatmul.f32.gmra.mxu0 %v3151
        %v3170 = vpop.f32.mrf.mxu0
        %v3171 = vadd.f32 %v3148, %v3170
        %3172 = vdwg.mxu0
        %v3173 = vsel %vm712, %v3171, 0.0
        %3174 = vadd.xlane.f32.xlu0 %v3173
        %v3175 = vpop.xlane.xlu0 %3174
        %v3176 = vmul.f32 %v3175, %v722
        %v3177 = vsub.f32 %v3171, %v3176
        %v3178 = vmul.f32 %v3177, %v3177
        %v3179 = vsel %vm712, %v3178, 0.0
        %3180 = vadd.xlane.f32.xlu0 %v3179
        %v3181 = vpop.xlane.xlu0 %3180
        %v3182 = vmul.f32 %v3181, %v722
        %v3183 = vadd.f32 %v3182, 1e-05
        %v3184 = vrsqrt.pop %v3183
        %v3185 = vmul.f32 %v3184, %v3183
        %v3186 = vmul.f32 %v3185, %v3184
        %v3187 = vmul.f32 0.5, %v3186
        %v3188 = vsub.f32 1.5, %v3187
        %v3189 = vmul.f32 %v3184, %v3188
        %vm3190 = vweird.f32 %v3183
        %vm3191 = vweird.f32 %v3184
        %vm3192 = vmor %vm3190, %vm3191
        %v3193 = vsel %vm3192, %v3184, %v3189
        %v3194 = vmul.f32 %v3177, %v3193
        %s3195 = scalar_lea.vmem [#allocation14], 64
        %v3196 = vld [vmem:[%s3195] sm:$0xff]
        %v3197 = vld [vmem:[%s3195 + $0x8] sm:$0xff]
        %v3198 = vld [vmem:[%s3195 + $0x10] sm:$0xff]
        %v3199 = vld [vmem:[%s3195 + $0x18] sm:$0xff]
        %v3200 = vld [vmem:[%s3195 + $0x20] sm:$0xff]
        %v3201 = vld [vmem:[%s3195 + $0x28] sm:$0xff]
        %v3202 = vld [vmem:[%s3195 + $0x30] sm:$0xff]
        %v3203 = vld [vmem:[%s3195 + $0x38] sm:$0xff]
        %s3204 = scalar_lea.vmem %s16, 1
        %v3205 = vld [vmem:[%s3204] sm:$0x1]
        %v3207 = vperm.slane %v3205, 0
        %v3210 = vsel %vm712, %v3194, 0
        %3212 = vmatpush.msra.mxu0 0.0
        %3213 = vmatpush.msra.mxu0 0.0
        %3214 = vmatpush.msra.mxu0 0.0
        %3215 = vmatpush.msra.mxu0 0.0
        %3216 = vmatpush.msra.mxu0 0.0
        %3217 = vmatpush.msra.mxu0 0.0
        %3218 = vmatpush.msra.mxu0 0.0
        %3219 = vmatpush.msra.mxu0 0.0
        %3220 = vmatpush.msra.mxu0 %v3203
        %3221 = vmatpush.msra.mxu0 %v3202
        %3222 = vmatpush.msra.mxu0 %v3201
        %3223 = vmatpush.msra.mxu0 %v3200
        %3224 = vmatpush.msra.mxu0 %v3199
        %3225 = vmatpush.msra.mxu0 %v3198
        %3226 = vmatpush.msra.mxu0 %v3197
        %3227 = vmatpush.msra.mxu0 %v3196
        %3228 = vmatmul.f32.gmra.mxu0 %v3210
        %v3229 = vpop.f32.mrf.mxu0
        %v3230 = vadd.f32 %v3207, %v3229
        %3231 = vdwg.mxu0
        %v3232 = vadd.f32 %v3230, %v3194
        %v3233 = vsel %vm712, %v3232, 0.0
        %3234 = vadd.xlane.f32.xlu0 %v3233
        %v3235 = vpop.xlane.xlu0 %3234
        %v3236 = vmul.f32 %v3235, %v722
        %v3237 = vsub.f32 %v3232, %v3236
        %v3238 = vmul.f32 %v3237, %v3237
        %v3239 = vsel %vm712, %v3238, 0.0
        %3240 = vadd.xlane.f32.xlu0 %v3239
        %v3241 = vpop.xlane.xlu0 %3240
        %v3242 = vmul.f32 %v3241, %v722
        %v3243 = vadd.f32 %v3242, 1e-05
        %v3244 = vrsqrt.pop %v3243
        %v3245 = vmul.f32 %v3244, %v3243
        %v3246 = vmul.f32 %v3245, %v3244
        %v3247 = vmul.f32 0.5, %v3246
        %v3248 = vsub.f32 1.5, %v3247
        %v3249 = vmul.f32 %v3244, %v3248
        %vm3250 = vweird.f32 %v3243
        %vm3251 = vweird.f32 %v3244
        %vm3252 = vmor %vm3250, %vm3251
        %v3253 = vsel %vm3252, %v3244, %v3249
        %v3254 = vmul.f32 %v3237, %v3253
        %v3255 = vld [vmem:[#allocation2] sm:$0xff]
        %v3256 = vld [vmem:[#allocation2 + $0x8] sm:$0xff]
        %v3257 = vld [vmem:[#allocation2 + $0x10] sm:$0xff]
        %v3258 = vld [vmem:[#allocation2 + $0x18] sm:$0xff]
        %v3259 = vld [vmem:[#allocation2 + $0x20] sm:$0xff]
        %v3260 = vld [vmem:[#allocation2 + $0x28] sm:$0xff]
        %v3261 = vld [vmem:[#allocation2 + $0x30] sm:$0xff]
        %v3262 = vld [vmem:[#allocation2 + $0x38] sm:$0xff]
        %v3263 = vld [vmem:[#allocation2 + $0x40] sm:$0xff]
        %v3264 = vld [vmem:[#allocation2 + $0x48] sm:$0xff]
        %v3265 = vld [vmem:[#allocation2 + $0x50] sm:$0xff]
        %v3266 = vld [vmem:[#allocation2 + $0x58] sm:$0xff]
        %v3267 = vld [vmem:[#allocation2 + $0x60] sm:$0xff]
        %v3268 = vld [vmem:[#allocation2 + $0x68] sm:$0xff]
        %v3269 = vld [vmem:[#allocation2 + $0x70] sm:$0xff]
        %v3270 = vld [vmem:[#allocation2 + $0x78] sm:$0xff]
        %v3271 = vld [vmem:[#allocation2 + $0x80] sm:$0xff]
        %v3272 = vld [vmem:[#allocation2 + $0x88] sm:$0xff]
        %v3273 = vld [vmem:[#allocation2 + $0x90] sm:$0xff]
        %v3274 = vld [vmem:[#allocation2 + $0x98] sm:$0xff]
        %v3275 = vld [vmem:[#allocation2 + $0xa0] sm:$0xff]
        %v3276 = vld [vmem:[#allocation2 + $0xa8] sm:$0xff]
        %v3277 = vld [vmem:[#allocation2 + $0xb0] sm:$0xff]
        %v3278 = vld [vmem:[#allocation2 + $0xb8] sm:$0xff]
        %v3279 = vld [vmem:[#allocation2 + $0xc0] sm:$0xff]
        %v3280 = vld [vmem:[#allocation2 + $0xc8] sm:$0xff]
        %v3281 = vld [vmem:[#allocation2 + $0xd0] sm:$0xff]
        %v3282 = vld [vmem:[#allocation2 + $0xd8] sm:$0xff]
        %v3283 = vld [vmem:[#allocation2 + $0xe0] sm:$0xff]
        %v3284 = vld [vmem:[#allocation2 + $0xe8] sm:$0xff]
        %v3285 = vld [vmem:[#allocation2 + $0xf0] sm:$0xff]
        %v3286 = vld [vmem:[#allocation2 + $0xf8] sm:$0xff]
        %v3287 = vld [vmem:[#allocation5] sm:$0xf]
        %v3289 = vperm.slane %v3287, 0
        %v3290 = vperm.slane %v3287, 1
        %v3291 = vperm.slane %v3287, 2
        %v3292 = vperm.slane %v3287, 3
        %v3298 = vsel %vm712, %v3254, 0
        %3300 = vmatpush.msra.mxu0 0.0
        %3301 = vmatpush.msra.mxu0 0.0
        %3302 = vmatpush.msra.mxu0 0.0
        %3303 = vmatpush.msra.mxu0 0.0
        %3304 = vmatpush.msra.mxu0 0.0
        %3305 = vmatpush.msra.mxu0 0.0
        %3306 = vmatpush.msra.mxu0 0.0
        %3307 = vmatpush.msra.mxu0 0.0
        %3308 = vmatpush.msra.mxu0 %v3283
        %3309 = vmatpush.msra.mxu0 %v3279
        %3310 = vmatpush.msra.mxu0 %v3275
        %3311 = vmatpush.msra.mxu0 %v3271
        %3312 = vmatpush.msra.mxu0 %v3267
        %3313 = vmatpush.msra.mxu0 %v3263
        %3314 = vmatpush.msra.mxu0 %v3259
        %3315 = vmatpush.msra.mxu0 %v3255
        %3316 = vmatmul.f32.gmra.mxu0 %v3298
        %v3317 = vpop.f32.mrf.mxu0
        %v3318 = vadd.f32 %v3289, %v3317
        %3319 = vdwg.mxu0
        %3320 = vmatpush.msra.mxu0 0.0
        %3321 = vmatpush.msra.mxu0 0.0
        %3322 = vmatpush.msra.mxu0 0.0
        %3323 = vmatpush.msra.mxu0 0.0
        %3324 = vmatpush.msra.mxu0 0.0
        %3325 = vmatpush.msra.mxu0 0.0
        %3326 = vmatpush.msra.mxu0 0.0
        %3327 = vmatpush.msra.mxu0 0.0
        %3328 = vmatpush.msra.mxu0 %v3284
        %3329 = vmatpush.msra.mxu0 %v3280
        %3330 = vmatpush.msra.mxu0 %v3276
        %3331 = vmatpush.msra.mxu0 %v3272
        %3332 = vmatpush.msra.mxu0 %v3268
        %3333 = vmatpush.msra.mxu0 %v3264
        %3334 = vmatpush.msra.mxu0 %v3260
        %3335 = vmatpush.msra.mxu0 %v3256
        %3336 = vmatmul.f32.gmra.mxu0 %v3298
        %v3337 = vpop.f32.mrf.mxu0
        %v3338 = vadd.f32 %v3290, %v3337
        %3339 = vdwg.mxu0
        %3340 = vmatpush.msra.mxu0 0.0
        %3341 = vmatpush.msra.mxu0 0.0
        %3342 = vmatpush.msra.mxu0 0.0
        %3343 = vmatpush.msra.mxu0 0.0
        %3344 = vmatpush.msra.mxu0 0.0
        %3345 = vmatpush.msra.mxu0 0.0
        %3346 = vmatpush.msra.mxu0 0.0
        %3347 = vmatpush.msra.mxu0 0.0
        %3348 = vmatpush.msra.mxu0 %v3285
        %3349 = vmatpush.msra.mxu0 %v3281
        %3350 = vmatpush.msra.mxu0 %v3277
        %3351 = vmatpush.msra.mxu0 %v3273
        %3352 = vmatpush.msra.mxu0 %v3269
        %3353 = vmatpush.msra.mxu0 %v3265
        %3354 = vmatpush.msra.mxu0 %v3261
        %3355 = vmatpush.msra.mxu0 %v3257
        %3356 = vmatmul.f32.gmra.mxu0 %v3298
        %v3357 = vpop.f32.mrf.mxu0
        %v3358 = vadd.f32 %v3291, %v3357
        %3359 = vdwg.mxu0
        %3360 = vmatpush.msra.mxu0 0.0
        %3361 = vmatpush.msra.mxu0 0.0
        %3362 = vmatpush.msra.mxu0 0.0
        %3363 = vmatpush.msra.mxu0 0.0
        %3364 = vmatpush.msra.mxu0 0.0
        %3365 = vmatpush.msra.mxu0 0.0
        %3366 = vmatpush.msra.mxu0 0.0
        %3367 = vmatpush.msra.mxu0 0.0
        %3368 = vmatpush.msra.mxu0 %v3286
        %3369 = vmatpush.msra.mxu0 %v3282
        %3370 = vmatpush.msra.mxu0 %v3278
        %3371 = vmatpush.msra.mxu0 %v3274
        %3372 = vmatpush.msra.mxu0 %v3270
        %3373 = vmatpush.msra.mxu0 %v3266
        %3374 = vmatpush.msra.mxu0 %v3262
        %3375 = vmatpush.msra.mxu0 %v3258
        %3376 = vmatmul.f32.gmra.mxu0 %v3298
        %v3377 = vpop.f32.mrf.mxu0
        %v3378 = vadd.f32 %v3292, %v3377
        %3379 = vdwg.mxu0
        %v3380 = vmul.f32 %v3318, 0.125
        %v3381 = vmul.f32 %v3338, 0.125
        %v3382 = vmul.f32 %v3358, 0.125
        %v3383 = vmul.f32 %v3378, 0.125
        %3385 = vrot.lane.b32.xlu0 %v3380, 64
        %v3386 = vpop.permute.xlu0 %3385
        %3388 = vrot.lane.b32.xlu0 %v3381, 64
        %v3389 = vpop.permute.xlu0 %3388
        %3391 = vrot.lane.b32.xlu0 %v3382, 64
        %v3392 = vpop.permute.xlu0 %3391
        %3394 = vrot.lane.b32.xlu0 %v3383, 64
        %v3395 = vpop.permute.xlu0 %3394
        %v3396 = vsel %vm712, %v3380, 0
        %3398 = vmatpush.xpose.msra.mxu0 0.0
        %3399 = vmatpush.xpose.msra.mxu0 0.0
        %3400 = vmatpush.xpose.msra.mxu0 0.0
        %3401 = vmatpush.xpose.msra.mxu0 0.0
        %3402 = vmatpush.xpose.msra.mxu0 0.0
        %3403 = vmatpush.xpose.msra.mxu0 0.0
        %3404 = vmatpush.xpose.msra.mxu0 0.0
        %3405 = vmatpush.xpose.msra.mxu0 0.0
        %3406 = vmatpush.xpose.msra.mxu0 0.0
        %3407 = vmatpush.xpose.msra.mxu0 0.0
        %3408 = vmatpush.xpose.msra.mxu0 0.0
        %3409 = vmatpush.xpose.msra.mxu0 0.0
        %3410 = vmatpush.xpose.msra.mxu0 0.0
        %3411 = vmatpush.xpose.msra.mxu0 0.0
        %3412 = vmatpush.xpose.msra.mxu0 0.0
        %3413 = vmatpush.xpose.msra.mxu0 %v1180
        %3414 = vmatmul.f32.gmra.mxu0 %v3396
        %v3415 = vpop.f32.mrf.mxu0
        %v3416 = vadd.f32 0.0, %v3415
        %3417 = vdwg.mxu0
        %v3418 = vsel %vm712, %v3386, 0
        %3420 = vmatpush.xpose.msra.mxu0 0.0
        %3421 = vmatpush.xpose.msra.mxu0 0.0
        %3422 = vmatpush.xpose.msra.mxu0 0.0
        %3423 = vmatpush.xpose.msra.mxu0 0.0
        %3424 = vmatpush.xpose.msra.mxu0 0.0
        %3425 = vmatpush.xpose.msra.mxu0 0.0
        %3426 = vmatpush.xpose.msra.mxu0 0.0
        %3427 = vmatpush.xpose.msra.mxu0 0.0
        %3428 = vmatpush.xpose.msra.mxu0 0.0
        %3429 = vmatpush.xpose.msra.mxu0 0.0
        %3430 = vmatpush.xpose.msra.mxu0 0.0
        %3431 = vmatpush.xpose.msra.mxu0 0.0
        %3432 = vmatpush.xpose.msra.mxu0 0.0
        %3433 = vmatpush.xpose.msra.mxu0 0.0
        %3434 = vmatpush.xpose.msra.mxu0 0.0
        %3435 = vmatpush.xpose.msra.mxu0 %v1204
        %3436 = vmatmul.f32.gmra.mxu0 %v3418
        %v3437 = vpop.f32.mrf.mxu0
        %v3438 = vadd.f32 0.0, %v3437
        %3439 = vdwg.mxu0
        %v3440 = vsel %vm712, %v3381, 0
        %3442 = vmatpush.xpose.msra.mxu0 0.0
        %3443 = vmatpush.xpose.msra.mxu0 0.0
        %3444 = vmatpush.xpose.msra.mxu0 0.0
        %3445 = vmatpush.xpose.msra.mxu0 0.0
        %3446 = vmatpush.xpose.msra.mxu0 0.0
        %3447 = vmatpush.xpose.msra.mxu0 0.0
        %3448 = vmatpush.xpose.msra.mxu0 0.0
        %3449 = vmatpush.xpose.msra.mxu0 0.0
        %3450 = vmatpush.xpose.msra.mxu0 0.0
        %3451 = vmatpush.xpose.msra.mxu0 0.0
        %3452 = vmatpush.xpose.msra.mxu0 0.0
        %3453 = vmatpush.xpose.msra.mxu0 0.0
        %3454 = vmatpush.xpose.msra.mxu0 0.0
        %3455 = vmatpush.xpose.msra.mxu0 0.0
        %3456 = vmatpush.xpose.msra.mxu0 0.0
        %3457 = vmatpush.xpose.msra.mxu0 %v1228
        %3458 = vmatmul.f32.gmra.mxu0 %v3440
        %v3459 = vpop.f32.mrf.mxu0
        %v3460 = vadd.f32 0.0, %v3459
        %3461 = vdwg.mxu0
        %v3462 = vsel %vm712, %v3389, 0
        %3464 = vmatpush.xpose.msra.mxu0 0.0
        %3465 = vmatpush.xpose.msra.mxu0 0.0
        %3466 = vmatpush.xpose.msra.mxu0 0.0
        %3467 = vmatpush.xpose.msra.mxu0 0.0
        %3468 = vmatpush.xpose.msra.mxu0 0.0
        %3469 = vmatpush.xpose.msra.mxu0 0.0
        %3470 = vmatpush.xpose.msra.mxu0 0.0
        %3471 = vmatpush.xpose.msra.mxu0 0.0
        %3472 = vmatpush.xpose.msra.mxu0 0.0
        %3473 = vmatpush.xpose.msra.mxu0 0.0
        %3474 = vmatpush.xpose.msra.mxu0 0.0
        %3475 = vmatpush.xpose.msra.mxu0 0.0
        %3476 = vmatpush.xpose.msra.mxu0 0.0
        %3477 = vmatpush.xpose.msra.mxu0 0.0
        %3478 = vmatpush.xpose.msra.mxu0 0.0
        %3479 = vmatpush.xpose.msra.mxu0 %v1252
        %3480 = vmatmul.f32.gmra.mxu0 %v3462
        %v3481 = vpop.f32.mrf.mxu0
        %v3482 = vadd.f32 0.0, %v3481
        %3483 = vdwg.mxu0
        %v3484 = vsel %vm712, %v3382, 0
        %3486 = vmatpush.xpose.msra.mxu0 0.0
        %3487 = vmatpush.xpose.msra.mxu0 0.0
        %3488 = vmatpush.xpose.msra.mxu0 0.0
        %3489 = vmatpush.xpose.msra.mxu0 0.0
        %3490 = vmatpush.xpose.msra.mxu0 0.0
        %3491 = vmatpush.xpose.msra.mxu0 0.0
        %3492 = vmatpush.xpose.msra.mxu0 0.0
        %3493 = vmatpush.xpose.msra.mxu0 0.0
        %3494 = vmatpush.xpose.msra.mxu0 0.0
        %3495 = vmatpush.xpose.msra.mxu0 0.0
        %3496 = vmatpush.xpose.msra.mxu0 0.0
        %3497 = vmatpush.xpose.msra.mxu0 0.0
        %3498 = vmatpush.xpose.msra.mxu0 0.0
        %3499 = vmatpush.xpose.msra.mxu0 0.0
        %3500 = vmatpush.xpose.msra.mxu0 0.0
        %3501 = vmatpush.xpose.msra.mxu0 %v1276
        %3502 = vmatmul.f32.gmra.mxu0 %v3484
        %v3503 = vpop.f32.mrf.mxu0
        %v3504 = vadd.f32 0.0, %v3503
        %3505 = vdwg.mxu0
        %v3506 = vsel %vm712, %v3392, 0
        %3508 = vmatpush.xpose.msra.mxu0 0.0
        %3509 = vmatpush.xpose.msra.mxu0 0.0
        %3510 = vmatpush.xpose.msra.mxu0 0.0
        %3511 = vmatpush.xpose.msra.mxu0 0.0
        %3512 = vmatpush.xpose.msra.mxu0 0.0
        %3513 = vmatpush.xpose.msra.mxu0 0.0
        %3514 = vmatpush.xpose.msra.mxu0 0.0
        %3515 = vmatpush.xpose.msra.mxu0 0.0
        %3516 = vmatpush.xpose.msra.mxu0 0.0
        %3517 = vmatpush.xpose.msra.mxu0 0.0
        %3518 = vmatpush.xpose.msra.mxu0 0.0
        %3519 = vmatpush.xpose.msra.mxu0 0.0
        %3520 = vmatpush.xpose.msra.mxu0 0.0
        %3521 = vmatpush.xpose.msra.mxu0 0.0
        %3522 = vmatpush.xpose.msra.mxu0 0.0
        %3523 = vmatpush.xpose.msra.mxu0 %v1300
        %3524 = vmatmul.f32.gmra.mxu0 %v3506
        %v3525 = vpop.f32.mrf.mxu0
        %v3526 = vadd.f32 0.0, %v3525
        %3527 = vdwg.mxu0
        %v3528 = vsel %vm712, %v3383, 0
        %3530 = vmatpush.xpose.msra.mxu0 0.0
        %3531 = vmatpush.xpose.msra.mxu0 0.0
        %3532 = vmatpush.xpose.msra.mxu0 0.0
        %3533 = vmatpush.xpose.msra.mxu0 0.0
        %3534 = vmatpush.xpose.msra.mxu0 0.0
        %3535 = vmatpush.xpose.msra.mxu0 0.0
        %3536 = vmatpush.xpose.msra.mxu0 0.0
        %3537 = vmatpush.xpose.msra.mxu0 0.0
        %3538 = vmatpush.xpose.msra.mxu0 0.0
        %3539 = vmatpush.xpose.msra.mxu0 0.0
        %3540 = vmatpush.xpose.msra.mxu0 0.0
        %3541 = vmatpush.xpose.msra.mxu0 0.0
        %3542 = vmatpush.xpose.msra.mxu0 0.0
        %3543 = vmatpush.xpose.msra.mxu0 0.0
        %3544 = vmatpush.xpose.msra.mxu0 0.0
        %3545 = vmatpush.xpose.msra.mxu0 %v1324
        %3546 = vmatmul.f32.gmra.mxu0 %v3528
        %v3547 = vpop.f32.mrf.mxu0
        %v3548 = vadd.f32 0.0, %v3547
        %3549 = vdwg.mxu0
        %v3550 = vsel %vm712, %v3395, 0
        %3552 = vmatpush.xpose.msra.mxu0 0.0
        %3553 = vmatpush.xpose.msra.mxu0 0.0
        %3554 = vmatpush.xpose.msra.mxu0 0.0
        %3555 = vmatpush.xpose.msra.mxu0 0.0
        %3556 = vmatpush.xpose.msra.mxu0 0.0
        %3557 = vmatpush.xpose.msra.mxu0 0.0
        %3558 = vmatpush.xpose.msra.mxu0 0.0
        %3559 = vmatpush.xpose.msra.mxu0 0.0
        %3560 = vmatpush.xpose.msra.mxu0 0.0
        %3561 = vmatpush.xpose.msra.mxu0 0.0
        %3562 = vmatpush.xpose.msra.mxu0 0.0
        %3563 = vmatpush.xpose.msra.mxu0 0.0
        %3564 = vmatpush.xpose.msra.mxu0 0.0
        %3565 = vmatpush.xpose.msra.mxu0 0.0
        %3566 = vmatpush.xpose.msra.mxu0 0.0
        %3567 = vmatpush.xpose.msra.mxu0 %v1348
        %3568 = vmatmul.f32.gmra.mxu0 %v3550
        %v3569 = vpop.f32.mrf.mxu0
        %v3570 = vadd.f32 0.0, %v3569
        %3571 = vdwg.mxu0
        %v3572 = vsel %vm1370, %v3416, -inf
        %3573 = vmax.xlane.f32.xlu0 %v3572
        %v3574 = vpop.xlane.xlu0 %3573
        %v3575 = vsel %vm1370, %v3438, -inf
        %3576 = vmax.xlane.f32.xlu0 %v3575
        %v3577 = vpop.xlane.xlu0 %3576
        %v3578 = vsel %vm1370, %v3460, -inf
        %3579 = vmax.xlane.f32.xlu0 %v3578
        %v3580 = vpop.xlane.xlu0 %3579
        %v3581 = vsel %vm1370, %v3482, -inf
        %3582 = vmax.xlane.f32.xlu0 %v3581
        %v3583 = vpop.xlane.xlu0 %3582
        %v3584 = vsel %vm1370, %v3504, -inf
        %3585 = vmax.xlane.f32.xlu0 %v3584
        %v3586 = vpop.xlane.xlu0 %3585
        %v3587 = vsel %vm1370, %v3526, -inf
        %3588 = vmax.xlane.f32.xlu0 %v3587
        %v3589 = vpop.xlane.xlu0 %3588
        %v3590 = vsel %vm1370, %v3548, -inf
        %3591 = vmax.xlane.f32.xlu0 %v3590
        %v3592 = vpop.xlane.xlu0 %3591
        %v3593 = vsel %vm1370, %v3570, -inf
        %3594 = vmax.xlane.f32.xlu0 %v3593
        %v3595 = vpop.xlane.xlu0 %3594
        %v3596 = vsub.f32 %v3416, %v3574
        %v3597 = vsub.f32 %v3438, %v3577
        %v3598 = vsub.f32 %v3460, %v3580
        %v3599 = vsub.f32 %v3482, %v3583
        %v3600 = vsub.f32 %v3504, %v3586
        %v3601 = vsub.f32 %v3526, %v3589
        %v3602 = vsub.f32 %v3548, %v3592
        %v3603 = vsub.f32 %v3570, %v3595
        %v3604 = vmul.f32 %v3596, 1.442695
        %v3605 = vpow.pop %v3604
        %v3606 = vmul.f32 %v3597, 1.442695
        %v3607 = vpow.pop %v3606
        %v3608 = vmul.f32 %v3598, 1.442695
        %v3609 = vpow.pop %v3608
        %v3610 = vmul.f32 %v3599, 1.442695
        %v3611 = vpow.pop %v3610
        %v3612 = vmul.f32 %v3600, 1.442695
        %v3613 = vpow.pop %v3612
        %v3614 = vmul.f32 %v3601, 1.442695
        %v3615 = vpow.pop %v3614
        %v3616 = vmul.f32 %v3602, 1.442695
        %v3617 = vpow.pop %v3616
        %v3618 = vmul.f32 %v3603, 1.442695
        %v3619 = vpow.pop %v3618
        %v3620 = vsel %vm1370, %v3605, 0.0
        %3621 = vadd.xlane.f32.xlu0 %v3620
        %v3622 = vpop.xlane.xlu0 %3621
        %v3623 = vsel %vm1370, %v3607, 0.0
        %3624 = vadd.xlane.f32.xlu0 %v3623
        %v3625 = vpop.xlane.xlu0 %3624
        %v3626 = vsel %vm1370, %v3609, 0.0
        %3627 = vadd.xlane.f32.xlu0 %v3626
        %v3628 = vpop.xlane.xlu0 %3627
        %v3629 = vsel %vm1370, %v3611, 0.0
        %3630 = vadd.xlane.f32.xlu0 %v3629
        %v3631 = vpop.xlane.xlu0 %3630
        %v3632 = vsel %vm1370, %v3613, 0.0
        %3633 = vadd.xlane.f32.xlu0 %v3632
        %v3634 = vpop.xlane.xlu0 %3633
        %v3635 = vsel %vm1370, %v3615, 0.0
        %3636 = vadd.xlane.f32.xlu0 %v3635
        %v3637 = vpop.xlane.xlu0 %3636
        %v3638 = vsel %vm1370, %v3617, 0.0
        %3639 = vadd.xlane.f32.xlu0 %v3638
        %v3640 = vpop.xlane.xlu0 %3639
        %v3641 = vsel %vm1370, %v3619, 0.0
        %3642 = vadd.xlane.f32.xlu0 %v3641
        %v3643 = vpop.xlane.xlu0 %3642
        %v3644 = vrcp.pop %v3622
        %v3645 = vmul.f32 %v3622, %v3644
        %v3646 = vsub.f32 1.0, %v3645
        %v3647 = vmul.f32 %v3644, %v3646
        %v3648 = vadd.f32 %v3644, %v3647
        %vm3649 = vweird.f32 %v3622
        %vm3650 = vweird.f32 %v3644
        %vm3651 = vmor %vm3649, %vm3650
        %v3652 = vsel %vm3651, %v3644, %v3648
        %v3653 = vand.u32 2147483647, %v3622
        %vm3654 = vcmp.eq.f32.partialorder %v3653, 8.507059e+37
        %v3655 = vand.u32 %v3622, 2147483648
        %v3656 = vor.u32 1.1754944e-38, %v3655
        %v3657 = vsel %vm3654, %v3656, %v3652
        %v3658 = vmul.f32 %v3605, %v3657
        %v3659 = vrcp.pop %v3625
        %v3660 = vmul.f32 %v3625, %v3659
        %v3661 = vsub.f32 1.0, %v3660
        %v3662 = vmul.f32 %v3659, %v3661
        %v3663 = vadd.f32 %v3659, %v3662
        %vm3664 = vweird.f32 %v3625
        %vm3665 = vweird.f32 %v3659
        %vm3666 = vmor %vm3664, %vm3665
        %v3667 = vsel %vm3666, %v3659, %v3663
        %v3668 = vand.u32 2147483647, %v3625
        %vm3669 = vcmp.eq.f32.partialorder %v3668, 8.507059e+37
        %v3670 = vand.u32 %v3625, 2147483648
        %v3671 = vor.u32 1.1754944e-38, %v3670
        %v3672 = vsel %vm3669, %v3671, %v3667
        %v3673 = vmul.f32 %v3607, %v3672
        %v3674 = vrcp.pop %v3628
        %v3675 = vmul.f32 %v3628, %v3674
        %v3676 = vsub.f32 1.0, %v3675
        %v3677 = vmul.f32 %v3674, %v3676
        %v3678 = vadd.f32 %v3674, %v3677
        %vm3679 = vweird.f32 %v3628
        %vm3680 = vweird.f32 %v3674
        %vm3681 = vmor %vm3679, %vm3680
        %v3682 = vsel %vm3681, %v3674, %v3678
        %v3683 = vand.u32 2147483647, %v3628
        %vm3684 = vcmp.eq.f32.partialorder %v3683, 8.507059e+37
        %v3685 = vand.u32 %v3628, 2147483648
        %v3686 = vor.u32 1.1754944e-38, %v3685
        %v3687 = vsel %vm3684, %v3686, %v3682
        %v3688 = vmul.f32 %v3609, %v3687
        %v3689 = vrcp.pop %v3631
        %v3690 = vmul.f32 %v3631, %v3689
        %v3691 = vsub.f32 1.0, %v3690
        %v3692 = vmul.f32 %v3689, %v3691
        %v3693 = vadd.f32 %v3689, %v3692
        %vm3694 = vweird.f32 %v3631
        %vm3695 = vweird.f32 %v3689
        %vm3696 = vmor %vm3694, %vm3695
        %v3697 = vsel %vm3696, %v3689, %v3693
        %v3698 = vand.u32 2147483647, %v3631
        %vm3699 = vcmp.eq.f32.partialorder %v3698, 8.507059e+37
        %v3700 = vand.u32 %v3631, 2147483648
        %v3701 = vor.u32 1.1754944e-38, %v3700
        %v3702 = vsel %vm3699, %v3701, %v3697
        %v3703 = vmul.f32 %v3611, %v3702
        %v3704 = vrcp.pop %v3634
        %v3705 = vmul.f32 %v3634, %v3704
        %v3706 = vsub.f32 1.0, %v3705
        %v3707 = vmul.f32 %v3704, %v3706
        %v3708 = vadd.f32 %v3704, %v3707
        %vm3709 = vweird.f32 %v3634
        %vm3710 = vweird.f32 %v3704
        %vm3711 = vmor %vm3709, %vm3710
        %v3712 = vsel %vm3711, %v3704, %v3708
        %v3713 = vand.u32 2147483647, %v3634
        %vm3714 = vcmp.eq.f32.partialorder %v3713, 8.507059e+37
        %v3715 = vand.u32 %v3634, 2147483648
        %v3716 = vor.u32 1.1754944e-38, %v3715
        %v3717 = vsel %vm3714, %v3716, %v3712
        %v3718 = vmul.f32 %v3613, %v3717
        %v3719 = vrcp.pop %v3637
        %v3720 = vmul.f32 %v3637, %v3719
        %v3721 = vsub.f32 1.0, %v3720
        %v3722 = vmul.f32 %v3719, %v3721
        %v3723 = vadd.f32 %v3719, %v3722
        %vm3724 = vweird.f32 %v3637
        %vm3725 = vweird.f32 %v3719
        %vm3726 = vmor %vm3724, %vm3725
        %v3727 = vsel %vm3726, %v3719, %v3723
        %v3728 = vand.u32 2147483647, %v3637
        %vm3729 = vcmp.eq.f32.partialorder %v3728, 8.507059e+37
        %v3730 = vand.u32 %v3637, 2147483648
        %v3731 = vor.u32 1.1754944e-38, %v3730
        %v3732 = vsel %vm3729, %v3731, %v3727
        %v3733 = vmul.f32 %v3615, %v3732
        %v3734 = vrcp.pop %v3640
        %v3735 = vmul.f32 %v3640, %v3734
        %v3736 = vsub.f32 1.0, %v3735
        %v3737 = vmul.f32 %v3734, %v3736
        %v3738 = vadd.f32 %v3734, %v3737
        %vm3739 = vweird.f32 %v3640
        %vm3740 = vweird.f32 %v3734
        %vm3741 = vmor %vm3739, %vm3740
        %v3742 = vsel %vm3741, %v3734, %v3738
        %v3743 = vand.u32 2147483647, %v3640
        %vm3744 = vcmp.eq.f32.partialorder %v3743, 8.507059e+37
        %v3745 = vand.u32 %v3640, 2147483648
        %v3746 = vor.u32 1.1754944e-38, %v3745
        %v3747 = vsel %vm3744, %v3746, %v3742
        %v3748 = vmul.f32 %v3617, %v3747
        %v3749 = vrcp.pop %v3643
        %v3750 = vmul.f32 %v3643, %v3749
        %v3751 = vsub.f32 1.0, %v3750
        %v3752 = vmul.f32 %v3749, %v3751
        %v3753 = vadd.f32 %v3749, %v3752
        %vm3754 = vweird.f32 %v3643
        %vm3755 = vweird.f32 %v3749
        %vm3756 = vmor %vm3754, %vm3755
        %v3757 = vsel %vm3756, %v3749, %v3753
        %v3758 = vand.u32 2147483647, %v3643
        %vm3759 = vcmp.eq.f32.partialorder %v3758, 8.507059e+37
        %v3760 = vand.u32 %v3643, 2147483648
        %v3761 = vor.u32 1.1754944e-38, %v3760
        %v3762 = vsel %vm3759, %v3761, %v3757
        %v3763 = vmul.f32 %v3619, %v3762
        %v3765 = vsel %vm1370, %v3658, 0
        %3767 = vmatpush.msra.mxu0 0.0
        %3768 = vmatpush.msra.mxu0 0.0
        %3769 = vmatpush.msra.mxu0 0.0
        %3770 = vmatpush.msra.mxu0 0.0
        %3771 = vmatpush.msra.mxu0 0.0
        %3772 = vmatpush.msra.mxu0 0.0
        %3773 = vmatpush.msra.mxu0 0.0
        %3774 = vmatpush.msra.mxu0 0.0
        %3775 = vmatpush.msra.mxu0 0.0
        %3776 = vmatpush.msra.mxu0 0.0
        %3777 = vmatpush.msra.mxu0 0.0
        %3778 = vmatpush.msra.mxu0 0.0
        %3779 = vmatpush.msra.mxu0 0.0
        %3780 = vmatpush.msra.mxu0 0.0
        %3781 = vmatpush.msra.mxu0 0.0
        %3782 = vmatpush.msra.mxu0 %v925
        %3783 = vmatmul.f32.gmra.mxu0 %v3765
        %v3784 = vpop.f32.mrf.mxu0
        %v3785 = vadd.f32 0.0, %v3784
        %3786 = vdwg.mxu0
        %v3788 = vsel %vm1370, %v3673, 0
        %3790 = vmatpush.msra.mxu0 0.0
        %3791 = vmatpush.msra.mxu0 0.0
        %3792 = vmatpush.msra.mxu0 0.0
        %3793 = vmatpush.msra.mxu0 0.0
        %3794 = vmatpush.msra.mxu0 0.0
        %3795 = vmatpush.msra.mxu0 0.0
        %3796 = vmatpush.msra.mxu0 0.0
        %3797 = vmatpush.msra.mxu0 0.0
        %3798 = vmatpush.msra.mxu0 0.0
        %3799 = vmatpush.msra.mxu0 0.0
        %3800 = vmatpush.msra.mxu0 0.0
        %3801 = vmatpush.msra.mxu0 0.0
        %3802 = vmatpush.msra.mxu0 0.0
        %3803 = vmatpush.msra.mxu0 0.0
        %3804 = vmatpush.msra.mxu0 0.0
        %3805 = vmatpush.msra.mxu0 %v1001
        %3806 = vmatmul.f32.gmra.mxu0 %v3788
        %v3807 = vpop.f32.mrf.mxu0
        %v3808 = vadd.f32 0.0, %v3807
        %3809 = vdwg.mxu0
        %v3811 = vsel %vm1370, %v3688, 0
        %3813 = vmatpush.msra.mxu0 0.0
        %3814 = vmatpush.msra.mxu0 0.0
        %3815 = vmatpush.msra.mxu0 0.0
        %3816 = vmatpush.msra.mxu0 0.0
        %3817 = vmatpush.msra.mxu0 0.0
        %3818 = vmatpush.msra.mxu0 0.0
        %3819 = vmatpush.msra.mxu0 0.0
        %3820 = vmatpush.msra.mxu0 0.0
        %3821 = vmatpush.msra.mxu0 0.0
        %3822 = vmatpush.msra.mxu0 0.0
        %3823 = vmatpush.msra.mxu0 0.0
        %3824 = vmatpush.msra.mxu0 0.0
        %3825 = vmatpush.msra.mxu0 0.0
        %3826 = vmatpush.msra.mxu0 0.0
        %3827 = vmatpush.msra.mxu0 0.0
        %3828 = vmatpush.msra.mxu0 %v945
        %3829 = vmatmul.f32.gmra.mxu0 %v3811
        %v3830 = vpop.f32.mrf.mxu0
        %v3831 = vadd.f32 0.0, %v3830
        %3832 = vdwg.mxu0
        %v3834 = vsel %vm1370, %v3703, 0
        %3836 = vmatpush.msra.mxu0 0.0
        %3837 = vmatpush.msra.mxu0 0.0
        %3838 = vmatpush.msra.mxu0 0.0
        %3839 = vmatpush.msra.mxu0 0.0
        %3840 = vmatpush.msra.mxu0 0.0
        %3841 = vmatpush.msra.mxu0 0.0
        %3842 = vmatpush.msra.mxu0 0.0
        %3843 = vmatpush.msra.mxu0 0.0
        %3844 = vmatpush.msra.mxu0 0.0
        %3845 = vmatpush.msra.mxu0 0.0
        %3846 = vmatpush.msra.mxu0 0.0
        %3847 = vmatpush.msra.mxu0 0.0
        %3848 = vmatpush.msra.mxu0 0.0
        %3849 = vmatpush.msra.mxu0 0.0
        %3850 = vmatpush.msra.mxu0 0.0
        %3851 = vmatpush.msra.mxu0 %v1005
        %3852 = vmatmul.f32.gmra.mxu0 %v3834
        %v3853 = vpop.f32.mrf.mxu0
        %v3854 = vadd.f32 0.0, %v3853
        %3855 = vdwg.mxu0
        %v3857 = vsel %vm1370, %v3718, 0
        %3859 = vmatpush.msra.mxu0 0.0
        %3860 = vmatpush.msra.mxu0 0.0
        %3861 = vmatpush.msra.mxu0 0.0
        %3862 = vmatpush.msra.mxu0 0.0
        %3863 = vmatpush.msra.mxu0 0.0
        %3864 = vmatpush.msra.mxu0 0.0
        %3865 = vmatpush.msra.mxu0 0.0
        %3866 = vmatpush.msra.mxu0 0.0
        %3867 = vmatpush.msra.mxu0 0.0
        %3868 = vmatpush.msra.mxu0 0.0
        %3869 = vmatpush.msra.mxu0 0.0
        %3870 = vmatpush.msra.mxu0 0.0
        %3871 = vmatpush.msra.mxu0 0.0
        %3872 = vmatpush.msra.mxu0 0.0
        %3873 = vmatpush.msra.mxu0 0.0
        %3874 = vmatpush.msra.mxu0 %v965
        %3875 = vmatmul.f32.gmra.mxu0 %v3857
        %v3876 = vpop.f32.mrf.mxu0
        %v3877 = vadd.f32 0.0, %v3876
        %3878 = vdwg.mxu0
        %v3880 = vsel %vm1370, %v3733, 0
        %3882 = vmatpush.msra.mxu0 0.0
        %3883 = vmatpush.msra.mxu0 0.0
        %3884 = vmatpush.msra.mxu0 0.0
        %3885 = vmatpush.msra.mxu0 0.0
        %3886 = vmatpush.msra.mxu0 0.0
        %3887 = vmatpush.msra.mxu0 0.0
        %3888 = vmatpush.msra.mxu0 0.0
        %3889 = vmatpush.msra.mxu0 0.0
        %3890 = vmatpush.msra.mxu0 0.0
        %3891 = vmatpush.msra.mxu0 0.0
        %3892 = vmatpush.msra.mxu0 0.0
        %3893 = vmatpush.msra.mxu0 0.0
        %3894 = vmatpush.msra.mxu0 0.0
        %3895 = vmatpush.msra.mxu0 0.0
        %3896 = vmatpush.msra.mxu0 0.0
        %3897 = vmatpush.msra.mxu0 %v1009
        %3898 = vmatmul.f32.gmra.mxu0 %v3880
        %v3899 = vpop.f32.mrf.mxu0
        %v3900 = vadd.f32 0.0, %v3899
        %3901 = vdwg.mxu0
        %v3903 = vsel %vm1370, %v3748, 0
        %3905 = vmatpush.msra.mxu0 0.0
        %3906 = vmatpush.msra.mxu0 0.0
        %3907 = vmatpush.msra.mxu0 0.0
        %3908 = vmatpush.msra.mxu0 0.0
        %3909 = vmatpush.msra.mxu0 0.0
        %3910 = vmatpush.msra.mxu0 0.0
        %3911 = vmatpush.msra.mxu0 0.0
        %3912 = vmatpush.msra.mxu0 0.0
        %3913 = vmatpush.msra.mxu0 0.0
        %3914 = vmatpush.msra.mxu0 0.0
        %3915 = vmatpush.msra.mxu0 0.0
        %3916 = vmatpush.msra.mxu0 0.0
        %3917 = vmatpush.msra.mxu0 0.0
        %3918 = vmatpush.msra.mxu0 0.0
        %3919 = vmatpush.msra.mxu0 0.0
        %3920 = vmatpush.msra.mxu0 %v985
        %3921 = vmatmul.f32.gmra.mxu0 %v3903
        %v3922 = vpop.f32.mrf.mxu0
        %v3923 = vadd.f32 0.0, %v3922
        %3924 = vdwg.mxu0
        %v3926 = vsel %vm1370, %v3763, 0
        %3928 = vmatpush.msra.mxu0 0.0
        %3929 = vmatpush.msra.mxu0 0.0
        %3930 = vmatpush.msra.mxu0 0.0
        %3931 = vmatpush.msra.mxu0 0.0
        %3932 = vmatpush.msra.mxu0 0.0
        %3933 = vmatpush.msra.mxu0 0.0
        %3934 = vmatpush.msra.mxu0 0.0
        %3935 = vmatpush.msra.mxu0 0.0
        %3936 = vmatpush.msra.mxu0 0.0
        %3937 = vmatpush.msra.mxu0 0.0
        %3938 = vmatpush.msra.mxu0 0.0
        %3939 = vmatpush.msra.mxu0 0.0
        %3940 = vmatpush.msra.mxu0 0.0
        %3941 = vmatpush.msra.mxu0 0.0
        %3942 = vmatpush.msra.mxu0 0.0
        %3943 = vmatpush.msra.mxu0 %v1013
        %3944 = vmatmul.f32.gmra.mxu0 %v3926
        %v3945 = vpop.f32.mrf.mxu0
        %v3946 = vadd.f32 0.0, %v3945
        %3947 = vdwg.mxu0
        %3949 = vrot.lane.b32.xlu0 %v3808, 64
        %v3950 = vpop.permute.xlu0 %3949
        %3953 = vrot.lane.b32.xlu0 %v3854, 64
        %v3954 = vpop.permute.xlu0 %3953
        %3957 = vrot.lane.b32.xlu0 %v3900, 64
        %v3958 = vpop.permute.xlu0 %3957
        %3961 = vrot.lane.b32.xlu0 %v3946, 64
        %v3962 = vpop.permute.xlu0 %3961
        %v3964 = vsel %vm712, %v3785, %v3950
        %v3965 = vsel %vm712, %v3831, %v3954
        %v3966 = vsel %vm712, %v3877, %v3958
        %v3967 = vsel %vm712, %v3923, %v3962
        %v3968 = vmul.f32 %v3964, %v1770
        %v3969 = vmul.f32 %v3965, %v1770
        %v3970 = vmul.f32 %v3966, %v1770
        %v3971 = vmul.f32 %v3967, %v1770
        %v3972 = vld [vmem:[#allocation8] sm:$0xff]
        %v3973 = vld [vmem:[#allocation8 + $0x8] sm:$0xff]
        %v3974 = vld [vmem:[#allocation8 + $0x10] sm:$0xff]
        %v3975 = vld [vmem:[#allocation8 + $0x18] sm:$0xff]
        %v3976 = vld [vmem:[#allocation8 + $0x20] sm:$0xff]
        %v3977 = vld [vmem:[#allocation8 + $0x28] sm:$0xff]
        %v3978 = vld [vmem:[#allocation8 + $0x30] sm:$0xff]
        %v3979 = vld [vmem:[#allocation8 + $0x38] sm:$0xff]
        %v3980 = vld [vmem:[#allocation8 + $0x40] sm:$0xff]
        %v3981 = vld [vmem:[#allocation8 + $0x48] sm:$0xff]
        %v3982 = vld [vmem:[#allocation8 + $0x50] sm:$0xff]
        %v3983 = vld [vmem:[#allocation8 + $0x58] sm:$0xff]
        %v3984 = vld [vmem:[#allocation8 + $0x60] sm:$0xff]
        %v3985 = vld [vmem:[#allocation8 + $0x68] sm:$0xff]
        %v3986 = vld [vmem:[#allocation8 + $0x70] sm:$0xff]
        %v3987 = vld [vmem:[#allocation8 + $0x78] sm:$0xff]
        %v3988 = vld [vmem:[#allocation8 + $0x80] sm:$0xff]
        %v3989 = vld [vmem:[#allocation8 + $0x88] sm:$0xff]
        %v3990 = vld [vmem:[#allocation8 + $0x90] sm:$0xff]
        %v3991 = vld [vmem:[#allocation8 + $0x98] sm:$0xff]
        %v3992 = vld [vmem:[#allocation8 + $0xa0] sm:$0xff]
        %v3993 = vld [vmem:[#allocation8 + $0xa8] sm:$0xff]
        %v3994 = vld [vmem:[#allocation8 + $0xb0] sm:$0xff]
        %v3995 = vld [vmem:[#allocation8 + $0xb8] sm:$0xff]
        %v3996 = vld [vmem:[#allocation8 + $0xc0] sm:$0xff]
        %v3997 = vld [vmem:[#allocation8 + $0xc8] sm:$0xff]
        %v3998 = vld [vmem:[#allocation8 + $0xd0] sm:$0xff]
        %v3999 = vld [vmem:[#allocation8 + $0xd8] sm:$0xff]
        %v4000 = vld [vmem:[#allocation8 + $0xe0] sm:$0xff]
        %v4001 = vld [vmem:[#allocation8 + $0xe8] sm:$0xff]
        %v4002 = vld [vmem:[#allocation8 + $0xf0] sm:$0xff]
        %v4003 = vld [vmem:[#allocation8 + $0xf8] sm:$0xff]
        %v4004 = vld [vmem:[#allocation8 + $0x100] sm:$0xff]
        %v4005 = vld [vmem:[#allocation8 + $0x108] sm:$0xff]
        %v4006 = vld [vmem:[#allocation8 + $0x110] sm:$0xff]
        %v4007 = vld [vmem:[#allocation8 + $0x118] sm:$0xff]
        %v4008 = vld [vmem:[#allocation8 + $0x120] sm:$0xff]
        %v4009 = vld [vmem:[#allocation8 + $0x128] sm:$0xff]
        %v4010 = vld [vmem:[#allocation8 + $0x130] sm:$0xff]
        %v4011 = vld [vmem:[#allocation8 + $0x138] sm:$0xff]
        %v4012 = vld [vmem:[#allocation8 + $0x140] sm:$0xff]
        %v4013 = vld [vmem:[#allocation8 + $0x148] sm:$0xff]
        %v4014 = vld [vmem:[#allocation8 + $0x150] sm:$0xff]
        %v4015 = vld [vmem:[#allocation8 + $0x158] sm:$0xff]
        %v4016 = vld [vmem:[#allocation8 + $0x160] sm:$0xff]
        %v4017 = vld [vmem:[#allocation8 + $0x168] sm:$0xff]
        %v4018 = vld [vmem:[#allocation8 + $0x170] sm:$0xff]
        %v4019 = vld [vmem:[#allocation8 + $0x178] sm:$0xff]
        %v4020 = vld [vmem:[#allocation8 + $0x180] sm:$0xff]
        %v4021 = vld [vmem:[#allocation8 + $0x188] sm:$0xff]
        %v4022 = vld [vmem:[#allocation8 + $0x190] sm:$0xff]
        %v4023 = vld [vmem:[#allocation8 + $0x198] sm:$0xff]
        %v4024 = vld [vmem:[#allocation8 + $0x1a0] sm:$0xff]
        %v4025 = vld [vmem:[#allocation8 + $0x1a8] sm:$0xff]
        %v4026 = vld [vmem:[#allocation8 + $0x1b0] sm:$0xff]
        %v4027 = vld [vmem:[#allocation8 + $0x1b8] sm:$0xff]
        %v4028 = vld [vmem:[#allocation8 + $0x1c0] sm:$0xff]
        %v4029 = vld [vmem:[#allocation8 + $0x1c8] sm:$0xff]
        %v4030 = vld [vmem:[#allocation8 + $0x1d0] sm:$0xff]
        %v4031 = vld [vmem:[#allocation8 + $0x1d8] sm:$0xff]
        %v4032 = vld [vmem:[#allocation8 + $0x1e0] sm:$0xff]
        %v4033 = vld [vmem:[#allocation8 + $0x1e8] sm:$0xff]
        %v4034 = vld [vmem:[#allocation8 + $0x1f0] sm:$0xff]
        %v4035 = vld [vmem:[#allocation8 + $0x1f8] sm:$0xff]
        %v4036 = vld [vmem:[%s8] sm:$0x1]
        %v4038 = vperm.slane %v4036, 0
        %4040 = vmatpush.msra.mxu0 %v3987
        %4041 = vmatpush.msra.mxu0 %v3986
        %4042 = vmatpush.msra.mxu0 %v3985
        %4043 = vmatpush.msra.mxu0 %v3984
        %4044 = vmatpush.msra.mxu0 %v3983
        %4045 = vmatpush.msra.mxu0 %v3982
        %4046 = vmatpush.msra.mxu0 %v3981
        %4047 = vmatpush.msra.mxu0 %v3980
        %4048 = vmatpush.msra.mxu0 %v3979
        %4049 = vmatpush.msra.mxu0 %v3978
        %4050 = vmatpush.msra.mxu0 %v3977
        %4051 = vmatpush.msra.mxu0 %v3976
        %4052 = vmatpush.msra.mxu0 %v3975
        %4053 = vmatpush.msra.mxu0 %v3974
        %4054 = vmatpush.msra.mxu0 %v3973
        %4055 = vmatpush.msra.mxu0 %v3972
        %4056 = vmatmul.f32.gmra.mxu0 %v3968
        %v4057 = vpop.f32.mrf.mxu0
        %v4058 = vadd.f32 %v4038, %v4057
        %4059 = vdwg.mxu0
        %4060 = vmatpush.msra.mxu0 %v4003
        %4061 = vmatpush.msra.mxu0 %v4002
        %4062 = vmatpush.msra.mxu0 %v4001
        %4063 = vmatpush.msra.mxu0 %v4000
        %4064 = vmatpush.msra.mxu0 %v3999
        %4065 = vmatpush.msra.mxu0 %v3998
        %4066 = vmatpush.msra.mxu0 %v3997
        %4067 = vmatpush.msra.mxu0 %v3996
        %4068 = vmatpush.msra.mxu0 %v3995
        %4069 = vmatpush.msra.mxu0 %v3994
        %4070 = vmatpush.msra.mxu0 %v3993
        %4071 = vmatpush.msra.mxu0 %v3992
        %4072 = vmatpush.msra.mxu0 %v3991
        %4073 = vmatpush.msra.mxu0 %v3990
        %4074 = vmatpush.msra.mxu0 %v3989
        %4075 = vmatpush.msra.mxu0 %v3988
        %4076 = vmatmul.f32.gmra.mxu0 %v3969
        %v4077 = vpop.f32.mrf.mxu0
        %v4078 = vadd.f32 %v4058, %v4077
        %4079 = vdwg.mxu0
        %4080 = vmatpush.msra.mxu0 %v4019
        %4081 = vmatpush.msra.mxu0 %v4018
        %4082 = vmatpush.msra.mxu0 %v4017
        %4083 = vmatpush.msra.mxu0 %v4016
        %4084 = vmatpush.msra.mxu0 %v4015
        %4085 = vmatpush.msra.mxu0 %v4014
        %4086 = vmatpush.msra.mxu0 %v4013
        %4087 = vmatpush.msra.mxu0 %v4012
        %4088 = vmatpush.msra.mxu0 %v4011
        %4089 = vmatpush.msra.mxu0 %v4010
        %4090 = vmatpush.msra.mxu0 %v4009
        %4091 = vmatpush.msra.mxu0 %v4008
        %4092 = vmatpush.msra.mxu0 %v4007
        %4093 = vmatpush.msra.mxu0 %v4006
        %4094 = vmatpush.msra.mxu0 %v4005
        %4095 = vmatpush.msra.mxu0 %v4004
        %4096 = vmatmul.f32.gmra.mxu0 %v3970
        %v4097 = vpop.f32.mrf.mxu0
        %v4098 = vadd.f32 %v4078, %v4097
        %4099 = vdwg.mxu0
        %4100 = vmatpush.msra.mxu0 %v4035
        %4101 = vmatpush.msra.mxu0 %v4034
        %4102 = vmatpush.msra.mxu0 %v4033
        %4103 = vmatpush.msra.mxu0 %v4032
        %4104 = vmatpush.msra.mxu0 %v4031
        %4105 = vmatpush.msra.mxu0 %v4030
        %4106 = vmatpush.msra.mxu0 %v4029
        %4107 = vmatpush.msra.mxu0 %v4028
        %4108 = vmatpush.msra.mxu0 %v4027
        %4109 = vmatpush.msra.mxu0 %v4026
        %4110 = vmatpush.msra.mxu0 %v4025
        %4111 = vmatpush.msra.mxu0 %v4024
        %4112 = vmatpush.msra.mxu0 %v4023
        %4113 = vmatpush.msra.mxu0 %v4022
        %4114 = vmatpush.msra.mxu0 %v4021
        %4115 = vmatpush.msra.mxu0 %v4020
        %4116 = vmatmul.f32.gmra.mxu0 %v3971
        %v4117 = vpop.f32.mrf.mxu0
        %v4118 = vadd.f32 %v4098, %v4117
        %4119 = vdwg.mxu0
        %v4120 = vsel %vm712, %v4118, 0.0
        %4121 = vadd.xlane.f32.xlu0 %v4120
        %v4122 = vpop.xlane.xlu0 %4121
        %v4123 = vmul.f32 %v4122, %v722
        %v4124 = vsub.f32 %v4118, %v4123
        %v4125 = vmul.f32 %v4124, %v4124
        %v4126 = vsel %vm712, %v4125, 0.0
        %4127 = vadd.xlane.f32.xlu0 %v4126
        %v4128 = vpop.xlane.xlu0 %4127
        %v4129 = vmul.f32 %v4128, %v722
        %v4130 = vadd.f32 %v4129, 1e-05
        %v4131 = vrsqrt.pop %v4130
        %v4132 = vmul.f32 %v4131, %v4130
        %v4133 = vmul.f32 %v4132, %v4131
        %v4134 = vmul.f32 0.5, %v4133
        %v4135 = vsub.f32 1.5, %v4134
        %v4136 = vmul.f32 %v4131, %v4135
        %vm4137 = vweird.f32 %v4130
        %vm4138 = vweird.f32 %v4131
        %vm4139 = vmor %vm4137, %vm4138
        %v4140 = vsel %vm4139, %v4131, %v4136
        %v4141 = vmul.f32 %v4124, %v4140
        %s4142 = scalar_lea.vmem [#allocation13], 128
        %v4143 = vld [vmem:[%s4142] sm:$0xff]
        %v4144 = vld [vmem:[%s4142 + $0x8] sm:$0xff]
        %v4145 = vld [vmem:[%s4142 + $0x10] sm:$0xff]
        %v4146 = vld [vmem:[%s4142 + $0x18] sm:$0xff]
        %v4147 = vld [vmem:[%s4142 + $0x20] sm:$0xff]
        %v4148 = vld [vmem:[%s4142 + $0x28] sm:$0xff]
        %v4149 = vld [vmem:[%s4142 + $0x30] sm:$0xff]
        %v4150 = vld [vmem:[%s4142 + $0x38] sm:$0xff]
        %s4151 = scalar_lea.vmem %s14, 2
        %v4152 = vld [vmem:[%s4151] sm:$0x1]
        %v4154 = vperm.slane %v4152, 0
        %v4157 = vsel %vm712, %v4141, 0
        %4159 = vmatpush.msra.mxu0 0.0
        %4160 = vmatpush.msra.mxu0 0.0
        %4161 = vmatpush.msra.mxu0 0.0
        %4162 = vmatpush.msra.mxu0 0.0
        %4163 = vmatpush.msra.mxu0 0.0
        %4164 = vmatpush.msra.mxu0 0.0
        %4165 = vmatpush.msra.mxu0 0.0
        %4166 = vmatpush.msra.mxu0 0.0
        %4167 = vmatpush.msra.mxu0 %v4150
        %4168 = vmatpush.msra.mxu0 %v4149
        %4169 = vmatpush.msra.mxu0 %v4148
        %4170 = vmatpush.msra.mxu0 %v4147
        %4171 = vmatpush.msra.mxu0 %v4146
        %4172 = vmatpush.msra.mxu0 %v4145
        %4173 = vmatpush.msra.mxu0 %v4144
        %4174 = vmatpush.msra.mxu0 %v4143
        %4175 = vmatmul.f32.gmra.mxu0 %v4157
        %v4176 = vpop.f32.mrf.mxu0
        %v4177 = vadd.f32 %v4154, %v4176
        %4178 = vdwg.mxu0
        %v4179 = vadd.f32 %v4177, %v4141
        %v4180 = vsel %vm712, %v4179, 0.0
        %4181 = vadd.xlane.f32.xlu0 %v4180
        %v4182 = vpop.xlane.xlu0 %4181
        %v4183 = vmul.f32 %v4182, %v722
        %v4184 = vsub.f32 %v4179, %v4183
        %v4185 = vmul.f32 %v4184, %v4184
        %v4186 = vsel %vm712, %v4185, 0.0
        %4187 = vadd.xlane.f32.xlu0 %v4186
        %v4188 = vpop.xlane.xlu0 %4187
        %v4189 = vmul.f32 %v4188, %v722
        %v4190 = vadd.f32 %v4189, 1e-05
        %v4191 = vrsqrt.pop %v4190
        %v4192 = vmul.f32 %v4191, %v4190
        %v4193 = vmul.f32 %v4192, %v4191
        %v4194 = vmul.f32 0.5, %v4193
        %v4195 = vsub.f32 1.5, %v4194
        %v4196 = vmul.f32 %v4191, %v4195
        %vm4197 = vweird.f32 %v4190
        %vm4198 = vweird.f32 %v4191
        %vm4199 = vmor %vm4197, %vm4198
        %v4200 = vsel %vm4199, %v4191, %v4196
        %v4201 = vmul.f32 %v4184, %v4200
        %v4202 = vld [vmem:[#allocation10] sm:$0xff]
        %v4203 = vld [vmem:[#allocation10 + $0x8] sm:$0xff]
        %v4204 = vld [vmem:[#allocation10 + $0x10] sm:$0xff]
        %v4205 = vld [vmem:[#allocation10 + $0x18] sm:$0xff]
        %v4206 = vld [vmem:[#allocation10 + $0x20] sm:$0xff]
        %v4207 = vld [vmem:[#allocation10 + $0x28] sm:$0xff]
        %v4208 = vld [vmem:[#allocation10 + $0x30] sm:$0xff]
        %v4209 = vld [vmem:[#allocation10 + $0x38] sm:$0xff]
        %v4210 = vld [vmem:[%s10] sm:$0x1]
        %v4212 = vperm.slane %v4210, 0
        %v4215 = vsel %vm712, %v4201, 0
        %4217 = vmatpush.msra.mxu0 0.0
        %4218 = vmatpush.msra.mxu0 0.0
        %4219 = vmatpush.msra.mxu0 0.0
        %4220 = vmatpush.msra.mxu0 0.0
        %4221 = vmatpush.msra.mxu0 0.0
        %4222 = vmatpush.msra.mxu0 0.0
        %4223 = vmatpush.msra.mxu0 0.0
        %4224 = vmatpush.msra.mxu0 0.0
        %4225 = vmatpush.msra.mxu0 %v4209
        %4226 = vmatpush.msra.mxu0 %v4208
        %4227 = vmatpush.msra.mxu0 %v4207
        %4228 = vmatpush.msra.mxu0 %v4206
        %4229 = vmatpush.msra.mxu0 %v4205
        %4230 = vmatpush.msra.mxu0 %v4204
        %4231 = vmatpush.msra.mxu0 %v4203
        %4232 = vmatpush.msra.mxu0 %v4202
        %4233 = vmatmul.f32.gmra.mxu0 %v4215
        %v4234 = vpop.f32.mrf.mxu0
        %v4235 = vadd.f32 %v4212, %v4234
        %4236 = vdwg.mxu0
        %v4237 = vmax.f32 %v4235, 0.0
        %v4238 = vld [vmem:[#allocation11] sm:$0xff]
        %v4239 = vld [vmem:[#allocation11 + $0x8] sm:$0xff]
        %v4240 = vld [vmem:[#allocation11 + $0x10] sm:$0xff]
        %v4241 = vld [vmem:[#allocation11 + $0x18] sm:$0xff]
        %v4242 = vld [vmem:[#allocation11 + $0x20] sm:$0xff]
        %v4243 = vld [vmem:[#allocation11 + $0x28] sm:$0xff]
        %v4244 = vld [vmem:[#allocation11 + $0x30] sm:$0xff]
        %v4245 = vld [vmem:[#allocation11 + $0x38] sm:$0xff]
        %v4246 = vld [vmem:[%s12] sm:$0x1]
        %v4248 = vperm.slane %v4246, 0
        %v4251 = vsel %vm712, %v4237, 0
        %4253 = vmatpush.msra.mxu0 0.0
        %4254 = vmatpush.msra.mxu0 0.0
        %4255 = vmatpush.msra.mxu0 0.0
        %4256 = vmatpush.msra.mxu0 0.0
        %4257 = vmatpush.msra.mxu0 0.0
        %4258 = vmatpush.msra.mxu0 0.0
        %4259 = vmatpush.msra.mxu0 0.0
        %4260 = vmatpush.msra.mxu0 0.0
        %4261 = vmatpush.msra.mxu0 %v4245
        %4262 = vmatpush.msra.mxu0 %v4244
        %4263 = vmatpush.msra.mxu0 %v4243
        %4264 = vmatpush.msra.mxu0 %v4242
        %4265 = vmatpush.msra.mxu0 %v4241
        %4266 = vmatpush.msra.mxu0 %v4240
        %4267 = vmatpush.msra.mxu0 %v4239
        %4268 = vmatpush.msra.mxu0 %v4238
        %4269 = vmatmul.f32.gmra.mxu0 %v4251
        %v4270 = vpop.f32.mrf.mxu0
        %v4271 = vadd.f32 %v4248, %v4270
        %4272 = vdwg.mxu0
        %v4273 = vsel %vm712, %v4271, 0.0
        %4274 = vadd.xlane.f32.xlu0 %v4273
        %v4275 = vpop.xlane.xlu0 %4274
        %v4276 = vmul.f32 %v4275, %v722
        %v4277 = vsub.f32 %v4271, %v4276
        %v4278 = vmul.f32 %v4277, %v4277
        %v4279 = vsel %vm712, %v4278, 0.0
        %4280 = vadd.xlane.f32.xlu0 %v4279
        %v4281 = vpop.xlane.xlu0 %4280
        %v4282 = vmul.f32 %v4281, %v722
        %v4283 = vadd.f32 %v4282, 1e-05
        %v4284 = vrsqrt.pop %v4283
        %v4285 = vmul.f32 %v4284, %v4283
        %v4286 = vmul.f32 %v4285, %v4284
        %v4287 = vmul.f32 0.5, %v4286
        %v4288 = vsub.f32 1.5, %v4287
        %v4289 = vmul.f32 %v4284, %v4288
        %vm4290 = vweird.f32 %v4283
        %vm4291 = vweird.f32 %v4284
        %vm4292 = vmor %vm4290, %vm4291
        %v4293 = vsel %vm4292, %v4284, %v4289
        %v4294 = vmul.f32 %v4277, %v4293
        %s4295 = scalar_lea.vmem [#allocation14], 128
        %v4296 = vld [vmem:[%s4295] sm:$0xff]
        %v4297 = vld [vmem:[%s4295 + $0x8] sm:$0xff]
        %v4298 = vld [vmem:[%s4295 + $0x10] sm:$0xff]
        %v4299 = vld [vmem:[%s4295 + $0x18] sm:$0xff]
        %v4300 = vld [vmem:[%s4295 + $0x20] sm:$0xff]
        %v4301 = vld [vmem:[%s4295 + $0x28] sm:$0xff]
        %v4302 = vld [vmem:[%s4295 + $0x30] sm:$0xff]
        %v4303 = vld [vmem:[%s4295 + $0x38] sm:$0xff]
        %s4304 = scalar_lea.vmem %s16, 2
        %v4305 = vld [vmem:[%s4304] sm:$0x1]
        %v4307 = vperm.slane %v4305, 0
        %v4310 = vsel %vm712, %v4294, 0
        %4312 = vmatpush.msra.mxu0 0.0
        %4313 = vmatpush.msra.mxu0 0.0
        %4314 = vmatpush.msra.mxu0 0.0
        %4315 = vmatpush.msra.mxu0 0.0
        %4316 = vmatpush.msra.mxu0 0.0
        %4317 = vmatpush.msra.mxu0 0.0
        %4318 = vmatpush.msra.mxu0 0.0
        %4319 = vmatpush.msra.mxu0 0.0
        %4320 = vmatpush.msra.mxu0 %v4303
        %4321 = vmatpush.msra.mxu0 %v4302
        %4322 = vmatpush.msra.mxu0 %v4301
        %4323 = vmatpush.msra.mxu0 %v4300
        %4324 = vmatpush.msra.mxu0 %v4299
        %4325 = vmatpush.msra.mxu0 %v4298
        %4326 = vmatpush.msra.mxu0 %v4297
        %4327 = vmatpush.msra.mxu0 %v4296
        %4328 = vmatmul.f32.gmra.mxu0 %v4310
        %v4329 = vpop.f32.mrf.mxu0
        %v4330 = vadd.f32 %v4307, %v4329
        %4331 = vdwg.mxu0
        %v4332 = vadd.f32 %v4330, %v4294
        %v4333 = vsel %vm712, %v4332, 0.0
        %4334 = vadd.xlane.f32.xlu0 %v4333
        %v4335 = vpop.xlane.xlu0 %4334
        %v4336 = vmul.f32 %v4335, %v722
        %v4337 = vsub.f32 %v4332, %v4336
        %v4338 = vmul.f32 %v4337, %v4337
        %v4339 = vsel %vm712, %v4338, 0.0
        %4340 = vadd.xlane.f32.xlu0 %v4339
        %v4341 = vpop.xlane.xlu0 %4340
        %v4342 = vmul.f32 %v4341, %v722
        %v4343 = vadd.f32 %v4342, 1e-05
        %v4344 = vrsqrt.pop %v4343
        %v4345 = vmul.f32 %v4344, %v4343
        %v4346 = vmul.f32 %v4345, %v4344
        %v4347 = vmul.f32 0.5, %v4346
        %v4348 = vsub.f32 1.5, %v4347
        %v4349 = vmul.f32 %v4344, %v4348
        %vm4350 = vweird.f32 %v4343
        %vm4351 = vweird.f32 %v4344
        %vm4352 = vmor %vm4350, %vm4351
        %v4353 = vsel %vm4352, %v4344, %v4349
        %v4354 = vmul.f32 %v4337, %v4353
        %v4355 = vld [vmem:[#allocation2] sm:$0xff]
        %v4356 = vld [vmem:[#allocation2 + $0x8] sm:$0xff]
        %v4357 = vld [vmem:[#allocation2 + $0x10] sm:$0xff]
        %v4358 = vld [vmem:[#allocation2 + $0x18] sm:$0xff]
        %v4359 = vld [vmem:[#allocation2 + $0x20] sm:$0xff]
        %v4360 = vld [vmem:[#allocation2 + $0x28] sm:$0xff]
        %v4361 = vld [vmem:[#allocation2 + $0x30] sm:$0xff]
        %v4362 = vld [vmem:[#allocation2 + $0x38] sm:$0xff]
        %v4363 = vld [vmem:[#allocation2 + $0x40] sm:$0xff]
        %v4364 = vld [vmem:[#allocation2 + $0x48] sm:$0xff]
        %v4365 = vld [vmem:[#allocation2 + $0x50] sm:$0xff]
        %v4366 = vld [vmem:[#allocation2 + $0x58] sm:$0xff]
        %v4367 = vld [vmem:[#allocation2 + $0x60] sm:$0xff]
        %v4368 = vld [vmem:[#allocation2 + $0x68] sm:$0xff]
        %v4369 = vld [vmem:[#allocation2 + $0x70] sm:$0xff]
        %v4370 = vld [vmem:[#allocation2 + $0x78] sm:$0xff]
        %v4371 = vld [vmem:[#allocation2 + $0x80] sm:$0xff]
        %v4372 = vld [vmem:[#allocation2 + $0x88] sm:$0xff]
        %v4373 = vld [vmem:[#allocation2 + $0x90] sm:$0xff]
        %v4374 = vld [vmem:[#allocation2 + $0x98] sm:$0xff]
        %v4375 = vld [vmem:[#allocation2 + $0xa0] sm:$0xff]
        %v4376 = vld [vmem:[#allocation2 + $0xa8] sm:$0xff]
        %v4377 = vld [vmem:[#allocation2 + $0xb0] sm:$0xff]
        %v4378 = vld [vmem:[#allocation2 + $0xb8] sm:$0xff]
        %v4379 = vld [vmem:[#allocation2 + $0xc0] sm:$0xff]
        %v4380 = vld [vmem:[#allocation2 + $0xc8] sm:$0xff]
        %v4381 = vld [vmem:[#allocation2 + $0xd0] sm:$0xff]
        %v4382 = vld [vmem:[#allocation2 + $0xd8] sm:$0xff]
        %v4383 = vld [vmem:[#allocation2 + $0xe0] sm:$0xff]
        %v4384 = vld [vmem:[#allocation2 + $0xe8] sm:$0xff]
        %v4385 = vld [vmem:[#allocation2 + $0xf0] sm:$0xff]
        %v4386 = vld [vmem:[#allocation2 + $0xf8] sm:$0xff]
        %v4387 = vld [vmem:[#allocation5] sm:$0xf]
        %v4389 = vperm.slane %v4387, 0
        %v4390 = vperm.slane %v4387, 1
        %v4391 = vperm.slane %v4387, 2
        %v4392 = vperm.slane %v4387, 3
        %v4398 = vsel %vm712, %v4354, 0
        %4400 = vmatpush.msra.mxu0 0.0
        %4401 = vmatpush.msra.mxu0 0.0
        %4402 = vmatpush.msra.mxu0 0.0
        %4403 = vmatpush.msra.mxu0 0.0
        %4404 = vmatpush.msra.mxu0 0.0
        %4405 = vmatpush.msra.mxu0 0.0
        %4406 = vmatpush.msra.mxu0 0.0
        %4407 = vmatpush.msra.mxu0 0.0
        %4408 = vmatpush.msra.mxu0 %v4383
        %4409 = vmatpush.msra.mxu0 %v4379
        %4410 = vmatpush.msra.mxu0 %v4375
        %4411 = vmatpush.msra.mxu0 %v4371
        %4412 = vmatpush.msra.mxu0 %v4367
        %4413 = vmatpush.msra.mxu0 %v4363
        %4414 = vmatpush.msra.mxu0 %v4359
        %4415 = vmatpush.msra.mxu0 %v4355
        %4416 = vmatmul.f32.gmra.mxu0 %v4398
        %v4417 = vpop.f32.mrf.mxu0
        %v4418 = vadd.f32 %v4389, %v4417
        %4419 = vdwg.mxu0
        %4420 = vmatpush.msra.mxu0 0.0
        %4421 = vmatpush.msra.mxu0 0.0
        %4422 = vmatpush.msra.mxu0 0.0
        %4423 = vmatpush.msra.mxu0 0.0
        %4424 = vmatpush.msra.mxu0 0.0
        %4425 = vmatpush.msra.mxu0 0.0
        %4426 = vmatpush.msra.mxu0 0.0
        %4427 = vmatpush.msra.mxu0 0.0
        %4428 = vmatpush.msra.mxu0 %v4384
        %4429 = vmatpush.msra.mxu0 %v4380
        %4430 = vmatpush.msra.mxu0 %v4376
        %4431 = vmatpush.msra.mxu0 %v4372
        %4432 = vmatpush.msra.mxu0 %v4368
        %4433 = vmatpush.msra.mxu0 %v4364
        %4434 = vmatpush.msra.mxu0 %v4360
        %4435 = vmatpush.msra.mxu0 %v4356
        %4436 = vmatmul.f32.gmra.mxu0 %v4398
        %v4437 = vpop.f32.mrf.mxu0
        %v4438 = vadd.f32 %v4390, %v4437
        %4439 = vdwg.mxu0
        %4440 = vmatpush.msra.mxu0 0.0
        %4441 = vmatpush.msra.mxu0 0.0
        %4442 = vmatpush.msra.mxu0 0.0
        %4443 = vmatpush.msra.mxu0 0.0
        %4444 = vmatpush.msra.mxu0 0.0
        %4445 = vmatpush.msra.mxu0 0.0
        %4446 = vmatpush.msra.mxu0 0.0
        %4447 = vmatpush.msra.mxu0 0.0
        %4448 = vmatpush.msra.mxu0 %v4385
        %4449 = vmatpush.msra.mxu0 %v4381
        %4450 = vmatpush.msra.mxu0 %v4377
        %4451 = vmatpush.msra.mxu0 %v4373
        %4452 = vmatpush.msra.mxu0 %v4369
        %4453 = vmatpush.msra.mxu0 %v4365
        %4454 = vmatpush.msra.mxu0 %v4361
        %4455 = vmatpush.msra.mxu0 %v4357
        %4456 = vmatmul.f32.gmra.mxu0 %v4398
        %v4457 = vpop.f32.mrf.mxu0
        %v4458 = vadd.f32 %v4391, %v4457
        %4459 = vdwg.mxu0
        %4460 = vmatpush.msra.mxu0 0.0
        %4461 = vmatpush.msra.mxu0 0.0
        %4462 = vmatpush.msra.mxu0 0.0
        %4463 = vmatpush.msra.mxu0 0.0
        %4464 = vmatpush.msra.mxu0 0.0
        %4465 = vmatpush.msra.mxu0 0.0
        %4466 = vmatpush.msra.mxu0 0.0
        %4467 = vmatpush.msra.mxu0 0.0
        %4468 = vmatpush.msra.mxu0 %v4386
        %4469 = vmatpush.msra.mxu0 %v4382
        %4470 = vmatpush.msra.mxu0 %v4378
        %4471 = vmatpush.msra.mxu0 %v4374
        %4472 = vmatpush.msra.mxu0 %v4370
        %4473 = vmatpush.msra.mxu0 %v4366
        %4474 = vmatpush.msra.mxu0 %v4362
        %4475 = vmatpush.msra.mxu0 %v4358
        %4476 = vmatmul.f32.gmra.mxu0 %v4398
        %v4477 = vpop.f32.mrf.mxu0
        %v4478 = vadd.f32 %v4392, %v4477
        %4479 = vdwg.mxu0
        %v4480 = vmul.f32 %v4418, 0.125
        %v4481 = vmul.f32 %v4438, 0.125
        %v4482 = vmul.f32 %v4458, 0.125
        %v4483 = vmul.f32 %v4478, 0.125
        %4485 = vrot.lane.b32.xlu0 %v4480, 64
        %v4486 = vpop.permute.xlu0 %4485
        %4488 = vrot.lane.b32.xlu0 %v4481, 64
        %v4489 = vpop.permute.xlu0 %4488
        %4491 = vrot.lane.b32.xlu0 %v4482, 64
        %v4492 = vpop.permute.xlu0 %4491
        %4494 = vrot.lane.b32.xlu0 %v4483, 64
        %v4495 = vpop.permute.xlu0 %4494
        %v4496 = vsel %vm712, %v4480, 0
        %4498 = vmatpush.xpose.msra.mxu0 0.0
        %4499 = vmatpush.xpose.msra.mxu0 0.0
        %4500 = vmatpush.xpose.msra.mxu0 0.0
        %4501 = vmatpush.xpose.msra.mxu0 0.0
        %4502 = vmatpush.xpose.msra.mxu0 0.0
        %4503 = vmatpush.xpose.msra.mxu0 0.0
        %4504 = vmatpush.xpose.msra.mxu0 0.0
        %4505 = vmatpush.xpose.msra.mxu0 0.0
        %4506 = vmatpush.xpose.msra.mxu0 0.0
        %4507 = vmatpush.xpose.msra.mxu0 0.0
        %4508 = vmatpush.xpose.msra.mxu0 0.0
        %4509 = vmatpush.xpose.msra.mxu0 0.0
        %4510 = vmatpush.xpose.msra.mxu0 0.0
        %4511 = vmatpush.xpose.msra.mxu0 0.0
        %4512 = vmatpush.xpose.msra.mxu0 0.0
        %4513 = vmatpush.xpose.msra.mxu0 %v1180
        %4514 = vmatmul.f32.gmra.mxu0 %v4496
        %v4515 = vpop.f32.mrf.mxu0
        %v4516 = vadd.f32 0.0, %v4515
        %4517 = vdwg.mxu0
        %v4518 = vsel %vm712, %v4486, 0
        %4520 = vmatpush.xpose.msra.mxu0 0.0
        %4521 = vmatpush.xpose.msra.mxu0 0.0
        %4522 = vmatpush.xpose.msra.mxu0 0.0
        %4523 = vmatpush.xpose.msra.mxu0 0.0
        %4524 = vmatpush.xpose.msra.mxu0 0.0
        %4525 = vmatpush.xpose.msra.mxu0 0.0
        %4526 = vmatpush.xpose.msra.mxu0 0.0
        %4527 = vmatpush.xpose.msra.mxu0 0.0
        %4528 = vmatpush.xpose.msra.mxu0 0.0
        %4529 = vmatpush.xpose.msra.mxu0 0.0
        %4530 = vmatpush.xpose.msra.mxu0 0.0
        %4531 = vmatpush.xpose.msra.mxu0 0.0
        %4532 = vmatpush.xpose.msra.mxu0 0.0
        %4533 = vmatpush.xpose.msra.mxu0 0.0
        %4534 = vmatpush.xpose.msra.mxu0 0.0
        %4535 = vmatpush.xpose.msra.mxu0 %v1204
        %4536 = vmatmul.f32.gmra.mxu0 %v4518
        %v4537 = vpop.f32.mrf.mxu0
        %v4538 = vadd.f32 0.0, %v4537
        %4539 = vdwg.mxu0
        %v4540 = vsel %vm712, %v4481, 0
        %4542 = vmatpush.xpose.msra.mxu0 0.0
        %4543 = vmatpush.xpose.msra.mxu0 0.0
        %4544 = vmatpush.xpose.msra.mxu0 0.0
        %4545 = vmatpush.xpose.msra.mxu0 0.0
        %4546 = vmatpush.xpose.msra.mxu0 0.0
        %4547 = vmatpush.xpose.msra.mxu0 0.0
        %4548 = vmatpush.xpose.msra.mxu0 0.0
        %4549 = vmatpush.xpose.msra.mxu0 0.0
        %4550 = vmatpush.xpose.msra.mxu0 0.0
        %4551 = vmatpush.xpose.msra.mxu0 0.0
        %4552 = vmatpush.xpose.msra.mxu0 0.0
        %4553 = vmatpush.xpose.msra.mxu0 0.0
        %4554 = vmatpush.xpose.msra.mxu0 0.0
        %4555 = vmatpush.xpose.msra.mxu0 0.0
        %4556 = vmatpush.xpose.msra.mxu0 0.0
        %4557 = vmatpush.xpose.msra.mxu0 %v1228
        %4558 = vmatmul.f32.gmra.mxu0 %v4540
        %v4559 = vpop.f32.mrf.mxu0
        %v4560 = vadd.f32 0.0, %v4559
        %4561 = vdwg.mxu0
        %v4562 = vsel %vm712, %v4489, 0
        %4564 = vmatpush.xpose.msra.mxu0 0.0
        %4565 = vmatpush.xpose.msra.mxu0 0.0
        %4566 = vmatpush.xpose.msra.mxu0 0.0
        %4567 = vmatpush.xpose.msra.mxu0 0.0
        %4568 = vmatpush.xpose.msra.mxu0 0.0
        %4569 = vmatpush.xpose.msra.mxu0 0.0
        %4570 = vmatpush.xpose.msra.mxu0 0.0
        %4571 = vmatpush.xpose.msra.mxu0 0.0
        %4572 = vmatpush.xpose.msra.mxu0 0.0
        %4573 = vmatpush.xpose.msra.mxu0 0.0
        %4574 = vmatpush.xpose.msra.mxu0 0.0
        %4575 = vmatpush.xpose.msra.mxu0 0.0
        %4576 = vmatpush.xpose.msra.mxu0 0.0
        %4577 = vmatpush.xpose.msra.mxu0 0.0
        %4578 = vmatpush.xpose.msra.mxu0 0.0
        %4579 = vmatpush.xpose.msra.mxu0 %v1252
        %4580 = vmatmul.f32.gmra.mxu0 %v4562
        %v4581 = vpop.f32.mrf.mxu0
        %v4582 = vadd.f32 0.0, %v4581
        %4583 = vdwg.mxu0
        %v4584 = vsel %vm712, %v4482, 0
        %4586 = vmatpush.xpose.msra.mxu0 0.0
        %4587 = vmatpush.xpose.msra.mxu0 0.0
        %4588 = vmatpush.xpose.msra.mxu0 0.0
        %4589 = vmatpush.xpose.msra.mxu0 0.0
        %4590 = vmatpush.xpose.msra.mxu0 0.0
        %4591 = vmatpush.xpose.msra.mxu0 0.0
        %4592 = vmatpush.xpose.msra.mxu0 0.0
        %4593 = vmatpush.xpose.msra.mxu0 0.0
        %4594 = vmatpush.xpose.msra.mxu0 0.0
        %4595 = vmatpush.xpose.msra.mxu0 0.0
        %4596 = vmatpush.xpose.msra.mxu0 0.0
        %4597 = vmatpush.xpose.msra.mxu0 0.0
        %4598 = vmatpush.xpose.msra.mxu0 0.0
        %4599 = vmatpush.xpose.msra.mxu0 0.0
        %4600 = vmatpush.xpose.msra.mxu0 0.0
        %4601 = vmatpush.xpose.msra.mxu0 %v1276
        %4602 = vmatmul.f32.gmra.mxu0 %v4584
        %v4603 = vpop.f32.mrf.mxu0
        %v4604 = vadd.f32 0.0, %v4603
        %4605 = vdwg.mxu0
        %v4606 = vsel %vm712, %v4492, 0
        %4608 = vmatpush.xpose.msra.mxu0 0.0
        %4609 = vmatpush.xpose.msra.mxu0 0.0
        %4610 = vmatpush.xpose.msra.mxu0 0.0
        %4611 = vmatpush.xpose.msra.mxu0 0.0
        %4612 = vmatpush.xpose.msra.mxu0 0.0
        %4613 = vmatpush.xpose.msra.mxu0 0.0
        %4614 = vmatpush.xpose.msra.mxu0 0.0
        %4615 = vmatpush.xpose.msra.mxu0 0.0
        %4616 = vmatpush.xpose.msra.mxu0 0.0
        %4617 = vmatpush.xpose.msra.mxu0 0.0
        %4618 = vmatpush.xpose.msra.mxu0 0.0
        %4619 = vmatpush.xpose.msra.mxu0 0.0
        %4620 = vmatpush.xpose.msra.mxu0 0.0
        %4621 = vmatpush.xpose.msra.mxu0 0.0
        %4622 = vmatpush.xpose.msra.mxu0 0.0
        %4623 = vmatpush.xpose.msra.mxu0 %v1300
        %4624 = vmatmul.f32.gmra.mxu0 %v4606
        %v4625 = vpop.f32.mrf.mxu0
        %v4626 = vadd.f32 0.0, %v4625
        %4627 = vdwg.mxu0
        %v4628 = vsel %vm712, %v4483, 0
        %4630 = vmatpush.xpose.msra.mxu0 0.0
        %4631 = vmatpush.xpose.msra.mxu0 0.0
        %4632 = vmatpush.xpose.msra.mxu0 0.0
        %4633 = vmatpush.xpose.msra.mxu0 0.0
        %4634 = vmatpush.xpose.msra.mxu0 0.0
        %4635 = vmatpush.xpose.msra.mxu0 0.0
        %4636 = vmatpush.xpose.msra.mxu0 0.0
        %4637 = vmatpush.xpose.msra.mxu0 0.0
        %4638 = vmatpush.xpose.msra.mxu0 0.0
        %4639 = vmatpush.xpose.msra.mxu0 0.0
        %4640 = vmatpush.xpose.msra.mxu0 0.0
        %4641 = vmatpush.xpose.msra.mxu0 0.0
        %4642 = vmatpush.xpose.msra.mxu0 0.0
        %4643 = vmatpush.xpose.msra.mxu0 0.0
        %4644 = vmatpush.xpose.msra.mxu0 0.0
        %4645 = vmatpush.xpose.msra.mxu0 %v1324
        %4646 = vmatmul.f32.gmra.mxu0 %v4628
        %v4647 = vpop.f32.mrf.mxu0
        %v4648 = vadd.f32 0.0, %v4647
        %4649 = vdwg.mxu0
        %v4650 = vsel %vm712, %v4495, 0
        %4652 = vmatpush.xpose.msra.mxu0 0.0
        %4653 = vmatpush.xpose.msra.mxu0 0.0
        %4654 = vmatpush.xpose.msra.mxu0 0.0
        %4655 = vmatpush.xpose.msra.mxu0 0.0
        %4656 = vmatpush.xpose.msra.mxu0 0.0
        %4657 = vmatpush.xpose.msra.mxu0 0.0
        %4658 = vmatpush.xpose.msra.mxu0 0.0
        %4659 = vmatpush.xpose.msra.mxu0 0.0
        %4660 = vmatpush.xpose.msra.mxu0 0.0
        %4661 = vmatpush.xpose.msra.mxu0 0.0
        %4662 = vmatpush.xpose.msra.mxu0 0.0
        %4663 = vmatpush.xpose.msra.mxu0 0.0
        %4664 = vmatpush.xpose.msra.mxu0 0.0
        %4665 = vmatpush.xpose.msra.mxu0 0.0
        %4666 = vmatpush.xpose.msra.mxu0 0.0
        %4667 = vmatpush.xpose.msra.mxu0 %v1348
        %4668 = vmatmul.f32.gmra.mxu0 %v4650
        %v4669 = vpop.f32.mrf.mxu0
        %v4670 = vadd.f32 0.0, %v4669
        %4671 = vdwg.mxu0
        %v4672 = vsel %vm1370, %v4516, -inf
        %4673 = vmax.xlane.f32.xlu0 %v4672
        %v4674 = vpop.xlane.xlu0 %4673
        %v4675 = vsel %vm1370, %v4538, -inf
        %4676 = vmax.xlane.f32.xlu0 %v4675
        %v4677 = vpop.xlane.xlu0 %4676
        %v4678 = vsel %vm1370, %v4560, -inf
        %4679 = vmax.xlane.f32.xlu0 %v4678
        %v4680 = vpop.xlane.xlu0 %4679
        %v4681 = vsel %vm1370, %v4582, -inf
        %4682 = vmax.xlane.f32.xlu0 %v4681
        %v4683 = vpop.xlane.xlu0 %4682
        %v4684 = vsel %vm1370, %v4604, -inf
        %4685 = vmax.xlane.f32.xlu0 %v4684
        %v4686 = vpop.xlane.xlu0 %4685
        %v4687 = vsel %vm1370, %v4626, -inf
        %4688 = vmax.xlane.f32.xlu0 %v4687
        %v4689 = vpop.xlane.xlu0 %4688
        %v4690 = vsel %vm1370, %v4648, -inf
        %4691 = vmax.xlane.f32.xlu0 %v4690
        %v4692 = vpop.xlane.xlu0 %4691
        %v4693 = vsel %vm1370, %v4670, -inf
        %4694 = vmax.xlane.f32.xlu0 %v4693
        %v4695 = vpop.xlane.xlu0 %4694
        %v4696 = vsub.f32 %v4516, %v4674
        %v4697 = vsub.f32 %v4538, %v4677
        %v4698 = vsub.f32 %v4560, %v4680
        %v4699 = vsub.f32 %v4582, %v4683
        %v4700 = vsub.f32 %v4604, %v4686
        %v4701 = vsub.f32 %v4626, %v4689
        %v4702 = vsub.f32 %v4648, %v4692
        %v4703 = vsub.f32 %v4670, %v4695
        %v4704 = vmul.f32 %v4696, 1.442695
        %v4705 = vpow.pop %v4704
        %v4706 = vmul.f32 %v4697, 1.442695
        %v4707 = vpow.pop %v4706
        %v4708 = vmul.f32 %v4698, 1.442695
        %v4709 = vpow.pop %v4708
        %v4710 = vmul.f32 %v4699, 1.442695
        %v4711 = vpow.pop %v4710
        %v4712 = vmul.f32 %v4700, 1.442695
        %v4713 = vpow.pop %v4712
        %v4714 = vmul.f32 %v4701, 1.442695
        %v4715 = vpow.pop %v4714
        %v4716 = vmul.f32 %v4702, 1.442695
        %v4717 = vpow.pop %v4716
        %v4718 = vmul.f32 %v4703, 1.442695
        %v4719 = vpow.pop %v4718
        %v4720 = vsel %vm1370, %v4705, 0.0
        %4721 = vadd.xlane.f32.xlu0 %v4720
        %v4722 = vpop.xlane.xlu0 %4721
        %v4723 = vsel %vm1370, %v4707, 0.0
        %4724 = vadd.xlane.f32.xlu0 %v4723
        %v4725 = vpop.xlane.xlu0 %4724
        %v4726 = vsel %vm1370, %v4709, 0.0
        %4727 = vadd.xlane.f32.xlu0 %v4726
        %v4728 = vpop.xlane.xlu0 %4727
        %v4729 = vsel %vm1370, %v4711, 0.0
        %4730 = vadd.xlane.f32.xlu0 %v4729
        %v4731 = vpop.xlane.xlu0 %4730
        %v4732 = vsel %vm1370, %v4713, 0.0
        %4733 = vadd.xlane.f32.xlu0 %v4732
        %v4734 = vpop.xlane.xlu0 %4733
        %v4735 = vsel %vm1370, %v4715, 0.0
        %4736 = vadd.xlane.f32.xlu0 %v4735
        %v4737 = vpop.xlane.xlu0 %4736
        %v4738 = vsel %vm1370, %v4717, 0.0
        %4739 = vadd.xlane.f32.xlu0 %v4738
        %v4740 = vpop.xlane.xlu0 %4739
        %v4741 = vsel %vm1370, %v4719, 0.0
        %4742 = vadd.xlane.f32.xlu0 %v4741
        %v4743 = vpop.xlane.xlu0 %4742
        %v4744 = vrcp.pop %v4722
        %v4745 = vmul.f32 %v4722, %v4744
        %v4746 = vsub.f32 1.0, %v4745
        %v4747 = vmul.f32 %v4744, %v4746
        %v4748 = vadd.f32 %v4744, %v4747
        %vm4749 = vweird.f32 %v4722
        %vm4750 = vweird.f32 %v4744
        %vm4751 = vmor %vm4749, %vm4750
        %v4752 = vsel %vm4751, %v4744, %v4748
        %v4753 = vand.u32 2147483647, %v4722
        %vm4754 = vcmp.eq.f32.partialorder %v4753, 8.507059e+37
        %v4755 = vand.u32 %v4722, 2147483648
        %v4756 = vor.u32 1.1754944e-38, %v4755
        %v4757 = vsel %vm4754, %v4756, %v4752
        %v4758 = vmul.f32 %v4705, %v4757
        %v4759 = vrcp.pop %v4725
        %v4760 = vmul.f32 %v4725, %v4759
        %v4761 = vsub.f32 1.0, %v4760
        %v4762 = vmul.f32 %v4759, %v4761
        %v4763 = vadd.f32 %v4759, %v4762
        %vm4764 = vweird.f32 %v4725
        %vm4765 = vweird.f32 %v4759
        %vm4766 = vmor %vm4764, %vm4765
        %v4767 = vsel %vm4766, %v4759, %v4763
        %v4768 = vand.u32 2147483647, %v4725
        %vm4769 = vcmp.eq.f32.partialorder %v4768, 8.507059e+37
        %v4770 = vand.u32 %v4725, 2147483648
        %v4771 = vor.u32 1.1754944e-38, %v4770
        %v4772 = vsel %vm4769, %v4771, %v4767
        %v4773 = vmul.f32 %v4707, %v4772
        %v4774 = vrcp.pop %v4728
        %v4775 = vmul.f32 %v4728, %v4774
        %v4776 = vsub.f32 1.0, %v4775
        %v4777 = vmul.f32 %v4774, %v4776
        %v4778 = vadd.f32 %v4774, %v4777
        %vm4779 = vweird.f32 %v4728
        %vm4780 = vweird.f32 %v4774
        %vm4781 = vmor %vm4779, %vm4780
        %v4782 = vsel %vm4781, %v4774, %v4778
        %v4783 = vand.u32 2147483647, %v4728
        %vm4784 = vcmp.eq.f32.partialorder %v4783, 8.507059e+37
        %v4785 = vand.u32 %v4728, 2147483648
        %v4786 = vor.u32 1.1754944e-38, %v4785
        %v4787 = vsel %vm4784, %v4786, %v4782
        %v4788 = vmul.f32 %v4709, %v4787
        %v4789 = vrcp.pop %v4731
        %v4790 = vmul.f32 %v4731, %v4789
        %v4791 = vsub.f32 1.0, %v4790
        %v4792 = vmul.f32 %v4789, %v4791
        %v4793 = vadd.f32 %v4789, %v4792
        %vm4794 = vweird.f32 %v4731
        %vm4795 = vweird.f32 %v4789
        %vm4796 = vmor %vm4794, %vm4795
        %v4797 = vsel %vm4796, %v4789, %v4793
        %v4798 = vand.u32 2147483647, %v4731
        %vm4799 = vcmp.eq.f32.partialorder %v4798, 8.507059e+37
        %v4800 = vand.u32 %v4731, 2147483648
        %v4801 = vor.u32 1.1754944e-38, %v4800
        %v4802 = vsel %vm4799, %v4801, %v4797
        %v4803 = vmul.f32 %v4711, %v4802
        %v4804 = vrcp.pop %v4734
        %v4805 = vmul.f32 %v4734, %v4804
        %v4806 = vsub.f32 1.0, %v4805
        %v4807 = vmul.f32 %v4804, %v4806
        %v4808 = vadd.f32 %v4804, %v4807
        %vm4809 = vweird.f32 %v4734
        %vm4810 = vweird.f32 %v4804
        %vm4811 = vmor %vm4809, %vm4810
        %v4812 = vsel %vm4811, %v4804, %v4808
        %v4813 = vand.u32 2147483647, %v4734
        %vm4814 = vcmp.eq.f32.partialorder %v4813, 8.507059e+37
        %v4815 = vand.u32 %v4734, 2147483648
        %v4816 = vor.u32 1.1754944e-38, %v4815
        %v4817 = vsel %vm4814, %v4816, %v4812
        %v4818 = vmul.f32 %v4713, %v4817
        %v4819 = vrcp.pop %v4737
        %v4820 = vmul.f32 %v4737, %v4819
        %v4821 = vsub.f32 1.0, %v4820
        %v4822 = vmul.f32 %v4819, %v4821
        %v4823 = vadd.f32 %v4819, %v4822
        %vm4824 = vweird.f32 %v4737
        %vm4825 = vweird.f32 %v4819
        %vm4826 = vmor %vm4824, %vm4825
        %v4827 = vsel %vm4826, %v4819, %v4823
        %v4828 = vand.u32 2147483647, %v4737
        %vm4829 = vcmp.eq.f32.partialorder %v4828, 8.507059e+37
        %v4830 = vand.u32 %v4737, 2147483648
        %v4831 = vor.u32 1.1754944e-38, %v4830
        %v4832 = vsel %vm4829, %v4831, %v4827
        %v4833 = vmul.f32 %v4715, %v4832
        %v4834 = vrcp.pop %v4740
        %v4835 = vmul.f32 %v4740, %v4834
        %v4836 = vsub.f32 1.0, %v4835
        %v4837 = vmul.f32 %v4834, %v4836
        %v4838 = vadd.f32 %v4834, %v4837
        %vm4839 = vweird.f32 %v4740
        %vm4840 = vweird.f32 %v4834
        %vm4841 = vmor %vm4839, %vm4840
        %v4842 = vsel %vm4841, %v4834, %v4838
        %v4843 = vand.u32 2147483647, %v4740
        %vm4844 = vcmp.eq.f32.partialorder %v4843, 8.507059e+37
        %v4845 = vand.u32 %v4740, 2147483648
        %v4846 = vor.u32 1.1754944e-38, %v4845
        %v4847 = vsel %vm4844, %v4846, %v4842
        %v4848 = vmul.f32 %v4717, %v4847
        %v4849 = vrcp.pop %v4743
        %v4850 = vmul.f32 %v4743, %v4849
        %v4851 = vsub.f32 1.0, %v4850
        %v4852 = vmul.f32 %v4849, %v4851
        %v4853 = vadd.f32 %v4849, %v4852
        %vm4854 = vweird.f32 %v4743
        %vm4855 = vweird.f32 %v4849
        %vm4856 = vmor %vm4854, %vm4855
        %v4857 = vsel %vm4856, %v4849, %v4853
        %v4858 = vand.u32 2147483647, %v4743
        %vm4859 = vcmp.eq.f32.partialorder %v4858, 8.507059e+37
        %v4860 = vand.u32 %v4743, 2147483648
        %v4861 = vor.u32 1.1754944e-38, %v4860
        %v4862 = vsel %vm4859, %v4861, %v4857
        %v4863 = vmul.f32 %v4719, %v4862
        %v4865 = vsel %vm1370, %v4758, 0
        %4867 = vmatpush.msra.mxu0 0.0
        %4868 = vmatpush.msra.mxu0 0.0
        %4869 = vmatpush.msra.mxu0 0.0
        %4870 = vmatpush.msra.mxu0 0.0
        %4871 = vmatpush.msra.mxu0 0.0
        %4872 = vmatpush.msra.mxu0 0.0
        %4873 = vmatpush.msra.mxu0 0.0
        %4874 = vmatpush.msra.mxu0 0.0
        %4875 = vmatpush.msra.mxu0 0.0
        %4876 = vmatpush.msra.mxu0 0.0
        %4877 = vmatpush.msra.mxu0 0.0
        %4878 = vmatpush.msra.mxu0 0.0
        %4879 = vmatpush.msra.mxu0 0.0
        %4880 = vmatpush.msra.mxu0 0.0
        %4881 = vmatpush.msra.mxu0 0.0
        %4882 = vmatpush.msra.mxu0 %v925
        %4883 = vmatmul.f32.gmra.mxu0 %v4865
        %v4884 = vpop.f32.mrf.mxu0
        %v4885 = vadd.f32 0.0, %v4884
        %4886 = vdwg.mxu0
        %v4888 = vsel %vm1370, %v4773, 0
        %4890 = vmatpush.msra.mxu0 0.0
        %4891 = vmatpush.msra.mxu0 0.0
        %4892 = vmatpush.msra.mxu0 0.0
        %4893 = vmatpush.msra.mxu0 0.0
        %4894 = vmatpush.msra.mxu0 0.0
        %4895 = vmatpush.msra.mxu0 0.0
        %4896 = vmatpush.msra.mxu0 0.0
        %4897 = vmatpush.msra.mxu0 0.0
        %4898 = vmatpush.msra.mxu0 0.0
        %4899 = vmatpush.msra.mxu0 0.0
        %4900 = vmatpush.msra.mxu0 0.0
        %4901 = vmatpush.msra.mxu0 0.0
        %4902 = vmatpush.msra.mxu0 0.0
        %4903 = vmatpush.msra.mxu0 0.0
        %4904 = vmatpush.msra.mxu0 0.0
        %4905 = vmatpush.msra.mxu0 %v1001
        %4906 = vmatmul.f32.gmra.mxu0 %v4888
        %v4907 = vpop.f32.mrf.mxu0
        %v4908 = vadd.f32 0.0, %v4907
        %4909 = vdwg.mxu0
        %v4911 = vsel %vm1370, %v4788, 0
        %4913 = vmatpush.msra.mxu0 0.0
        %4914 = vmatpush.msra.mxu0 0.0
        %4915 = vmatpush.msra.mxu0 0.0
        %4916 = vmatpush.msra.mxu0 0.0
        %4917 = vmatpush.msra.mxu0 0.0
        %4918 = vmatpush.msra.mxu0 0.0
        %4919 = vmatpush.msra.mxu0 0.0
        %4920 = vmatpush.msra.mxu0 0.0
        %4921 = vmatpush.msra.mxu0 0.0
        %4922 = vmatpush.msra.mxu0 0.0
        %4923 = vmatpush.msra.mxu0 0.0
        %4924 = vmatpush.msra.mxu0 0.0
        %4925 = vmatpush.msra.mxu0 0.0
        %4926 = vmatpush.msra.mxu0 0.0
        %4927 = vmatpush.msra.mxu0 0.0
        %4928 = vmatpush.msra.mxu0 %v945
        %4929 = vmatmul.f32.gmra.mxu0 %v4911
        %v4930 = vpop.f32.mrf.mxu0
        %v4931 = vadd.f32 0.0, %v4930
        %4932 = vdwg.mxu0
        %v4934 = vsel %vm1370, %v4803, 0
        %4936 = vmatpush.msra.mxu0 0.0
        %4937 = vmatpush.msra.mxu0 0.0
        %4938 = vmatpush.msra.mxu0 0.0
        %4939 = vmatpush.msra.mxu0 0.0
        %4940 = vmatpush.msra.mxu0 0.0
        %4941 = vmatpush.msra.mxu0 0.0
        %4942 = vmatpush.msra.mxu0 0.0
        %4943 = vmatpush.msra.mxu0 0.0
        %4944 = vmatpush.msra.mxu0 0.0
        %4945 = vmatpush.msra.mxu0 0.0
        %4946 = vmatpush.msra.mxu0 0.0
        %4947 = vmatpush.msra.mxu0 0.0
        %4948 = vmatpush.msra.mxu0 0.0
        %4949 = vmatpush.msra.mxu0 0.0
        %4950 = vmatpush.msra.mxu0 0.0
        %4951 = vmatpush.msra.mxu0 %v1005
        %4952 = vmatmul.f32.gmra.mxu0 %v4934
        %v4953 = vpop.f32.mrf.mxu0
        %v4954 = vadd.f32 0.0, %v4953
        %4955 = vdwg.mxu0
        %v4957 = vsel %vm1370, %v4818, 0
        %4959 = vmatpush.msra.mxu0 0.0
        %4960 = vmatpush.msra.mxu0 0.0
        %4961 = vmatpush.msra.mxu0 0.0
        %4962 = vmatpush.msra.mxu0 0.0
        %4963 = vmatpush.msra.mxu0 0.0
        %4964 = vmatpush.msra.mxu0 0.0
        %4965 = vmatpush.msra.mxu0 0.0
        %4966 = vmatpush.msra.mxu0 0.0
        %4967 = vmatpush.msra.mxu0 0.0
        %4968 = vmatpush.msra.mxu0 0.0
        %4969 = vmatpush.msra.mxu0 0.0
        %4970 = vmatpush.msra.mxu0 0.0
        %4971 = vmatpush.msra.mxu0 0.0
        %4972 = vmatpush.msra.mxu0 0.0
        %4973 = vmatpush.msra.mxu0 0.0
        %4974 = vmatpush.msra.mxu0 %v965
        %4975 = vmatmul.f32.gmra.mxu0 %v4957
        %v4976 = vpop.f32.mrf.mxu0
        %v4977 = vadd.f32 0.0, %v4976
        %4978 = vdwg.mxu0
        %v4980 = vsel %vm1370, %v4833, 0
        %4982 = vmatpush.msra.mxu0 0.0
        %4983 = vmatpush.msra.mxu0 0.0
        %4984 = vmatpush.msra.mxu0 0.0
        %4985 = vmatpush.msra.mxu0 0.0
        %4986 = vmatpush.msra.mxu0 0.0
        %4987 = vmatpush.msra.mxu0 0.0
        %4988 = vmatpush.msra.mxu0 0.0
        %4989 = vmatpush.msra.mxu0 0.0
        %4990 = vmatpush.msra.mxu0 0.0
        %4991 = vmatpush.msra.mxu0 0.0
        %4992 = vmatpush.msra.mxu0 0.0
        %4993 = vmatpush.msra.mxu0 0.0
        %4994 = vmatpush.msra.mxu0 0.0
        %4995 = vmatpush.msra.mxu0 0.0
        %4996 = vmatpush.msra.mxu0 0.0
        %4997 = vmatpush.msra.mxu0 %v1009
        %4998 = vmatmul.f32.gmra.mxu0 %v4980
        %v4999 = vpop.f32.mrf.mxu0
        %v5000 = vadd.f32 0.0, %v4999
        %5001 = vdwg.mxu0
        %v5003 = vsel %vm1370, %v4848, 0
        %5005 = vmatpush.msra.mxu0 0.0
        %5006 = vmatpush.msra.mxu0 0.0
        %5007 = vmatpush.msra.mxu0 0.0
        %5008 = vmatpush.msra.mxu0 0.0
        %5009 = vmatpush.msra.mxu0 0.0
        %5010 = vmatpush.msra.mxu0 0.0
        %5011 = vmatpush.msra.mxu0 0.0
        %5012 = vmatpush.msra.mxu0 0.0
        %5013 = vmatpush.msra.mxu0 0.0
        %5014 = vmatpush.msra.mxu0 0.0
        %5015 = vmatpush.msra.mxu0 0.0
        %5016 = vmatpush.msra.mxu0 0.0
        %5017 = vmatpush.msra.mxu0 0.0
        %5018 = vmatpush.msra.mxu0 0.0
        %5019 = vmatpush.msra.mxu0 0.0
        %5020 = vmatpush.msra.mxu0 %v985
        %5021 = vmatmul.f32.gmra.mxu0 %v5003
        %v5022 = vpop.f32.mrf.mxu0
        %v5023 = vadd.f32 0.0, %v5022
        %5024 = vdwg.mxu0
        %v5026 = vsel %vm1370, %v4863, 0
        %5028 = vmatpush.msra.mxu0 0.0
        %5029 = vmatpush.msra.mxu0 0.0
        %5030 = vmatpush.msra.mxu0 0.0
        %5031 = vmatpush.msra.mxu0 0.0
        %5032 = vmatpush.msra.mxu0 0.0
        %5033 = vmatpush.msra.mxu0 0.0
        %5034 = vmatpush.msra.mxu0 0.0
        %5035 = vmatpush.msra.mxu0 0.0
        %5036 = vmatpush.msra.mxu0 0.0
        %5037 = vmatpush.msra.mxu0 0.0
        %5038 = vmatpush.msra.mxu0 0.0
        %5039 = vmatpush.msra.mxu0 0.0
        %5040 = vmatpush.msra.mxu0 0.0
        %5041 = vmatpush.msra.mxu0 0.0
        %5042 = vmatpush.msra.mxu0 0.0
        %5043 = vmatpush.msra.mxu0 %v1013
        %5044 = vmatmul.f32.gmra.mxu0 %v5026
        %v5045 = vpop.f32.mrf.mxu0
        %v5046 = vadd.f32 0.0, %v5045
        %5047 = vdwg.mxu0
        %5049 = vrot.lane.b32.xlu0 %v4908, 64
        %v5050 = vpop.permute.xlu0 %5049
        %5053 = vrot.lane.b32.xlu0 %v4954, 64
        %v5054 = vpop.permute.xlu0 %5053
        %5057 = vrot.lane.b32.xlu0 %v5000, 64
        %v5058 = vpop.permute.xlu0 %5057
        %5061 = vrot.lane.b32.xlu0 %v5046, 64
        %v5062 = vpop.permute.xlu0 %5061
        %v5064 = vsel %vm712, %v4885, %v5050
        %v5065 = vsel %vm712, %v4931, %v5054
        %v5066 = vsel %vm712, %v4977, %v5058
        %v5067 = vsel %vm712, %v5023, %v5062
        %v5068 = vmul.f32 %v5064, %v1770
        %v5069 = vmul.f32 %v5065, %v1770
        %v5070 = vmul.f32 %v5066, %v1770
        %v5071 = vmul.f32 %v5067, %v1770
        %v5072 = vld [vmem:[#allocation8] sm:$0xff]
        %v5073 = vld [vmem:[#allocation8 + $0x8] sm:$0xff]
        %v5074 = vld [vmem:[#allocation8 + $0x10] sm:$0xff]
        %v5075 = vld [vmem:[#allocation8 + $0x18] sm:$0xff]
        %v5076 = vld [vmem:[#allocation8 + $0x20] sm:$0xff]
        %v5077 = vld [vmem:[#allocation8 + $0x28] sm:$0xff]
        %v5078 = vld [vmem:[#allocation8 + $0x30] sm:$0xff]
        %v5079 = vld [vmem:[#allocation8 + $0x38] sm:$0xff]
        %v5080 = vld [vmem:[#allocation8 + $0x40] sm:$0xff]
        %v5081 = vld [vmem:[#allocation8 + $0x48] sm:$0xff]
        %v5082 = vld [vmem:[#allocation8 + $0x50] sm:$0xff]
        %v5083 = vld [vmem:[#allocation8 + $0x58] sm:$0xff]
        %v5084 = vld [vmem:[#allocation8 + $0x60] sm:$0xff]
        %v5085 = vld [vmem:[#allocation8 + $0x68] sm:$0xff]
        %v5086 = vld [vmem:[#allocation8 + $0x70] sm:$0xff]
        %v5087 = vld [vmem:[#allocation8 + $0x78] sm:$0xff]
        %v5088 = vld [vmem:[#allocation8 + $0x80] sm:$0xff]
        %v5089 = vld [vmem:[#allocation8 + $0x88] sm:$0xff]
        %v5090 = vld [vmem:[#allocation8 + $0x90] sm:$0xff]
        %v5091 = vld [vmem:[#allocation8 + $0x98] sm:$0xff]
        %v5092 = vld [vmem:[#allocation8 + $0xa0] sm:$0xff]
        %v5093 = vld [vmem:[#allocation8 + $0xa8] sm:$0xff]
        %v5094 = vld [vmem:[#allocation8 + $0xb0] sm:$0xff]
        %v5095 = vld [vmem:[#allocation8 + $0xb8] sm:$0xff]
        %v5096 = vld [vmem:[#allocation8 + $0xc0] sm:$0xff]
        %v5097 = vld [vmem:[#allocation8 + $0xc8] sm:$0xff]
        %v5098 = vld [vmem:[#allocation8 + $0xd0] sm:$0xff]
        %v5099 = vld [vmem:[#allocation8 + $0xd8] sm:$0xff]
        %v5100 = vld [vmem:[#allocation8 + $0xe0] sm:$0xff]
        %v5101 = vld [vmem:[#allocation8 + $0xe8] sm:$0xff]
        %v5102 = vld [vmem:[#allocation8 + $0xf0] sm:$0xff]
        %v5103 = vld [vmem:[#allocation8 + $0xf8] sm:$0xff]
        %v5104 = vld [vmem:[#allocation8 + $0x100] sm:$0xff]
        %v5105 = vld [vmem:[#allocation8 + $0x108] sm:$0xff]
        %v5106 = vld [vmem:[#allocation8 + $0x110] sm:$0xff]
        %v5107 = vld [vmem:[#allocation8 + $0x118] sm:$0xff]
        %v5108 = vld [vmem:[#allocation8 + $0x120] sm:$0xff]
        %v5109 = vld [vmem:[#allocation8 + $0x128] sm:$0xff]
        %v5110 = vld [vmem:[#allocation8 + $0x130] sm:$0xff]
        %v5111 = vld [vmem:[#allocation8 + $0x138] sm:$0xff]
        %v5112 = vld [vmem:[#allocation8 + $0x140] sm:$0xff]
        %v5113 = vld [vmem:[#allocation8 + $0x148] sm:$0xff]
        %v5114 = vld [vmem:[#allocation8 + $0x150] sm:$0xff]
        %v5115 = vld [vmem:[#allocation8 + $0x158] sm:$0xff]
        %v5116 = vld [vmem:[#allocation8 + $0x160] sm:$0xff]
        %v5117 = vld [vmem:[#allocation8 + $0x168] sm:$0xff]
        %v5118 = vld [vmem:[#allocation8 + $0x170] sm:$0xff]
        %v5119 = vld [vmem:[#allocation8 + $0x178] sm:$0xff]
        %v5120 = vld [vmem:[#allocation8 + $0x180] sm:$0xff]
        %v5121 = vld [vmem:[#allocation8 + $0x188] sm:$0xff]
        %v5122 = vld [vmem:[#allocation8 + $0x190] sm:$0xff]
        %v5123 = vld [vmem:[#allocation8 + $0x198] sm:$0xff]
        %v5124 = vld [vmem:[#allocation8 + $0x1a0] sm:$0xff]
        %v5125 = vld [vmem:[#allocation8 + $0x1a8] sm:$0xff]
        %v5126 = vld [vmem:[#allocation8 + $0x1b0] sm:$0xff]
        %v5127 = vld [vmem:[#allocation8 + $0x1b8] sm:$0xff]
        %v5128 = vld [vmem:[#allocation8 + $0x1c0] sm:$0xff]
        %v5129 = vld [vmem:[#allocation8 + $0x1c8] sm:$0xff]
        %v5130 = vld [vmem:[#allocation8 + $0x1d0] sm:$0xff]
        %v5131 = vld [vmem:[#allocation8 + $0x1d8] sm:$0xff]
        %v5132 = vld [vmem:[#allocation8 + $0x1e0] sm:$0xff]
        %v5133 = vld [vmem:[#allocation8 + $0x1e8] sm:$0xff]
        %v5134 = vld [vmem:[#allocation8 + $0x1f0] sm:$0xff]
        %v5135 = vld [vmem:[#allocation8 + $0x1f8] sm:$0xff]
        %v5136 = vld [vmem:[%s8] sm:$0x1]
        %v5138 = vperm.slane %v5136, 0
        %5140 = vmatpush.msra.mxu0 %v5087
        %5141 = vmatpush.msra.mxu0 %v5086
        %5142 = vmatpush.msra.mxu0 %v5085
        %5143 = vmatpush.msra.mxu0 %v5084
        %5144 = vmatpush.msra.mxu0 %v5083
        %5145 = vmatpush.msra.mxu0 %v5082
        %5146 = vmatpush.msra.mxu0 %v5081
        %5147 = vmatpush.msra.mxu0 %v5080
        %5148 = vmatpush.msra.mxu0 %v5079
        %5149 = vmatpush.msra.mxu0 %v5078
        %5150 = vmatpush.msra.mxu0 %v5077
        %5151 = vmatpush.msra.mxu0 %v5076
        %5152 = vmatpush.msra.mxu0 %v5075
        %5153 = vmatpush.msra.mxu0 %v5074
        %5154 = vmatpush.msra.mxu0 %v5073
        %5155 = vmatpush.msra.mxu0 %v5072
        %5156 = vmatmul.f32.gmra.mxu0 %v5068
        %v5157 = vpop.f32.mrf.mxu0
        %v5158 = vadd.f32 %v5138, %v5157
        %5159 = vdwg.mxu0
        %5160 = vmatpush.msra.mxu0 %v5103
        %5161 = vmatpush.msra.mxu0 %v5102
        %5162 = vmatpush.msra.mxu0 %v5101
        %5163 = vmatpush.msra.mxu0 %v5100
        %5164 = vmatpush.msra.mxu0 %v5099
        %5165 = vmatpush.msra.mxu0 %v5098
        %5166 = vmatpush.msra.mxu0 %v5097
        %5167 = vmatpush.msra.mxu0 %v5096
        %5168 = vmatpush.msra.mxu0 %v5095
        %5169 = vmatpush.msra.mxu0 %v5094
        %5170 = vmatpush.msra.mxu0 %v5093
        %5171 = vmatpush.msra.mxu0 %v5092
        %5172 = vmatpush.msra.mxu0 %v5091
        %5173 = vmatpush.msra.mxu0 %v5090
        %5174 = vmatpush.msra.mxu0 %v5089
        %5175 = vmatpush.msra.mxu0 %v5088
        %5176 = vmatmul.f32.gmra.mxu0 %v5069
        %v5177 = vpop.f32.mrf.mxu0
        %v5178 = vadd.f32 %v5158, %v5177
        %5179 = vdwg.mxu0
        %5180 = vmatpush.msra.mxu0 %v5119
        %5181 = vmatpush.msra.mxu0 %v5118
        %5182 = vmatpush.msra.mxu0 %v5117
        %5183 = vmatpush.msra.mxu0 %v5116
        %5184 = vmatpush.msra.mxu0 %v5115
        %5185 = vmatpush.msra.mxu0 %v5114
        %5186 = vmatpush.msra.mxu0 %v5113
        %5187 = vmatpush.msra.mxu0 %v5112
        %5188 = vmatpush.msra.mxu0 %v5111
        %5189 = vmatpush.msra.mxu0 %v5110
        %5190 = vmatpush.msra.mxu0 %v5109
        %5191 = vmatpush.msra.mxu0 %v5108
        %5192 = vmatpush.msra.mxu0 %v5107
        %5193 = vmatpush.msra.mxu0 %v5106
        %5194 = vmatpush.msra.mxu0 %v5105
        %5195 = vmatpush.msra.mxu0 %v5104
        %5196 = vmatmul.f32.gmra.mxu0 %v5070
        %v5197 = vpop.f32.mrf.mxu0
        %v5198 = vadd.f32 %v5178, %v5197
        %5199 = vdwg.mxu0
        %5200 = vmatpush.msra.mxu0 %v5135
        %5201 = vmatpush.msra.mxu0 %v5134
        %5202 = vmatpush.msra.mxu0 %v5133
        %5203 = vmatpush.msra.mxu0 %v5132
        %5204 = vmatpush.msra.mxu0 %v5131
        %5205 = vmatpush.msra.mxu0 %v5130
        %5206 = vmatpush.msra.mxu0 %v5129
        %5207 = vmatpush.msra.mxu0 %v5128
        %5208 = vmatpush.msra.mxu0 %v5127
        %5209 = vmatpush.msra.mxu0 %v5126
        %5210 = vmatpush.msra.mxu0 %v5125
        %5211 = vmatpush.msra.mxu0 %v5124
        %5212 = vmatpush.msra.mxu0 %v5123
        %5213 = vmatpush.msra.mxu0 %v5122
        %5214 = vmatpush.msra.mxu0 %v5121
        %5215 = vmatpush.msra.mxu0 %v5120
        %5216 = vmatmul.f32.gmra.mxu0 %v5071
        %v5217 = vpop.f32.mrf.mxu0
        %v5218 = vadd.f32 %v5198, %v5217
        %5219 = vdwg.mxu0
        %v5220 = vsel %vm712, %v5218, 0.0
        %5221 = vadd.xlane.f32.xlu0 %v5220
        %v5222 = vpop.xlane.xlu0 %5221
        %v5223 = vmul.f32 %v5222, %v722
        %v5224 = vsub.f32 %v5218, %v5223
        %v5225 = vmul.f32 %v5224, %v5224
        %v5226 = vsel %vm712, %v5225, 0.0
        %5227 = vadd.xlane.f32.xlu0 %v5226
        %v5228 = vpop.xlane.xlu0 %5227
        %v5229 = vmul.f32 %v5228, %v722
        %v5230 = vadd.f32 %v5229, 1e-05
        %v5231 = vrsqrt.pop %v5230
        %v5232 = vmul.f32 %v5231, %v5230
        %v5233 = vmul.f32 %v5232, %v5231
        %v5234 = vmul.f32 0.5, %v5233
        %v5235 = vsub.f32 1.5, %v5234
        %v5236 = vmul.f32 %v5231, %v5235
        %vm5237 = vweird.f32 %v5230
        %vm5238 = vweird.f32 %v5231
        %vm5239 = vmor %vm5237, %vm5238
        %v5240 = vsel %vm5239, %v5231, %v5236
        %v5241 = vmul.f32 %v5224, %v5240
        %s5242 = scalar_lea.vmem [#allocation13], 192
        %v5243 = vld [vmem:[%s5242] sm:$0xff]
        %v5244 = vld [vmem:[%s5242 + $0x8] sm:$0xff]
        %v5245 = vld [vmem:[%s5242 + $0x10] sm:$0xff]
        %v5246 = vld [vmem:[%s5242 + $0x18] sm:$0xff]
        %v5247 = vld [vmem:[%s5242 + $0x20] sm:$0xff]
        %v5248 = vld [vmem:[%s5242 + $0x28] sm:$0xff]
        %v5249 = vld [vmem:[%s5242 + $0x30] sm:$0xff]
        %v5250 = vld [vmem:[%s5242 + $0x38] sm:$0xff]
        %s5251 = scalar_lea.vmem %s14, 3
        %v5252 = vld [vmem:[%s5251] sm:$0x1]
        %v5254 = vperm.slane %v5252, 0
        %v5257 = vsel %vm712, %v5241, 0
        %5259 = vmatpush.msra.mxu0 0.0
        %5260 = vmatpush.msra.mxu0 0.0
        %5261 = vmatpush.msra.mxu0 0.0
        %5262 = vmatpush.msra.mxu0 0.0
        %5263 = vmatpush.msra.mxu0 0.0
        %5264 = vmatpush.msra.mxu0 0.0
        %5265 = vmatpush.msra.mxu0 0.0
        %5266 = vmatpush.msra.mxu0 0.0
        %5267 = vmatpush.msra.mxu0 %v5250
        %5268 = vmatpush.msra.mxu0 %v5249
        %5269 = vmatpush.msra.mxu0 %v5248
        %5270 = vmatpush.msra.mxu0 %v5247
        %5271 = vmatpush.msra.mxu0 %v5246
        %5272 = vmatpush.msra.mxu0 %v5245
        %5273 = vmatpush.msra.mxu0 %v5244
        %5274 = vmatpush.msra.mxu0 %v5243
        %5275 = vmatmul.f32.gmra.mxu0 %v5257
        %v5276 = vpop.f32.mrf.mxu0
        %v5277 = vadd.f32 %v5254, %v5276
        %5278 = vdwg.mxu0
        %v5279 = vadd.f32 %v5277, %v5241
        %v5280 = vsel %vm712, %v5279, 0.0
        %5281 = vadd.xlane.f32.xlu0 %v5280
        %v5282 = vpop.xlane.xlu0 %5281
        %v5283 = vmul.f32 %v5282, %v722
        %v5284 = vsub.f32 %v5279, %v5283
        %v5285 = vmul.f32 %v5284, %v5284
        %v5286 = vsel %vm712, %v5285, 0.0
        %5287 = vadd.xlane.f32.xlu0 %v5286
        %v5288 = vpop.xlane.xlu0 %5287
        %v5289 = vmul.f32 %v5288, %v722
        %v5290 = vadd.f32 %v5289, 1e-05
        %v5291 = vrsqrt.pop %v5290
        %v5292 = vmul.f32 %v5291, %v5290
        %v5293 = vmul.f32 %v5292, %v5291
        %v5294 = vmul.f32 0.5, %v5293
        %v5295 = vsub.f32 1.5, %v5294
        %v5296 = vmul.f32 %v5291, %v5295
        %vm5297 = vweird.f32 %v5290
        %vm5298 = vweird.f32 %v5291
        %vm5299 = vmor %vm5297, %vm5298
        %v5300 = vsel %vm5299, %v5291, %v5296
        %v5301 = vmul.f32 %v5284, %v5300
        %v5302 = vld [vmem:[#allocation10] sm:$0xff]
        %v5303 = vld [vmem:[#allocation10 + $0x8] sm:$0xff]
        %v5304 = vld [vmem:[#allocation10 + $0x10] sm:$0xff]
        %v5305 = vld [vmem:[#allocation10 + $0x18] sm:$0xff]
        %v5306 = vld [vmem:[#allocation10 + $0x20] sm:$0xff]
        %v5307 = vld [vmem:[#allocation10 + $0x28] sm:$0xff]
        %v5308 = vld [vmem:[#allocation10 + $0x30] sm:$0xff]
        %v5309 = vld [vmem:[#allocation10 + $0x38] sm:$0xff]
        %v5310 = vld [vmem:[%s10] sm:$0x1]
        %v5312 = vperm.slane %v5310, 0
        %v5315 = vsel %vm712, %v5301, 0
        %5317 = vmatpush.msra.mxu0 0.0
        %5318 = vmatpush.msra.mxu0 0.0
        %5319 = vmatpush.msra.mxu0 0.0
        %5320 = vmatpush.msra.mxu0 0.0
        %5321 = vmatpush.msra.mxu0 0.0
        %5322 = vmatpush.msra.mxu0 0.0
        %5323 = vmatpush.msra.mxu0 0.0
        %5324 = vmatpush.msra.mxu0 0.0
        %5325 = vmatpush.msra.mxu0 %v5309
        %5326 = vmatpush.msra.mxu0 %v5308
        %5327 = vmatpush.msra.mxu0 %v5307
        %5328 = vmatpush.msra.mxu0 %v5306
        %5329 = vmatpush.msra.mxu0 %v5305
        %5330 = vmatpush.msra.mxu0 %v5304
        %5331 = vmatpush.msra.mxu0 %v5303
        %5332 = vmatpush.msra.mxu0 %v5302
        %5333 = vmatmul.f32.gmra.mxu0 %v5315
        %v5334 = vpop.f32.mrf.mxu0
        %v5335 = vadd.f32 %v5312, %v5334
        %5336 = vdwg.mxu0
        %v5337 = vmax.f32 %v5335, 0.0
        %v5338 = vld [vmem:[#allocation11] sm:$0xff]
        %v5339 = vld [vmem:[#allocation11 + $0x8] sm:$0xff]
        %v5340 = vld [vmem:[#allocation11 + $0x10] sm:$0xff]
        %v5341 = vld [vmem:[#allocation11 + $0x18] sm:$0xff]
        %v5342 = vld [vmem:[#allocation11 + $0x20] sm:$0xff]
        %v5343 = vld [vmem:[#allocation11 + $0x28] sm:$0xff]
        %v5344 = vld [vmem:[#allocation11 + $0x30] sm:$0xff]
        %v5345 = vld [vmem:[#allocation11 + $0x38] sm:$0xff]
        %v5346 = vld [vmem:[%s12] sm:$0x1]
        %v5348 = vperm.slane %v5346, 0
        %v5351 = vsel %vm712, %v5337, 0
        %5353 = vmatpush.msra.mxu0 0.0
        %5354 = vmatpush.msra.mxu0 0.0
        %5355 = vmatpush.msra.mxu0 0.0
        %5356 = vmatpush.msra.mxu0 0.0
        %5357 = vmatpush.msra.mxu0 0.0
        %5358 = vmatpush.msra.mxu0 0.0
        %5359 = vmatpush.msra.mxu0 0.0
        %5360 = vmatpush.msra.mxu0 0.0
        %5361 = vmatpush.msra.mxu0 %v5345
        %5362 = vmatpush.msra.mxu0 %v5344
        %5363 = vmatpush.msra.mxu0 %v5343
        %5364 = vmatpush.msra.mxu0 %v5342
        %5365 = vmatpush.msra.mxu0 %v5341
        %5366 = vmatpush.msra.mxu0 %v5340
        %5367 = vmatpush.msra.mxu0 %v5339
        %5368 = vmatpush.msra.mxu0 %v5338
        %5369 = vmatmul.f32.gmra.mxu0 %v5351
        %v5370 = vpop.f32.mrf.mxu0
        %v5371 = vadd.f32 %v5348, %v5370
        %5372 = vdwg.mxu0
        %v5373 = vsel %vm712, %v5371, 0.0
        %5374 = vadd.xlane.f32.xlu0 %v5373
        %v5375 = vpop.xlane.xlu0 %5374
        %v5376 = vmul.f32 %v5375, %v722
        %v5377 = vsub.f32 %v5371, %v5376
        %v5378 = vmul.f32 %v5377, %v5377
        %v5379 = vsel %vm712, %v5378, 0.0
        %5380 = vadd.xlane.f32.xlu0 %v5379
        %v5381 = vpop.xlane.xlu0 %5380
        %v5382 = vmul.f32 %v5381, %v722
        %v5383 = vadd.f32 %v5382, 1e-05
        %v5384 = vrsqrt.pop %v5383
        %v5385 = vmul.f32 %v5384, %v5383
        %v5386 = vmul.f32 %v5385, %v5384
        %v5387 = vmul.f32 0.5, %v5386
        %v5388 = vsub.f32 1.5, %v5387
        %v5389 = vmul.f32 %v5384, %v5388
        %vm5390 = vweird.f32 %v5383
        %vm5391 = vweird.f32 %v5384
        %vm5392 = vmor %vm5390, %vm5391
        %v5393 = vsel %vm5392, %v5384, %v5389
        %v5394 = vmul.f32 %v5377, %v5393
        %s5395 = scalar_lea.vmem [#allocation14], 192
        %v5396 = vld [vmem:[%s5395] sm:$0xff]
        %v5397 = vld [vmem:[%s5395 + $0x8] sm:$0xff]
        %v5398 = vld [vmem:[%s5395 + $0x10] sm:$0xff]
        %v5399 = vld [vmem:[%s5395 + $0x18] sm:$0xff]
        %v5400 = vld [vmem:[%s5395 + $0x20] sm:$0xff]
        %v5401 = vld [vmem:[%s5395 + $0x28] sm:$0xff]
        %v5402 = vld [vmem:[%s5395 + $0x30] sm:$0xff]
        %v5403 = vld [vmem:[%s5395 + $0x38] sm:$0xff]
        %s5404 = scalar_lea.vmem %s16, 3
        %v5405 = vld [vmem:[%s5404] sm:$0x1]
        %v5407 = vperm.slane %v5405, 0
        %v5410 = vsel %vm712, %v5394, 0
        %5412 = vmatpush.msra.mxu0 0.0
        %5413 = vmatpush.msra.mxu0 0.0
        %5414 = vmatpush.msra.mxu0 0.0
        %5415 = vmatpush.msra.mxu0 0.0
        %5416 = vmatpush.msra.mxu0 0.0
        %5417 = vmatpush.msra.mxu0 0.0
        %5418 = vmatpush.msra.mxu0 0.0
        %5419 = vmatpush.msra.mxu0 0.0
        %5420 = vmatpush.msra.mxu0 %v5403
        %5421 = vmatpush.msra.mxu0 %v5402
        %5422 = vmatpush.msra.mxu0 %v5401
        %5423 = vmatpush.msra.mxu0 %v5400
        %5424 = vmatpush.msra.mxu0 %v5399
        %5425 = vmatpush.msra.mxu0 %v5398
        %5426 = vmatpush.msra.mxu0 %v5397
        %5427 = vmatpush.msra.mxu0 %v5396
        %5428 = vmatmul.f32.gmra.mxu0 %v5410
        %v5429 = vpop.f32.mrf.mxu0
        %v5430 = vadd.f32 %v5407, %v5429
        %5431 = vdwg.mxu0
        %v5432 = vadd.f32 %v5430, %v5394
        %v5433 = vsel %vm712, %v5432, 0.0
        %5434 = vadd.xlane.f32.xlu0 %v5433
        %v5435 = vpop.xlane.xlu0 %5434
        %v5436 = vmul.f32 %v5435, %v722
        %v5437 = vsub.f32 %v5432, %v5436
        %v5438 = vmul.f32 %v5437, %v5437
        %v5439 = vsel %vm712, %v5438, 0.0
        %5440 = vadd.xlane.f32.xlu0 %v5439
        %v5441 = vpop.xlane.xlu0 %5440
        %v5442 = vmul.f32 %v5441, %v722
        %v5443 = vadd.f32 %v5442, 1e-05
        %v5444 = vrsqrt.pop %v5443
        %v5445 = vmul.f32 %v5444, %v5443
        %v5446 = vmul.f32 %v5445, %v5444
        %v5447 = vmul.f32 0.5, %v5446
        %v5448 = vsub.f32 1.5, %v5447
        %v5449 = vmul.f32 %v5444, %v5448
        %vm5450 = vweird.f32 %v5443
        %vm5451 = vweird.f32 %v5444
        %vm5452 = vmor %vm5450, %vm5451
        %v5453 = vsel %vm5452, %v5444, %v5449
        %v5454 = vmul.f32 %v5437, %v5453
        %v5455 = vld [vmem:[#allocation2] sm:$0xff]
        %v5456 = vld [vmem:[#allocation2 + $0x8] sm:$0xff]
        %v5457 = vld [vmem:[#allocation2 + $0x10] sm:$0xff]
        %v5458 = vld [vmem:[#allocation2 + $0x18] sm:$0xff]
        %v5459 = vld [vmem:[#allocation2 + $0x20] sm:$0xff]
        %v5460 = vld [vmem:[#allocation2 + $0x28] sm:$0xff]
        %v5461 = vld [vmem:[#allocation2 + $0x30] sm:$0xff]
        %v5462 = vld [vmem:[#allocation2 + $0x38] sm:$0xff]
        %v5463 = vld [vmem:[#allocation2 + $0x40] sm:$0xff]
        %v5464 = vld [vmem:[#allocation2 + $0x48] sm:$0xff]
        %v5465 = vld [vmem:[#allocation2 + $0x50] sm:$0xff]
        %v5466 = vld [vmem:[#allocation2 + $0x58] sm:$0xff]
        %v5467 = vld [vmem:[#allocation2 + $0x60] sm:$0xff]
        %v5468 = vld [vmem:[#allocation2 + $0x68] sm:$0xff]
        %v5469 = vld [vmem:[#allocation2 + $0x70] sm:$0xff]
        %v5470 = vld [vmem:[#allocation2 + $0x78] sm:$0xff]
        %v5471 = vld [vmem:[#allocation2 + $0x80] sm:$0xff]
        %v5472 = vld [vmem:[#allocation2 + $0x88] sm:$0xff]
        %v5473 = vld [vmem:[#allocation2 + $0x90] sm:$0xff]
        %v5474 = vld [vmem:[#allocation2 + $0x98] sm:$0xff]
        %v5475 = vld [vmem:[#allocation2 + $0xa0] sm:$0xff]
        %v5476 = vld [vmem:[#allocation2 + $0xa8] sm:$0xff]
        %v5477 = vld [vmem:[#allocation2 + $0xb0] sm:$0xff]
        %v5478 = vld [vmem:[#allocation2 + $0xb8] sm:$0xff]
        %v5479 = vld [vmem:[#allocation2 + $0xc0] sm:$0xff]
        %v5480 = vld [vmem:[#allocation2 + $0xc8] sm:$0xff]
        %v5481 = vld [vmem:[#allocation2 + $0xd0] sm:$0xff]
        %v5482 = vld [vmem:[#allocation2 + $0xd8] sm:$0xff]
        %v5483 = vld [vmem:[#allocation2 + $0xe0] sm:$0xff]
        %v5484 = vld [vmem:[#allocation2 + $0xe8] sm:$0xff]
        %v5485 = vld [vmem:[#allocation2 + $0xf0] sm:$0xff]
        %v5486 = vld [vmem:[#allocation2 + $0xf8] sm:$0xff]
        %v5487 = vld [vmem:[#allocation5] sm:$0xf]
        %v5489 = vperm.slane %v5487, 0
        %v5490 = vperm.slane %v5487, 1
        %v5491 = vperm.slane %v5487, 2
        %v5492 = vperm.slane %v5487, 3
        %v5498 = vsel %vm712, %v5454, 0
        %5500 = vmatpush.msra.mxu0 0.0
        %5501 = vmatpush.msra.mxu0 0.0
        %5502 = vmatpush.msra.mxu0 0.0
        %5503 = vmatpush.msra.mxu0 0.0
        %5504 = vmatpush.msra.mxu0 0.0
        %5505 = vmatpush.msra.mxu0 0.0
        %5506 = vmatpush.msra.mxu0 0.0
        %5507 = vmatpush.msra.mxu0 0.0
        %5508 = vmatpush.msra.mxu0 %v5483
        %5509 = vmatpush.msra.mxu0 %v5479
        %5510 = vmatpush.msra.mxu0 %v5475
        %5511 = vmatpush.msra.mxu0 %v5471
        %5512 = vmatpush.msra.mxu0 %v5467
        %5513 = vmatpush.msra.mxu0 %v5463
        %5514 = vmatpush.msra.mxu0 %v5459
        %5515 = vmatpush.msra.mxu0 %v5455
        %5516 = vmatmul.f32.gmra.mxu0 %v5498
        %v5517 = vpop.f32.mrf.mxu0
        %v5518 = vadd.f32 %v5489, %v5517
        %5519 = vdwg.mxu0
        %5520 = vmatpush.msra.mxu0 0.0
        %5521 = vmatpush.msra.mxu0 0.0
        %5522 = vmatpush.msra.mxu0 0.0
        %5523 = vmatpush.msra.mxu0 0.0
        %5524 = vmatpush.msra.mxu0 0.0
        %5525 = vmatpush.msra.mxu0 0.0
        %5526 = vmatpush.msra.mxu0 0.0
        %5527 = vmatpush.msra.mxu0 0.0
        %5528 = vmatpush.msra.mxu0 %v5484
        %5529 = vmatpush.msra.mxu0 %v5480
        %5530 = vmatpush.msra.mxu0 %v5476
        %5531 = vmatpush.msra.mxu0 %v5472
        %5532 = vmatpush.msra.mxu0 %v5468
        %5533 = vmatpush.msra.mxu0 %v5464
        %5534 = vmatpush.msra.mxu0 %v5460
        %5535 = vmatpush.msra.mxu0 %v5456
        %5536 = vmatmul.f32.gmra.mxu0 %v5498
        %v5537 = vpop.f32.mrf.mxu0
        %v5538 = vadd.f32 %v5490, %v5537
        %5539 = vdwg.mxu0
        %5540 = vmatpush.msra.mxu0 0.0
        %5541 = vmatpush.msra.mxu0 0.0
        %5542 = vmatpush.msra.mxu0 0.0
        %5543 = vmatpush.msra.mxu0 0.0
        %5544 = vmatpush.msra.mxu0 0.0
        %5545 = vmatpush.msra.mxu0 0.0
        %5546 = vmatpush.msra.mxu0 0.0
        %5547 = vmatpush.msra.mxu0 0.0
        %5548 = vmatpush.msra.mxu0 %v5485
        %5549 = vmatpush.msra.mxu0 %v5481
        %5550 = vmatpush.msra.mxu0 %v5477
        %5551 = vmatpush.msra.mxu0 %v5473
        %5552 = vmatpush.msra.mxu0 %v5469
        %5553 = vmatpush.msra.mxu0 %v5465
        %5554 = vmatpush.msra.mxu0 %v5461
        %5555 = vmatpush.msra.mxu0 %v5457
        %5556 = vmatmul.f32.gmra.mxu0 %v5498
        %v5557 = vpop.f32.mrf.mxu0
        %v5558 = vadd.f32 %v5491, %v5557
        %5559 = vdwg.mxu0
        %5560 = vmatpush.msra.mxu0 0.0
        %5561 = vmatpush.msra.mxu0 0.0
        %5562 = vmatpush.msra.mxu0 0.0
        %5563 = vmatpush.msra.mxu0 0.0
        %5564 = vmatpush.msra.mxu0 0.0
        %5565 = vmatpush.msra.mxu0 0.0
        %5566 = vmatpush.msra.mxu0 0.0
        %5567 = vmatpush.msra.mxu0 0.0
        %5568 = vmatpush.msra.mxu0 %v5486
        %5569 = vmatpush.msra.mxu0 %v5482
        %5570 = vmatpush.msra.mxu0 %v5478
        %5571 = vmatpush.msra.mxu0 %v5474
        %5572 = vmatpush.msra.mxu0 %v5470
        %5573 = vmatpush.msra.mxu0 %v5466
        %5574 = vmatpush.msra.mxu0 %v5462
        %5575 = vmatpush.msra.mxu0 %v5458
        %5576 = vmatmul.f32.gmra.mxu0 %v5498
        %v5577 = vpop.f32.mrf.mxu0
        %v5578 = vadd.f32 %v5492, %v5577
        %5579 = vdwg.mxu0
        %v5580 = vmul.f32 %v5518, 0.125
        %v5581 = vmul.f32 %v5538, 0.125
        %v5582 = vmul.f32 %v5558, 0.125
        %v5583 = vmul.f32 %v5578, 0.125
        %5585 = vrot.lane.b32.xlu0 %v5580, 64
        %v5586 = vpop.permute.xlu0 %5585
        %5588 = vrot.lane.b32.xlu0 %v5581, 64
        %v5589 = vpop.permute.xlu0 %5588
        %5591 = vrot.lane.b32.xlu0 %v5582, 64
        %v5592 = vpop.permute.xlu0 %5591
        %5594 = vrot.lane.b32.xlu0 %v5583, 64
        %v5595 = vpop.permute.xlu0 %5594
        %v5596 = vsel %vm712, %v5580, 0
        %5598 = vmatpush.xpose.msra.mxu0 0.0
        %5599 = vmatpush.xpose.msra.mxu0 0.0
        %5600 = vmatpush.xpose.msra.mxu0 0.0
        %5601 = vmatpush.xpose.msra.mxu0 0.0
        %5602 = vmatpush.xpose.msra.mxu0 0.0
        %5603 = vmatpush.xpose.msra.mxu0 0.0
        %5604 = vmatpush.xpose.msra.mxu0 0.0
        %5605 = vmatpush.xpose.msra.mxu0 0.0
        %5606 = vmatpush.xpose.msra.mxu0 0.0
        %5607 = vmatpush.xpose.msra.mxu0 0.0
        %5608 = vmatpush.xpose.msra.mxu0 0.0
        %5609 = vmatpush.xpose.msra.mxu0 0.0
        %5610 = vmatpush.xpose.msra.mxu0 0.0
        %5611 = vmatpush.xpose.msra.mxu0 0.0
        %5612 = vmatpush.xpose.msra.mxu0 0.0
        %5613 = vmatpush.xpose.msra.mxu0 %v1180
        %5614 = vmatmul.f32.gmra.mxu0 %v5596
        %v5615 = vpop.f32.mrf.mxu0
        %v5616 = vadd.f32 0.0, %v5615
        %5617 = vdwg.mxu0
        %v5618 = vsel %vm712, %v5586, 0
        %5620 = vmatpush.xpose.msra.mxu0 0.0
        %5621 = vmatpush.xpose.msra.mxu0 0.0
        %5622 = vmatpush.xpose.msra.mxu0 0.0
        %5623 = vmatpush.xpose.msra.mxu0 0.0
        %5624 = vmatpush.xpose.msra.mxu0 0.0
        %5625 = vmatpush.xpose.msra.mxu0 0.0
        %5626 = vmatpush.xpose.msra.mxu0 0.0
        %5627 = vmatpush.xpose.msra.mxu0 0.0
        %5628 = vmatpush.xpose.msra.mxu0 0.0
        %5629 = vmatpush.xpose.msra.mxu0 0.0
        %5630 = vmatpush.xpose.msra.mxu0 0.0
        %5631 = vmatpush.xpose.msra.mxu0 0.0
        %5632 = vmatpush.xpose.msra.mxu0 0.0
        %5633 = vmatpush.xpose.msra.mxu0 0.0
        %5634 = vmatpush.xpose.msra.mxu0 0.0
        %5635 = vmatpush.xpose.msra.mxu0 %v1204
        %5636 = vmatmul.f32.gmra.mxu0 %v5618
        %v5637 = vpop.f32.mrf.mxu0
        %v5638 = vadd.f32 0.0, %v5637
        %5639 = vdwg.mxu0
        %v5640 = vsel %vm712, %v5581, 0
        %5642 = vmatpush.xpose.msra.mxu0 0.0
        %5643 = vmatpush.xpose.msra.mxu0 0.0
        %5644 = vmatpush.xpose.msra.mxu0 0.0
        %5645 = vmatpush.xpose.msra.mxu0 0.0
        %5646 = vmatpush.xpose.msra.mxu0 0.0
        %5647 = vmatpush.xpose.msra.mxu0 0.0
        %5648 = vmatpush.xpose.msra.mxu0 0.0
        %5649 = vmatpush.xpose.msra.mxu0 0.0
        %5650 = vmatpush.xpose.msra.mxu0 0.0
        %5651 = vmatpush.xpose.msra.mxu0 0.0
        %5652 = vmatpush.xpose.msra.mxu0 0.0
        %5653 = vmatpush.xpose.msra.mxu0 0.0
        %5654 = vmatpush.xpose.msra.mxu0 0.0
        %5655 = vmatpush.xpose.msra.mxu0 0.0
        %5656 = vmatpush.xpose.msra.mxu0 0.0
        %5657 = vmatpush.xpose.msra.mxu0 %v1228
        %5658 = vmatmul.f32.gmra.mxu0 %v5640
        %v5659 = vpop.f32.mrf.mxu0
        %v5660 = vadd.f32 0.0, %v5659
        %5661 = vdwg.mxu0
        %v5662 = vsel %vm712, %v5589, 0
        %5664 = vmatpush.xpose.msra.mxu0 0.0
        %5665 = vmatpush.xpose.msra.mxu0 0.0
        %5666 = vmatpush.xpose.msra.mxu0 0.0
        %5667 = vmatpush.xpose.msra.mxu0 0.0
        %5668 = vmatpush.xpose.msra.mxu0 0.0
        %5669 = vmatpush.xpose.msra.mxu0 0.0
        %5670 = vmatpush.xpose.msra.mxu0 0.0
        %5671 = vmatpush.xpose.msra.mxu0 0.0
        %5672 = vmatpush.xpose.msra.mxu0 0.0
        %5673 = vmatpush.xpose.msra.mxu0 0.0
        %5674 = vmatpush.xpose.msra.mxu0 0.0
        %5675 = vmatpush.xpose.msra.mxu0 0.0
        %5676 = vmatpush.xpose.msra.mxu0 0.0
        %5677 = vmatpush.xpose.msra.mxu0 0.0
        %5678 = vmatpush.xpose.msra.mxu0 0.0
        %5679 = vmatpush.xpose.msra.mxu0 %v1252
        %5680 = vmatmul.f32.gmra.mxu0 %v5662
        %v5681 = vpop.f32.mrf.mxu0
        %v5682 = vadd.f32 0.0, %v5681
        %5683 = vdwg.mxu0
        %v5684 = vsel %vm712, %v5582, 0
        %5686 = vmatpush.xpose.msra.mxu0 0.0
        %5687 = vmatpush.xpose.msra.mxu0 0.0
        %5688 = vmatpush.xpose.msra.mxu0 0.0
        %5689 = vmatpush.xpose.msra.mxu0 0.0
        %5690 = vmatpush.xpose.msra.mxu0 0.0
        %5691 = vmatpush.xpose.msra.mxu0 0.0
        %5692 = vmatpush.xpose.msra.mxu0 0.0
        %5693 = vmatpush.xpose.msra.mxu0 0.0
        %5694 = vmatpush.xpose.msra.mxu0 0.0
        %5695 = vmatpush.xpose.msra.mxu0 0.0
        %5696 = vmatpush.xpose.msra.mxu0 0.0
        %5697 = vmatpush.xpose.msra.mxu0 0.0
        %5698 = vmatpush.xpose.msra.mxu0 0.0
        %5699 = vmatpush.xpose.msra.mxu0 0.0
        %5700 = vmatpush.xpose.msra.mxu0 0.0
        %5701 = vmatpush.xpose.msra.mxu0 %v1276
        %5702 = vmatmul.f32.gmra.mxu0 %v5684
        %v5703 = vpop.f32.mrf.mxu0
        %v5704 = vadd.f32 0.0, %v5703
        %5705 = vdwg.mxu0
        %v5706 = vsel %vm712, %v5592, 0
        %5708 = vmatpush.xpose.msra.mxu0 0.0
        %5709 = vmatpush.xpose.msra.mxu0 0.0
        %5710 = vmatpush.xpose.msra.mxu0 0.0
        %5711 = vmatpush.xpose.msra.mxu0 0.0
        %5712 = vmatpush.xpose.msra.mxu0 0.0
        %5713 = vmatpush.xpose.msra.mxu0 0.0
        %5714 = vmatpush.xpose.msra.mxu0 0.0
        %5715 = vmatpush.xpose.msra.mxu0 0.0
        %5716 = vmatpush.xpose.msra.mxu0 0.0
        %5717 = vmatpush.xpose.msra.mxu0 0.0
        %5718 = vmatpush.xpose.msra.mxu0 0.0
        %5719 = vmatpush.xpose.msra.mxu0 0.0
        %5720 = vmatpush.xpose.msra.mxu0 0.0
        %5721 = vmatpush.xpose.msra.mxu0 0.0
        %5722 = vmatpush.xpose.msra.mxu0 0.0
        %5723 = vmatpush.xpose.msra.mxu0 %v1300
        %5724 = vmatmul.f32.gmra.mxu0 %v5706
        %v5725 = vpop.f32.mrf.mxu0
        %v5726 = vadd.f32 0.0, %v5725
        %5727 = vdwg.mxu0
        %v5728 = vsel %vm712, %v5583, 0
        %5730 = vmatpush.xpose.msra.mxu0 0.0
        %5731 = vmatpush.xpose.msra.mxu0 0.0
        %5732 = vmatpush.xpose.msra.mxu0 0.0
        %5733 = vmatpush.xpose.msra.mxu0 0.0
        %5734 = vmatpush.xpose.msra.mxu0 0.0
        %5735 = vmatpush.xpose.msra.mxu0 0.0
        %5736 = vmatpush.xpose.msra.mxu0 0.0
        %5737 = vmatpush.xpose.msra.mxu0 0.0
        %5738 = vmatpush.xpose.msra.mxu0 0.0
        %5739 = vmatpush.xpose.msra.mxu0 0.0
        %5740 = vmatpush.xpose.msra.mxu0 0.0
        %5741 = vmatpush.xpose.msra.mxu0 0.0
        %5742 = vmatpush.xpose.msra.mxu0 0.0
        %5743 = vmatpush.xpose.msra.mxu0 0.0
        %5744 = vmatpush.xpose.msra.mxu0 0.0
        %5745 = vmatpush.xpose.msra.mxu0 %v1324
        %5746 = vmatmul.f32.gmra.mxu0 %v5728
        %v5747 = vpop.f32.mrf.mxu0
        %v5748 = vadd.f32 0.0, %v5747
        %5749 = vdwg.mxu0
        %v5750 = vsel %vm712, %v5595, 0
        %5752 = vmatpush.xpose.msra.mxu0 0.0
        %5753 = vmatpush.xpose.msra.mxu0 0.0
        %5754 = vmatpush.xpose.msra.mxu0 0.0
        %5755 = vmatpush.xpose.msra.mxu0 0.0
        %5756 = vmatpush.xpose.msra.mxu0 0.0
        %5757 = vmatpush.xpose.msra.mxu0 0.0
        %5758 = vmatpush.xpose.msra.mxu0 0.0
        %5759 = vmatpush.xpose.msra.mxu0 0.0
        %5760 = vmatpush.xpose.msra.mxu0 0.0
        %5761 = vmatpush.xpose.msra.mxu0 0.0
        %5762 = vmatpush.xpose.msra.mxu0 0.0
        %5763 = vmatpush.xpose.msra.mxu0 0.0
        %5764 = vmatpush.xpose.msra.mxu0 0.0
        %5765 = vmatpush.xpose.msra.mxu0 0.0
        %5766 = vmatpush.xpose.msra.mxu0 0.0
        %5767 = vmatpush.xpose.msra.mxu0 %v1348
        %5768 = vmatmul.f32.gmra.mxu0 %v5750
        %v5769 = vpop.f32.mrf.mxu0
        %v5770 = vadd.f32 0.0, %v5769
        %5771 = vdwg.mxu0
        %v5772 = vsel %vm1370, %v5616, -inf
        %5773 = vmax.xlane.f32.xlu0 %v5772
        %v5774 = vpop.xlane.xlu0 %5773
        %v5775 = vsel %vm1370, %v5638, -inf
        %5776 = vmax.xlane.f32.xlu0 %v5775
        %v5777 = vpop.xlane.xlu0 %5776
        %v5778 = vsel %vm1370, %v5660, -inf
        %5779 = vmax.xlane.f32.xlu0 %v5778
        %v5780 = vpop.xlane.xlu0 %5779
        %v5781 = vsel %vm1370, %v5682, -inf
        %5782 = vmax.xlane.f32.xlu0 %v5781
        %v5783 = vpop.xlane.xlu0 %5782
        %v5784 = vsel %vm1370, %v5704, -inf
        %5785 = vmax.xlane.f32.xlu0 %v5784
        %v5786 = vpop.xlane.xlu0 %5785
        %v5787 = vsel %vm1370, %v5726, -inf
        %5788 = vmax.xlane.f32.xlu0 %v5787
        %v5789 = vpop.xlane.xlu0 %5788
        %v5790 = vsel %vm1370, %v5748, -inf
        %5791 = vmax.xlane.f32.xlu0 %v5790
        %v5792 = vpop.xlane.xlu0 %5791
        %v5793 = vsel %vm1370, %v5770, -inf
        %5794 = vmax.xlane.f32.xlu0 %v5793
        %v5795 = vpop.xlane.xlu0 %5794
        %v5796 = vsub.f32 %v5616, %v5774
        %v5797 = vsub.f32 %v5638, %v5777
        %v5798 = vsub.f32 %v5660, %v5780
        %v5799 = vsub.f32 %v5682, %v5783
        %v5800 = vsub.f32 %v5704, %v5786
        %v5801 = vsub.f32 %v5726, %v5789
        %v5802 = vsub.f32 %v5748, %v5792
        %v5803 = vsub.f32 %v5770, %v5795
        %v5804 = vmul.f32 %v5796, 1.442695
        %v5805 = vpow.pop %v5804
        %v5806 = vmul.f32 %v5797, 1.442695
        %v5807 = vpow.pop %v5806
        %v5808 = vmul.f32 %v5798, 1.442695
        %v5809 = vpow.pop %v5808
        %v5810 = vmul.f32 %v5799, 1.442695
        %v5811 = vpow.pop %v5810
        %v5812 = vmul.f32 %v5800, 1.442695
        %v5813 = vpow.pop %v5812
        %v5814 = vmul.f32 %v5801, 1.442695
        %v5815 = vpow.pop %v5814
        %v5816 = vmul.f32 %v5802, 1.442695
        %v5817 = vpow.pop %v5816
        %v5818 = vmul.f32 %v5803, 1.442695
        %v5819 = vpow.pop %v5818
        %v5820 = vsel %vm1370, %v5805, 0.0
        %5821 = vadd.xlane.f32.xlu0 %v5820
        %v5822 = vpop.xlane.xlu0 %5821
        %v5823 = vsel %vm1370, %v5807, 0.0
        %5824 = vadd.xlane.f32.xlu0 %v5823
        %v5825 = vpop.xlane.xlu0 %5824
        %v5826 = vsel %vm1370, %v5809, 0.0
        %5827 = vadd.xlane.f32.xlu0 %v5826
        %v5828 = vpop.xlane.xlu0 %5827
        %v5829 = vsel %vm1370, %v5811, 0.0
        %5830 = vadd.xlane.f32.xlu0 %v5829
        %v5831 = vpop.xlane.xlu0 %5830
        %v5832 = vsel %vm1370, %v5813, 0.0
        %5833 = vadd.xlane.f32.xlu0 %v5832
        %v5834 = vpop.xlane.xlu0 %5833
        %v5835 = vsel %vm1370, %v5815, 0.0
        %5836 = vadd.xlane.f32.xlu0 %v5835
        %v5837 = vpop.xlane.xlu0 %5836
        %v5838 = vsel %vm1370, %v5817, 0.0
        %5839 = vadd.xlane.f32.xlu0 %v5838
        %v5840 = vpop.xlane.xlu0 %5839
        %v5841 = vsel %vm1370, %v5819, 0.0
        %5842 = vadd.xlane.f32.xlu0 %v5841
        %v5843 = vpop.xlane.xlu0 %5842
        %v5844 = vrcp.pop %v5822
        %v5845 = vmul.f32 %v5822, %v5844
        %v5846 = vsub.f32 1.0, %v5845
        %v5847 = vmul.f32 %v5844, %v5846
        %v5848 = vadd.f32 %v5844, %v5847
        %vm5849 = vweird.f32 %v5822
        %vm5850 = vweird.f32 %v5844
        %vm5851 = vmor %vm5849, %vm5850
        %v5852 = vsel %vm5851, %v5844, %v5848
        %v5853 = vand.u32 2147483647, %v5822
        %vm5854 = vcmp.eq.f32.partialorder %v5853, 8.507059e+37
        %v5855 = vand.u32 %v5822, 2147483648
        %v5856 = vor.u32 1.1754944e-38, %v5855
        %v5857 = vsel %vm5854, %v5856, %v5852
        %v5858 = vmul.f32 %v5805, %v5857
        %v5859 = vrcp.pop %v5825
        %v5860 = vmul.f32 %v5825, %v5859
        %v5861 = vsub.f32 1.0, %v5860
        %v5862 = vmul.f32 %v5859, %v5861
        %v5863 = vadd.f32 %v5859, %v5862
        %vm5864 = vweird.f32 %v5825
        %vm5865 = vweird.f32 %v5859
        %vm5866 = vmor %vm5864, %vm5865
        %v5867 = vsel %vm5866, %v5859, %v5863
        %v5868 = vand.u32 2147483647, %v5825
        %vm5869 = vcmp.eq.f32.partialorder %v5868, 8.507059e+37
        %v5870 = vand.u32 %v5825, 2147483648
        %v5871 = vor.u32 1.1754944e-38, %v5870
        %v5872 = vsel %vm5869, %v5871, %v5867
        %v5873 = vmul.f32 %v5807, %v5872
        %v5874 = vrcp.pop %v5828
        %v5875 = vmul.f32 %v5828, %v5874
        %v5876 = vsub.f32 1.0, %v5875
        %v5877 = vmul.f32 %v5874, %v5876
        %v5878 = vadd.f32 %v5874, %v5877
        %vm5879 = vweird.f32 %v5828
        %vm5880 = vweird.f32 %v5874
        %vm5881 = vmor %vm5879, %vm5880
        %v5882 = vsel %vm5881, %v5874, %v5878
        %v5883 = vand.u32 2147483647, %v5828
        %vm5884 = vcmp.eq.f32.partialorder %v5883, 8.507059e+37
        %v5885 = vand.u32 %v5828, 2147483648
        %v5886 = vor.u32 1.1754944e-38, %v5885
        %v5887 = vsel %vm5884, %v5886, %v5882
        %v5888 = vmul.f32 %v5809, %v5887
        %v5889 = vrcp.pop %v5831
        %v5890 = vmul.f32 %v5831, %v5889
        %v5891 = vsub.f32 1.0, %v5890
        %v5892 = vmul.f32 %v5889, %v5891
        %v5893 = vadd.f32 %v5889, %v5892
        %vm5894 = vweird.f32 %v5831
        %vm5895 = vweird.f32 %v5889
        %vm5896 = vmor %vm5894, %vm5895
        %v5897 = vsel %vm5896, %v5889, %v5893
        %v5898 = vand.u32 2147483647, %v5831
        %vm5899 = vcmp.eq.f32.partialorder %v5898, 8.507059e+37
        %v5900 = vand.u32 %v5831, 2147483648
        %v5901 = vor.u32 1.1754944e-38, %v5900
        %v5902 = vsel %vm5899, %v5901, %v5897
        %v5903 = vmul.f32 %v5811, %v5902
        %v5904 = vrcp.pop %v5834
        %v5905 = vmul.f32 %v5834, %v5904
        %v5906 = vsub.f32 1.0, %v5905
        %v5907 = vmul.f32 %v5904, %v5906
        %v5908 = vadd.f32 %v5904, %v5907
        %vm5909 = vweird.f32 %v5834
        %vm5910 = vweird.f32 %v5904
        %vm5911 = vmor %vm5909, %vm5910
        %v5912 = vsel %vm5911, %v5904, %v5908
        %v5913 = vand.u32 2147483647, %v5834
        %vm5914 = vcmp.eq.f32.partialorder %v5913, 8.507059e+37
        %v5915 = vand.u32 %v5834, 2147483648
        %v5916 = vor.u32 1.1754944e-38, %v5915
        %v5917 = vsel %vm5914, %v5916, %v5912
        %v5918 = vmul.f32 %v5813, %v5917
        %v5919 = vrcp.pop %v5837
        %v5920 = vmul.f32 %v5837, %v5919
        %v5921 = vsub.f32 1.0, %v5920
        %v5922 = vmul.f32 %v5919, %v5921
        %v5923 = vadd.f32 %v5919, %v5922
        %vm5924 = vweird.f32 %v5837
        %vm5925 = vweird.f32 %v5919
        %vm5926 = vmor %vm5924, %vm5925
        %v5927 = vsel %vm5926, %v5919, %v5923
        %v5928 = vand.u32 2147483647, %v5837
        %vm5929 = vcmp.eq.f32.partialorder %v5928, 8.507059e+37
        %v5930 = vand.u32 %v5837, 2147483648
        %v5931 = vor.u32 1.1754944e-38, %v5930
        %v5932 = vsel %vm5929, %v5931, %v5927
        %v5933 = vmul.f32 %v5815, %v5932
        %v5934 = vrcp.pop %v5840
        %v5935 = vmul.f32 %v5840, %v5934
        %v5936 = vsub.f32 1.0, %v5935
        %v5937 = vmul.f32 %v5934, %v5936
        %v5938 = vadd.f32 %v5934, %v5937
        %vm5939 = vweird.f32 %v5840
        %vm5940 = vweird.f32 %v5934
        %vm5941 = vmor %vm5939, %vm5940
        %v5942 = vsel %vm5941, %v5934, %v5938
        %v5943 = vand.u32 2147483647, %v5840
        %vm5944 = vcmp.eq.f32.partialorder %v5943, 8.507059e+37
        %v5945 = vand.u32 %v5840, 2147483648
        %v5946 = vor.u32 1.1754944e-38, %v5945
        %v5947 = vsel %vm5944, %v5946, %v5942
        %v5948 = vmul.f32 %v5817, %v5947
        %v5949 = vrcp.pop %v5843
        %v5950 = vmul.f32 %v5843, %v5949
        %v5951 = vsub.f32 1.0, %v5950
        %v5952 = vmul.f32 %v5949, %v5951
        %v5953 = vadd.f32 %v5949, %v5952
        %vm5954 = vweird.f32 %v5843
        %vm5955 = vweird.f32 %v5949
        %vm5956 = vmor %vm5954, %vm5955
        %v5957 = vsel %vm5956, %v5949, %v5953
        %v5958 = vand.u32 2147483647, %v5843
        %vm5959 = vcmp.eq.f32.partialorder %v5958, 8.507059e+37
        %v5960 = vand.u32 %v5843, 2147483648
        %v5961 = vor.u32 1.1754944e-38, %v5960
        %v5962 = vsel %vm5959, %v5961, %v5957
        %v5963 = vmul.f32 %v5819, %v5962
        %v5965 = vsel %vm1370, %v5858, 0
        %5967 = vmatpush.msra.mxu0 0.0
        %5968 = vmatpush.msra.mxu0 0.0
        %5969 = vmatpush.msra.mxu0 0.0
        %5970 = vmatpush.msra.mxu0 0.0
        %5971 = vmatpush.msra.mxu0 0.0
        %5972 = vmatpush.msra.mxu0 0.0
        %5973 = vmatpush.msra.mxu0 0.0
        %5974 = vmatpush.msra.mxu0 0.0
        %5975 = vmatpush.msra.mxu0 0.0
        %5976 = vmatpush.msra.mxu0 0.0
        %5977 = vmatpush.msra.mxu0 0.0
        %5978 = vmatpush.msra.mxu0 0.0
        %5979 = vmatpush.msra.mxu0 0.0
        %5980 = vmatpush.msra.mxu0 0.0
        %5981 = vmatpush.msra.mxu0 0.0
        %5982 = vmatpush.msra.mxu0 %v925
        %5983 = vmatmul.f32.gmra.mxu0 %v5965
        %v5984 = vpop.f32.mrf.mxu0
        %v5985 = vadd.f32 0.0, %v5984
        %5986 = vdwg.mxu0
        %v5988 = vsel %vm1370, %v5873, 0
        %5990 = vmatpush.msra.mxu0 0.0
        %5991 = vmatpush.msra.mxu0 0.0
        %5992 = vmatpush.msra.mxu0 0.0
        %5993 = vmatpush.msra.mxu0 0.0
        %5994 = vmatpush.msra.mxu0 0.0
        %5995 = vmatpush.msra.mxu0 0.0
        %5996 = vmatpush.msra.mxu0 0.0
        %5997 = vmatpush.msra.mxu0 0.0
        %5998 = vmatpush.msra.mxu0 0.0
        %5999 = vmatpush.msra.mxu0 0.0
        %6000 = vmatpush.msra.mxu0 0.0
        %6001 = vmatpush.msra.mxu0 0.0
        %6002 = vmatpush.msra.mxu0 0.0
        %6003 = vmatpush.msra.mxu0 0.0
        %6004 = vmatpush.msra.mxu0 0.0
        %6005 = vmatpush.msra.mxu0 %v1001
        %6006 = vmatmul.f32.gmra.mxu0 %v5988
        %v6007 = vpop.f32.mrf.mxu0
        %v6008 = vadd.f32 0.0, %v6007
        %6009 = vdwg.mxu0
        %v6011 = vsel %vm1370, %v5888, 0
        %6013 = vmatpush.msra.mxu0 0.0
        %6014 = vmatpush.msra.mxu0 0.0
        %6015 = vmatpush.msra.mxu0 0.0
        %6016 = vmatpush.msra.mxu0 0.0
        %6017 = vmatpush.msra.mxu0 0.0
        %6018 = vmatpush.msra.mxu0 0.0
        %6019 = vmatpush.msra.mxu0 0.0
        %6020 = vmatpush.msra.mxu0 0.0
        %6021 = vmatpush.msra.mxu0 0.0
        %6022 = vmatpush.msra.mxu0 0.0
        %6023 = vmatpush.msra.mxu0 0.0
        %6024 = vmatpush.msra.mxu0 0.0
        %6025 = vmatpush.msra.mxu0 0.0
        %6026 = vmatpush.msra.mxu0 0.0
        %6027 = vmatpush.msra.mxu0 0.0
        %6028 = vmatpush.msra.mxu0 %v945
        %6029 = vmatmul.f32.gmra.mxu0 %v6011
        %v6030 = vpop.f32.mrf.mxu0
        %v6031 = vadd.f32 0.0, %v6030
        %6032 = vdwg.mxu0
        %v6034 = vsel %vm1370, %v5903, 0
        %6036 = vmatpush.msra.mxu0 0.0
        %6037 = vmatpush.msra.mxu0 0.0
        %6038 = vmatpush.msra.mxu0 0.0
        %6039 = vmatpush.msra.mxu0 0.0
        %6040 = vmatpush.msra.mxu0 0.0
        %6041 = vmatpush.msra.mxu0 0.0
        %6042 = vmatpush.msra.mxu0 0.0
        %6043 = vmatpush.msra.mxu0 0.0
        %6044 = vmatpush.msra.mxu0 0.0
        %6045 = vmatpush.msra.mxu0 0.0
        %6046 = vmatpush.msra.mxu0 0.0
        %6047 = vmatpush.msra.mxu0 0.0
        %6048 = vmatpush.msra.mxu0 0.0
        %6049 = vmatpush.msra.mxu0 0.0
        %6050 = vmatpush.msra.mxu0 0.0
        %6051 = vmatpush.msra.mxu0 %v1005
        %6052 = vmatmul.f32.gmra.mxu0 %v6034
        %v6053 = vpop.f32.mrf.mxu0
        %v6054 = vadd.f32 0.0, %v6053
        %6055 = vdwg.mxu0
        %v6057 = vsel %vm1370, %v5918, 0
        %6059 = vmatpush.msra.mxu0 0.0
        %6060 = vmatpush.msra.mxu0 0.0
        %6061 = vmatpush.msra.mxu0 0.0
        %6062 = vmatpush.msra.mxu0 0.0
        %6063 = vmatpush.msra.mxu0 0.0
        %6064 = vmatpush.msra.mxu0 0.0
        %6065 = vmatpush.msra.mxu0 0.0
        %6066 = vmatpush.msra.mxu0 0.0
        %6067 = vmatpush.msra.mxu0 0.0
        %6068 = vmatpush.msra.mxu0 0.0
        %6069 = vmatpush.msra.mxu0 0.0
        %6070 = vmatpush.msra.mxu0 0.0
        %6071 = vmatpush.msra.mxu0 0.0
        %6072 = vmatpush.msra.mxu0 0.0
        %6073 = vmatpush.msra.mxu0 0.0
        %6074 = vmatpush.msra.mxu0 %v965
        %6075 = vmatmul.f32.gmra.mxu0 %v6057
        %v6076 = vpop.f32.mrf.mxu0
        %v6077 = vadd.f32 0.0, %v6076
        %6078 = vdwg.mxu0
        %v6080 = vsel %vm1370, %v5933, 0
        %6082 = vmatpush.msra.mxu0 0.0
        %6083 = vmatpush.msra.mxu0 0.0
        %6084 = vmatpush.msra.mxu0 0.0
        %6085 = vmatpush.msra.mxu0 0.0
        %6086 = vmatpush.msra.mxu0 0.0
        %6087 = vmatpush.msra.mxu0 0.0
        %6088 = vmatpush.msra.mxu0 0.0
        %6089 = vmatpush.msra.mxu0 0.0
        %6090 = vmatpush.msra.mxu0 0.0
        %6091 = vmatpush.msra.mxu0 0.0
        %6092 = vmatpush.msra.mxu0 0.0
        %6093 = vmatpush.msra.mxu0 0.0
        %6094 = vmatpush.msra.mxu0 0.0
        %6095 = vmatpush.msra.mxu0 0.0
        %6096 = vmatpush.msra.mxu0 0.0
        %6097 = vmatpush.msra.mxu0 %v1009
        %6098 = vmatmul.f32.gmra.mxu0 %v6080
        %v6099 = vpop.f32.mrf.mxu0
        %v6100 = vadd.f32 0.0, %v6099
        %6101 = vdwg.mxu0
        %v6103 = vsel %vm1370, %v5948, 0
        %6105 = vmatpush.msra.mxu0 0.0
        %6106 = vmatpush.msra.mxu0 0.0
        %6107 = vmatpush.msra.mxu0 0.0
        %6108 = vmatpush.msra.mxu0 0.0
        %6109 = vmatpush.msra.mxu0 0.0
        %6110 = vmatpush.msra.mxu0 0.0
        %6111 = vmatpush.msra.mxu0 0.0
        %6112 = vmatpush.msra.mxu0 0.0
        %6113 = vmatpush.msra.mxu0 0.0
        %6114 = vmatpush.msra.mxu0 0.0
        %6115 = vmatpush.msra.mxu0 0.0
        %6116 = vmatpush.msra.mxu0 0.0
        %6117 = vmatpush.msra.mxu0 0.0
        %6118 = vmatpush.msra.mxu0 0.0
        %6119 = vmatpush.msra.mxu0 0.0
        %6120 = vmatpush.msra.mxu0 %v985
        %6121 = vmatmul.f32.gmra.mxu0 %v6103
        %v6122 = vpop.f32.mrf.mxu0
        %v6123 = vadd.f32 0.0, %v6122
        %6124 = vdwg.mxu0
        %v6126 = vsel %vm1370, %v5963, 0
        %6128 = vmatpush.msra.mxu0 0.0
        %6129 = vmatpush.msra.mxu0 0.0
        %6130 = vmatpush.msra.mxu0 0.0
        %6131 = vmatpush.msra.mxu0 0.0
        %6132 = vmatpush.msra.mxu0 0.0
        %6133 = vmatpush.msra.mxu0 0.0
        %6134 = vmatpush.msra.mxu0 0.0
        %6135 = vmatpush.msra.mxu0 0.0
        %6136 = vmatpush.msra.mxu0 0.0
        %6137 = vmatpush.msra.mxu0 0.0
        %6138 = vmatpush.msra.mxu0 0.0
        %6139 = vmatpush.msra.mxu0 0.0
        %6140 = vmatpush.msra.mxu0 0.0
        %6141 = vmatpush.msra.mxu0 0.0
        %6142 = vmatpush.msra.mxu0 0.0
        %6143 = vmatpush.msra.mxu0 %v1013
        %6144 = vmatmul.f32.gmra.mxu0 %v6126
        %v6145 = vpop.f32.mrf.mxu0
        %v6146 = vadd.f32 0.0, %v6145
        %6147 = vdwg.mxu0
        %6149 = vrot.lane.b32.xlu0 %v6008, 64
        %v6150 = vpop.permute.xlu0 %6149
        %6153 = vrot.lane.b32.xlu0 %v6054, 64
        %v6154 = vpop.permute.xlu0 %6153
        %6157 = vrot.lane.b32.xlu0 %v6100, 64
        %v6158 = vpop.permute.xlu0 %6157
        %6161 = vrot.lane.b32.xlu0 %v6146, 64
        %v6162 = vpop.permute.xlu0 %6161
        %v6164 = vsel %vm712, %v5985, %v6150
        %v6165 = vsel %vm712, %v6031, %v6154
        %v6166 = vsel %vm712, %v6077, %v6158
        %v6167 = vsel %vm712, %v6123, %v6162
        %v6168 = vmul.f32 %v6164, %v1770
        %v6169 = vmul.f32 %v6165, %v1770
        %v6170 = vmul.f32 %v6166, %v1770
        %v6171 = vmul.f32 %v6167, %v1770
        %v6172 = vld [vmem:[#allocation8] sm:$0xff]
        %v6173 = vld [vmem:[#allocation8 + $0x8] sm:$0xff]
        %v6174 = vld [vmem:[#allocation8 + $0x10] sm:$0xff]
        %v6175 = vld [vmem:[#allocation8 + $0x18] sm:$0xff]
        %v6176 = vld [vmem:[#allocation8 + $0x20] sm:$0xff]
        %v6177 = vld [vmem:[#allocation8 + $0x28] sm:$0xff]
        %v6178 = vld [vmem:[#allocation8 + $0x30] sm:$0xff]
        %v6179 = vld [vmem:[#allocation8 + $0x38] sm:$0xff]
        %v6180 = vld [vmem:[#allocation8 + $0x40] sm:$0xff]
        %v6181 = vld [vmem:[#allocation8 + $0x48] sm:$0xff]
        %v6182 = vld [vmem:[#allocation8 + $0x50] sm:$0xff]
        %v6183 = vld [vmem:[#allocation8 + $0x58] sm:$0xff]
        %v6184 = vld [vmem:[#allocation8 + $0x60] sm:$0xff]
        %v6185 = vld [vmem:[#allocation8 + $0x68] sm:$0xff]
        %v6186 = vld [vmem:[#allocation8 + $0x70] sm:$0xff]
        %v6187 = vld [vmem:[#allocation8 + $0x78] sm:$0xff]
        %v6188 = vld [vmem:[#allocation8 + $0x80] sm:$0xff]
        %v6189 = vld [vmem:[#allocation8 + $0x88] sm:$0xff]
        %v6190 = vld [vmem:[#allocation8 + $0x90] sm:$0xff]
        %v6191 = vld [vmem:[#allocation8 + $0x98] sm:$0xff]
        %v6192 = vld [vmem:[#allocation8 + $0xa0] sm:$0xff]
        %v6193 = vld [vmem:[#allocation8 + $0xa8] sm:$0xff]
        %v6194 = vld [vmem:[#allocation8 + $0xb0] sm:$0xff]
        %v6195 = vld [vmem:[#allocation8 + $0xb8] sm:$0xff]
        %v6196 = vld [vmem:[#allocation8 + $0xc0] sm:$0xff]
        %v6197 = vld [vmem:[#allocation8 + $0xc8] sm:$0xff]
        %v6198 = vld [vmem:[#allocation8 + $0xd0] sm:$0xff]
        %v6199 = vld [vmem:[#allocation8 + $0xd8] sm:$0xff]
        %v6200 = vld [vmem:[#allocation8 + $0xe0] sm:$0xff]
        %v6201 = vld [vmem:[#allocation8 + $0xe8] sm:$0xff]
        %v6202 = vld [vmem:[#allocation8 + $0xf0] sm:$0xff]
        %v6203 = vld [vmem:[#allocation8 + $0xf8] sm:$0xff]
        %v6204 = vld [vmem:[#allocation8 + $0x100] sm:$0xff]
        %v6205 = vld [vmem:[#allocation8 + $0x108] sm:$0xff]
        %v6206 = vld [vmem:[#allocation8 + $0x110] sm:$0xff]
        %v6207 = vld [vmem:[#allocation8 + $0x118] sm:$0xff]
        %v6208 = vld [vmem:[#allocation8 + $0x120] sm:$0xff]
        %v6209 = vld [vmem:[#allocation8 + $0x128] sm:$0xff]
        %v6210 = vld [vmem:[#allocation8 + $0x130] sm:$0xff]
        %v6211 = vld [vmem:[#allocation8 + $0x138] sm:$0xff]
        %v6212 = vld [vmem:[#allocation8 + $0x140] sm:$0xff]
        %v6213 = vld [vmem:[#allocation8 + $0x148] sm:$0xff]
        %v6214 = vld [vmem:[#allocation8 + $0x150] sm:$0xff]
        %v6215 = vld [vmem:[#allocation8 + $0x158] sm:$0xff]
        %v6216 = vld [vmem:[#allocation8 + $0x160] sm:$0xff]
        %v6217 = vld [vmem:[#allocation8 + $0x168] sm:$0xff]
        %v6218 = vld [vmem:[#allocation8 + $0x170] sm:$0xff]
        %v6219 = vld [vmem:[#allocation8 + $0x178] sm:$0xff]
        %v6220 = vld [vmem:[#allocation8 + $0x180] sm:$0xff]
        %v6221 = vld [vmem:[#allocation8 + $0x188] sm:$0xff]
        %v6222 = vld [vmem:[#allocation8 + $0x190] sm:$0xff]
        %v6223 = vld [vmem:[#allocation8 + $0x198] sm:$0xff]
        %v6224 = vld [vmem:[#allocation8 + $0x1a0] sm:$0xff]
        %v6225 = vld [vmem:[#allocation8 + $0x1a8] sm:$0xff]
        %v6226 = vld [vmem:[#allocation8 + $0x1b0] sm:$0xff]
        %v6227 = vld [vmem:[#allocation8 + $0x1b8] sm:$0xff]
        %v6228 = vld [vmem:[#allocation8 + $0x1c0] sm:$0xff]
        %v6229 = vld [vmem:[#allocation8 + $0x1c8] sm:$0xff]
        %v6230 = vld [vmem:[#allocation8 + $0x1d0] sm:$0xff]
        %v6231 = vld [vmem:[#allocation8 + $0x1d8] sm:$0xff]
        %v6232 = vld [vmem:[#allocation8 + $0x1e0] sm:$0xff]
        %v6233 = vld [vmem:[#allocation8 + $0x1e8] sm:$0xff]
        %v6234 = vld [vmem:[#allocation8 + $0x1f0] sm:$0xff]
        %v6235 = vld [vmem:[#allocation8 + $0x1f8] sm:$0xff]
        %v6236 = vld [vmem:[%s8] sm:$0x1]
        %v6238 = vperm.slane %v6236, 0
        %6240 = vmatpush.msra.mxu0 %v6187
        %6241 = vmatpush.msra.mxu0 %v6186
        %6242 = vmatpush.msra.mxu0 %v6185
        %6243 = vmatpush.msra.mxu0 %v6184
        %6244 = vmatpush.msra.mxu0 %v6183
        %6245 = vmatpush.msra.mxu0 %v6182
        %6246 = vmatpush.msra.mxu0 %v6181
        %6247 = vmatpush.msra.mxu0 %v6180
        %6248 = vmatpush.msra.mxu0 %v6179
        %6249 = vmatpush.msra.mxu0 %v6178
        %6250 = vmatpush.msra.mxu0 %v6177
        %6251 = vmatpush.msra.mxu0 %v6176
        %6252 = vmatpush.msra.mxu0 %v6175
        %6253 = vmatpush.msra.mxu0 %v6174
        %6254 = vmatpush.msra.mxu0 %v6173
        %6255 = vmatpush.msra.mxu0 %v6172
        %6256 = vmatmul.f32.gmra.mxu0 %v6168
        %v6257 = vpop.f32.mrf.mxu0
        %v6258 = vadd.f32 %v6238, %v6257
        %6259 = vdwg.mxu0
        %6260 = vmatpush.msra.mxu0 %v6203
        %6261 = vmatpush.msra.mxu0 %v6202
        %6262 = vmatpush.msra.mxu0 %v6201
        %6263 = vmatpush.msra.mxu0 %v6200
        %6264 = vmatpush.msra.mxu0 %v6199
        %6265 = vmatpush.msra.mxu0 %v6198
        %6266 = vmatpush.msra.mxu0 %v6197
        %6267 = vmatpush.msra.mxu0 %v6196
        %6268 = vmatpush.msra.mxu0 %v6195
        %6269 = vmatpush.msra.mxu0 %v6194
        %6270 = vmatpush.msra.mxu0 %v6193
        %6271 = vmatpush.msra.mxu0 %v6192
        %6272 = vmatpush.msra.mxu0 %v6191
        %6273 = vmatpush.msra.mxu0 %v6190
        %6274 = vmatpush.msra.mxu0 %v6189
        %6275 = vmatpush.msra.mxu0 %v6188
        %6276 = vmatmul.f32.gmra.mxu0 %v6169
        %v6277 = vpop.f32.mrf.mxu0
        %v6278 = vadd.f32 %v6258, %v6277
        %6279 = vdwg.mxu0
        %6280 = vmatpush.msra.mxu0 %v6219
        %6281 = vmatpush.msra.mxu0 %v6218
        %6282 = vmatpush.msra.mxu0 %v6217
        %6283 = vmatpush.msra.mxu0 %v6216
        %6284 = vmatpush.msra.mxu0 %v6215
        %6285 = vmatpush.msra.mxu0 %v6214
        %6286 = vmatpush.msra.mxu0 %v6213
        %6287 = vmatpush.msra.mxu0 %v6212
        %6288 = vmatpush.msra.mxu0 %v6211
        %6289 = vmatpush.msra.mxu0 %v6210
        %6290 = vmatpush.msra.mxu0 %v6209
        %6291 = vmatpush.msra.mxu0 %v6208
        %6292 = vmatpush.msra.mxu0 %v6207
        %6293 = vmatpush.msra.mxu0 %v6206
        %6294 = vmatpush.msra.mxu0 %v6205
        %6295 = vmatpush.msra.mxu0 %v6204
        %6296 = vmatmul.f32.gmra.mxu0 %v6170
        %v6297 = vpop.f32.mrf.mxu0
        %v6298 = vadd.f32 %v6278, %v6297
        %6299 = vdwg.mxu0
        %6300 = vmatpush.msra.mxu0 %v6235
        %6301 = vmatpush.msra.mxu0 %v6234
        %6302 = vmatpush.msra.mxu0 %v6233
        %6303 = vmatpush.msra.mxu0 %v6232
        %6304 = vmatpush.msra.mxu0 %v6231
        %6305 = vmatpush.msra.mxu0 %v6230
        %6306 = vmatpush.msra.mxu0 %v6229
        %6307 = vmatpush.msra.mxu0 %v6228
        %6308 = vmatpush.msra.mxu0 %v6227
        %6309 = vmatpush.msra.mxu0 %v6226
        %6310 = vmatpush.msra.mxu0 %v6225
        %6311 = vmatpush.msra.mxu0 %v6224
        %6312 = vmatpush.msra.mxu0 %v6223
        %6313 = vmatpush.msra.mxu0 %v6222
        %6314 = vmatpush.msra.mxu0 %v6221
        %6315 = vmatpush.msra.mxu0 %v6220
        %6316 = vmatmul.f32.gmra.mxu0 %v6171
        %v6317 = vpop.f32.mrf.mxu0
        %v6318 = vadd.f32 %v6298, %v6317
        %6319 = vdwg.mxu0
        %v6320 = vsel %vm712, %v6318, 0.0
        %6321 = vadd.xlane.f32.xlu0 %v6320
        %v6322 = vpop.xlane.xlu0 %6321
        %v6323 = vmul.f32 %v6322, %v722
        %v6324 = vsub.f32 %v6318, %v6323
        %v6325 = vmul.f32 %v6324, %v6324
        %v6326 = vsel %vm712, %v6325, 0.0
        %6327 = vadd.xlane.f32.xlu0 %v6326
        %v6328 = vpop.xlane.xlu0 %6327
        %v6329 = vmul.f32 %v6328, %v722
        %v6330 = vadd.f32 %v6329, 1e-05
        %v6331 = vrsqrt.pop %v6330
        %v6332 = vmul.f32 %v6331, %v6330
        %v6333 = vmul.f32 %v6332, %v6331
        %v6334 = vmul.f32 0.5, %v6333
        %v6335 = vsub.f32 1.5, %v6334
        %v6336 = vmul.f32 %v6331, %v6335
        %vm6337 = vweird.f32 %v6330
        %vm6338 = vweird.f32 %v6331
        %vm6339 = vmor %vm6337, %vm6338
        %v6340 = vsel %vm6339, %v6331, %v6336
        %v6341 = vmul.f32 %v6324, %v6340
        %s6342 = scalar_lea.vmem [#allocation13], 256
        %v6343 = vld [vmem:[%s6342] sm:$0xff]
        %v6344 = vld [vmem:[%s6342 + $0x8] sm:$0xff]
        %v6345 = vld [vmem:[%s6342 + $0x10] sm:$0xff]
        %v6346 = vld [vmem:[%s6342 + $0x18] sm:$0xff]
        %v6347 = vld [vmem:[%s6342 + $0x20] sm:$0xff]
        %v6348 = vld [vmem:[%s6342 + $0x28] sm:$0xff]
        %v6349 = vld [vmem:[%s6342 + $0x30] sm:$0xff]
        %v6350 = vld [vmem:[%s6342 + $0x38] sm:$0xff]
        %s6351 = scalar_lea.vmem %s14, 4
        %v6352 = vld [vmem:[%s6351] sm:$0x1]
        %v6354 = vperm.slane %v6352, 0
        %v6357 = vsel %vm712, %v6341, 0
        %6359 = vmatpush.msra.mxu0 0.0
        %6360 = vmatpush.msra.mxu0 0.0
        %6361 = vmatpush.msra.mxu0 0.0
        %6362 = vmatpush.msra.mxu0 0.0
        %6363 = vmatpush.msra.mxu0 0.0
        %6364 = vmatpush.msra.mxu0 0.0
        %6365 = vmatpush.msra.mxu0 0.0
        %6366 = vmatpush.msra.mxu0 0.0
        %6367 = vmatpush.msra.mxu0 %v6350
        %6368 = vmatpush.msra.mxu0 %v6349
        %6369 = vmatpush.msra.mxu0 %v6348
        %6370 = vmatpush.msra.mxu0 %v6347
        %6371 = vmatpush.msra.mxu0 %v6346
        %6372 = vmatpush.msra.mxu0 %v6345
        %6373 = vmatpush.msra.mxu0 %v6344
        %6374 = vmatpush.msra.mxu0 %v6343
        %6375 = vmatmul.f32.gmra.mxu0 %v6357
        %v6376 = vpop.f32.mrf.mxu0
        %v6377 = vadd.f32 %v6354, %v6376
        %6378 = vdwg.mxu0
        %v6379 = vadd.f32 %v6377, %v6341
        %v6380 = vsel %vm712, %v6379, 0.0
        %6381 = vadd.xlane.f32.xlu0 %v6380
        %v6382 = vpop.xlane.xlu0 %6381
        %v6383 = vmul.f32 %v6382, %v722
        %v6384 = vsub.f32 %v6379, %v6383
        %v6385 = vmul.f32 %v6384, %v6384
        %v6386 = vsel %vm712, %v6385, 0.0
        %6387 = vadd.xlane.f32.xlu0 %v6386
        %v6388 = vpop.xlane.xlu0 %6387
        %v6389 = vmul.f32 %v6388, %v722
        %v6390 = vadd.f32 %v6389, 1e-05
        %v6391 = vrsqrt.pop %v6390
        %v6392 = vmul.f32 %v6391, %v6390
        %v6393 = vmul.f32 %v6392, %v6391
        %v6394 = vmul.f32 0.5, %v6393
        %v6395 = vsub.f32 1.5, %v6394
        %v6396 = vmul.f32 %v6391, %v6395
        %vm6397 = vweird.f32 %v6390
        %vm6398 = vweird.f32 %v6391
        %vm6399 = vmor %vm6397, %vm6398
        %v6400 = vsel %vm6399, %v6391, %v6396
        %v6401 = vmul.f32 %v6384, %v6400
        %v6402 = vld [vmem:[#allocation10] sm:$0xff]
        %v6403 = vld [vmem:[#allocation10 + $0x8] sm:$0xff]
        %v6404 = vld [vmem:[#allocation10 + $0x10] sm:$0xff]
        %v6405 = vld [vmem:[#allocation10 + $0x18] sm:$0xff]
        %v6406 = vld [vmem:[#allocation10 + $0x20] sm:$0xff]
        %v6407 = vld [vmem:[#allocation10 + $0x28] sm:$0xff]
        %v6408 = vld [vmem:[#allocation10 + $0x30] sm:$0xff]
        %v6409 = vld [vmem:[#allocation10 + $0x38] sm:$0xff]
        %v6410 = vld [vmem:[%s10] sm:$0x1]
        %v6412 = vperm.slane %v6410, 0
        %v6415 = vsel %vm712, %v6401, 0
        %6417 = vmatpush.msra.mxu0 0.0
        %6418 = vmatpush.msra.mxu0 0.0
        %6419 = vmatpush.msra.mxu0 0.0
        %6420 = vmatpush.msra.mxu0 0.0
        %6421 = vmatpush.msra.mxu0 0.0
        %6422 = vmatpush.msra.mxu0 0.0
        %6423 = vmatpush.msra.mxu0 0.0
        %6424 = vmatpush.msra.mxu0 0.0
        %6425 = vmatpush.msra.mxu0 %v6409
        %6426 = vmatpush.msra.mxu0 %v6408
        %6427 = vmatpush.msra.mxu0 %v6407
        %6428 = vmatpush.msra.mxu0 %v6406
        %6429 = vmatpush.msra.mxu0 %v6405
        %6430 = vmatpush.msra.mxu0 %v6404
        %6431 = vmatpush.msra.mxu0 %v6403
        %6432 = vmatpush.msra.mxu0 %v6402
        %6433 = vmatmul.f32.gmra.mxu0 %v6415
        %v6434 = vpop.f32.mrf.mxu0
        %v6435 = vadd.f32 %v6412, %v6434
        %6436 = vdwg.mxu0
        %v6437 = vmax.f32 %v6435, 0.0
        %v6438 = vld [vmem:[#allocation11] sm:$0xff]
        %v6439 = vld [vmem:[#allocation11 + $0x8] sm:$0xff]
        %v6440 = vld [vmem:[#allocation11 + $0x10] sm:$0xff]
        %v6441 = vld [vmem:[#allocation11 + $0x18] sm:$0xff]
        %v6442 = vld [vmem:[#allocation11 + $0x20] sm:$0xff]
        %v6443 = vld [vmem:[#allocation11 + $0x28] sm:$0xff]
        %v6444 = vld [vmem:[#allocation11 + $0x30] sm:$0xff]
        %v6445 = vld [vmem:[#allocation11 + $0x38] sm:$0xff]
        %v6446 = vld [vmem:[%s12] sm:$0x1]
        %v6448 = vperm.slane %v6446, 0
        %v6451 = vsel %vm712, %v6437, 0
        %6453 = vmatpush.msra.mxu0 0.0
        %6454 = vmatpush.msra.mxu0 0.0
        %6455 = vmatpush.msra.mxu0 0.0
        %6456 = vmatpush.msra.mxu0 0.0
        %6457 = vmatpush.msra.mxu0 0.0
        %6458 = vmatpush.msra.mxu0 0.0
        %6459 = vmatpush.msra.mxu0 0.0
        %6460 = vmatpush.msra.mxu0 0.0
        %6461 = vmatpush.msra.mxu0 %v6445
        %6462 = vmatpush.msra.mxu0 %v6444
        %6463 = vmatpush.msra.mxu0 %v6443
        %6464 = vmatpush.msra.mxu0 %v6442
        %6465 = vmatpush.msra.mxu0 %v6441
        %6466 = vmatpush.msra.mxu0 %v6440
        %6467 = vmatpush.msra.mxu0 %v6439
        %6468 = vmatpush.msra.mxu0 %v6438
        %6469 = vmatmul.f32.gmra.mxu0 %v6451
        %v6470 = vpop.f32.mrf.mxu0
        %v6471 = vadd.f32 %v6448, %v6470
        %6472 = vdwg.mxu0
        %v6473 = vsel %vm712, %v6471, 0.0
        %6474 = vadd.xlane.f32.xlu0 %v6473
        %v6475 = vpop.xlane.xlu0 %6474
        %v6476 = vmul.f32 %v6475, %v722
        %v6477 = vsub.f32 %v6471, %v6476
        %v6478 = vmul.f32 %v6477, %v6477
        %v6479 = vsel %vm712, %v6478, 0.0
        %6480 = vadd.xlane.f32.xlu0 %v6479
        %v6481 = vpop.xlane.xlu0 %6480
        %v6482 = vmul.f32 %v6481, %v722
        %v6483 = vadd.f32 %v6482, 1e-05
        %v6484 = vrsqrt.pop %v6483
        %v6485 = vmul.f32 %v6484, %v6483
        %v6486 = vmul.f32 %v6485, %v6484
        %v6487 = vmul.f32 0.5, %v6486
        %v6488 = vsub.f32 1.5, %v6487
        %v6489 = vmul.f32 %v6484, %v6488
        %vm6490 = vweird.f32 %v6483
        %vm6491 = vweird.f32 %v6484
        %vm6492 = vmor %vm6490, %vm6491
        %v6493 = vsel %vm6492, %v6484, %v6489
        %v6494 = vmul.f32 %v6477, %v6493
        %s6495 = scalar_lea.vmem [#allocation14], 256
        %v6496 = vld [vmem:[%s6495] sm:$0xff]
        %v6497 = vld [vmem:[%s6495 + $0x8] sm:$0xff]
        %v6498 = vld [vmem:[%s6495 + $0x10] sm:$0xff]
        %v6499 = vld [vmem:[%s6495 + $0x18] sm:$0xff]
        %v6500 = vld [vmem:[%s6495 + $0x20] sm:$0xff]
        %v6501 = vld [vmem:[%s6495 + $0x28] sm:$0xff]
        %v6502 = vld [vmem:[%s6495 + $0x30] sm:$0xff]
        %v6503 = vld [vmem:[%s6495 + $0x38] sm:$0xff]
        %s6504 = scalar_lea.vmem %s16, 4
        %v6505 = vld [vmem:[%s6504] sm:$0x1]
        %v6507 = vperm.slane %v6505, 0
        %v6510 = vsel %vm712, %v6494, 0
        %6512 = vmatpush.msra.mxu0 0.0
        %6513 = vmatpush.msra.mxu0 0.0
        %6514 = vmatpush.msra.mxu0 0.0
        %6515 = vmatpush.msra.mxu0 0.0
        %6516 = vmatpush.msra.mxu0 0.0
        %6517 = vmatpush.msra.mxu0 0.0
        %6518 = vmatpush.msra.mxu0 0.0
        %6519 = vmatpush.msra.mxu0 0.0
        %6520 = vmatpush.msra.mxu0 %v6503
        %6521 = vmatpush.msra.mxu0 %v6502
        %6522 = vmatpush.msra.mxu0 %v6501
        %6523 = vmatpush.msra.mxu0 %v6500
        %6524 = vmatpush.msra.mxu0 %v6499
        %6525 = vmatpush.msra.mxu0 %v6498
        %6526 = vmatpush.msra.mxu0 %v6497
        %6527 = vmatpush.msra.mxu0 %v6496
        %6528 = vmatmul.f32.gmra.mxu0 %v6510
        %v6529 = vpop.f32.mrf.mxu0
        %v6530 = vadd.f32 %v6507, %v6529
        %6531 = vdwg.mxu0
        %v6532 = vadd.f32 %v6530, %v6494
        %6533 = vst.msk [vmem:[%s696] sm:$0xff] %vm712, %v6532
        %s6534 = sand.u32 %s416, 1
        %s6535 = scalar_lea.sflag [#allocation4], %s6534
        %s6536 = sand.u32 %s416, 1
        %s6537 = smul.addr %s6536, 8
        %s6538 = scalar_lea.vmem [#allocation16], %s6537
        // Predicated region
        $region121: #{_lambda_.1} parent=87 // pred_check
          %p6539 = pneg %p426
        $region122: #{_lambda_.1} parent=87 // pred_check_branch
          %6541 = sbr.rel (%p6539) target = $region124
        $region123: #{_lambda_.1} parent=87 // pred_region
          %6543 = vsyncadd %s6535, 0
          %s6544 = smul.addr %s36, 8
          %s6545 = scalar_lea.hbm %s17, %s6544
          %s6547 = sshll.u32 %s6538, 4
          %s6548 = int_to_ptr.vmem [resolvable:$true] %s6547
          %s6549 = sshll.u32 %s6545, 4
          %s6550 = int_to_ptr.hbm [resolvable:$true] %s6549
          %6552 = dma.vmem_to_hbm [thread:$0]  %s6548, 128, %s6550, %s6535
        $region124: #{_lambda_.1} parent=87 // pred_fallthru
          _
      $region88: #{_lambda_.1} parent=5 // pred_fallthru
        _
      %p6553 = scmp.le.s32.totalorder 2, %s31
      // Predicated region
      $region125: #{_lambda_.1} parent=5 // pred_check
        %p6554 = pneg %p6553
      $region126: #{_lambda_.1} parent=5 // pred_check_branch
        %6556 = sbr.rel (%p6554) target = $region128
      $region127: #{_lambda_.1} parent=5 // pred_region
        %s6557 = ssub.s32 %s31, 2
        // Predicated region
        $region129: #{_lambda_.1} parent=127 // pred_check
          %p6558 = pneg %p432
        $region130: #{_lambda_.1} parent=127 // pred_check_branch
          %6560 = sbr.rel (%p6558) target = $region132
        $region131: #{_lambda_.1} parent=127 // pred_region
          %s6561 = sand.u32 %s417, 1
          %s6562 = scalar_lea.sflag [#allocation4], %s6561
          %s6563 = sand.u32 %s417, 1
          %s6564 = smul.addr %s6563, 8
          %s6565 = scalar_lea.vmem [#allocation16], %s6564
          %6567 = dma.done %s6562, 128
        $region132: #{_lambda_.1} parent=127 // pred_fallthru
          _
      $region128: #{_lambda_.1} parent=5 // pred_fallthru
        _
    $region6: #{_lambda_.1} parent=1 // loop_footer
      %s35 = sadd.s32 1, %s31
    $region7: #{_lambda_.1} parent=1 // loop_footer_branch
      %30 = sbr.rel target = $region3
    $region8: #{_lambda_.1} parent=1 // loop_exit
      _
    %6568 = vsyncpa [#allocation3], 1
    %s6569 = scalar_lea.sflag [#allocation3], 1
    %6570 = vsyncpa %s6569, 1
    %6571 = vsyncpa [#allocation6], 1
    %6572 = vsyncpa [#allocation9], 1
    %6573 = vsyncpa [#allocation12], 1
    %6574 = vsyncpa [#allocation15], 1
    %6575 = vsyncpa [#allocation4], 1
    %s6576 = scalar_lea.sflag [#allocation4], 1
    %6577 = vsyncpa %s6576, 1

</llo_original>
